<compile_context>
chip_gen: v6e
topology: v6e:2x2x1
jax: 0.10.0
libtpu: 0.0.40
codegen_flags: <defaults>
</compile_context>

<pallas_src>
import functools

import jax
import jax.numpy as jnp
from jax.experimental import pallas as pl
from jax.experimental.pallas import tpu as pltpu

_SENTINEL = 2 ** 30  # padded receiver id: never matches a real node row


# ---------------------------------------------------------------------------
# Kernel 1: batched edge MLP (all edge sets in one call), single K=3D matmul,
# fused f32 residual.  grid = (num_edge_sets, E_pad // te).
# ---------------------------------------------------------------------------
def _edge_mlp_kernel(s_ref, d_ref, e_ref, w1_ref, b1_ref, w2_ref, b2_ref,
                     g_ref, bt_ref, opre_ref, ores_ref, xcat_ref):
    """Linear(K=3D) -> ReLU -> Linear -> LayerNorm(eps=1e-5) (+ f32 residual).

    MXU inputs bf16; accumulation, LN statistics and the residual stay in f32.
    Outputs: bf16 pre-residual (node path) and f32 post-residual (new edges).
    """
    d = s_ref.shape[-1]
    ef32 = e_ref[0]                                        # f32 [te, D]

    # Lane-concat the three D-wide tiles into one (te, 3D) bf16 slab so the
    # layer-1 matmul runs with K=3D (fills the 256-deep MXU on v6e/v7x).
    xcat_ref[:, 0:d] = s_ref[0]
    xcat_ref[:, d:2 * d] = d_ref[0]
    xcat_ref[:, 2 * d:3 * d] = ef32.astype(jnp.bfloat16)

    h = jnp.dot(xcat_ref[...], w1_ref[0],
                preferred_element_type=jnp.float32) + b1_ref[0]
    h = jnp.maximum(h, 0.0)
    y = jnp.dot(h.astype(jnp.bfloat16), w2_ref[0],
                preferred_element_type=jnp.float32) + b2_ref[0]

    # One-pass LayerNorm statistics (single cross-lane reduction pair).
    mu = jnp.mean(y, axis=-1, keepdims=True)
    var = jnp.maximum(jnp.mean(y * y, axis=-1, keepdims=True) - mu * mu, 0.0)
    ln = (y - mu) * jax.lax.rsqrt(var + 1e-5) * g_ref[0] + bt_ref[0]

    opre_ref[0] = ln.astype(jnp.bfloat16)                  # pre-residual, bf16
    ores_ref[0] = ln + ef32                                # residual fused, f32


def edge_mlps_pallas(srcs_all, dsts_all, ef_all, prepared, *, te):
    """srcs/dsts bf16 [S,E_pad,D]; ef f32 [S,E_pad,D].

    Returns (bf16 pre-residual [S,E_pad,Do], f32 post-residual [S,E_pad,Do]).
    """
    s, e_pad, d = ef_all.shape
    hdim = prepared["edge_w1"].shape[-1]
    odim = prepared["edge_w2"].shape[-1]
    assert odim == d, "edge residual requires MLP output dim == edge dim"

    return pl.pallas_call(
        _edge_mlp_kernel,
        out_shape=(jax.ShapeDtypeStruct((s, e_pad, odim), jnp.bfloat16),
                   jax.ShapeDtypeStruct((s, e_pad, odim), jnp.float32)),
        grid=(s, e_pad // te),
        in_specs=[
            pl.BlockSpec((1, te, d), lambda si, ei: (si, ei, 0)),      # srcs (bf16)
            pl.BlockSpec((1, te, d), lambda si, ei: (si, ei, 0)),      # dsts (bf16)
            pl.BlockSpec((1, te, d), lambda si, ei: (si, ei, 0)),      # edge feats (f32)
            pl.BlockSpec((1, 3 * d, hdim), lambda si, ei: (si, 0, 0)),  # W1 (full K=3D)
            pl.BlockSpec((1, 1, hdim), lambda si, ei: (si, 0, 0)),      # b1
            pl.BlockSpec((1, hdim, odim), lambda si, ei: (si, 0, 0)),   # W2
            pl.BlockSpec((1, 1, odim), lambda si, ei: (si, 0, 0)),      # b2
            pl.BlockSpec((1, 1, odim), lambda si, ei: (si, 0, 0)),      # gamma
            pl.BlockSpec((1, 1, odim), lambda si, ei: (si, 0, 0)),      # beta
        ],
        out_specs=[pl.BlockSpec((1, te, odim), lambda si, ei: (si, ei, 0)),
                   pl.BlockSpec((1, te, odim), lambda si, ei: (si, ei, 0))],
        scratch_shapes=[pltpu.VMEM((te, 3 * d), jnp.bfloat16)],         # xcat slab
        compiler_params=pltpu.CompilerParams(
            dimension_semantics=("parallel", "parallel")),
    )(srcs_all, dsts_all, ef_all, prepared["edge_w1"], prepared["edge_b1"],
      prepared["edge_w2"], prepared["edge_b2"], prepared["edge_gamma"],
      prepared["edge_beta"])


# ---------------------------------------------------------------------------
# Kernel 2: fused tiled segment-sum (one-hot MXU) + node MLP + node residual.
# grid = (N_pad // tn, E_pad // te); edge axis is the innermost "arbitrary"
# reduction axis with a per-set f32 VMEM accumulator (P3).  The node MLP runs
# at the last edge step with a single K=(1+S)*D layer-1 matmul, so the
# [N, (1+S)*D] concat intermediate never touches HBM.
# ---------------------------------------------------------------------------
def _node_update_kernel(node_ref, recv_ref, emlp_ref, w1_ref, b1_ref, w2_ref,
                        b2_ref, g_ref, bt_ref, o_ref, seg_acc, xcat_ref, *,
                        num_sets):
    e_step = pl.program_id(1)

    @pl.when(e_step == 0)
    def _init():
        seg_acc[...] = jnp.zeros_like(seg_acc)

    tn = node_ref.shape[0]
    d = node_ref.shape[1]
    te = recv_ref.shape[1]
    n_base = pl.program_id(0) * tn
    # node-id per sublane within this node tile, broadcast over the edge lanes
    row_ids = jax.lax.broadcasted_iota(jnp.int32, (tn, te), 0) + n_base
    recv_all = recv_ref[...]                                     # [S, te] int32
    for s in range(num_sets):
        onehot = (row_ids == recv_all[s:s + 1, :]).astype(jnp.bfloat16)  # [tn, te]
        seg_acc[s] = seg_acc[s] + jnp.dot(onehot, emlp_ref[s],
                                          preferred_element_type=jnp.float32)

    @pl.when(e_step == pl.num_programs(1) - 1)
    def _finalize():
        x = node_ref[...]                                        # f32 [tn, D]
        # Lane-concat node features + per-set segment sums -> one K=(1+S)*D dot.
        xcat_ref[:, 0:d] = x.astype(jnp.bfloat16)
        for s in range(num_sets):
            xcat_ref[:, d * (s + 1):d * (s + 2)] = seg_acc[s].astype(jnp.bfloat16)
        h = jnp.dot(xcat_ref[...], w1_ref[...],
                    preferred_element_type=jnp.float32) + b1_ref[...]
        h = jnp.maximum(h, 0.0)
        y = jnp.dot(h.astype(jnp.bfloat16), w2_ref[...],
                    preferred_element_type=jnp.float32) + b2_ref[...]
        mu = jnp.mean(y, axis=-1, keepdims=True)
        var = jnp.maximum(jnp.mean(y * y, axis=-1, keepdims=True) - mu * mu, 0.0)
        yn = (y - mu) * jax.lax.rsqrt(var + 1e-5)
        o_ref[...] = yn * g_ref[...] + bt_ref[...] + x           # in-kernel residual


def node_update_pallas(node_pad, recv_all, emlp_all, prepared, *, tn, te):
    """node_pad f32 [N_pad,D]; recv_all int32 [S,E_pad]; emlp_all bf16 [S,E_pad,D]."""
    n_pad, d = node_pad.shape
    s, e_pad, _ = emlp_all.shape
    hdim = prepared["node_w1"].shape[-1]
    odim = prepared["node_w2"].shape[-1]
    assert odim == d, "node residual requires MLP output dim == node dim"

    return pl.pallas_call(
        functools.partial(_node_update_kernel, num_sets=s),
        out_shape=jax.ShapeDtypeStruct((n_pad, odim), jnp.float32),
        grid=(n_pad // tn, e_pad // te),
        in_specs=[
            pl.BlockSpec((tn, d), lambda i, e: (i, 0)),              # node tile (resident)
            pl.BlockSpec((s, te), lambda i, e: (0, e)),              # receivers (lane-dense)
            pl.BlockSpec((s, te, d), lambda i, e: (0, e, 0)),        # edge-MLP outputs bf16
            pl.BlockSpec(((1 + s) * d, hdim), lambda i, e: (0, 0)),  # W1 (full K)
            pl.BlockSpec((1, hdim), lambda i, e: (0, 0)),            # b1
            pl.BlockSpec((hdim, odim), lambda i, e: (0, 0)),         # W2
            pl.BlockSpec((1, odim), lambda i, e: (0, 0)),            # b2
            pl.BlockSpec((1, odim), lambda i, e: (0, 0)),            # gamma
            pl.BlockSpec((1, odim), lambda i, e: (0, 0)),            # beta
        ],
        out_specs=pl.BlockSpec((tn, odim), lambda i, e: (i, 0)),
        scratch_shapes=[pltpu.VMEM((s, tn, d), jnp.float32),         # segment-sum acc
                        pltpu.VMEM((tn, (1 + s) * d), jnp.bfloat16)],  # xcat slab
        compiler_params=pltpu.CompilerParams(
            dimension_semantics=("parallel", "arbitrary")),
    )(node_pad, recv_all, emlp_all, prepared["node_w1"], prepared["node_b1"],
      prepared["node_w2"], prepared["node_b2"], prepared["node_gamma"],
      prepared["node_beta"])


# ---------------------------------------------------------------------------
# Parameter packing (done ONCE, outside the per-block forward).
# ---------------------------------------------------------------------------
def prepare_block_params(params):
    ep = params["edge_mlps"]
    npar = params["node_mlp"]
    return {
        "edge_w1": jnp.stack([p["w1"] for p in ep], 0).astype(jnp.bfloat16),
        "edge_b1": jnp.stack([p["b1"] for p in ep], 0),
        "edge_w2": jnp.stack([p["w2"] for p in ep], 0).astype(jnp.bfloat16),
        "edge_b2": jnp.stack([p["b2"] for p in ep], 0),
        "edge_gamma": jnp.stack([p["gamma"] for p in ep], 0),
        "edge_beta": jnp.stack([p["beta"] for p in ep], 0),
        "node_w1": npar["w1"].astype(jnp.bfloat16),
        "node_b1": npar["b1"],
        "node_w2": npar["w2"].astype(jnp.bfloat16),
        "node_b2": npar["b2"],
        "node_gamma": npar["gamma"],
        "node_beta": npar["beta"],
    }


# ---------------------------------------------------------------------------
# GraphNetBlock forward (Pallas-backed)
# ---------------------------------------------------------------------------
def _round_up(x, m):
    return ((x + m - 1) // m) * m


def _pad_rows(x, target_rows):
    pad = target_rows - x.shape[0]
    if pad == 0:
        return x
    return jnp.pad(x, ((0, pad), (0, 0)))


def graphnet_block_forward(prepared, node_features, edge_sets, *, tn=512, te=1024):
    """edge_sets: list of (features [E,D], senders [E], receivers [E])."""
    n, d = node_features.shape
    num_sets = len(edge_sets)
    e_sizes = [es[0].shape[0] for es in edge_sets]
    max_e = max(e_sizes)

    # Don't over-pad tiny problems; keep tiles multiples of 256 (>> (8,128)).
    te = min(te, _round_up(max_e, 256))
    tn = min(tn, _round_up(n, 256))
    e_pad = _round_up(max_e, te)
    n_pad = _round_up(n, tn)

    node_bf = node_features.astype(jnp.bfloat16)

    # Pad the (tiny) index arrays instead of the gathered [E, D] rows: the
    # gathers below then produce E_pad rows directly with no extra pad pass.
    snd_idx = jnp.stack([jnp.pad(snd.astype(jnp.int32), (0, e_pad - snd.shape[0]))
                         for (_, snd, _) in edge_sets], 0)               # [S, E_pad]
    rcv_idx = jnp.stack([jnp.pad(rcv.astype(jnp.int32), (0, e_pad - rcv.shape[0]))
                         for (_, _, rcv) in edge_sets], 0)               # gather idx (pad=0)
    recv_all = jnp.stack([jnp.pad(rcv.astype(jnp.int32), (0, e_pad - rcv.shape[0]),
                                  constant_values=_SENTINEL)
                          for (_, _, rcv) in edge_sets], 0)              # seg-sum ids

    # TODO(synk): fuse these gathers into the edge-MLP kernel (node_features at
    # pl.ANY + scalar-prefetched indices driving a manual DMA row gather).
    srcs_all = jnp.take(node_bf, snd_idx.reshape(-1), axis=0).reshape(num_sets, e_pad, d)
    dsts_all = jnp.take(node_bf, rcv_idx.reshape(-1), axis=0).reshape(num_sets, e_pad, d)
    ef_all = jnp.stack([_pad_rows(ef, e_pad) for (ef, _, _) in edge_sets], 0)  # f32

    # --- edge update: MLP + LN + fused f32 residual, one batched call -------
    emlp_bf16, new_edges_all = edge_mlps_pallas(srcs_all, dsts_all, ef_all,
                                                prepared, te=te)

    # --- node update: tiled one-hot segment-sum + node MLP + residual -------
    node_pad = _pad_rows(node_features, n_pad)
    new_nodes = node_update_pallas(node_pad, recv_all, emlp_bf16, prepared,
                                   tn=tn, te=te)[:n]

    new_edges = [new_edges_all[i, :e_sizes[i]] for i in range(num_sets)]
    return new_nodes, new_edges


# ---------------------------------------------------------------------------
# Deterministic parameter init (synthetic; shapes follow Mlp.__init__)
# ---------------------------------------------------------------------------
def init_mlp_params(key, din, widths):
    hid, dout = widths
    k1, k2, k3, k4 = jax.random.split(key, 4)
    s1 = 1.0 / jnp.sqrt(din)
    s2 = 1.0 / jnp.sqrt(hid)
    return {
        "w1": jax.random.uniform(k1, (din, hid), jnp.float32, -s1, s1),
        "b1": jax.random.uniform(k2, (1, hid), jnp.float32, -s1, s1),
        "w2": jax.random.uniform(k3, (hid, dout), jnp.float32, -s2, s2),
        "b2": jax.random.uniform(k4, (1, dout), jnp.float32, -s2, s2),
        "gamma": jnp.ones((1, dout), jnp.float32),
        "beta": jnp.zeros((1, dout), jnp.float32),
    }


# ---------------------------------------------------------------------------
# Pure-JAX reference (mirrors the PyTorch forward with the same deliberate
# precision policy: bf16 MXU inputs, f32 accumulation / LayerNorm / residuals).
# ---------------------------------------------------------------------------
def reference_forward(params, node_features, edge_sets):
    bf, f32 = jnp.bfloat16, jnp.float32

    def mlp(x, p):
        h = jnp.dot(x.astype(bf), p["w1"].astype(bf),
                    preferred_element_type=f32) + p["b1"]
        h = jnp.maximum(h, 0.0)
        y = jnp.dot(h.astype(bf), p["w2"].astype(bf),
                    preferred_element_type=f32) + p["b2"]
        mu = y.mean(-1, keepdims=True)
        var = ((y - mu) ** 2).mean(-1, keepdims=True)
        return (y - mu) / jnp.sqrt(var + 1e-5) * p["gamma"] + p["beta"]

    n, _ = node_features.shape
    emlp_out = []
    for i, (ef, snd, rcv) in enumerate(edge_sets):
        x = jnp.concatenate([node_features[snd], node_features[rcv], ef], axis=-1)
        emlp_out.append(mlp(x, params["edge_mlps"][i]))
    segs = [jax.ops.segment_sum(emlp_out[i].astype(bf).astype(f32),
                                edge_sets[i][2], num_segments=n)
            for i in range(len(edge_sets))]
    x = jnp.concatenate([node_features] + segs, axis=-1)
    new_nodes = mlp(x, params["node_mlp"]) + node_features
    new_edges = [emlp_out[i] + edge_sets[i][0] for i in range(len(edge_sets))]
    return new_nodes, new_edges


# ---------------------------------------------------------------------------
if __name__ == "__main__":
    # Lane-dense D=128; N / E deliberately not multiples of the row tiles so
    # the padding / sentinel paths are exercised.
    N, E, D = 500, 1000, 128
    NUM_EDGE_SETS = 2
    MLP_WIDTHS = [128, 128]            # residuals require last width == D

    key = jax.random.PRNGKey(0)
    keys = jax.random.split(key, 4 + 3 * NUM_EDGE_SETS)

    node_features = jax.random.normal(keys[0], (N, D), jnp.float32)

    edge_sets = []
    for i in range(NUM_EDGE_SETS):
        ef = jax.random.normal(keys[1 + 3 * i], (E, D), jnp.float32)
        senders = jax.random.randint(keys[2 + 3 * i], (E,), 0, N, jnp.int32)
        receivers = jax.random.randint(keys[3 + 3 * i], (E,), 0, N, jnp.int32)
        edge_sets.append((ef, senders, receivers))

    node_mlp_in = D + NUM_EDGE_SETS * D
    edge_mlp_in = 2 * D + D
    params = {
        "node_mlp": init_mlp_params(keys[-1], node_mlp_in, MLP_WIDTHS),
        "edge_mlps": [init_mlp_params(keys[-2 - i], edge_mlp_in, MLP_WIDTHS)
                      for i in range(NUM_EDGE_SETS)],
    }
    prepared = prepare_block_params(params)   # packed/cast once, reused per call

    new_nodes, new_edges = graphnet_block_forward(prepared, node_features, edge_sets)
    new_nodes = jax.block_until_ready(new_nodes)
    new_edges = [jax.block_until_ready(e) for e in new_edges]

    ref_nodes, ref_edges = reference_forward(params, node_features, edge_sets)
    assert jnp.allclose(new_nodes, ref_nodes, atol=2e-3, rtol=2e-3)
    for a, b in zip(new_edges, ref_edges):
        assert jnp.allclose(a, b, atol=2e-3, rtol=2e-3)

    print("KERNEL_OK")
</pallas_src>

<mosaic_0001>
module attributes {stable_mosaic.version = 11 : i64} {
  func.func @_edge_mlp_kernel(%arg0: i32, %arg1: i32, %arg2: memref<1x1024x128xbf16, #tpu.memory_space<vmem>>, %arg3: memref<1x1024x128xbf16, #tpu.memory_space<vmem>>, %arg4: memref<1x1024x128xf32, #tpu.memory_space<vmem>>, %arg5: memref<1x384x128xbf16, #tpu.memory_space<vmem>>, %arg6: memref<1x1x128xf32, #tpu.memory_space<vmem>>, %arg7: memref<1x128x128xbf16, #tpu.memory_space<vmem>>, %arg8: memref<1x1x128xf32, #tpu.memory_space<vmem>>, %arg9: memref<1x1x128xf32, #tpu.memory_space<vmem>>, %arg10: memref<1x1x128xf32, #tpu.memory_space<vmem>>, %arg11: memref<1x1024x128xbf16, #tpu.memory_space<vmem>>, %arg12: memref<1x1024x128xf32, #tpu.memory_space<vmem>>, %arg13: memref<1024x384xbf16, #tpu.memory_space<vmem>>) attributes {dimension_semantics = [#tpu.dimension_semantics<parallel>, #tpu.dimension_semantics<parallel>], iteration_bounds = array<i64: 2, 1>, scalar_prefetch = 0 : i64, scratch_operands = 1 : i64, tpu.core_type = #tpu.core_type<tc>, window_params = [{transform_indices = @transform_0, window_bounds = array<i64: 1, 1024, 128>}, {transform_indices = @transform_1, window_bounds = array<i64: 1, 1024, 128>}, {transform_indices = @transform_2, window_bounds = array<i64: 1, 1024, 128>}, {transform_indices = @transform_3, window_bounds = array<i64: 1, 384, 128>}, {transform_indices = @transform_4, window_bounds = array<i64: 1, 1, 128>}, {transform_indices = @transform_5, window_bounds = array<i64: 1, 128, 128>}, {transform_indices = @transform_6, window_bounds = array<i64: 1, 1, 128>}, {transform_indices = @transform_7, window_bounds = array<i64: 1, 1, 128>}, {transform_indices = @transform_8, window_bounds = array<i64: 1, 1, 128>}, {transform_indices = @transform_9, window_bounds = array<i64: 1, 1024, 128>}, {transform_indices = @transform_10, window_bounds = array<i64: 1, 1024, 128>}]} {
    %c0 = arith.constant 0 : index
    %c0_0 = arith.constant 0 : index
    %c0_1 = arith.constant 0 : index
    %0 = vector.load %arg4[%c0, %c0_0, %c0_1] : memref<1x1024x128xf32, #tpu.memory_space<vmem>>, vector<1x1024x128xf32>
    %1 = vector.shape_cast %0 : vector<1x1024x128xf32> to vector<1024x128xf32>
    %c0_2 = arith.constant 0 : index
    %c0_3 = arith.constant 0 : index
    %c0_4 = arith.constant 0 : index
    %2 = vector.load %arg2[%c0_2, %c0_3, %c0_4] : memref<1x1024x128xbf16, #tpu.memory_space<vmem>>, vector<1x1024x128xbf16>
    %3 = vector.shape_cast %2 : vector<1x1024x128xbf16> to vector<1024x128xbf16>
    %c0_5 = arith.constant 0 : index
    %c0_6 = arith.constant 0 : index
    %4 = vector.load %arg13[%c0_5, %c0_6] : memref<1024x384xbf16, #tpu.memory_space<vmem>>, vector<1024x128xbf16>
    tpu.vector_store %arg13[%c0_5, %c0_6], %3 {strides = array<i32>} : memref<1024x384xbf16, #tpu.memory_space<vmem>>, vector<1024x128xbf16>,
    %c0_7 = arith.constant 0 : index
    %c0_8 = arith.constant 0 : index
    %c0_9 = arith.constant 0 : index
    %5 = vector.load %arg3[%c0_7, %c0_8, %c0_9] : memref<1x1024x128xbf16, #tpu.memory_space<vmem>>, vector<1x1024x128xbf16>
    %6 = vector.shape_cast %5 : vector<1x1024x128xbf16> to vector<1024x128xbf16>
    %c0_10 = arith.constant 0 : index
    %c128 = arith.constant 128 : index
    %7 = vector.load %arg13[%c0_10, %c128] : memref<1024x384xbf16, #tpu.memory_space<vmem>>, vector<1024x128xbf16>
    tpu.vector_store %arg13[%c0_10, %c128], %6 {strides = array<i32>} : memref<1024x384xbf16, #tpu.memory_space<vmem>>, vector<1024x128xbf16>,
    %8 = arith.truncf %1 : vector<1024x128xf32> to vector<1024x128xbf16>
    %c0_11 = arith.constant 0 : index
    %c256 = arith.constant 256 : index
    %9 = vector.load %arg13[%c0_11, %c256] : memref<1024x384xbf16, #tpu.memory_space<vmem>>, vector<1024x128xbf16>
    tpu.vector_store %arg13[%c0_11, %c256], %8 {strides = array<i32>} : memref<1024x384xbf16, #tpu.memory_space<vmem>>, vector<1024x128xbf16>,
    %c0_12 = arith.constant 0 : index
    %c0_13 = arith.constant 0 : index
    %10 = vector.load %arg13[%c0_12, %c0_13] : memref<1024x384xbf16, #tpu.memory_space<vmem>>, vector<1024x384xbf16>
    %c0_14 = arith.constant 0 : index
    %c0_15 = arith.constant 0 : index
    %c0_16 = arith.constant 0 : index
    %11 = vector.load %arg5[%c0_14, %c0_15, %c0_16] : memref<1x384x128xbf16, #tpu.memory_space<vmem>>, vector<1x384x128xbf16>
    %12 = vector.shape_cast %11 : vector<1x384x128xbf16> to vector<384x128xbf16>
    %cst = arith.constant dense<0.000000e+00> : vector<1024x128xf32>
    %13 = tpu.matmul %10, %12, %cst {dimension_numbers = #tpu.dot_dimension_numbers<[1], [0], [0], [1], [0, 0, 1, 1], [], []>} : vector<1024x384xbf16>, vector<384x128xbf16>, vector<1024x128xf32> -> vector<1024x128xf32>
    %c0_17 = arith.constant 0 : index
    %c0_18 = arith.constant 0 : index
    %c0_19 = arith.constant 0 : index
    %14 = vector.load %arg6[%c0_17, %c0_18, %c0_19] : memref<1x1x128xf32, #tpu.memory_space<vmem>>, vector<1x1x128xf32>
    %15 = vector.shape_cast %14 : vector<1x1x128xf32> to vector<1x128xf32>
    %16 = vector.broadcast %15 : vector<1x128xf32> to vector<1024x128xf32>
    %17 = arith.addf %13, %16 : vector<1024x128xf32>
    %cst_20 = arith.constant 0.000000e+00 : f32
    %18 = vector.broadcast %cst_20 : f32 to vector<1024x128xf32>
    %19 = arith.maximumf %17, %18 : vector<1024x128xf32>
    %20 = arith.truncf %19 : vector<1024x128xf32> to vector<1024x128xbf16>
    %c0_21 = arith.constant 0 : index
    %c0_22 = arith.constant 0 : index
    %c0_23 = arith.constant 0 : index
    %21 = vector.load %arg7[%c0_21, %c0_22, %c0_23] : memref<1x128x128xbf16, #tpu.memory_space<vmem>>, vector<1x128x128xbf16>
    %22 = vector.shape_cast %21 : vector<1x128x128xbf16> to vector<128x128xbf16>
    %cst_24 = arith.constant dense<0.000000e+00> : vector<1024x128xf32>
    %23 = tpu.matmul %20, %22, %cst_24 {dimension_numbers = #tpu.dot_dimension_numbers<[1], [0], [0], [1], [0, 0, 1, 1], [], []>} : vector<1024x128xbf16>, vector<128x128xbf16>, vector<1024x128xf32> -> vector<1024x128xf32>
    %c0_25 = arith.constant 0 : index
    %c0_26 = arith.constant 0 : index
    %c0_27 = arith.constant 0 : index
    %24 = vector.load %arg8[%c0_25, %c0_26, %c0_27] : memref<1x1x128xf32, #tpu.memory_space<vmem>>, vector<1x1x128xf32>
    %25 = vector.shape_cast %24 : vector<1x1x128xf32> to vector<1x128xf32>
    %26 = vector.broadcast %25 : vector<1x128xf32> to vector<1024x128xf32>
    %27 = arith.addf %23, %26 : vector<1024x128xf32>
    %cst_28 = arith.constant dense<0.000000e+00> : vector<1024xf32>
    %28 = vector.multi_reduction <add>, %27, %cst_28 [1] : vector<1024x128xf32> to vector<1024xf32>
    %29 = vector.shape_cast %28 : vector<1024xf32> to vector<1024x1xf32>
    %cst_29 = arith.constant 1.280000e+02 : f32
    %30 = vector.broadcast %cst_29 : f32 to vector<1024x1xf32>
    %31 = arith.divf %29, %30 : vector<1024x1xf32>
    %32 = arith.mulf %27, %27 : vector<1024x128xf32>
    %cst_30 = arith.constant dense<0.000000e+00> : vector<1024xf32>
    %33 = vector.multi_reduction <add>, %32, %cst_30 [1] : vector<1024x128xf32> to vector<1024xf32>
    %34 = vector.shape_cast %33 : vector<1024xf32> to vector<1024x1xf32>
    %cst_31 = arith.constant 1.280000e+02 : f32
    %35 = vector.broadcast %cst_31 : f32 to vector<1024x1xf32>
    %36 = arith.divf %34, %35 : vector<1024x1xf32>
    %37 = arith.mulf %31, %31 : vector<1024x1xf32>
    %38 = arith.subf %36, %37 : vector<1024x1xf32>
    %cst_32 = arith.constant 0.000000e+00 : f32
    %39 = vector.broadcast %cst_32 : f32 to vector<1024x1xf32>
    %40 = arith.maximumf %38, %39 : vector<1024x1xf32>
    %41 = vector.broadcast %31 : vector<1024x1xf32> to vector<1024x128xf32>
    %42 = arith.subf %27, %41 : vector<1024x128xf32>
    %cst_33 = arith.constant 9.99999974E-6 : f32
    %43 = vector.broadcast %cst_33 : f32 to vector<1024x1xf32>
    %44 = arith.addf %40, %43 : vector<1024x1xf32>
    %45 = math.rsqrt %44 : vector<1024x1xf32>
    %46 = vector.broadcast %45 : vector<1024x1xf32> to vector<1024x128xf32>
    %47 = arith.mulf %42, %46 : vector<1024x128xf32>
    %c0_34 = arith.constant 0 : index
    %c0_35 = arith.constant 0 : index
    %c0_36 = arith.constant 0 : index
    %48 = vector.load %arg9[%c0_34, %c0_35, %c0_36] : memref<1x1x128xf32, #tpu.memory_space<vmem>>, vector<1x1x128xf32>
    %49 = vector.shape_cast %48 : vector<1x1x128xf32> to vector<1x128xf32>
    %50 = vector.broadcast %49 : vector<1x128xf32> to vector<1024x128xf32>
    %51 = arith.mulf %47, %50 : vector<1024x128xf32>
    %c0_37 = arith.constant 0 : index
    %c0_38 = arith.constant 0 : index
    %c0_39 = arith.constant 0 : index
    %52 = vector.load %arg10[%c0_37, %c0_38, %c0_39] : memref<1x1x128xf32, #tpu.memory_space<vmem>>, vector<1x1x128xf32>
    %53 = vector.shape_cast %52 : vector<1x1x128xf32> to vector<1x128xf32>
    %54 = vector.broadcast %53 : vector<1x128xf32> to vector<1024x128xf32>
    %55 = arith.addf %51, %54 : vector<1024x128xf32>
    %56 = arith.truncf %55 : vector<1024x128xf32> to vector<1024x128xbf16>
    %c0_40 = arith.constant 0 : index
    %c0_41 = arith.constant 0 : index
    %c0_42 = arith.constant 0 : index
    %57 = vector.load %arg11[%c0_40, %c0_41, %c0_42] : memref<1x1024x128xbf16, #tpu.memory_space<vmem>>, vector<1x1024x128xbf16>
    %58 = vector.shape_cast %57 : vector<1x1024x128xbf16> to vector<1024x128xbf16>
    %59 = vector.shape_cast %56 : vector<1024x128xbf16> to vector<1x1024x128xbf16>
    tpu.vector_store %arg11[%c0_40, %c0_41, %c0_42], %59 {strides = array<i32>} : memref<1x1024x128xbf16, #tpu.memory_space<vmem>>, vector<1x1024x128xbf16>,
    %60 = arith.addf %55, %1 : vector<1024x128xf32>
    %c0_43 = arith.constant 0 : index
    %c0_44 = arith.constant 0 : index
    %c0_45 = arith.constant 0 : index
    %61 = vector.load %arg12[%c0_43, %c0_44, %c0_45] : memref<1x1024x128xf32, #tpu.memory_space<vmem>>, vector<1x1024x128xf32>
    %62 = vector.shape_cast %61 : vector<1x1024x128xf32> to vector<1024x128xf32>
    %63 = vector.shape_cast %60 : vector<1024x128xf32> to vector<1x1024x128xf32>
    tpu.vector_store %arg12[%c0_43, %c0_44, %c0_45], %63 {strides = array<i32>} : memref<1x1024x128xf32, #tpu.memory_space<vmem>>, vector<1x1024x128xf32>,
    return
  }
  func.func @transform_0(%arg0: i32, %arg1: i32) -> (i32, i32, i32) {
    %c0_i32 = arith.constant 0 : i32
    %c0_i32_0 = arith.constant 0 : i32
    return %arg0, %arg1, %c0_i32 : i32, i32, i32
  }
  func.func @transform_1(%arg0: i32, %arg1: i32) -> (i32, i32, i32) {
    %c0_i32 = arith.constant 0 : i32
    %c0_i32_0 = arith.constant 0 : i32
    return %arg0, %arg1, %c0_i32 : i32, i32, i32
  }
  func.func @transform_2(%arg0: i32, %arg1: i32) -> (i32, i32, i32) {
    %c0_i32 = arith.constant 0 : i32
    %c0_i32_0 = arith.constant 0 : i32
    return %arg0, %arg1, %c0_i32 : i32, i32, i32
  }
  func.func @transform_3(%arg0: i32, %arg1: i32) -> (i32, i32, i32) {
    %c0_i32 = arith.constant 0 : i32
    %c0_i32_0 = arith.constant 0 : i32
    %c0_i32_1 = arith.constant 0 : i32
    return %arg0, %c0_i32, %c0_i32_0 : i32, i32, i32
  }
  func.func @transform_4(%arg0: i32, %arg1: i32) -> (i32, i32, i32) {
    %c0_i32 = arith.constant 0 : i32
    %c0_i32_0 = arith.constant 0 : i32
    %c0_i32_1 = arith.constant 0 : i32
    return %arg0, %c0_i32, %c0_i32_0 : i32, i32, i32
  }
  func.func @transform_5(%arg0: i32, %arg1: i32) -> (i32, i32, i32) {
    %c0_i32 = arith.constant 0 : i32
    %c0_i32_0 = arith.constant 0 : i32
    %c0_i32_1 = arith.constant 0 : i32
    return %arg0, %c0_i32, %c0_i32_0 : i32, i32, i32
  }
  func.func @transform_6(%arg0: i32, %arg1: i32) -> (i32, i32, i32) {
    %c0_i32 = arith.constant 0 : i32
    %c0_i32_0 = arith.constant 0 : i32
    %c0_i32_1 = arith.constant 0 : i32
    return %arg0, %c0_i32, %c0_i32_0 : i32, i32, i32
  }
  func.func @transform_7(%arg0: i32, %arg1: i32) -> (i32, i32, i32) {
    %c0_i32 = arith.constant 0 : i32
    %c0_i32_0 = arith.constant 0 : i32
    %c0_i32_1 = arith.constant 0 : i32
    return %arg0, %c0_i32, %c0_i32_0 : i32, i32, i32
  }
  func.func @transform_8(%arg0: i32, %arg1: i32) -> (i32, i32, i32) {
    %c0_i32 = arith.constant 0 : i32
    %c0_i32_0 = arith.constant 0 : i32
    %c0_i32_1 = arith.constant 0 : i32
    return %arg0, %c0_i32, %c0_i32_0 : i32, i32, i32
  }
  func.func @transform_9(%arg0: i32, %arg1: i32) -> (i32, i32, i32) {
    %c0_i32 = arith.constant 0 : i32
    %c0_i32_0 = arith.constant 0 : i32
    return %arg0, %arg1, %c0_i32 : i32, i32, i32
  }
  func.func @transform_10(%arg0: i32, %arg1: i32) -> (i32, i32, i32) {
    %c0_i32 = arith.constant 0 : i32
    %c0_i32_0 = arith.constant 0 : i32
    return %arg0, %arg1, %c0_i32 : i32, i32, i32
  }
}

</mosaic_0001>

<llo_original>
// kernel: tpu_custom_call.1
$region0: #{tpu_custom_call.1}
  #allocation0 [shape = 'u32[]', space=smem, size = 0x4, offset = 0x4, fixed_abs, tag = 'smem constant byte address 0x4 - core index']
  #allocation1 [shape = 'u32[144,128]{1,0:T(1,128)}', space=vmem, size = 0x12000, scoped, tag = 'internal scratch']
  #allocation2 [shape = 'bf16[1024,384]{1,0:T(8,128)(2,1)}', space=vmem, size = 0xc0000, scoped, tag = 'scratch operand']
  %s0 = inlined_call_operand.hbm [shape: bf16[2,1024,128], index: 0, kind: input, shape index: {}]
  %s1 = inlined_call_operand.hbm [shape: bf16[2,1024,128], index: 1, kind: input, shape index: {}]
  %s2 = inlined_call_operand.hbm [shape: f32[2,1024,128], index: 2, kind: input, shape index: {}]
  %s3 = inlined_call_operand.hbm [shape: bf16[2,384,128], index: 3, kind: input, shape index: {}]
  %s4 = inlined_call_operand.vmem [shape: f32[2,1,128], index: 4, kind: input, shape index: {}]
  %s5 = inlined_call_operand.hbm [shape: bf16[2,128,128], index: 5, kind: input, shape index: {}]
  %s6 = inlined_call_operand.vmem [shape: f32[2,1,128], index: 6, kind: input, shape index: {}]
  %s7 = inlined_call_operand.vmem [shape: f32[2,1,128], index: 7, kind: input, shape index: {}]
  %s8 = inlined_call_operand.vmem [shape: f32[2,1,128], index: 8, kind: input, shape index: {}]
  %s9 = inlined_call_operand.hbm [shape: bf16[2,1024,128], index: 9, kind: output, shape index: {0}]
  %s10 = inlined_call_operand.hbm [shape: f32[2,1024,128], index: 10, kind: output, shape index: {1}]
  %11 = xla_tuple %s9, %s10
  %s12 = sld [smem:[#allocation0]]
  $region97: #{tpu_custom_call.1} parent=0
    _
  %s14 = ssub.s32 1, %s12
  %s15 = scalar_select 0, %s14, %s12
  $region1: #{tpu_custom_call.1} parent=0
    #allocation3 [shape = 'u8[524288]{0}', space=vmem, size = 0x80000, scoped, tag = 'input window, operand 0']
    #allocation4 [shape = 's32[2]{0}', space=sflag, size = 0x8, scoped, tag = 'scoped memory for tpu_custom_call.1']
    #allocation5 [shape = 's32[2]{0}', space=sflag, size = 0x8, scoped, tag = 'scoped memory for tpu_custom_call.1']
    #allocation6 [shape = 'u8[524288]{0}', space=vmem, size = 0x80000, scoped, tag = 'input window, operand 1']
    #allocation7 [shape = 's32[2]{0}', space=sflag, size = 0x8, scoped, tag = 'scoped memory for tpu_custom_call.1']
    #allocation8 [shape = 'u8[1048576]{0}', space=vmem, size = 0x100000, scoped, tag = 'input window, operand 2']
    #allocation9 [shape = 'u8[196608]{0}', space=vmem, size = 0x30000, scoped, tag = 'input window, operand 3']
    #allocation10 [shape = 's32[2]{0}', space=sflag, size = 0x8, scoped, tag = 'scoped memory for tpu_custom_call.1']
    #allocation11 [shape = 'u8[65536]{0}', space=vmem, size = 0x10000, scoped, tag = 'input window, operand 5']
    #allocation12 [shape = 'u8[524288]{0}', space=vmem, size = 0x80000, scoped, tag = 'output window, operand 0']
    #allocation13 [shape = 'u8[1048576]{0}', space=vmem, size = 0x100000, scoped, tag = 'output window, operand 1']
    #allocation14 [shape = 's32[2]{0}', space=sflag, size = 0x8, scoped, tag = 'scoped memory for tpu_custom_call.1']
    %16 = vsyncpa [#allocation4], 0
    %s17 = scalar_lea.sflag [#allocation4], 1
    %18 = vsyncpa %s17, 0
    %19 = vsyncpa [#allocation7], 0
    %s20 = scalar_lea.sflag [#allocation7], 1
    %21 = vsyncpa %s20, 0
    %22 = vsyncpa [#allocation10], 0
    %s23 = scalar_lea.sflag [#allocation10], 1
    %24 = vsyncpa %s23, 0
    %25 = vsyncpa [#allocation5], 0
    %s26 = scalar_lea.sflag [#allocation5], 1
    %27 = vsyncpa %s26, 0
    %28 = vsyncpa [#allocation14], 0
    %s29 = scalar_lea.sflag [#allocation14], 1
    %30 = vsyncpa %s29, 0
    loop: start=0, step=1, limit=4
    $region2: #{tpu_custom_call.1} parent=1 // loop_pre_header
      _
    $region3: #{tpu_custom_call.1} parent=1 // loop_header
      %s32 = sphi 0, %s36
      %p33 = scmp.ge.s32.totalorder %s32, 4
      %s39 = sphi 0, %s51
      %s40 = sphi 0, %s47
      %s41 = sphi 0, %s39
      %s42 = sphi 0, %s40
      %s43 = sphi 0, %s41
      %s44 = sphi 0, %s42
      %s56 = sphi 0, %s58
      %s59 = sphi 0, %s56
      %s60 = sphi 0, %s59
      %s76 = sphi 0, %s60
      %s84 = sphi 0, %s86
      %s87 = sphi 0, %s84
      %s88 = sphi 0, %s87
      %s104 = sphi 0, %s88
      %s112 = sphi 0, %s114
      %s115 = sphi 0, %s112
      %s116 = sphi 0, %s115
      %s132 = sphi 0, %s116
      %s138 = sphi 0, %s140
      %s141 = sphi 0, %s138
      %s142 = sphi 0, %s141
      %s158 = sphi 0, %s142
      %s164 = sphi 0, %s166
      %s167 = sphi 0, %s164
      %s168 = sphi 0, %s167
      %s184 = sphi 0, %s168
      %s190 = sphi 0, %s192
      %s193 = sphi 0, %s190
      %s194 = sphi 0, %s193
      %s210 = sphi 0, %s194
      %s216 = sphi 0, %s218
      %s219 = sphi 0, %s216
      %s220 = sphi 0, %s219
      %s236 = sphi 0, %s220
      %s242 = sphi 0, %s244
      %s245 = sphi 0, %s242
      %s246 = sphi 0, %s245
      %s262 = sphi 0, %s246
      %s268 = sphi 0, %s270
      %s271 = sphi 0, %s268
      %s272 = sphi 0, %s271
      %s288 = sphi 0, %s272
      %s296 = sphi 0, %s298
      %s299 = sphi 0, %s296
      %s300 = sphi 0, %s299
      %s316 = sphi 0, %s300
      %s324 = sphi 0, %s326
      %s327 = sphi 0, %s324
      %s328 = sphi 0, %s327
      %s344 = sphi 0, %s328
    $region4: #{tpu_custom_call.1} parent=1 // loop_header_branch
      %35 = sbr.rel (%p33) target = $region8
    $region5: #{tpu_custom_call.1} parent=1 // loop_body
      %s37 = ssub.s32 %s32, 1
      %s38 = ssub.s32 %s32, 2
      %s45 = sadd.s32 1, %s40
      %p46 = scmp.ge.s32.totalorder %s45, 1
      %s47 = scalar_select %p46, 0, %s45
      %s48 = sadd.s32 1, %s39
      %s49 = scalar_select %p46, %s48, %s39
      %p50 = scmp.ge.s32.totalorder %s49, 2
      %s51 = scalar_select %p50, 0, %s49
      %s52 = ssub.s32 %s39, %s51
      %s53 = ssub.s32 %s40, %s47
      %s54 = sor.u32 %s52, %s53
      %p55 = scmp.eq.s32.totalorder %s54, 0
      %s57 = sadd.s32 %s56, 1
      %s58 = scalar_select %p55, %s56, %s57
      %p61 = pneg %p55
      %p62 = scmp.eq.s32.totalorder %s32, 1
      %p63 = por %p61, %p62
      %p64 = scmp.ne.s32.totalorder %s56, %s59
      %p65 = scmp.eq.s32.totalorder %s32, 0
      %p66 = por %p64, %p65
      %p67 = scmp.ne.s32.totalorder %s56, %s59
      %p68 = scmp.eq.s32.totalorder %s37, 1
      %p69 = por %p67, %p68
      %p70 = scmp.ne.s32.totalorder %s59, %s60
      %p71 = scmp.eq.s32.totalorder %s37, 0
      %p72 = por %p70, %p71
      %p73 = scmp.ne.s32.totalorder %s59, %s60
      %p74 = scmp.eq.s32.totalorder %s38, 1
      %p75 = por %p73, %p74
      %p77 = scmp.ne.s32.totalorder %s60, %s76
      %p78 = scmp.eq.s32.totalorder %s38, 0
      %p79 = por %p77, %p78
      %s80 = ssub.s32 %s39, %s51
      %s81 = ssub.s32 %s40, %s47
      %s82 = sor.u32 %s80, %s81
      %p83 = scmp.eq.s32.totalorder %s82, 0
      %s85 = sadd.s32 %s84, 1
      %s86 = scalar_select %p83, %s84, %s85
      %p89 = pneg %p83
      %p90 = scmp.eq.s32.totalorder %s32, 1
      %p91 = por %p89, %p90
      %p92 = scmp.ne.s32.totalorder %s84, %s87
      %p93 = scmp.eq.s32.totalorder %s32, 0
      %p94 = por %p92, %p93
      %p95 = scmp.ne.s32.totalorder %s84, %s87
      %p96 = scmp.eq.s32.totalorder %s37, 1
      %p97 = por %p95, %p96
      %p98 = scmp.ne.s32.totalorder %s87, %s88
      %p99 = scmp.eq.s32.totalorder %s37, 0
      %p100 = por %p98, %p99
      %p101 = scmp.ne.s32.totalorder %s87, %s88
      %p102 = scmp.eq.s32.totalorder %s38, 1
      %p103 = por %p101, %p102
      %p105 = scmp.ne.s32.totalorder %s88, %s104
      %p106 = scmp.eq.s32.totalorder %s38, 0
      %p107 = por %p105, %p106
      %s108 = ssub.s32 %s39, %s51
      %s109 = ssub.s32 %s40, %s47
      %s110 = sor.u32 %s108, %s109
      %p111 = scmp.eq.s32.totalorder %s110, 0
      %s113 = sadd.s32 %s112, 1
      %s114 = scalar_select %p111, %s112, %s113
      %p117 = pneg %p111
      %p118 = scmp.eq.s32.totalorder %s32, 1
      %p119 = por %p117, %p118
      %p120 = scmp.ne.s32.totalorder %s112, %s115
      %p121 = scmp.eq.s32.totalorder %s32, 0
      %p122 = por %p120, %p121
      %p123 = scmp.ne.s32.totalorder %s112, %s115
      %p124 = scmp.eq.s32.totalorder %s37, 1
      %p125 = por %p123, %p124
      %p126 = scmp.ne.s32.totalorder %s115, %s116
      %p127 = scmp.eq.s32.totalorder %s37, 0
      %p128 = por %p126, %p127
      %p129 = scmp.ne.s32.totalorder %s115, %s116
      %p130 = scmp.eq.s32.totalorder %s38, 1
      %p131 = por %p129, %p130
      %p133 = scmp.ne.s32.totalorder %s116, %s132
      %p134 = scmp.eq.s32.totalorder %s38, 0
      %p135 = por %p133, %p134
      %s136 = ssub.s32 %s39, %s51
      %p137 = scmp.eq.s32.totalorder %s136, 0
      %s139 = sadd.s32 %s138, 1
      %s140 = scalar_select %p137, %s138, %s139
      %p143 = pneg %p137
      %p144 = scmp.eq.s32.totalorder %s32, 1
      %p145 = por %p143, %p144
      %p146 = scmp.ne.s32.totalorder %s138, %s141
      %p147 = scmp.eq.s32.totalorder %s32, 0
      %p148 = por %p146, %p147
      %p149 = scmp.ne.s32.totalorder %s138, %s141
      %p150 = scmp.eq.s32.totalorder %s37, 1
      %p151 = por %p149, %p150
      %p152 = scmp.ne.s32.totalorder %s141, %s142
      %p153 = scmp.eq.s32.totalorder %s37, 0
      %p154 = por %p152, %p153
      %p155 = scmp.ne.s32.totalorder %s141, %s142
      %p156 = scmp.eq.s32.totalorder %s38, 1
      %p157 = por %p155, %p156
      %p159 = scmp.ne.s32.totalorder %s142, %s158
      %p160 = scmp.eq.s32.totalorder %s38, 0
      %p161 = por %p159, %p160
      %s162 = ssub.s32 %s39, %s51
      %p163 = scmp.eq.s32.totalorder %s162, 0
      %s165 = sadd.s32 %s164, 1
      %s166 = scalar_select %p163, %s164, %s165
      %p169 = pneg %p163
      %p170 = scmp.eq.s32.totalorder %s32, 1
      %p171 = por %p169, %p170
      %p172 = scmp.ne.s32.totalorder %s164, %s167
      %p173 = scmp.eq.s32.totalorder %s32, 0
      %p174 = por %p172, %p173
      %p175 = scmp.ne.s32.totalorder %s164, %s167
      %p176 = scmp.eq.s32.totalorder %s37, 1
      %p177 = por %p175, %p176
      %p178 = scmp.ne.s32.totalorder %s167, %s168
      %p179 = scmp.eq.s32.totalorder %s37, 0
      %p180 = por %p178, %p179
      %p181 = scmp.ne.s32.totalorder %s167, %s168
      %p182 = scmp.eq.s32.totalorder %s38, 1
      %p183 = por %p181, %p182
      %p185 = scmp.ne.s32.totalorder %s168, %s184
      %p186 = scmp.eq.s32.totalorder %s38, 0
      %p187 = por %p185, %p186
      %s188 = ssub.s32 %s39, %s51
      %p189 = scmp.eq.s32.totalorder %s188, 0
      %s191 = sadd.s32 %s190, 1
      %s192 = scalar_select %p189, %s190, %s191
      %p195 = pneg %p189
      %p196 = scmp.eq.s32.totalorder %s32, 1
      %p197 = por %p195, %p196
      %p198 = scmp.ne.s32.totalorder %s190, %s193
      %p199 = scmp.eq.s32.totalorder %s32, 0
      %p200 = por %p198, %p199
      %p201 = scmp.ne.s32.totalorder %s190, %s193
      %p202 = scmp.eq.s32.totalorder %s37, 1
      %p203 = por %p201, %p202
      %p204 = scmp.ne.s32.totalorder %s193, %s194
      %p205 = scmp.eq.s32.totalorder %s37, 0
      %p206 = por %p204, %p205
      %p207 = scmp.ne.s32.totalorder %s193, %s194
      %p208 = scmp.eq.s32.totalorder %s38, 1
      %p209 = por %p207, %p208
      %p211 = scmp.ne.s32.totalorder %s194, %s210
      %p212 = scmp.eq.s32.totalorder %s38, 0
      %p213 = por %p211, %p212
      %s214 = ssub.s32 %s39, %s51
      %p215 = scmp.eq.s32.totalorder %s214, 0
      %s217 = sadd.s32 %s216, 1
      %s218 = scalar_select %p215, %s216, %s217
      %p221 = pneg %p215
      %p222 = scmp.eq.s32.totalorder %s32, 1
      %p223 = por %p221, %p222
      %p224 = scmp.ne.s32.totalorder %s216, %s219
      %p225 = scmp.eq.s32.totalorder %s32, 0
      %p226 = por %p224, %p225
      %p227 = scmp.ne.s32.totalorder %s216, %s219
      %p228 = scmp.eq.s32.totalorder %s37, 1
      %p229 = por %p227, %p228
      %p230 = scmp.ne.s32.totalorder %s219, %s220
      %p231 = scmp.eq.s32.totalorder %s37, 0
      %p232 = por %p230, %p231
      %p233 = scmp.ne.s32.totalorder %s219, %s220
      %p234 = scmp.eq.s32.totalorder %s38, 1
      %p235 = por %p233, %p234
      %p237 = scmp.ne.s32.totalorder %s220, %s236
      %p238 = scmp.eq.s32.totalorder %s38, 0
      %p239 = por %p237, %p238
      %s240 = ssub.s32 %s39, %s51
      %p241 = scmp.eq.s32.totalorder %s240, 0
      %s243 = sadd.s32 %s242, 1
      %s244 = scalar_select %p241, %s242, %s243
      %p247 = pneg %p241
      %p248 = scmp.eq.s32.totalorder %s32, 1
      %p249 = por %p247, %p248
      %p250 = scmp.ne.s32.totalorder %s242, %s245
      %p251 = scmp.eq.s32.totalorder %s32, 0
      %p252 = por %p250, %p251
      %p253 = scmp.ne.s32.totalorder %s242, %s245
      %p254 = scmp.eq.s32.totalorder %s37, 1
      %p255 = por %p253, %p254
      %p256 = scmp.ne.s32.totalorder %s245, %s246
      %p257 = scmp.eq.s32.totalorder %s37, 0
      %p258 = por %p256, %p257
      %p259 = scmp.ne.s32.totalorder %s245, %s246
      %p260 = scmp.eq.s32.totalorder %s38, 1
      %p261 = por %p259, %p260
      %p263 = scmp.ne.s32.totalorder %s246, %s262
      %p264 = scmp.eq.s32.totalorder %s38, 0
      %p265 = por %p263, %p264
      %s266 = ssub.s32 %s39, %s51
      %p267 = scmp.eq.s32.totalorder %s266, 0
      %s269 = sadd.s32 %s268, 1
      %s270 = scalar_select %p267, %s268, %s269
      %p273 = pneg %p267
      %p274 = scmp.eq.s32.totalorder %s32, 1
      %p275 = por %p273, %p274
      %p276 = scmp.ne.s32.totalorder %s268, %s271
      %p277 = scmp.eq.s32.totalorder %s32, 0
      %p278 = por %p276, %p277
      %p279 = scmp.ne.s32.totalorder %s268, %s271
      %p280 = scmp.eq.s32.totalorder %s37, 1
      %p281 = por %p279, %p280
      %p282 = scmp.ne.s32.totalorder %s271, %s272
      %p283 = scmp.eq.s32.totalorder %s37, 0
      %p284 = por %p282, %p283
      %p285 = scmp.ne.s32.totalorder %s271, %s272
      %p286 = scmp.eq.s32.totalorder %s38, 1
      %p287 = por %p285, %p286
      %p289 = scmp.ne.s32.totalorder %s272, %s288
      %p290 = scmp.eq.s32.totalorder %s38, 0
      %p291 = por %p289, %p290
      %s292 = ssub.s32 %s39, %s51
      %s293 = ssub.s32 %s40, %s47
      %s294 = sor.u32 %s292, %s293
      %p295 = scmp.eq.s32.totalorder %s294, 0
      %s297 = sadd.s32 %s296, 1
      %s298 = scalar_select %p295, %s296, %s297
      %p301 = pneg %p295
      %p302 = scmp.eq.s32.totalorder %s32, 1
      %p303 = por %p301, %p302
      %p304 = scmp.ne.s32.totalorder %s296, %s299
      %p305 = scmp.eq.s32.totalorder %s32, 0
      %p306 = por %p304, %p305
      %p307 = scmp.ne.s32.totalorder %s296, %s299
      %p308 = scmp.eq.s32.totalorder %s37, 1
      %p309 = por %p307, %p308
      %p310 = scmp.ne.s32.totalorder %s299, %s300
      %p311 = scmp.eq.s32.totalorder %s37, 0
      %p312 = por %p310, %p311
      %p313 = scmp.ne.s32.totalorder %s299, %s300
      %p314 = scmp.eq.s32.totalorder %s38, 1
      %p315 = por %p313, %p314
      %p317 = scmp.ne.s32.totalorder %s300, %s316
      %p318 = scmp.eq.s32.totalorder %s38, 0
      %p319 = por %p317, %p318
      %s320 = ssub.s32 %s39, %s51
      %s321 = ssub.s32 %s40, %s47
      %s322 = sor.u32 %s320, %s321
      %p323 = scmp.eq.s32.totalorder %s322, 0
      %s325 = sadd.s32 %s324, 1
      %s326 = scalar_select %p323, %s324, %s325
      %p329 = pneg %p323
      %p330 = scmp.eq.s32.totalorder %s32, 1
      %p331 = por %p329, %p330
      %p332 = scmp.ne.s32.totalorder %s324, %s327
      %p333 = scmp.eq.s32.totalorder %s32, 0
      %p334 = por %p332, %p333
      %p335 = scmp.ne.s32.totalorder %s324, %s327
      %p336 = scmp.eq.s32.totalorder %s37, 1
      %p337 = por %p335, %p336
      %p338 = scmp.ne.s32.totalorder %s327, %s328
      %p339 = scmp.eq.s32.totalorder %s37, 0
      %p340 = por %p338, %p339
      %p341 = scmp.ne.s32.totalorder %s327, %s328
      %p342 = scmp.eq.s32.totalorder %s38, 1
      %p343 = por %p341, %p342
      %p345 = scmp.ne.s32.totalorder %s328, %s344
      %p346 = scmp.eq.s32.totalorder %s38, 0
      %p347 = por %p345, %p346
      %p348 = scmp.le.s32.totalorder 1, %s32
      %p349 = scmp.lt.s32.totalorder %s32, 3
      %p350 = pnand %p348, %p349
      %p351 = pneg %p350
      // Predicated region
      $region9: #{tpu_custom_call.1} parent=5 // pred_check
        _
      $region10: #{tpu_custom_call.1} parent=5 // pred_check_branch
        %353 = sbr.rel (%p350) target = $region12
      $region11: #{tpu_custom_call.1} parent=5 // pred_region
        %s354 = ssub.s32 %s32, 1
      $region12: #{tpu_custom_call.1} parent=5 // pred_fallthru
        _
      %p355 = scmp.lt.s32.totalorder %s32, 2
      // Predicated region
      $region13: #{tpu_custom_call.1} parent=5 // pred_check
        %p356 = pneg %p355
      $region14: #{tpu_custom_call.1} parent=5 // pred_check_branch
        %358 = sbr.rel (%p356) target = $region16
      $region15: #{tpu_custom_call.1} parent=5 // pred_region
        // Predicated region
        $region17: #{tpu_custom_call.1} parent=15 // pred_check
          %p359 = pneg %p66
        $region18: #{tpu_custom_call.1} parent=15 // pred_check_branch
          %361 = sbr.rel (%p359) target = $region20
        $region19: #{tpu_custom_call.1} parent=15 // pred_region
          %s362 = sand.u32 %s56, 1
          %s363 = scalar_lea.sflag [#allocation4], %s362
          %s364 = sand.u32 %s56, 1
          %s365 = smul.addr %s364, 512
          %s366 = scalar_lea.vmem [#allocation3], %s365
          %s367 = smul.u32 128, %s40
          %s369 = ssub.s32 8192, 8192
          %370 = vsyncadd %s363, %s369
          %s371 = smul.addr %s39, 128
          %s372 = sadd.s32 %s367, %s371
          %s373 = smul.addr %s372, 64
          %s374 = scalar_lea.hbm %s0, %s373
          %s375 = sshll.u32 %s366, 4
          %s376 = int_to_ptr.vmem [resolvable:$true] %s375
          %381 = dma.hbm_to_vmem [thread:$0]  %s374, 8192, %s376, %s363, 64, 64, 4
        $region20: #{tpu_custom_call.1} parent=15 // pred_fallthru
          _
        // Predicated region
        $region21: #{tpu_custom_call.1} parent=15 // pred_check
          %p382 = pneg %p94
        $region22: #{tpu_custom_call.1} parent=15 // pred_check_branch
          %384 = sbr.rel (%p382) target = $region24
        $region23: #{tpu_custom_call.1} parent=15 // pred_region
          %s385 = sand.u32 %s32, 1
          %s386 = scalar_lea.sflag [#allocation7], %s385
          %s387 = sand.u32 %s84, 1
          %s388 = smul.addr %s387, 512
          %s389 = scalar_lea.vmem [#allocation6], %s388
          %s390 = smul.u32 128, %s40
          %s392 = ssub.s32 8192, 8192
          %393 = vsyncadd %s386, %s392
          %s394 = smul.addr %s39, 128
          %s395 = sadd.s32 %s390, %s394
          %s396 = smul.addr %s395, 64
          %s397 = scalar_lea.hbm %s1, %s396
          %s398 = sshll.u32 %s389, 4
          %s399 = int_to_ptr.vmem [resolvable:$true] %s398
          %404 = dma.hbm_to_vmem [thread:$0]  %s397, 8192, %s399, %s386, 64, 64, 4
        $region24: #{tpu_custom_call.1} parent=15 // pred_fallthru
          _
        // Predicated region
        $region25: #{tpu_custom_call.1} parent=15 // pred_check
          %p405 = pneg %p122
        $region26: #{tpu_custom_call.1} parent=15 // pred_check_branch
          %407 = sbr.rel (%p405) target = $region28
        $region27: #{tpu_custom_call.1} parent=15 // pred_region
          %s408 = sand.u32 %s32, 1
          %s409 = scalar_lea.sflag [#allocation7], %s408
          %s410 = sand.u32 %s112, 1
          %s411 = smul.addr %s410, 1024
          %s412 = scalar_lea.vmem [#allocation8], %s411
          %s413 = smul.u32 128, %s40
          %s415 = ssub.s32 16384, 16384
          %416 = vsyncadd %s409, %s415
          %s417 = smul.addr %s39, 128
          %s418 = sadd.s32 %s413, %s417
          %s419 = smul.addr %s418, 128
          %s420 = scalar_lea.hbm %s2, %s419
          %s421 = sshll.u32 %s412, 4
          %s422 = int_to_ptr.vmem [resolvable:$true] %s421
          %427 = dma.hbm_to_vmem [thread:$0]  %s420, 16384, %s422, %s409, 128, 128, 8
        $region28: #{tpu_custom_call.1} parent=15 // pred_fallthru
          _
        // Predicated region
        $region29: #{tpu_custom_call.1} parent=15 // pred_check
          %p428 = pneg %p148
        $region30: #{tpu_custom_call.1} parent=15 // pred_check_branch
          %430 = sbr.rel (%p428) target = $region32
        $region31: #{tpu_custom_call.1} parent=15 // pred_region
          %s431 = sand.u32 %s32, 1
          %s432 = scalar_lea.sflag [#allocation10], %s431
          %s433 = sand.u32 %s138, 1
          %s434 = smul.addr %s433, 192
          %s435 = scalar_lea.vmem [#allocation9], %s434
          %s437 = ssub.s32 3072, 3072
          %438 = vsyncadd %s432, %s437
          %s439 = smul.addr %s39, 48
          %s440 = smul.addr %s439, 64
          %s441 = scalar_lea.hbm %s3, %s440
          %s442 = sshll.u32 %s435, 4
          %s443 = int_to_ptr.vmem [resolvable:$true] %s442
          %448 = dma.hbm_to_vmem [thread:$0]  %s441, 3072, %s443, %s432, 64, 64, 4
        $region32: #{tpu_custom_call.1} parent=15 // pred_fallthru
          _
        // Predicated region
        $region33: #{tpu_custom_call.1} parent=15 // pred_check
          %p449 = pneg %p174
        $region34: #{tpu_custom_call.1} parent=15 // pred_check_branch
          %451 = sbr.rel (%p449) target = $region36
        $region35: #{tpu_custom_call.1} parent=15 // pred_region
          %p452 = scmp.lt.s32.totalorder %s39, 1
          %s453 = scalar_select %p452, %s39, 1
          %s454 = scalar_lea.vmem %s4, %s453
        $region36: #{tpu_custom_call.1} parent=15 // pred_fallthru
          _
        // Predicated region
        $region37: #{tpu_custom_call.1} parent=15 // pred_check
          %p455 = pneg %p200
        $region38: #{tpu_custom_call.1} parent=15 // pred_check_branch
          %457 = sbr.rel (%p455) target = $region40
        $region39: #{tpu_custom_call.1} parent=15 // pred_region
          %s458 = sand.u32 %s32, 1
          %s459 = scalar_lea.sflag [#allocation10], %s458
          %s460 = sand.u32 %s190, 1
          %s461 = smul.addr %s460, 64
          %s462 = scalar_lea.vmem [#allocation11], %s461
          %s464 = ssub.s32 1024, 1024
          %465 = vsyncadd %s459, %s464
          %s466 = smul.addr %s39, 16
          %s467 = smul.addr %s466, 64
          %s468 = scalar_lea.hbm %s5, %s467
          %s469 = sshll.u32 %s462, 4
          %s470 = int_to_ptr.vmem [resolvable:$true] %s469
          %475 = dma.hbm_to_vmem [thread:$0]  %s468, 1024, %s470, %s459, 64, 64, 4
        $region40: #{tpu_custom_call.1} parent=15 // pred_fallthru
          _
        // Predicated region
        $region41: #{tpu_custom_call.1} parent=15 // pred_check
          %p476 = pneg %p226
        $region42: #{tpu_custom_call.1} parent=15 // pred_check_branch
          %478 = sbr.rel (%p476) target = $region44
        $region43: #{tpu_custom_call.1} parent=15 // pred_region
          %p479 = scmp.lt.s32.totalorder %s39, 1
          %s480 = scalar_select %p479, %s39, 1
          %s481 = scalar_lea.vmem %s6, %s480
        $region44: #{tpu_custom_call.1} parent=15 // pred_fallthru
          _
        // Predicated region
        $region45: #{tpu_custom_call.1} parent=15 // pred_check
          %p482 = pneg %p252
        $region46: #{tpu_custom_call.1} parent=15 // pred_check_branch
          %484 = sbr.rel (%p482) target = $region48
        $region47: #{tpu_custom_call.1} parent=15 // pred_region
          %p485 = scmp.lt.s32.totalorder %s39, 1
          %s486 = scalar_select %p485, %s39, 1
          %s487 = scalar_lea.vmem %s7, %s486
        $region48: #{tpu_custom_call.1} parent=15 // pred_fallthru
          _
        // Predicated region
        $region49: #{tpu_custom_call.1} parent=15 // pred_check
          %p488 = pneg %p278
        $region50: #{tpu_custom_call.1} parent=15 // pred_check_branch
          %490 = sbr.rel (%p488) target = $region52
        $region51: #{tpu_custom_call.1} parent=15 // pred_region
          %p491 = scmp.lt.s32.totalorder %s39, 1
          %s492 = scalar_select %p491, %s39, 1
          %s493 = scalar_lea.vmem %s8, %s492
        $region52: #{tpu_custom_call.1} parent=15 // pred_fallthru
          _
      $region16: #{tpu_custom_call.1} parent=5 // pred_fallthru
        _
      %p494 = scmp.le.s32.totalorder 1, %s32
      %p495 = scmp.lt.s32.totalorder %s32, 3
      %p496 = pnand %p494, %p495
      %p497 = pneg %p496
      // Predicated region
      $region53: #{tpu_custom_call.1} parent=5 // pred_check
        _
      $region54: #{tpu_custom_call.1} parent=5 // pred_check_branch
        %499 = sbr.rel (%p496) target = $region56
      $region55: #{tpu_custom_call.1} parent=5 // pred_region
        %s500 = ssub.s32 %s32, 1
        %s501 = sand.u32 %s59, 1
        %s502 = scalar_lea.sflag [#allocation4], %s501
        %s503 = sand.u32 %s59, 1
        %s504 = smul.addr %s503, 512
        %s505 = scalar_lea.vmem [#allocation3], %s504
        // Predicated region
        $region57: #{tpu_custom_call.1} parent=55 // pred_check
          %p506 = pneg %p72
        $region58: #{tpu_custom_call.1} parent=55 // pred_check_branch
          %508 = sbr.rel (%p506) target = $region60
        $region59: #{tpu_custom_call.1} parent=55 // pred_region
          %509 = dma.done %s502, 8192
        $region60: #{tpu_custom_call.1} parent=55 // pred_fallthru
          _
        %s510 = sand.u32 %s37, 1
        %s511 = scalar_lea.sflag [#allocation7], %s510
        %s512 = sand.u32 %s87, 1
        %s513 = smul.addr %s512, 512
        %s514 = scalar_lea.vmem [#allocation6], %s513
        // Predicated region
        $region61: #{tpu_custom_call.1} parent=55 // pred_check
          %p515 = pneg %p100
        $region62: #{tpu_custom_call.1} parent=55 // pred_check_branch
          %517 = sbr.rel (%p515) target = $region64
        $region63: #{tpu_custom_call.1} parent=55 // pred_region
          %518 = dma.done %s511, 8192
        $region64: #{tpu_custom_call.1} parent=55 // pred_fallthru
          _
        %s519 = sand.u32 %s37, 1
        %s520 = scalar_lea.sflag [#allocation7], %s519
        %s521 = sand.u32 %s115, 1
        %s522 = smul.addr %s521, 1024
        %s523 = scalar_lea.vmem [#allocation8], %s522
        // Predicated region
        $region65: #{tpu_custom_call.1} parent=55 // pred_check
          %p524 = pneg %p128
        $region66: #{tpu_custom_call.1} parent=55 // pred_check_branch
          %526 = sbr.rel (%p524) target = $region68
        $region67: #{tpu_custom_call.1} parent=55 // pred_region
          %527 = dma.done %s520, 16384
        $region68: #{tpu_custom_call.1} parent=55 // pred_fallthru
          _
        %s528 = sand.u32 %s37, 1
        %s529 = scalar_lea.sflag [#allocation10], %s528
        %s530 = sand.u32 %s141, 1
        %s531 = smul.addr %s530, 192
        %s532 = scalar_lea.vmem [#allocation9], %s531
        // Predicated region
        $region69: #{tpu_custom_call.1} parent=55 // pred_check
          %p533 = pneg %p154
        $region70: #{tpu_custom_call.1} parent=55 // pred_check_branch
          %535 = sbr.rel (%p533) target = $region72
        $region71: #{tpu_custom_call.1} parent=55 // pred_region
          %536 = dma.done %s529, 3072
        $region72: #{tpu_custom_call.1} parent=55 // pred_fallthru
          _
        %s537 = sand.u32 %s37, 1
        %s538 = scalar_lea.sflag [#allocation10], %s537
        %s539 = sand.u32 %s193, 1
        %s540 = smul.addr %s539, 64
        %s541 = scalar_lea.vmem [#allocation11], %s540
        // Predicated region
        $region73: #{tpu_custom_call.1} parent=55 // pred_check
          %p542 = pneg %p206
        $region74: #{tpu_custom_call.1} parent=55 // pred_check_branch
          %544 = sbr.rel (%p542) target = $region76
        $region75: #{tpu_custom_call.1} parent=55 // pred_region
          %545 = dma.done %s538, 1024
        $region76: #{tpu_custom_call.1} parent=55 // pred_fallthru
          _
        %s546 = sand.u32 %s59, 1
        %s547 = scalar_lea.sflag [#allocation4], %s546
        %s548 = sand.u32 %s59, 1
        %s549 = smul.addr %s548, 512
        %s550 = scalar_lea.vmem [#allocation3], %s549
        %p551 = pneg %p72
        %p552 = pneg %p69
        %s553 = sand.u32 %s37, 1
        %s554 = scalar_lea.sflag [#allocation7], %s553
        %s555 = sand.u32 %s87, 1
        %s556 = smul.addr %s555, 512
        %s557 = scalar_lea.vmem [#allocation6], %s556
        %p558 = pneg %p100
        %p559 = pneg %p97
        %s560 = sand.u32 %s37, 1
        %s561 = scalar_lea.sflag [#allocation7], %s560
        %s562 = sand.u32 %s115, 1
        %s563 = smul.addr %s562, 1024
        %s564 = scalar_lea.vmem [#allocation8], %s563
        %p565 = pneg %p128
        %p566 = pneg %p125
        %s567 = sand.u32 %s37, 1
        %s568 = scalar_lea.sflag [#allocation10], %s567
        %s569 = sand.u32 %s141, 1
        %s570 = smul.addr %s569, 192
        %s571 = scalar_lea.vmem [#allocation9], %s570
        %p572 = pneg %p154
        %p573 = pneg %p151
        %p574 = scmp.lt.s32.totalorder %s41, 1
        %s575 = scalar_select %p574, %s41, 1
        %s576 = scalar_lea.vmem %s4, %s575
        %p577 = pneg %p180
        %p578 = pneg %p177
        %s579 = sand.u32 %s37, 1
        %s580 = scalar_lea.sflag [#allocation10], %s579
        %s581 = sand.u32 %s193, 1
        %s582 = smul.addr %s581, 64
        %s583 = scalar_lea.vmem [#allocation11], %s582
        %p584 = pneg %p206
        %p585 = pneg %p203
        %p586 = scmp.lt.s32.totalorder %s41, 1
        %s587 = scalar_select %p586, %s41, 1
        %s588 = scalar_lea.vmem %s6, %s587
        %p589 = pneg %p232
        %p590 = pneg %p229
        %p591 = scmp.lt.s32.totalorder %s41, 1
        %s592 = scalar_select %p591, %s41, 1
        %s593 = scalar_lea.vmem %s7, %s592
        %p594 = pneg %p258
        %p595 = pneg %p255
        %p596 = scmp.lt.s32.totalorder %s41, 1
        %s597 = scalar_select %p596, %s41, 1
        %s598 = scalar_lea.vmem %s8, %s597
        %p599 = pneg %p284
        %p600 = pneg %p281
        %p601 = pneg %p312
        %p602 = pneg %p309
        %s603 = sand.u32 %s299, 1
        %s604 = scalar_lea.sflag [#allocation5], %s603
        %s605 = sand.u32 %s299, 1
        %s606 = smul.addr %s605, 512
        %s607 = scalar_lea.vmem [#allocation12], %s606
        %p608 = pneg %p340
        %p609 = pneg %p337
        %s610 = sand.u32 %s327, 1
        %s611 = scalar_lea.sflag [#allocation14], %s610
        %s612 = sand.u32 %s327, 1
        %s613 = smul.addr %s612, 1024
        %s614 = scalar_lea.vmem [#allocation13], %s613
        %s615 = smul.u32 128, %s42
        %s616 = smul.u32 128, %s42
        %s617 = smul.u32 128, %s42
        %p618 = scmp.lt.s32.totalorder %s41, 1
        %s619 = scalar_select %p618, %s41, 1
        %s620 = scalar_lea.vmem %s4, %s619
        %p621 = scmp.lt.s32.totalorder %s41, 1
        %s622 = scalar_select %p621, %s41, 1
        %s623 = scalar_lea.vmem %s6, %s622
        %p624 = scmp.lt.s32.totalorder %s41, 1
        %s625 = scalar_select %p624, %s41, 1
        %s626 = scalar_lea.vmem %s7, %s625
        %p627 = scmp.lt.s32.totalorder %s41, 1
        %s628 = scalar_select %p627, %s41, 1
        %s629 = scalar_lea.vmem %s8, %s628
        %s630 = smul.u32 128, %s42
        %s631 = smul.u32 128, %s42
        %v633 = vld [vmem:[%s523] sm:$0xff]
        %v634 = vld [vmem:[%s523 + $0x8] sm:$0xff]
        %v635 = vld [vmem:[%s523 + $0x10] sm:$0xff]
        %v636 = vld [vmem:[%s523 + $0x18] sm:$0xff]
        %v637 = vld [vmem:[%s523 + $0x20] sm:$0xff]
        %v638 = vld [vmem:[%s523 + $0x28] sm:$0xff]
        %v639 = vld [vmem:[%s523 + $0x30] sm:$0xff]
        %v640 = vld [vmem:[%s523 + $0x38] sm:$0xff]
        %v641 = vld [vmem:[%s523 + $0x40] sm:$0xff]
        %v642 = vld [vmem:[%s523 + $0x48] sm:$0xff]
        %v643 = vld [vmem:[%s523 + $0x50] sm:$0xff]
        %v644 = vld [vmem:[%s523 + $0x58] sm:$0xff]
        %v645 = vld [vmem:[%s523 + $0x60] sm:$0xff]
        %v646 = vld [vmem:[%s523 + $0x68] sm:$0xff]
        %v647 = vld [vmem:[%s523 + $0x70] sm:$0xff]
        %v648 = vld [vmem:[%s523 + $0x78] sm:$0xff]
        %v649 = vld [vmem:[%s523 + $0x80] sm:$0xff]
        %v650 = vld [vmem:[%s523 + $0x88] sm:$0xff]
        %v651 = vld [vmem:[%s523 + $0x90] sm:$0xff]
        %v652 = vld [vmem:[%s523 + $0x98] sm:$0xff]
        %v653 = vld [vmem:[%s523 + $0xa0] sm:$0xff]
        %v654 = vld [vmem:[%s523 + $0xa8] sm:$0xff]
        %v655 = vld [vmem:[%s523 + $0xb0] sm:$0xff]
        %v656 = vld [vmem:[%s523 + $0xb8] sm:$0xff]
        %v657 = vld [vmem:[%s523 + $0xc0] sm:$0xff]
        %v658 = vld [vmem:[%s523 + $0xc8] sm:$0xff]
        %v659 = vld [vmem:[%s523 + $0xd0] sm:$0xff]
        %v660 = vld [vmem:[%s523 + $0xd8] sm:$0xff]
        %v661 = vld [vmem:[%s523 + $0xe0] sm:$0xff]
        %v662 = vld [vmem:[%s523 + $0xe8] sm:$0xff]
        %v663 = vld [vmem:[%s523 + $0xf0] sm:$0xff]
        %v664 = vld [vmem:[%s523 + $0xf8] sm:$0xff]
        %v665 = vld [vmem:[%s523 + $0x100] sm:$0xff]
        %v666 = vld [vmem:[%s523 + $0x108] sm:$0xff]
        %v667 = vld [vmem:[%s523 + $0x110] sm:$0xff]
        %v668 = vld [vmem:[%s523 + $0x118] sm:$0xff]
        %v669 = vld [vmem:[%s523 + $0x120] sm:$0xff]
        %v670 = vld [vmem:[%s523 + $0x128] sm:$0xff]
        %v671 = vld [vmem:[%s523 + $0x130] sm:$0xff]
        %v672 = vld [vmem:[%s523 + $0x138] sm:$0xff]
        %v673 = vld [vmem:[%s523 + $0x140] sm:$0xff]
        %v674 = vld [vmem:[%s523 + $0x148] sm:$0xff]
        %v675 = vld [vmem:[%s523 + $0x150] sm:$0xff]
        %v676 = vld [vmem:[%s523 + $0x158] sm:$0xff]
        %v677 = vld [vmem:[%s523 + $0x160] sm:$0xff]
        %v678 = vld [vmem:[%s523 + $0x168] sm:$0xff]
        %v679 = vld [vmem:[%s523 + $0x170] sm:$0xff]
        %v680 = vld [vmem:[%s523 + $0x178] sm:$0xff]
        %v681 = vld [vmem:[%s523 + $0x180] sm:$0xff]
        %v682 = vld [vmem:[%s523 + $0x188] sm:$0xff]
        %v683 = vld [vmem:[%s523 + $0x190] sm:$0xff]
        %v684 = vld [vmem:[%s523 + $0x198] sm:$0xff]
        %v685 = vld [vmem:[%s523 + $0x1a0] sm:$0xff]
        %v686 = vld [vmem:[%s523 + $0x1a8] sm:$0xff]
        %v687 = vld [vmem:[%s523 + $0x1b0] sm:$0xff]
        %v688 = vld [vmem:[%s523 + $0x1b8] sm:$0xff]
        %v689 = vld [vmem:[%s523 + $0x1c0] sm:$0xff]
        %v690 = vld [vmem:[%s523 + $0x1c8] sm:$0xff]
        %v691 = vld [vmem:[%s523 + $0x1d0] sm:$0xff]
        %v692 = vld [vmem:[%s523 + $0x1d8] sm:$0xff]
        %v693 = vld [vmem:[%s523 + $0x1e0] sm:$0xff]
        %v694 = vld [vmem:[%s523 + $0x1e8] sm:$0xff]
        %v695 = vld [vmem:[%s523 + $0x1f0] sm:$0xff]
        %v696 = vld [vmem:[%s523 + $0x1f8] sm:$0xff]
        %v697 = vld [vmem:[%s523 + $0x200] sm:$0xff]
        %v698 = vld [vmem:[%s523 + $0x208] sm:$0xff]
        %v699 = vld [vmem:[%s523 + $0x210] sm:$0xff]
        %v700 = vld [vmem:[%s523 + $0x218] sm:$0xff]
        %v701 = vld [vmem:[%s523 + $0x220] sm:$0xff]
        %v702 = vld [vmem:[%s523 + $0x228] sm:$0xff]
        %v703 = vld [vmem:[%s523 + $0x230] sm:$0xff]
        %v704 = vld [vmem:[%s523 + $0x238] sm:$0xff]
        %v705 = vld [vmem:[%s523 + $0x240] sm:$0xff]
        %v706 = vld [vmem:[%s523 + $0x248] sm:$0xff]
        %v707 = vld [vmem:[%s523 + $0x250] sm:$0xff]
        %v708 = vld [vmem:[%s523 + $0x258] sm:$0xff]
        %v709 = vld [vmem:[%s523 + $0x260] sm:$0xff]
        %v710 = vld [vmem:[%s523 + $0x268] sm:$0xff]
        %v711 = vld [vmem:[%s523 + $0x270] sm:$0xff]
        %v712 = vld [vmem:[%s523 + $0x278] sm:$0xff]
        %v713 = vld [vmem:[%s523 + $0x280] sm:$0xff]
        %v714 = vld [vmem:[%s523 + $0x288] sm:$0xff]
        %v715 = vld [vmem:[%s523 + $0x290] sm:$0xff]
        %v716 = vld [vmem:[%s523 + $0x298] sm:$0xff]
        %v717 = vld [vmem:[%s523 + $0x2a0] sm:$0xff]
        %v718 = vld [vmem:[%s523 + $0x2a8] sm:$0xff]
        %v719 = vld [vmem:[%s523 + $0x2b0] sm:$0xff]
        %v720 = vld [vmem:[%s523 + $0x2b8] sm:$0xff]
        %v721 = vld [vmem:[%s523 + $0x2c0] sm:$0xff]
        %v722 = vld [vmem:[%s523 + $0x2c8] sm:$0xff]
        %v723 = vld [vmem:[%s523 + $0x2d0] sm:$0xff]
        %v724 = vld [vmem:[%s523 + $0x2d8] sm:$0xff]
        %v725 = vld [vmem:[%s523 + $0x2e0] sm:$0xff]
        %v726 = vld [vmem:[%s523 + $0x2e8] sm:$0xff]
        %v727 = vld [vmem:[%s523 + $0x2f0] sm:$0xff]
        %v728 = vld [vmem:[%s523 + $0x2f8] sm:$0xff]
        %v729 = vld [vmem:[%s523 + $0x300] sm:$0xff]
        %v730 = vld [vmem:[%s523 + $0x308] sm:$0xff]
        %v731 = vld [vmem:[%s523 + $0x310] sm:$0xff]
        %v732 = vld [vmem:[%s523 + $0x318] sm:$0xff]
        %v733 = vld [vmem:[%s523 + $0x320] sm:$0xff]
        %v734 = vld [vmem:[%s523 + $0x328] sm:$0xff]
        %v735 = vld [vmem:[%s523 + $0x330] sm:$0xff]
        %v736 = vld [vmem:[%s523 + $0x338] sm:$0xff]
        %v737 = vld [vmem:[%s523 + $0x340] sm:$0xff]
        %v738 = vld [vmem:[%s523 + $0x348] sm:$0xff]
        %v739 = vld [vmem:[%s523 + $0x350] sm:$0xff]
        %v740 = vld [vmem:[%s523 + $0x358] sm:$0xff]
        %v741 = vld [vmem:[%s523 + $0x360] sm:$0xff]
        %v742 = vld [vmem:[%s523 + $0x368] sm:$0xff]
        %v743 = vld [vmem:[%s523 + $0x370] sm:$0xff]
        %v744 = vld [vmem:[%s523 + $0x378] sm:$0xff]
        %v745 = vld [vmem:[%s523 + $0x380] sm:$0xff]
        %v746 = vld [vmem:[%s523 + $0x388] sm:$0xff]
        %v747 = vld [vmem:[%s523 + $0x390] sm:$0xff]
        %v748 = vld [vmem:[%s523 + $0x398] sm:$0xff]
        %v749 = vld [vmem:[%s523 + $0x3a0] sm:$0xff]
        %v750 = vld [vmem:[%s523 + $0x3a8] sm:$0xff]
        %v751 = vld [vmem:[%s523 + $0x3b0] sm:$0xff]
        %v752 = vld [vmem:[%s523 + $0x3b8] sm:$0xff]
        %v753 = vld [vmem:[%s523 + $0x3c0] sm:$0xff]
        %v754 = vld [vmem:[%s523 + $0x3c8] sm:$0xff]
        %v755 = vld [vmem:[%s523 + $0x3d0] sm:$0xff]
        %v756 = vld [vmem:[%s523 + $0x3d8] sm:$0xff]
        %v757 = vld [vmem:[%s523 + $0x3e0] sm:$0xff]
        %v758 = vld [vmem:[%s523 + $0x3e8] sm:$0xff]
        %v759 = vld [vmem:[%s523 + $0x3f0] sm:$0xff]
        %v760 = vld [vmem:[%s523 + $0x3f8] sm:$0xff]
        %v761 = vld [vmem:[%s505] sm:$0xf]
        %v762 = vld [vmem:[%s505 + $0x4] sm:$0xf]
        %v763 = vld [vmem:[%s505 + $0x8] sm:$0xf]
        %v764 = vld [vmem:[%s505 + $0xc] sm:$0xf]
        %v765 = vld [vmem:[%s505 + $0x10] sm:$0xf]
        %v766 = vld [vmem:[%s505 + $0x14] sm:$0xf]
        %v767 = vld [vmem:[%s505 + $0x18] sm:$0xf]
        %v768 = vld [vmem:[%s505 + $0x1c] sm:$0xf]
        %v769 = vld [vmem:[%s505 + $0x20] sm:$0xf]
        %v770 = vld [vmem:[%s505 + $0x24] sm:$0xf]
        %v771 = vld [vmem:[%s505 + $0x28] sm:$0xf]
        %v772 = vld [vmem:[%s505 + $0x2c] sm:$0xf]
        %v773 = vld [vmem:[%s505 + $0x30] sm:$0xf]
        %v774 = vld [vmem:[%s505 + $0x34] sm:$0xf]
        %v775 = vld [vmem:[%s505 + $0x38] sm:$0xf]
        %v776 = vld [vmem:[%s505 + $0x3c] sm:$0xf]
        %v777 = vld [vmem:[%s505 + $0x40] sm:$0xf]
        %v778 = vld [vmem:[%s505 + $0x44] sm:$0xf]
        %v779 = vld [vmem:[%s505 + $0x48] sm:$0xf]
        %v780 = vld [vmem:[%s505 + $0x4c] sm:$0xf]
        %v781 = vld [vmem:[%s505 + $0x50] sm:$0xf]
        %v782 = vld [vmem:[%s505 + $0x54] sm:$0xf]
        %v783 = vld [vmem:[%s505 + $0x58] sm:$0xf]
        %v784 = vld [vmem:[%s505 + $0x5c] sm:$0xf]
        %v785 = vld [vmem:[%s505 + $0x60] sm:$0xf]
        %v786 = vld [vmem:[%s505 + $0x64] sm:$0xf]
        %v787 = vld [vmem:[%s505 + $0x68] sm:$0xf]
        %v788 = vld [vmem:[%s505 + $0x6c] sm:$0xf]
        %v789 = vld [vmem:[%s505 + $0x70] sm:$0xf]
        %v790 = vld [vmem:[%s505 + $0x74] sm:$0xf]
        %v791 = vld [vmem:[%s505 + $0x78] sm:$0xf]
        %v792 = vld [vmem:[%s505 + $0x7c] sm:$0xf]
        %v793 = vld [vmem:[%s505 + $0x80] sm:$0xf]
        %v794 = vld [vmem:[%s505 + $0x84] sm:$0xf]
        %v795 = vld [vmem:[%s505 + $0x88] sm:$0xf]
        %v796 = vld [vmem:[%s505 + $0x8c] sm:$0xf]
        %v797 = vld [vmem:[%s505 + $0x90] sm:$0xf]
        %v798 = vld [vmem:[%s505 + $0x94] sm:$0xf]
        %v799 = vld [vmem:[%s505 + $0x98] sm:$0xf]
        %v800 = vld [vmem:[%s505 + $0x9c] sm:$0xf]
        %v801 = vld [vmem:[%s505 + $0xa0] sm:$0xf]
        %v802 = vld [vmem:[%s505 + $0xa4] sm:$0xf]
        %v803 = vld [vmem:[%s505 + $0xa8] sm:$0xf]
        %v804 = vld [vmem:[%s505 + $0xac] sm:$0xf]
        %v805 = vld [vmem:[%s505 + $0xb0] sm:$0xf]
        %v806 = vld [vmem:[%s505 + $0xb4] sm:$0xf]
        %v807 = vld [vmem:[%s505 + $0xb8] sm:$0xf]
        %v808 = vld [vmem:[%s505 + $0xbc] sm:$0xf]
        %v809 = vld [vmem:[%s505 + $0xc0] sm:$0xf]
        %v810 = vld [vmem:[%s505 + $0xc4] sm:$0xf]
        %v811 = vld [vmem:[%s505 + $0xc8] sm:$0xf]
        %v812 = vld [vmem:[%s505 + $0xcc] sm:$0xf]
        %v813 = vld [vmem:[%s505 + $0xd0] sm:$0xf]
        %v814 = vld [vmem:[%s505 + $0xd4] sm:$0xf]
        %v815 = vld [vmem:[%s505 + $0xd8] sm:$0xf]
        %v816 = vld [vmem:[%s505 + $0xdc] sm:$0xf]
        %v817 = vld [vmem:[%s505 + $0xe0] sm:$0xf]
        %v818 = vld [vmem:[%s505 + $0xe4] sm:$0xf]
        %v819 = vld [vmem:[%s505 + $0xe8] sm:$0xf]
        %v820 = vld [vmem:[%s505 + $0xec] sm:$0xf]
        %v821 = vld [vmem:[%s505 + $0xf0] sm:$0xf]
        %v822 = vld [vmem:[%s505 + $0xf4] sm:$0xf]
        %v823 = vld [vmem:[%s505 + $0xf8] sm:$0xf]
        %v824 = vld [vmem:[%s505 + $0xfc] sm:$0xf]
        %v825 = vld [vmem:[%s505 + $0x100] sm:$0xf]
        %v826 = vld [vmem:[%s505 + $0x104] sm:$0xf]
        %v827 = vld [vmem:[%s505 + $0x108] sm:$0xf]
        %v828 = vld [vmem:[%s505 + $0x10c] sm:$0xf]
        %v829 = vld [vmem:[%s505 + $0x110] sm:$0xf]
        %v830 = vld [vmem:[%s505 + $0x114] sm:$0xf]
        %v831 = vld [vmem:[%s505 + $0x118] sm:$0xf]
        %v832 = vld [vmem:[%s505 + $0x11c] sm:$0xf]
        %v833 = vld [vmem:[%s505 + $0x120] sm:$0xf]
        %v834 = vld [vmem:[%s505 + $0x124] sm:$0xf]
        %v835 = vld [vmem:[%s505 + $0x128] sm:$0xf]
        %v836 = vld [vmem:[%s505 + $0x12c] sm:$0xf]
        %v837 = vld [vmem:[%s505 + $0x130] sm:$0xf]
        %v838 = vld [vmem:[%s505 + $0x134] sm:$0xf]
        %v839 = vld [vmem:[%s505 + $0x138] sm:$0xf]
        %v840 = vld [vmem:[%s505 + $0x13c] sm:$0xf]
        %v841 = vld [vmem:[%s505 + $0x140] sm:$0xf]
        %v842 = vld [vmem:[%s505 + $0x144] sm:$0xf]
        %v843 = vld [vmem:[%s505 + $0x148] sm:$0xf]
        %v844 = vld [vmem:[%s505 + $0x14c] sm:$0xf]
        %v845 = vld [vmem:[%s505 + $0x150] sm:$0xf]
        %v846 = vld [vmem:[%s505 + $0x154] sm:$0xf]
        %v847 = vld [vmem:[%s505 + $0x158] sm:$0xf]
        %v848 = vld [vmem:[%s505 + $0x15c] sm:$0xf]
        %v849 = vld [vmem:[%s505 + $0x160] sm:$0xf]
        %v850 = vld [vmem:[%s505 + $0x164] sm:$0xf]
        %v851 = vld [vmem:[%s505 + $0x168] sm:$0xf]
        %v852 = vld [vmem:[%s505 + $0x16c] sm:$0xf]
        %v853 = vld [vmem:[%s505 + $0x170] sm:$0xf]
        %v854 = vld [vmem:[%s505 + $0x174] sm:$0xf]
        %v855 = vld [vmem:[%s505 + $0x178] sm:$0xf]
        %v856 = vld [vmem:[%s505 + $0x17c] sm:$0xf]
        %v857 = vld [vmem:[%s505 + $0x180] sm:$0xf]
        %v858 = vld [vmem:[%s505 + $0x184] sm:$0xf]
        %v859 = vld [vmem:[%s505 + $0x188] sm:$0xf]
        %v860 = vld [vmem:[%s505 + $0x18c] sm:$0xf]
        %v861 = vld [vmem:[%s505 + $0x190] sm:$0xf]
        %v862 = vld [vmem:[%s505 + $0x194] sm:$0xf]
        %v863 = vld [vmem:[%s505 + $0x198] sm:$0xf]
        %v864 = vld [vmem:[%s505 + $0x19c] sm:$0xf]
        %v865 = vld [vmem:[%s505 + $0x1a0] sm:$0xf]
        %v866 = vld [vmem:[%s505 + $0x1a4] sm:$0xf]
        %v867 = vld [vmem:[%s505 + $0x1a8] sm:$0xf]
        %v868 = vld [vmem:[%s505 + $0x1ac] sm:$0xf]
        %v869 = vld [vmem:[%s505 + $0x1b0] sm:$0xf]
        %v870 = vld [vmem:[%s505 + $0x1b4] sm:$0xf]
        %v871 = vld [vmem:[%s505 + $0x1b8] sm:$0xf]
        %v872 = vld [vmem:[%s505 + $0x1bc] sm:$0xf]
        %v873 = vld [vmem:[%s505 + $0x1c0] sm:$0xf]
        %v874 = vld [vmem:[%s505 + $0x1c4] sm:$0xf]
        %v875 = vld [vmem:[%s505 + $0x1c8] sm:$0xf]
        %v876 = vld [vmem:[%s505 + $0x1cc] sm:$0xf]
        %v877 = vld [vmem:[%s505 + $0x1d0] sm:$0xf]
        %v878 = vld [vmem:[%s505 + $0x1d4] sm:$0xf]
        %v879 = vld [vmem:[%s505 + $0x1d8] sm:$0xf]
        %v880 = vld [vmem:[%s505 + $0x1dc] sm:$0xf]
        %v881 = vld [vmem:[%s505 + $0x1e0] sm:$0xf]
        %v882 = vld [vmem:[%s505 + $0x1e4] sm:$0xf]
        %v883 = vld [vmem:[%s505 + $0x1e8] sm:$0xf]
        %v884 = vld [vmem:[%s505 + $0x1ec] sm:$0xf]
        %v885 = vld [vmem:[%s505 + $0x1f0] sm:$0xf]
        %v886 = vld [vmem:[%s505 + $0x1f4] sm:$0xf]
        %v887 = vld [vmem:[%s505 + $0x1f8] sm:$0xf]
        %v888 = vld [vmem:[%s505 + $0x1fc] sm:$0xf]
        %889 = vst [vmem:[#allocation2] sm:$0xf] %v761
        %890 = vst [vmem:[#allocation2 + $0xc] sm:$0xf] %v762
        %891 = vst [vmem:[#allocation2 + $0x18] sm:$0xf] %v763
        %892 = vst [vmem:[#allocation2 + $0x24] sm:$0xf] %v764
        %893 = vst [vmem:[#allocation2 + $0x30] sm:$0xf] %v765
        %894 = vst [vmem:[#allocation2 + $0x3c] sm:$0xf] %v766
        %895 = vst [vmem:[#allocation2 + $0x48] sm:$0xf] %v767
        %896 = vst [vmem:[#allocation2 + $0x54] sm:$0xf] %v768
        %897 = vst [vmem:[#allocation2 + $0x60] sm:$0xf] %v769
        %898 = vst [vmem:[#allocation2 + $0x6c] sm:$0xf] %v770
        %899 = vst [vmem:[#allocation2 + $0x78] sm:$0xf] %v771
        %900 = vst [vmem:[#allocation2 + $0x84] sm:$0xf] %v772
        %901 = vst [vmem:[#allocation2 + $0x90] sm:$0xf] %v773
        %902 = vst [vmem:[#allocation2 + $0x9c] sm:$0xf] %v774
        %903 = vst [vmem:[#allocation2 + $0xa8] sm:$0xf] %v775
        %904 = vst [vmem:[#allocation2 + $0xb4] sm:$0xf] %v776
        %905 = vst [vmem:[#allocation2 + $0xc0] sm:$0xf] %v777
        %906 = vst [vmem:[#allocation2 + $0xcc] sm:$0xf] %v778
        %907 = vst [vmem:[#allocation2 + $0xd8] sm:$0xf] %v779
        %908 = vst [vmem:[#allocation2 + $0xe4] sm:$0xf] %v780
        %909 = vst [vmem:[#allocation2 + $0xf0] sm:$0xf] %v781
        %910 = vst [vmem:[#allocation2 + $0xfc] sm:$0xf] %v782
        %911 = vst [vmem:[#allocation2 + $0x108] sm:$0xf] %v783
        %912 = vst [vmem:[#allocation2 + $0x114] sm:$0xf] %v784
        %913 = vst [vmem:[#allocation2 + $0x120] sm:$0xf] %v785
        %914 = vst [vmem:[#allocation2 + $0x12c] sm:$0xf] %v786
        %915 = vst [vmem:[#allocation2 + $0x138] sm:$0xf] %v787
        %916 = vst [vmem:[#allocation2 + $0x144] sm:$0xf] %v788
        %917 = vst [vmem:[#allocation2 + $0x150] sm:$0xf] %v789
        %918 = vst [vmem:[#allocation2 + $0x15c] sm:$0xf] %v790
        %919 = vst [vmem:[#allocation2 + $0x168] sm:$0xf] %v791
        %920 = vst [vmem:[#allocation2 + $0x174] sm:$0xf] %v792
        %921 = vst [vmem:[#allocation2 + $0x180] sm:$0xf] %v793
        %922 = vst [vmem:[#allocation2 + $0x18c] sm:$0xf] %v794
        %923 = vst [vmem:[#allocation2 + $0x198] sm:$0xf] %v795
        %924 = vst [vmem:[#allocation2 + $0x1a4] sm:$0xf] %v796
        %925 = vst [vmem:[#allocation2 + $0x1b0] sm:$0xf] %v797
        %926 = vst [vmem:[#allocation2 + $0x1bc] sm:$0xf] %v798
        %927 = vst [vmem:[#allocation2 + $0x1c8] sm:$0xf] %v799
        %928 = vst [vmem:[#allocation2 + $0x1d4] sm:$0xf] %v800
        %929 = vst [vmem:[#allocation2 + $0x1e0] sm:$0xf] %v801
        %930 = vst [vmem:[#allocation2 + $0x1ec] sm:$0xf] %v802
        %931 = vst [vmem:[#allocation2 + $0x1f8] sm:$0xf] %v803
        %932 = vst [vmem:[#allocation2 + $0x204] sm:$0xf] %v804
        %933 = vst [vmem:[#allocation2 + $0x210] sm:$0xf] %v805
        %934 = vst [vmem:[#allocation2 + $0x21c] sm:$0xf] %v806
        %935 = vst [vmem:[#allocation2 + $0x228] sm:$0xf] %v807
        %936 = vst [vmem:[#allocation2 + $0x234] sm:$0xf] %v808
        %937 = vst [vmem:[#allocation2 + $0x240] sm:$0xf] %v809
        %938 = vst [vmem:[#allocation2 + $0x24c] sm:$0xf] %v810
        %939 = vst [vmem:[#allocation2 + $0x258] sm:$0xf] %v811
        %940 = vst [vmem:[#allocation2 + $0x264] sm:$0xf] %v812
        %941 = vst [vmem:[#allocation2 + $0x270] sm:$0xf] %v813
        %942 = vst [vmem:[#allocation2 + $0x27c] sm:$0xf] %v814
        %943 = vst [vmem:[#allocation2 + $0x288] sm:$0xf] %v815
        %944 = vst [vmem:[#allocation2 + $0x294] sm:$0xf] %v816
        %945 = vst [vmem:[#allocation2 + $0x2a0] sm:$0xf] %v817
        %946 = vst [vmem:[#allocation2 + $0x2ac] sm:$0xf] %v818
        %947 = vst [vmem:[#allocation2 + $0x2b8] sm:$0xf] %v819
        %948 = vst [vmem:[#allocation2 + $0x2c4] sm:$0xf] %v820
        %949 = vst [vmem:[#allocation2 + $0x2d0] sm:$0xf] %v821
        %950 = vst [vmem:[#allocation2 + $0x2dc] sm:$0xf] %v822
        %951 = vst [vmem:[#allocation2 + $0x2e8] sm:$0xf] %v823
        %952 = vst [vmem:[#allocation2 + $0x2f4] sm:$0xf] %v824
        %953 = vst [vmem:[#allocation2 + $0x300] sm:$0xf] %v825
        %954 = vst [vmem:[#allocation2 + $0x30c] sm:$0xf] %v826
        %955 = vst [vmem:[#allocation2 + $0x318] sm:$0xf] %v827
        %956 = vst [vmem:[#allocation2 + $0x324] sm:$0xf] %v828
        %957 = vst [vmem:[#allocation2 + $0x330] sm:$0xf] %v829
        %958 = vst [vmem:[#allocation2 + $0x33c] sm:$0xf] %v830
        %959 = vst [vmem:[#allocation2 + $0x348] sm:$0xf] %v831
        %960 = vst [vmem:[#allocation2 + $0x354] sm:$0xf] %v832
        %961 = vst [vmem:[#allocation2 + $0x360] sm:$0xf] %v833
        %962 = vst [vmem:[#allocation2 + $0x36c] sm:$0xf] %v834
        %963 = vst [vmem:[#allocation2 + $0x378] sm:$0xf] %v835
        %964 = vst [vmem:[#allocation2 + $0x384] sm:$0xf] %v836
        %965 = vst [vmem:[#allocation2 + $0x390] sm:$0xf] %v837
        %966 = vst [vmem:[#allocation2 + $0x39c] sm:$0xf] %v838
        %967 = vst [vmem:[#allocation2 + $0x3a8] sm:$0xf] %v839
        %968 = vst [vmem:[#allocation2 + $0x3b4] sm:$0xf] %v840
        %969 = vst [vmem:[#allocation2 + $0x3c0] sm:$0xf] %v841
        %970 = vst [vmem:[#allocation2 + $0x3cc] sm:$0xf] %v842
        %971 = vst [vmem:[#allocation2 + $0x3d8] sm:$0xf] %v843
        %972 = vst [vmem:[#allocation2 + $0x3e4] sm:$0xf] %v844
        %973 = vst [vmem:[#allocation2 + $0x3f0] sm:$0xf] %v845
        %974 = vst [vmem:[#allocation2 + $0x3fc] sm:$0xf] %v846
        %975 = vst [vmem:[#allocation2 + $0x408] sm:$0xf] %v847
        %976 = vst [vmem:[#allocation2 + $0x414] sm:$0xf] %v848
        %977 = vst [vmem:[#allocation2 + $0x420] sm:$0xf] %v849
        %978 = vst [vmem:[#allocation2 + $0x42c] sm:$0xf] %v850
        %979 = vst [vmem:[#allocation2 + $0x438] sm:$0xf] %v851
        %980 = vst [vmem:[#allocation2 + $0x444] sm:$0xf] %v852
        %981 = vst [vmem:[#allocation2 + $0x450] sm:$0xf] %v853
        %982 = vst [vmem:[#allocation2 + $0x45c] sm:$0xf] %v854
        %983 = vst [vmem:[#allocation2 + $0x468] sm:$0xf] %v855
        %984 = vst [vmem:[#allocation2 + $0x474] sm:$0xf] %v856
        %985 = vst [vmem:[#allocation2 + $0x480] sm:$0xf] %v857
        %986 = vst [vmem:[#allocation2 + $0x48c] sm:$0xf] %v858
        %987 = vst [vmem:[#allocation2 + $0x498] sm:$0xf] %v859
        %988 = vst [vmem:[#allocation2 + $0x4a4] sm:$0xf] %v860
        %989 = vst [vmem:[#allocation2 + $0x4b0] sm:$0xf] %v861
        %990 = vst [vmem:[#allocation2 + $0x4bc] sm:$0xf] %v862
        %991 = vst [vmem:[#allocation2 + $0x4c8] sm:$0xf] %v863
        %992 = vst [vmem:[#allocation2 + $0x4d4] sm:$0xf] %v864
        %993 = vst [vmem:[#allocation2 + $0x4e0] sm:$0xf] %v865
        %994 = vst [vmem:[#allocation2 + $0x4ec] sm:$0xf] %v866
        %995 = vst [vmem:[#allocation2 + $0x4f8] sm:$0xf] %v867
        %996 = vst [vmem:[#allocation2 + $0x504] sm:$0xf] %v868
        %997 = vst [vmem:[#allocation2 + $0x510] sm:$0xf] %v869
        %998 = vst [vmem:[#allocation2 + $0x51c] sm:$0xf] %v870
        %999 = vst [vmem:[#allocation2 + $0x528] sm:$0xf] %v871
        %1000 = vst [vmem:[#allocation2 + $0x534] sm:$0xf] %v872
        %1001 = vst [vmem:[#allocation2 + $0x540] sm:$0xf] %v873
        %1002 = vst [vmem:[#allocation2 + $0x54c] sm:$0xf] %v874
        %1003 = vst [vmem:[#allocation2 + $0x558] sm:$0xf] %v875
        %1004 = vst [vmem:[#allocation2 + $0x564] sm:$0xf] %v876
        %1005 = vst [vmem:[#allocation2 + $0x570] sm:$0xf] %v877
        %1006 = vst [vmem:[#allocation2 + $0x57c] sm:$0xf] %v878
        %1007 = vst [vmem:[#allocation2 + $0x588] sm:$0xf] %v879
        %1008 = vst [vmem:[#allocation2 + $0x594] sm:$0xf] %v880
        %1009 = vst [vmem:[#allocation2 + $0x5a0] sm:$0xf] %v881
        %1010 = vst [vmem:[#allocation2 + $0x5ac] sm:$0xf] %v882
        %1011 = vst [vmem:[#allocation2 + $0x5b8] sm:$0xf] %v883
        %1012 = vst [vmem:[#allocation2 + $0x5c4] sm:$0xf] %v884
        %1013 = vst [vmem:[#allocation2 + $0x5d0] sm:$0xf] %v885
        %1014 = vst [vmem:[#allocation2 + $0x5dc] sm:$0xf] %v886
        %1015 = vst [vmem:[#allocation2 + $0x5e8] sm:$0xf] %v887
        %1016 = vst [vmem:[#allocation2 + $0x5f4] sm:$0xf] %v888
        %v1017 = vld [vmem:[%s514] sm:$0xf]
        %v1018 = vld [vmem:[%s514 + $0x4] sm:$0xf]
        %v1019 = vld [vmem:[%s514 + $0x8] sm:$0xf]
        %v1020 = vld [vmem:[%s514 + $0xc] sm:$0xf]
        %v1021 = vld [vmem:[%s514 + $0x10] sm:$0xf]
        %v1022 = vld [vmem:[%s514 + $0x14] sm:$0xf]
        %v1023 = vld [vmem:[%s514 + $0x18] sm:$0xf]
        %v1024 = vld [vmem:[%s514 + $0x1c] sm:$0xf]
        %v1025 = vld [vmem:[%s514 + $0x20] sm:$0xf]
        %v1026 = vld [vmem:[%s514 + $0x24] sm:$0xf]
        %v1027 = vld [vmem:[%s514 + $0x28] sm:$0xf]
        %v1028 = vld [vmem:[%s514 + $0x2c] sm:$0xf]
        %v1029 = vld [vmem:[%s514 + $0x30] sm:$0xf]
        %v1030 = vld [vmem:[%s514 + $0x34] sm:$0xf]
        %v1031 = vld [vmem:[%s514 + $0x38] sm:$0xf]
        %v1032 = vld [vmem:[%s514 + $0x3c] sm:$0xf]
        %v1033 = vld [vmem:[%s514 + $0x40] sm:$0xf]
        %v1034 = vld [vmem:[%s514 + $0x44] sm:$0xf]
        %v1035 = vld [vmem:[%s514 + $0x48] sm:$0xf]
        %v1036 = vld [vmem:[%s514 + $0x4c] sm:$0xf]
        %v1037 = vld [vmem:[%s514 + $0x50] sm:$0xf]
        %v1038 = vld [vmem:[%s514 + $0x54] sm:$0xf]
        %v1039 = vld [vmem:[%s514 + $0x58] sm:$0xf]
        %v1040 = vld [vmem:[%s514 + $0x5c] sm:$0xf]
        %v1041 = vld [vmem:[%s514 + $0x60] sm:$0xf]
        %v1042 = vld [vmem:[%s514 + $0x64] sm:$0xf]
        %v1043 = vld [vmem:[%s514 + $0x68] sm:$0xf]
        %v1044 = vld [vmem:[%s514 + $0x6c] sm:$0xf]
        %v1045 = vld [vmem:[%s514 + $0x70] sm:$0xf]
        %v1046 = vld [vmem:[%s514 + $0x74] sm:$0xf]
        %v1047 = vld [vmem:[%s514 + $0x78] sm:$0xf]
        %v1048 = vld [vmem:[%s514 + $0x7c] sm:$0xf]
        %v1049 = vld [vmem:[%s514 + $0x80] sm:$0xf]
        %v1050 = vld [vmem:[%s514 + $0x84] sm:$0xf]
        %v1051 = vld [vmem:[%s514 + $0x88] sm:$0xf]
        %v1052 = vld [vmem:[%s514 + $0x8c] sm:$0xf]
        %v1053 = vld [vmem:[%s514 + $0x90] sm:$0xf]
        %v1054 = vld [vmem:[%s514 + $0x94] sm:$0xf]
        %v1055 = vld [vmem:[%s514 + $0x98] sm:$0xf]
        %v1056 = vld [vmem:[%s514 + $0x9c] sm:$0xf]
        %v1057 = vld [vmem:[%s514 + $0xa0] sm:$0xf]
        %v1058 = vld [vmem:[%s514 + $0xa4] sm:$0xf]
        %v1059 = vld [vmem:[%s514 + $0xa8] sm:$0xf]
        %v1060 = vld [vmem:[%s514 + $0xac] sm:$0xf]
        %v1061 = vld [vmem:[%s514 + $0xb0] sm:$0xf]
        %v1062 = vld [vmem:[%s514 + $0xb4] sm:$0xf]
        %v1063 = vld [vmem:[%s514 + $0xb8] sm:$0xf]
        %v1064 = vld [vmem:[%s514 + $0xbc] sm:$0xf]
        %v1065 = vld [vmem:[%s514 + $0xc0] sm:$0xf]
        %v1066 = vld [vmem:[%s514 + $0xc4] sm:$0xf]
        %v1067 = vld [vmem:[%s514 + $0xc8] sm:$0xf]
        %v1068 = vld [vmem:[%s514 + $0xcc] sm:$0xf]
        %v1069 = vld [vmem:[%s514 + $0xd0] sm:$0xf]
        %v1070 = vld [vmem:[%s514 + $0xd4] sm:$0xf]
        %v1071 = vld [vmem:[%s514 + $0xd8] sm:$0xf]
        %v1072 = vld [vmem:[%s514 + $0xdc] sm:$0xf]
        %v1073 = vld [vmem:[%s514 + $0xe0] sm:$0xf]
        %v1074 = vld [vmem:[%s514 + $0xe4] sm:$0xf]
        %v1075 = vld [vmem:[%s514 + $0xe8] sm:$0xf]
        %v1076 = vld [vmem:[%s514 + $0xec] sm:$0xf]
        %v1077 = vld [vmem:[%s514 + $0xf0] sm:$0xf]
        %v1078 = vld [vmem:[%s514 + $0xf4] sm:$0xf]
        %v1079 = vld [vmem:[%s514 + $0xf8] sm:$0xf]
        %v1080 = vld [vmem:[%s514 + $0xfc] sm:$0xf]
        %v1081 = vld [vmem:[%s514 + $0x100] sm:$0xf]
        %v1082 = vld [vmem:[%s514 + $0x104] sm:$0xf]
        %v1083 = vld [vmem:[%s514 + $0x108] sm:$0xf]
        %v1084 = vld [vmem:[%s514 + $0x10c] sm:$0xf]
        %v1085 = vld [vmem:[%s514 + $0x110] sm:$0xf]
        %v1086 = vld [vmem:[%s514 + $0x114] sm:$0xf]
        %v1087 = vld [vmem:[%s514 + $0x118] sm:$0xf]
        %v1088 = vld [vmem:[%s514 + $0x11c] sm:$0xf]
        %v1089 = vld [vmem:[%s514 + $0x120] sm:$0xf]
        %v1090 = vld [vmem:[%s514 + $0x124] sm:$0xf]
        %v1091 = vld [vmem:[%s514 + $0x128] sm:$0xf]
        %v1092 = vld [vmem:[%s514 + $0x12c] sm:$0xf]
        %v1093 = vld [vmem:[%s514 + $0x130] sm:$0xf]
        %v1094 = vld [vmem:[%s514 + $0x134] sm:$0xf]
        %v1095 = vld [vmem:[%s514 + $0x138] sm:$0xf]
        %v1096 = vld [vmem:[%s514 + $0x13c] sm:$0xf]
        %v1097 = vld [vmem:[%s514 + $0x140] sm:$0xf]
        %v1098 = vld [vmem:[%s514 + $0x144] sm:$0xf]
        %v1099 = vld [vmem:[%s514 + $0x148] sm:$0xf]
        %v1100 = vld [vmem:[%s514 + $0x14c] sm:$0xf]
        %v1101 = vld [vmem:[%s514 + $0x150] sm:$0xf]
        %v1102 = vld [vmem:[%s514 + $0x154] sm:$0xf]
        %v1103 = vld [vmem:[%s514 + $0x158] sm:$0xf]
        %v1104 = vld [vmem:[%s514 + $0x15c] sm:$0xf]
        %v1105 = vld [vmem:[%s514 + $0x160] sm:$0xf]
        %v1106 = vld [vmem:[%s514 + $0x164] sm:$0xf]
        %v1107 = vld [vmem:[%s514 + $0x168] sm:$0xf]
        %v1108 = vld [vmem:[%s514 + $0x16c] sm:$0xf]
        %v1109 = vld [vmem:[%s514 + $0x170] sm:$0xf]
        %v1110 = vld [vmem:[%s514 + $0x174] sm:$0xf]
        %v1111 = vld [vmem:[%s514 + $0x178] sm:$0xf]
        %v1112 = vld [vmem:[%s514 + $0x17c] sm:$0xf]
        %v1113 = vld [vmem:[%s514 + $0x180] sm:$0xf]
        %v1114 = vld [vmem:[%s514 + $0x184] sm:$0xf]
        %v1115 = vld [vmem:[%s514 + $0x188] sm:$0xf]
        %v1116 = vld [vmem:[%s514 + $0x18c] sm:$0xf]
        %v1117 = vld [vmem:[%s514 + $0x190] sm:$0xf]
        %v1118 = vld [vmem:[%s514 + $0x194] sm:$0xf]
        %v1119 = vld [vmem:[%s514 + $0x198] sm:$0xf]
        %v1120 = vld [vmem:[%s514 + $0x19c] sm:$0xf]
        %v1121 = vld [vmem:[%s514 + $0x1a0] sm:$0xf]
        %v1122 = vld [vmem:[%s514 + $0x1a4] sm:$0xf]
        %v1123 = vld [vmem:[%s514 + $0x1a8] sm:$0xf]
        %v1124 = vld [vmem:[%s514 + $0x1ac] sm:$0xf]
        %v1125 = vld [vmem:[%s514 + $0x1b0] sm:$0xf]
        %v1126 = vld [vmem:[%s514 + $0x1b4] sm:$0xf]
        %v1127 = vld [vmem:[%s514 + $0x1b8] sm:$0xf]
        %v1128 = vld [vmem:[%s514 + $0x1bc] sm:$0xf]
        %v1129 = vld [vmem:[%s514 + $0x1c0] sm:$0xf]
        %v1130 = vld [vmem:[%s514 + $0x1c4] sm:$0xf]
        %v1131 = vld [vmem:[%s514 + $0x1c8] sm:$0xf]
        %v1132 = vld [vmem:[%s514 + $0x1cc] sm:$0xf]
        %v1133 = vld [vmem:[%s514 + $0x1d0] sm:$0xf]
        %v1134 = vld [vmem:[%s514 + $0x1d4] sm:$0xf]
        %v1135 = vld [vmem:[%s514 + $0x1d8] sm:$0xf]
        %v1136 = vld [vmem:[%s514 + $0x1dc] sm:$0xf]
        %v1137 = vld [vmem:[%s514 + $0x1e0] sm:$0xf]
        %v1138 = vld [vmem:[%s514 + $0x1e4] sm:$0xf]
        %v1139 = vld [vmem:[%s514 + $0x1e8] sm:$0xf]
        %v1140 = vld [vmem:[%s514 + $0x1ec] sm:$0xf]
        %v1141 = vld [vmem:[%s514 + $0x1f0] sm:$0xf]
        %v1142 = vld [vmem:[%s514 + $0x1f4] sm:$0xf]
        %v1143 = vld [vmem:[%s514 + $0x1f8] sm:$0xf]
        %v1144 = vld [vmem:[%s514 + $0x1fc] sm:$0xf]
        %1145 = vst [vmem:[#allocation2 + $0x4] sm:$0xf] %v1017
        %1146 = vst [vmem:[#allocation2 + $0x10] sm:$0xf] %v1018
        %1147 = vst [vmem:[#allocation2 + $0x1c] sm:$0xf] %v1019
        %1148 = vst [vmem:[#allocation2 + $0x28] sm:$0xf] %v1020
        %1149 = vst [vmem:[#allocation2 + $0x34] sm:$0xf] %v1021
        %1150 = vst [vmem:[#allocation2 + $0x40] sm:$0xf] %v1022
        %1151 = vst [vmem:[#allocation2 + $0x4c] sm:$0xf] %v1023
        %1152 = vst [vmem:[#allocation2 + $0x58] sm:$0xf] %v1024
        %1153 = vst [vmem:[#allocation2 + $0x64] sm:$0xf] %v1025
        %1154 = vst [vmem:[#allocation2 + $0x70] sm:$0xf] %v1026
        %1155 = vst [vmem:[#allocation2 + $0x7c] sm:$0xf] %v1027
        %1156 = vst [vmem:[#allocation2 + $0x88] sm:$0xf] %v1028
        %1157 = vst [vmem:[#allocation2 + $0x94] sm:$0xf] %v1029
        %1158 = vst [vmem:[#allocation2 + $0xa0] sm:$0xf] %v1030
        %1159 = vst [vmem:[#allocation2 + $0xac] sm:$0xf] %v1031
        %1160 = vst [vmem:[#allocation2 + $0xb8] sm:$0xf] %v1032
        %1161 = vst [vmem:[#allocation2 + $0xc4] sm:$0xf] %v1033
        %1162 = vst [vmem:[#allocation2 + $0xd0] sm:$0xf] %v1034
        %1163 = vst [vmem:[#allocation2 + $0xdc] sm:$0xf] %v1035
        %1164 = vst [vmem:[#allocation2 + $0xe8] sm:$0xf] %v1036
        %1165 = vst [vmem:[#allocation2 + $0xf4] sm:$0xf] %v1037
        %1166 = vst [vmem:[#allocation2 + $0x100] sm:$0xf] %v1038
        %1167 = vst [vmem:[#allocation2 + $0x10c] sm:$0xf] %v1039
        %1168 = vst [vmem:[#allocation2 + $0x118] sm:$0xf] %v1040
        %1169 = vst [vmem:[#allocation2 + $0x124] sm:$0xf] %v1041
        %1170 = vst [vmem:[#allocation2 + $0x130] sm:$0xf] %v1042
        %1171 = vst [vmem:[#allocation2 + $0x13c] sm:$0xf] %v1043
        %1172 = vst [vmem:[#allocation2 + $0x148] sm:$0xf] %v1044
        %1173 = vst [vmem:[#allocation2 + $0x154] sm:$0xf] %v1045
        %1174 = vst [vmem:[#allocation2 + $0x160] sm:$0xf] %v1046
        %1175 = vst [vmem:[#allocation2 + $0x16c] sm:$0xf] %v1047
        %1176 = vst [vmem:[#allocation2 + $0x178] sm:$0xf] %v1048
        %1177 = vst [vmem:[#allocation2 + $0x184] sm:$0xf] %v1049
        %1178 = vst [vmem:[#allocation2 + $0x190] sm:$0xf] %v1050
        %1179 = vst [vmem:[#allocation2 + $0x19c] sm:$0xf] %v1051
        %1180 = vst [vmem:[#allocation2 + $0x1a8] sm:$0xf] %v1052
        %1181 = vst [vmem:[#allocation2 + $0x1b4] sm:$0xf] %v1053
        %1182 = vst [vmem:[#allocation2 + $0x1c0] sm:$0xf] %v1054
        %1183 = vst [vmem:[#allocation2 + $0x1cc] sm:$0xf] %v1055
        %1184 = vst [vmem:[#allocation2 + $0x1d8] sm:$0xf] %v1056
        %1185 = vst [vmem:[#allocation2 + $0x1e4] sm:$0xf] %v1057
        %1186 = vst [vmem:[#allocation2 + $0x1f0] sm:$0xf] %v1058
        %1187 = vst [vmem:[#allocation2 + $0x1fc] sm:$0xf] %v1059
        %1188 = vst [vmem:[#allocation2 + $0x208] sm:$0xf] %v1060
        %1189 = vst [vmem:[#allocation2 + $0x214] sm:$0xf] %v1061
        %1190 = vst [vmem:[#allocation2 + $0x220] sm:$0xf] %v1062
        %1191 = vst [vmem:[#allocation2 + $0x22c] sm:$0xf] %v1063
        %1192 = vst [vmem:[#allocation2 + $0x238] sm:$0xf] %v1064
        %1193 = vst [vmem:[#allocation2 + $0x244] sm:$0xf] %v1065
        %1194 = vst [vmem:[#allocation2 + $0x250] sm:$0xf] %v1066
        %1195 = vst [vmem:[#allocation2 + $0x25c] sm:$0xf] %v1067
        %1196 = vst [vmem:[#allocation2 + $0x268] sm:$0xf] %v1068
        %1197 = vst [vmem:[#allocation2 + $0x274] sm:$0xf] %v1069
        %1198 = vst [vmem:[#allocation2 + $0x280] sm:$0xf] %v1070
        %1199 = vst [vmem:[#allocation2 + $0x28c] sm:$0xf] %v1071
        %1200 = vst [vmem:[#allocation2 + $0x298] sm:$0xf] %v1072
        %1201 = vst [vmem:[#allocation2 + $0x2a4] sm:$0xf] %v1073
        %1202 = vst [vmem:[#allocation2 + $0x2b0] sm:$0xf] %v1074
        %1203 = vst [vmem:[#allocation2 + $0x2bc] sm:$0xf] %v1075
        %1204 = vst [vmem:[#allocation2 + $0x2c8] sm:$0xf] %v1076
        %1205 = vst [vmem:[#allocation2 + $0x2d4] sm:$0xf] %v1077
        %1206 = vst [vmem:[#allocation2 + $0x2e0] sm:$0xf] %v1078
        %1207 = vst [vmem:[#allocation2 + $0x2ec] sm:$0xf] %v1079
        %1208 = vst [vmem:[#allocation2 + $0x2f8] sm:$0xf] %v1080
        %1209 = vst [vmem:[#allocation2 + $0x304] sm:$0xf] %v1081
        %1210 = vst [vmem:[#allocation2 + $0x310] sm:$0xf] %v1082
        %1211 = vst [vmem:[#allocation2 + $0x31c] sm:$0xf] %v1083
        %1212 = vst [vmem:[#allocation2 + $0x328] sm:$0xf] %v1084
        %1213 = vst [vmem:[#allocation2 + $0x334] sm:$0xf] %v1085
        %1214 = vst [vmem:[#allocation2 + $0x340] sm:$0xf] %v1086
        %1215 = vst [vmem:[#allocation2 + $0x34c] sm:$0xf] %v1087
        %1216 = vst [vmem:[#allocation2 + $0x358] sm:$0xf] %v1088
        %1217 = vst [vmem:[#allocation2 + $0x364] sm:$0xf] %v1089
        %1218 = vst [vmem:[#allocation2 + $0x370] sm:$0xf] %v1090
        %1219 = vst [vmem:[#allocation2 + $0x37c] sm:$0xf] %v1091
        %1220 = vst [vmem:[#allocation2 + $0x388] sm:$0xf] %v1092
        %1221 = vst [vmem:[#allocation2 + $0x394] sm:$0xf] %v1093
        %1222 = vst [vmem:[#allocation2 + $0x3a0] sm:$0xf] %v1094
        %1223 = vst [vmem:[#allocation2 + $0x3ac] sm:$0xf] %v1095
        %1224 = vst [vmem:[#allocation2 + $0x3b8] sm:$0xf] %v1096
        %1225 = vst [vmem:[#allocation2 + $0x3c4] sm:$0xf] %v1097
        %1226 = vst [vmem:[#allocation2 + $0x3d0] sm:$0xf] %v1098
        %1227 = vst [vmem:[#allocation2 + $0x3dc] sm:$0xf] %v1099
        %1228 = vst [vmem:[#allocation2 + $0x3e8] sm:$0xf] %v1100
        %1229 = vst [vmem:[#allocation2 + $0x3f4] sm:$0xf] %v1101
        %1230 = vst [vmem:[#allocation2 + $0x400] sm:$0xf] %v1102
        %1231 = vst [vmem:[#allocation2 + $0x40c] sm:$0xf] %v1103
        %1232 = vst [vmem:[#allocation2 + $0x418] sm:$0xf] %v1104
        %1233 = vst [vmem:[#allocation2 + $0x424] sm:$0xf] %v1105
        %1234 = vst [vmem:[#allocation2 + $0x430] sm:$0xf] %v1106
        %1235 = vst [vmem:[#allocation2 + $0x43c] sm:$0xf] %v1107
        %1236 = vst [vmem:[#allocation2 + $0x448] sm:$0xf] %v1108
        %1237 = vst [vmem:[#allocation2 + $0x454] sm:$0xf] %v1109
        %1238 = vst [vmem:[#allocation2 + $0x460] sm:$0xf] %v1110
        %1239 = vst [vmem:[#allocation2 + $0x46c] sm:$0xf] %v1111
        %1240 = vst [vmem:[#allocation2 + $0x478] sm:$0xf] %v1112
        %1241 = vst [vmem:[#allocation2 + $0x484] sm:$0xf] %v1113
        %1242 = vst [vmem:[#allocation2 + $0x490] sm:$0xf] %v1114
        %1243 = vst [vmem:[#allocation2 + $0x49c] sm:$0xf] %v1115
        %1244 = vst [vmem:[#allocation2 + $0x4a8] sm:$0xf] %v1116
        %1245 = vst [vmem:[#allocation2 + $0x4b4] sm:$0xf] %v1117
        %1246 = vst [vmem:[#allocation2 + $0x4c0] sm:$0xf] %v1118
        %1247 = vst [vmem:[#allocation2 + $0x4cc] sm:$0xf] %v1119
        %1248 = vst [vmem:[#allocation2 + $0x4d8] sm:$0xf] %v1120
        %1249 = vst [vmem:[#allocation2 + $0x4e4] sm:$0xf] %v1121
        %1250 = vst [vmem:[#allocation2 + $0x4f0] sm:$0xf] %v1122
        %1251 = vst [vmem:[#allocation2 + $0x4fc] sm:$0xf] %v1123
        %1252 = vst [vmem:[#allocation2 + $0x508] sm:$0xf] %v1124
        %1253 = vst [vmem:[#allocation2 + $0x514] sm:$0xf] %v1125
        %1254 = vst [vmem:[#allocation2 + $0x520] sm:$0xf] %v1126
        %1255 = vst [vmem:[#allocation2 + $0x52c] sm:$0xf] %v1127
        %1256 = vst [vmem:[#allocation2 + $0x538] sm:$0xf] %v1128
        %1257 = vst [vmem:[#allocation2 + $0x544] sm:$0xf] %v1129
        %1258 = vst [vmem:[#allocation2 + $0x550] sm:$0xf] %v1130
        %1259 = vst [vmem:[#allocation2 + $0x55c] sm:$0xf] %v1131
        %1260 = vst [vmem:[#allocation2 + $0x568] sm:$0xf] %v1132
        %1261 = vst [vmem:[#allocation2 + $0x574] sm:$0xf] %v1133
        %1262 = vst [vmem:[#allocation2 + $0x580] sm:$0xf] %v1134
        %1263 = vst [vmem:[#allocation2 + $0x58c] sm:$0xf] %v1135
        %1264 = vst [vmem:[#allocation2 + $0x598] sm:$0xf] %v1136
        %1265 = vst [vmem:[#allocation2 + $0x5a4] sm:$0xf] %v1137
        %1266 = vst [vmem:[#allocation2 + $0x5b0] sm:$0xf] %v1138
        %1267 = vst [vmem:[#allocation2 + $0x5bc] sm:$0xf] %v1139
        %1268 = vst [vmem:[#allocation2 + $0x5c8] sm:$0xf] %v1140
        %1269 = vst [vmem:[#allocation2 + $0x5d4] sm:$0xf] %v1141
        %1270 = vst [vmem:[#allocation2 + $0x5e0] sm:$0xf] %v1142
        %1271 = vst [vmem:[#allocation2 + $0x5ec] sm:$0xf] %v1143
        %1272 = vst [vmem:[#allocation2 + $0x5f8] sm:$0xf] %v1144
        %v1273 = vpack.c.bf16 %v634, %v633
        %v1274 = vpack.c.bf16 %v636, %v635
        %v1275 = vpack.c.bf16 %v638, %v637
        %v1276 = vpack.c.bf16 %v640, %v639
        %v1277 = vpack.c.bf16 %v642, %v641
        %v1278 = vpack.c.bf16 %v644, %v643
        %v1279 = vpack.c.bf16 %v646, %v645
        %v1280 = vpack.c.bf16 %v648, %v647
        %v1281 = vpack.c.bf16 %v650, %v649
        %v1282 = vpack.c.bf16 %v652, %v651
        %v1283 = vpack.c.bf16 %v654, %v653
        %v1284 = vpack.c.bf16 %v656, %v655
        %v1285 = vpack.c.bf16 %v658, %v657
        %v1286 = vpack.c.bf16 %v660, %v659
        %v1287 = vpack.c.bf16 %v662, %v661
        %v1288 = vpack.c.bf16 %v664, %v663
        %v1289 = vpack.c.bf16 %v666, %v665
        %v1290 = vpack.c.bf16 %v668, %v667
        %v1291 = vpack.c.bf16 %v670, %v669
        %v1292 = vpack.c.bf16 %v672, %v671
        %v1293 = vpack.c.bf16 %v674, %v673
        %v1294 = vpack.c.bf16 %v676, %v675
        %v1295 = vpack.c.bf16 %v678, %v677
        %v1296 = vpack.c.bf16 %v680, %v679
        %v1297 = vpack.c.bf16 %v682, %v681
        %v1298 = vpack.c.bf16 %v684, %v683
        %v1299 = vpack.c.bf16 %v686, %v685
        %v1300 = vpack.c.bf16 %v688, %v687
        %v1301 = vpack.c.bf16 %v690, %v689
        %v1302 = vpack.c.bf16 %v692, %v691
        %v1303 = vpack.c.bf16 %v694, %v693
        %v1304 = vpack.c.bf16 %v696, %v695
        %v1305 = vpack.c.bf16 %v698, %v697
        %v1306 = vpack.c.bf16 %v700, %v699
        %v1307 = vpack.c.bf16 %v702, %v701
        %v1308 = vpack.c.bf16 %v704, %v703
        %v1309 = vpack.c.bf16 %v706, %v705
        %v1310 = vpack.c.bf16 %v708, %v707
        %v1311 = vpack.c.bf16 %v710, %v709
        %v1312 = vpack.c.bf16 %v712, %v711
        %v1313 = vpack.c.bf16 %v714, %v713
        %v1314 = vpack.c.bf16 %v716, %v715
        %v1315 = vpack.c.bf16 %v718, %v717
        %v1316 = vpack.c.bf16 %v720, %v719
        %v1317 = vpack.c.bf16 %v722, %v721
        %v1318 = vpack.c.bf16 %v724, %v723
        %v1319 = vpack.c.bf16 %v726, %v725
        %v1320 = vpack.c.bf16 %v728, %v727
        %v1321 = vpack.c.bf16 %v730, %v729
        %v1322 = vpack.c.bf16 %v732, %v731
        %v1323 = vpack.c.bf16 %v734, %v733
        %v1324 = vpack.c.bf16 %v736, %v735
        %v1325 = vpack.c.bf16 %v738, %v737
        %v1326 = vpack.c.bf16 %v740, %v739
        %v1327 = vpack.c.bf16 %v742, %v741
        %v1328 = vpack.c.bf16 %v744, %v743
        %v1329 = vpack.c.bf16 %v746, %v745
        %v1330 = vpack.c.bf16 %v748, %v747
        %v1331 = vpack.c.bf16 %v750, %v749
        %v1332 = vpack.c.bf16 %v752, %v751
        %v1333 = vpack.c.bf16 %v754, %v753
        %v1334 = vpack.c.bf16 %v756, %v755
        %v1335 = vpack.c.bf16 %v758, %v757
        %v1336 = vpack.c.bf16 %v760, %v759
        %v1401 = vunpack.c.l.b16 %v1273
        %v1402 = vunpack.c.h.b16 %v1273
        %v1403 = vunpack.c.l.b16 %v1274
        %v1404 = vunpack.c.h.b16 %v1274
        %v1405 = vunpack.c.l.b16 %v1275
        %v1406 = vunpack.c.h.b16 %v1275
        %v1407 = vunpack.c.l.b16 %v1276
        %v1408 = vunpack.c.h.b16 %v1276
        %v1409 = vunpack.c.l.b16 %v1277
        %v1410 = vunpack.c.h.b16 %v1277
        %v1411 = vunpack.c.l.b16 %v1278
        %v1412 = vunpack.c.h.b16 %v1278
        %v1413 = vunpack.c.l.b16 %v1279
        %v1414 = vunpack.c.h.b16 %v1279
        %v1415 = vunpack.c.l.b16 %v1280
        %v1416 = vunpack.c.h.b16 %v1280
        %v1417 = vunpack.c.l.b16 %v1281
        %v1418 = vunpack.c.h.b16 %v1281
        %v1419 = vunpack.c.l.b16 %v1282
        %v1420 = vunpack.c.h.b16 %v1282
        %v1421 = vunpack.c.l.b16 %v1283
        %v1422 = vunpack.c.h.b16 %v1283
        %v1423 = vunpack.c.l.b16 %v1284
        %v1424 = vunpack.c.h.b16 %v1284
        %v1425 = vunpack.c.l.b16 %v1285
        %v1426 = vunpack.c.h.b16 %v1285
        %v1427 = vunpack.c.l.b16 %v1286
        %v1428 = vunpack.c.h.b16 %v1286
        %v1429 = vunpack.c.l.b16 %v1287
        %v1430 = vunpack.c.h.b16 %v1287
        %v1431 = vunpack.c.l.b16 %v1288
        %v1432 = vunpack.c.h.b16 %v1288
        %v1433 = vunpack.c.l.b16 %v1289
        %v1434 = vunpack.c.h.b16 %v1289
        %v1435 = vunpack.c.l.b16 %v1290
        %v1436 = vunpack.c.h.b16 %v1290
        %v1437 = vunpack.c.l.b16 %v1291
        %v1438 = vunpack.c.h.b16 %v1291
        %v1439 = vunpack.c.l.b16 %v1292
        %v1440 = vunpack.c.h.b16 %v1292
        %v1441 = vunpack.c.l.b16 %v1293
        %v1442 = vunpack.c.h.b16 %v1293
        %v1443 = vunpack.c.l.b16 %v1294
        %v1444 = vunpack.c.h.b16 %v1294
        %v1445 = vunpack.c.l.b16 %v1295
        %v1446 = vunpack.c.h.b16 %v1295
        %v1447 = vunpack.c.l.b16 %v1296
        %v1448 = vunpack.c.h.b16 %v1296
        %v1449 = vunpack.c.l.b16 %v1297
        %v1450 = vunpack.c.h.b16 %v1297
        %v1451 = vunpack.c.l.b16 %v1298
        %v1452 = vunpack.c.h.b16 %v1298
        %v1453 = vunpack.c.l.b16 %v1299
        %v1454 = vunpack.c.h.b16 %v1299
        %v1455 = vunpack.c.l.b16 %v1300
        %v1456 = vunpack.c.h.b16 %v1300
        %v1457 = vunpack.c.l.b16 %v1301
        %v1458 = vunpack.c.h.b16 %v1301
        %v1459 = vunpack.c.l.b16 %v1302
        %v1460 = vunpack.c.h.b16 %v1302
        %v1461 = vunpack.c.l.b16 %v1303
        %v1462 = vunpack.c.h.b16 %v1303
        %v1463 = vunpack.c.l.b16 %v1304
        %v1464 = vunpack.c.h.b16 %v1304
        %v1465 = vunpack.c.l.b16 %v1305
        %v1466 = vunpack.c.h.b16 %v1305
        %v1467 = vunpack.c.l.b16 %v1306
        %v1468 = vunpack.c.h.b16 %v1306
        %v1469 = vunpack.c.l.b16 %v1307
        %v1470 = vunpack.c.h.b16 %v1307
        %v1471 = vunpack.c.l.b16 %v1308
        %v1472 = vunpack.c.h.b16 %v1308
        %v1473 = vunpack.c.l.b16 %v1309
        %v1474 = vunpack.c.h.b16 %v1309
        %v1475 = vunpack.c.l.b16 %v1310
        %v1476 = vunpack.c.h.b16 %v1310
        %v1477 = vunpack.c.l.b16 %v1311
        %v1478 = vunpack.c.h.b16 %v1311
        %v1479 = vunpack.c.l.b16 %v1312
        %v1480 = vunpack.c.h.b16 %v1312
        %v1481 = vunpack.c.l.b16 %v1313
        %v1482 = vunpack.c.h.b16 %v1313
        %v1483 = vunpack.c.l.b16 %v1314
        %v1484 = vunpack.c.h.b16 %v1314
        %v1485 = vunpack.c.l.b16 %v1315
        %v1486 = vunpack.c.h.b16 %v1315
        %v1487 = vunpack.c.l.b16 %v1316
        %v1488 = vunpack.c.h.b16 %v1316
        %v1489 = vunpack.c.l.b16 %v1317
        %v1490 = vunpack.c.h.b16 %v1317
        %v1491 = vunpack.c.l.b16 %v1318
        %v1492 = vunpack.c.h.b16 %v1318
        %v1493 = vunpack.c.l.b16 %v1319
        %v1494 = vunpack.c.h.b16 %v1319
        %v1495 = vunpack.c.l.b16 %v1320
        %v1496 = vunpack.c.h.b16 %v1320
        %v1497 = vunpack.c.l.b16 %v1321
        %v1498 = vunpack.c.h.b16 %v1321
        %v1499 = vunpack.c.l.b16 %v1322
        %v1500 = vunpack.c.h.b16 %v1322
        %v1501 = vunpack.c.l.b16 %v1323
        %v1502 = vunpack.c.h.b16 %v1323
        %v1503 = vunpack.c.l.b16 %v1324
        %v1504 = vunpack.c.h.b16 %v1324
        %v1505 = vunpack.c.l.b16 %v1325
        %v1506 = vunpack.c.h.b16 %v1325
        %v1507 = vunpack.c.l.b16 %v1326
        %v1508 = vunpack.c.h.b16 %v1326
        %v1509 = vunpack.c.l.b16 %v1327
        %v1510 = vunpack.c.h.b16 %v1327
        %v1511 = vunpack.c.l.b16 %v1328
        %v1512 = vunpack.c.h.b16 %v1328
        %v1513 = vunpack.c.l.b16 %v1329
        %v1514 = vunpack.c.h.b16 %v1329
        %v1515 = vunpack.c.l.b16 %v1330
        %v1516 = vunpack.c.h.b16 %v1330
        %v1517 = vunpack.c.l.b16 %v1331
        %v1518 = vunpack.c.h.b16 %v1331
        %v1519 = vunpack.c.l.b16 %v1332
        %v1520 = vunpack.c.h.b16 %v1332
        %v1521 = vunpack.c.l.b16 %v1333
        %v1522 = vunpack.c.h.b16 %v1333
        %v1523 = vunpack.c.l.b16 %v1334
        %v1524 = vunpack.c.h.b16 %v1334
        %v1525 = vunpack.c.l.b16 %v1335
        %v1526 = vunpack.c.h.b16 %v1335
        %v1527 = vunpack.c.l.b16 %v1336
        %v1528 = vunpack.c.h.b16 %v1336
        %v1529 = vpack.c.b16 %v1401, %v1401
        %v1530 = vpack.c.b16 %v1402, %v1402
        %v1531 = vpack.c.b16 %v1403, %v1403
        %v1532 = vpack.c.b16 %v1404, %v1404
        %v1533 = vpack.c.b16 %v1405, %v1405
        %v1534 = vpack.c.b16 %v1406, %v1406
        %v1535 = vpack.c.b16 %v1407, %v1407
        %v1536 = vpack.c.b16 %v1408, %v1408
        %v1537 = vpack.c.b16 %v1409, %v1409
        %v1538 = vpack.c.b16 %v1410, %v1410
        %v1539 = vpack.c.b16 %v1411, %v1411
        %v1540 = vpack.c.b16 %v1412, %v1412
        %v1541 = vpack.c.b16 %v1413, %v1413
        %v1542 = vpack.c.b16 %v1414, %v1414
        %v1543 = vpack.c.b16 %v1415, %v1415
        %v1544 = vpack.c.b16 %v1416, %v1416
        %v1545 = vpack.c.b16 %v1417, %v1417
        %v1546 = vpack.c.b16 %v1418, %v1418
        %v1547 = vpack.c.b16 %v1419, %v1419
        %v1548 = vpack.c.b16 %v1420, %v1420
        %v1549 = vpack.c.b16 %v1421, %v1421
        %v1550 = vpack.c.b16 %v1422, %v1422
        %v1551 = vpack.c.b16 %v1423, %v1423
        %v1552 = vpack.c.b16 %v1424, %v1424
        %v1553 = vpack.c.b16 %v1425, %v1425
        %v1554 = vpack.c.b16 %v1426, %v1426
        %v1555 = vpack.c.b16 %v1427, %v1427
        %v1556 = vpack.c.b16 %v1428, %v1428
        %v1557 = vpack.c.b16 %v1429, %v1429
        %v1558 = vpack.c.b16 %v1430, %v1430
        %v1559 = vpack.c.b16 %v1431, %v1431
        %v1560 = vpack.c.b16 %v1432, %v1432
        %v1561 = vpack.c.b16 %v1433, %v1433
        %v1562 = vpack.c.b16 %v1434, %v1434
        %v1563 = vpack.c.b16 %v1435, %v1435
        %v1564 = vpack.c.b16 %v1436, %v1436
        %v1565 = vpack.c.b16 %v1437, %v1437
        %v1566 = vpack.c.b16 %v1438, %v1438
        %v1567 = vpack.c.b16 %v1439, %v1439
        %v1568 = vpack.c.b16 %v1440, %v1440
        %v1569 = vpack.c.b16 %v1441, %v1441
        %v1570 = vpack.c.b16 %v1442, %v1442
        %v1571 = vpack.c.b16 %v1443, %v1443
        %v1572 = vpack.c.b16 %v1444, %v1444
        %v1573 = vpack.c.b16 %v1445, %v1445
        %v1574 = vpack.c.b16 %v1446, %v1446
        %v1575 = vpack.c.b16 %v1447, %v1447
        %v1576 = vpack.c.b16 %v1448, %v1448
        %v1577 = vpack.c.b16 %v1449, %v1449
        %v1578 = vpack.c.b16 %v1450, %v1450
        %v1579 = vpack.c.b16 %v1451, %v1451
        %v1580 = vpack.c.b16 %v1452, %v1452
        %v1581 = vpack.c.b16 %v1453, %v1453
        %v1582 = vpack.c.b16 %v1454, %v1454
        %v1583 = vpack.c.b16 %v1455, %v1455
        %v1584 = vpack.c.b16 %v1456, %v1456
        %v1585 = vpack.c.b16 %v1457, %v1457
        %v1586 = vpack.c.b16 %v1458, %v1458
        %v1587 = vpack.c.b16 %v1459, %v1459
        %v1588 = vpack.c.b16 %v1460, %v1460
        %v1589 = vpack.c.b16 %v1461, %v1461
        %v1590 = vpack.c.b16 %v1462, %v1462
        %v1591 = vpack.c.b16 %v1463, %v1463
        %v1592 = vpack.c.b16 %v1464, %v1464
        %v1593 = vpack.c.b16 %v1465, %v1465
        %v1594 = vpack.c.b16 %v1466, %v1466
        %v1595 = vpack.c.b16 %v1467, %v1467
        %v1596 = vpack.c.b16 %v1468, %v1468
        %v1597 = vpack.c.b16 %v1469, %v1469
        %v1598 = vpack.c.b16 %v1470, %v1470
        %v1599 = vpack.c.b16 %v1471, %v1471
        %v1600 = vpack.c.b16 %v1472, %v1472
        %v1601 = vpack.c.b16 %v1473, %v1473
        %v1602 = vpack.c.b16 %v1474, %v1474
        %v1603 = vpack.c.b16 %v1475, %v1475
        %v1604 = vpack.c.b16 %v1476, %v1476
        %v1605 = vpack.c.b16 %v1477, %v1477
        %v1606 = vpack.c.b16 %v1478, %v1478
        %v1607 = vpack.c.b16 %v1479, %v1479
        %v1608 = vpack.c.b16 %v1480, %v1480
        %v1609 = vpack.c.b16 %v1481, %v1481
        %v1610 = vpack.c.b16 %v1482, %v1482
        %v1611 = vpack.c.b16 %v1483, %v1483
        %v1612 = vpack.c.b16 %v1484, %v1484
        %v1613 = vpack.c.b16 %v1485, %v1485
        %v1614 = vpack.c.b16 %v1486, %v1486
        %v1615 = vpack.c.b16 %v1487, %v1487
        %v1616 = vpack.c.b16 %v1488, %v1488
        %v1617 = vpack.c.b16 %v1489, %v1489
        %v1618 = vpack.c.b16 %v1490, %v1490
        %v1619 = vpack.c.b16 %v1491, %v1491
        %v1620 = vpack.c.b16 %v1492, %v1492
        %v1621 = vpack.c.b16 %v1493, %v1493
        %v1622 = vpack.c.b16 %v1494, %v1494
        %v1623 = vpack.c.b16 %v1495, %v1495
        %v1624 = vpack.c.b16 %v1496, %v1496
        %v1625 = vpack.c.b16 %v1497, %v1497
        %v1626 = vpack.c.b16 %v1498, %v1498
        %v1627 = vpack.c.b16 %v1499, %v1499
        %v1628 = vpack.c.b16 %v1500, %v1500
        %v1629 = vpack.c.b16 %v1501, %v1501
        %v1630 = vpack.c.b16 %v1502, %v1502
        %v1631 = vpack.c.b16 %v1503, %v1503
        %v1632 = vpack.c.b16 %v1504, %v1504
        %v1633 = vpack.c.b16 %v1505, %v1505
        %v1634 = vpack.c.b16 %v1506, %v1506
        %v1635 = vpack.c.b16 %v1507, %v1507
        %v1636 = vpack.c.b16 %v1508, %v1508
        %v1637 = vpack.c.b16 %v1509, %v1509
        %v1638 = vpack.c.b16 %v1510, %v1510
        %v1639 = vpack.c.b16 %v1511, %v1511
        %v1640 = vpack.c.b16 %v1512, %v1512
        %v1641 = vpack.c.b16 %v1513, %v1513
        %v1642 = vpack.c.b16 %v1514, %v1514
        %v1643 = vpack.c.b16 %v1515, %v1515
        %v1644 = vpack.c.b16 %v1516, %v1516
        %v1645 = vpack.c.b16 %v1517, %v1517
        %v1646 = vpack.c.b16 %v1518, %v1518
        %v1647 = vpack.c.b16 %v1519, %v1519
        %v1648 = vpack.c.b16 %v1520, %v1520
        %v1649 = vpack.c.b16 %v1521, %v1521
        %v1650 = vpack.c.b16 %v1522, %v1522
        %v1651 = vpack.c.b16 %v1523, %v1523
        %v1652 = vpack.c.b16 %v1524, %v1524
        %v1653 = vpack.c.b16 %v1525, %v1525
        %v1654 = vpack.c.b16 %v1526, %v1526
        %v1655 = vpack.c.b16 %v1527, %v1527
        %v1656 = vpack.c.b16 %v1528, %v1528
        %1785 = vst [vmem:[#allocation2 + $0x8] sm:$0xf] %v1529
        %1786 = vst [vmem:[#allocation2 + $0x14] sm:$0xf] %v1530
        %1787 = vst [vmem:[#allocation2 + $0x20] sm:$0xf] %v1531
        %1788 = vst [vmem:[#allocation2 + $0x2c] sm:$0xf] %v1532
        %1789 = vst [vmem:[#allocation2 + $0x38] sm:$0xf] %v1533
        %1790 = vst [vmem:[#allocation2 + $0x44] sm:$0xf] %v1534
        %1791 = vst [vmem:[#allocation2 + $0x50] sm:$0xf] %v1535
        %1792 = vst [vmem:[#allocation2 + $0x5c] sm:$0xf] %v1536
        %1793 = vst [vmem:[#allocation2 + $0x68] sm:$0xf] %v1537
        %1794 = vst [vmem:[#allocation2 + $0x74] sm:$0xf] %v1538
        %1795 = vst [vmem:[#allocation2 + $0x80] sm:$0xf] %v1539
        %1796 = vst [vmem:[#allocation2 + $0x8c] sm:$0xf] %v1540
        %1797 = vst [vmem:[#allocation2 + $0x98] sm:$0xf] %v1541
        %1798 = vst [vmem:[#allocation2 + $0xa4] sm:$0xf] %v1542
        %1799 = vst [vmem:[#allocation2 + $0xb0] sm:$0xf] %v1543
        %1800 = vst [vmem:[#allocation2 + $0xbc] sm:$0xf] %v1544
        %1801 = vst [vmem:[#allocation2 + $0xc8] sm:$0xf] %v1545
        %1802 = vst [vmem:[#allocation2 + $0xd4] sm:$0xf] %v1546
        %1803 = vst [vmem:[#allocation2 + $0xe0] sm:$0xf] %v1547
        %1804 = vst [vmem:[#allocation2 + $0xec] sm:$0xf] %v1548
        %1805 = vst [vmem:[#allocation2 + $0xf8] sm:$0xf] %v1549
        %1806 = vst [vmem:[#allocation2 + $0x104] sm:$0xf] %v1550
        %1807 = vst [vmem:[#allocation2 + $0x110] sm:$0xf] %v1551
        %1808 = vst [vmem:[#allocation2 + $0x11c] sm:$0xf] %v1552
        %1809 = vst [vmem:[#allocation2 + $0x128] sm:$0xf] %v1553
        %1810 = vst [vmem:[#allocation2 + $0x134] sm:$0xf] %v1554
        %1811 = vst [vmem:[#allocation2 + $0x140] sm:$0xf] %v1555
        %1812 = vst [vmem:[#allocation2 + $0x14c] sm:$0xf] %v1556
        %1813 = vst [vmem:[#allocation2 + $0x158] sm:$0xf] %v1557
        %1814 = vst [vmem:[#allocation2 + $0x164] sm:$0xf] %v1558
        %1815 = vst [vmem:[#allocation2 + $0x170] sm:$0xf] %v1559
        %1816 = vst [vmem:[#allocation2 + $0x17c] sm:$0xf] %v1560
        %1817 = vst [vmem:[#allocation2 + $0x188] sm:$0xf] %v1561
        %1818 = vst [vmem:[#allocation2 + $0x194] sm:$0xf] %v1562
        %1819 = vst [vmem:[#allocation2 + $0x1a0] sm:$0xf] %v1563
        %1820 = vst [vmem:[#allocation2 + $0x1ac] sm:$0xf] %v1564
        %1821 = vst [vmem:[#allocation2 + $0x1b8] sm:$0xf] %v1565
        %1822 = vst [vmem:[#allocation2 + $0x1c4] sm:$0xf] %v1566
        %1823 = vst [vmem:[#allocation2 + $0x1d0] sm:$0xf] %v1567
        %1824 = vst [vmem:[#allocation2 + $0x1dc] sm:$0xf] %v1568
        %1825 = vst [vmem:[#allocation2 + $0x1e8] sm:$0xf] %v1569
        %1826 = vst [vmem:[#allocation2 + $0x1f4] sm:$0xf] %v1570
        %1827 = vst [vmem:[#allocation2 + $0x200] sm:$0xf] %v1571
        %1828 = vst [vmem:[#allocation2 + $0x20c] sm:$0xf] %v1572
        %1829 = vst [vmem:[#allocation2 + $0x218] sm:$0xf] %v1573
        %1830 = vst [vmem:[#allocation2 + $0x224] sm:$0xf] %v1574
        %1831 = vst [vmem:[#allocation2 + $0x230] sm:$0xf] %v1575
        %1832 = vst [vmem:[#allocation2 + $0x23c] sm:$0xf] %v1576
        %1833 = vst [vmem:[#allocation2 + $0x248] sm:$0xf] %v1577
        %1834 = vst [vmem:[#allocation2 + $0x254] sm:$0xf] %v1578
        %1835 = vst [vmem:[#allocation2 + $0x260] sm:$0xf] %v1579
        %1836 = vst [vmem:[#allocation2 + $0x26c] sm:$0xf] %v1580
        %1837 = vst [vmem:[#allocation2 + $0x278] sm:$0xf] %v1581
        %1838 = vst [vmem:[#allocation2 + $0x284] sm:$0xf] %v1582
        %1839 = vst [vmem:[#allocation2 + $0x290] sm:$0xf] %v1583
        %1840 = vst [vmem:[#allocation2 + $0x29c] sm:$0xf] %v1584
        %1841 = vst [vmem:[#allocation2 + $0x2a8] sm:$0xf] %v1585
        %1842 = vst [vmem:[#allocation2 + $0x2b4] sm:$0xf] %v1586
        %1843 = vst [vmem:[#allocation2 + $0x2c0] sm:$0xf] %v1587
        %1844 = vst [vmem:[#allocation2 + $0x2cc] sm:$0xf] %v1588
        %1845 = vst [vmem:[#allocation2 + $0x2d8] sm:$0xf] %v1589
        %1846 = vst [vmem:[#allocation2 + $0x2e4] sm:$0xf] %v1590
        %1847 = vst [vmem:[#allocation2 + $0x2f0] sm:$0xf] %v1591
        %1848 = vst [vmem:[#allocation2 + $0x2fc] sm:$0xf] %v1592
        %1849 = vst [vmem:[#allocation2 + $0x308] sm:$0xf] %v1593
        %1850 = vst [vmem:[#allocation2 + $0x314] sm:$0xf] %v1594
        %1851 = vst [vmem:[#allocation2 + $0x320] sm:$0xf] %v1595
        %1852 = vst [vmem:[#allocation2 + $0x32c] sm:$0xf] %v1596
        %1853 = vst [vmem:[#allocation2 + $0x338] sm:$0xf] %v1597
        %1854 = vst [vmem:[#allocation2 + $0x344] sm:$0xf] %v1598
        %1855 = vst [vmem:[#allocation2 + $0x350] sm:$0xf] %v1599
        %1856 = vst [vmem:[#allocation2 + $0x35c] sm:$0xf] %v1600
        %1857 = vst [vmem:[#allocation2 + $0x368] sm:$0xf] %v1601
        %1858 = vst [vmem:[#allocation2 + $0x374] sm:$0xf] %v1602
        %1859 = vst [vmem:[#allocation2 + $0x380] sm:$0xf] %v1603
        %1860 = vst [vmem:[#allocation2 + $0x38c] sm:$0xf] %v1604
        %1861 = vst [vmem:[#allocation2 + $0x398] sm:$0xf] %v1605
        %1862 = vst [vmem:[#allocation2 + $0x3a4] sm:$0xf] %v1606
        %1863 = vst [vmem:[#allocation2 + $0x3b0] sm:$0xf] %v1607
        %1864 = vst [vmem:[#allocation2 + $0x3bc] sm:$0xf] %v1608
        %1865 = vst [vmem:[#allocation2 + $0x3c8] sm:$0xf] %v1609
        %1866 = vst [vmem:[#allocation2 + $0x3d4] sm:$0xf] %v1610
        %1867 = vst [vmem:[#allocation2 + $0x3e0] sm:$0xf] %v1611
        %1868 = vst [vmem:[#allocation2 + $0x3ec] sm:$0xf] %v1612
        %1869 = vst [vmem:[#allocation2 + $0x3f8] sm:$0xf] %v1613
        %1870 = vst [vmem:[#allocation2 + $0x404] sm:$0xf] %v1614
        %1871 = vst [vmem:[#allocation2 + $0x410] sm:$0xf] %v1615
        %1872 = vst [vmem:[#allocation2 + $0x41c] sm:$0xf] %v1616
        %1873 = vst [vmem:[#allocation2 + $0x428] sm:$0xf] %v1617
        %1874 = vst [vmem:[#allocation2 + $0x434] sm:$0xf] %v1618
        %1875 = vst [vmem:[#allocation2 + $0x440] sm:$0xf] %v1619
        %1876 = vst [vmem:[#allocation2 + $0x44c] sm:$0xf] %v1620
        %1877 = vst [vmem:[#allocation2 + $0x458] sm:$0xf] %v1621
        %1878 = vst [vmem:[#allocation2 + $0x464] sm:$0xf] %v1622
        %1879 = vst [vmem:[#allocation2 + $0x470] sm:$0xf] %v1623
        %1880 = vst [vmem:[#allocation2 + $0x47c] sm:$0xf] %v1624
        %1881 = vst [vmem:[#allocation2 + $0x488] sm:$0xf] %v1625
        %1882 = vst [vmem:[#allocation2 + $0x494] sm:$0xf] %v1626
        %1883 = vst [vmem:[#allocation2 + $0x4a0] sm:$0xf] %v1627
        %1884 = vst [vmem:[#allocation2 + $0x4ac] sm:$0xf] %v1628
        %1885 = vst [vmem:[#allocation2 + $0x4b8] sm:$0xf] %v1629
        %1886 = vst [vmem:[#allocation2 + $0x4c4] sm:$0xf] %v1630
        %1887 = vst [vmem:[#allocation2 + $0x4d0] sm:$0xf] %v1631
        %1888 = vst [vmem:[#allocation2 + $0x4dc] sm:$0xf] %v1632
        %1889 = vst [vmem:[#allocation2 + $0x4e8] sm:$0xf] %v1633
        %1890 = vst [vmem:[#allocation2 + $0x4f4] sm:$0xf] %v1634
        %1891 = vst [vmem:[#allocation2 + $0x500] sm:$0xf] %v1635
        %1892 = vst [vmem:[#allocation2 + $0x50c] sm:$0xf] %v1636
        %1893 = vst [vmem:[#allocation2 + $0x518] sm:$0xf] %v1637
        %1894 = vst [vmem:[#allocation2 + $0x524] sm:$0xf] %v1638
        %1895 = vst [vmem:[#allocation2 + $0x530] sm:$0xf] %v1639
        %1896 = vst [vmem:[#allocation2 + $0x53c] sm:$0xf] %v1640
        %1897 = vst [vmem:[#allocation2 + $0x548] sm:$0xf] %v1641
        %1898 = vst [vmem:[#allocation2 + $0x554] sm:$0xf] %v1642
        %1899 = vst [vmem:[#allocation2 + $0x560] sm:$0xf] %v1643
        %1900 = vst [vmem:[#allocation2 + $0x56c] sm:$0xf] %v1644
        %1901 = vst [vmem:[#allocation2 + $0x578] sm:$0xf] %v1645
        %1902 = vst [vmem:[#allocation2 + $0x584] sm:$0xf] %v1646
        %1903 = vst [vmem:[#allocation2 + $0x590] sm:$0xf] %v1647
        %1904 = vst [vmem:[#allocation2 + $0x59c] sm:$0xf] %v1648
        %1905 = vst [vmem:[#allocation2 + $0x5a8] sm:$0xf] %v1649
        %1906 = vst [vmem:[#allocation2 + $0x5b4] sm:$0xf] %v1650
        %1907 = vst [vmem:[#allocation2 + $0x5c0] sm:$0xf] %v1651
        %1908 = vst [vmem:[#allocation2 + $0x5cc] sm:$0xf] %v1652
        %1909 = vst [vmem:[#allocation2 + $0x5d8] sm:$0xf] %v1653
        %1910 = vst [vmem:[#allocation2 + $0x5e4] sm:$0xf] %v1654
        %1911 = vst [vmem:[#allocation2 + $0x5f0] sm:$0xf] %v1655
        %1912 = vst [vmem:[#allocation2 + $0x5fc] sm:$0xf] %v1656
        %v1913 = vld [vmem:[#allocation2] sm:$0xff]
        %v1914 = vld [vmem:[#allocation2 + $0x8] sm:$0xf]
        %v1915 = vld [vmem:[#allocation2 + $0xc] sm:$0xff]
        %v1916 = vld [vmem:[#allocation2 + $0x14] sm:$0xf]
        %v1917 = vld [vmem:[#allocation2 + $0x18] sm:$0xff]
        %v1918 = vld [vmem:[#allocation2 + $0x20] sm:$0xf]
        %v1919 = vld [vmem:[#allocation2 + $0x24] sm:$0xff]
        %v1920 = vld [vmem:[#allocation2 + $0x2c] sm:$0xf]
        %v1921 = vld [vmem:[#allocation2 + $0x30] sm:$0xff]
        %v1922 = vld [vmem:[#allocation2 + $0x38] sm:$0xf]
        %v1923 = vld [vmem:[#allocation2 + $0x3c] sm:$0xff]
        %v1924 = vld [vmem:[#allocation2 + $0x44] sm:$0xf]
        %v1925 = vld [vmem:[#allocation2 + $0x48] sm:$0xff]
        %v1926 = vld [vmem:[#allocation2 + $0x50] sm:$0xf]
        %v1927 = vld [vmem:[#allocation2 + $0x54] sm:$0xff]
        %v1928 = vld [vmem:[#allocation2 + $0x5c] sm:$0xf]
        %v1929 = vld [vmem:[#allocation2 + $0x60] sm:$0xff]
        %v1930 = vld [vmem:[#allocation2 + $0x68] sm:$0xf]
        %v1931 = vld [vmem:[#allocation2 + $0x6c] sm:$0xff]
        %v1932 = vld [vmem:[#allocation2 + $0x74] sm:$0xf]
        %v1933 = vld [vmem:[#allocation2 + $0x78] sm:$0xff]
        %v1934 = vld [vmem:[#allocation2 + $0x80] sm:$0xf]
        %v1935 = vld [vmem:[#allocation2 + $0x84] sm:$0xff]
        %v1936 = vld [vmem:[#allocation2 + $0x8c] sm:$0xf]
        %v1937 = vld [vmem:[#allocation2 + $0x90] sm:$0xff]
        %v1938 = vld [vmem:[#allocation2 + $0x98] sm:$0xf]
        %v1939 = vld [vmem:[#allocation2 + $0x9c] sm:$0xff]
        %v1940 = vld [vmem:[#allocation2 + $0xa4] sm:$0xf]
        %v1941 = vld [vmem:[#allocation2 + $0xa8] sm:$0xff]
        %v1942 = vld [vmem:[#allocation2 + $0xb0] sm:$0xf]
        %v1943 = vld [vmem:[#allocation2 + $0xb4] sm:$0xff]
        %v1944 = vld [vmem:[#allocation2 + $0xbc] sm:$0xf]
        %v1945 = vld [vmem:[#allocation2 + $0xc0] sm:$0xff]
        %v1946 = vld [vmem:[#allocation2 + $0xc8] sm:$0xf]
        %v1947 = vld [vmem:[#allocation2 + $0xcc] sm:$0xff]
        %v1948 = vld [vmem:[#allocation2 + $0xd4] sm:$0xf]
        %v1949 = vld [vmem:[#allocation2 + $0xd8] sm:$0xff]
        %v1950 = vld [vmem:[#allocation2 + $0xe0] sm:$0xf]
        %v1951 = vld [vmem:[#allocation2 + $0xe4] sm:$0xff]
        %v1952 = vld [vmem:[#allocation2 + $0xec] sm:$0xf]
        %v1953 = vld [vmem:[#allocation2 + $0xf0] sm:$0xff]
        %v1954 = vld [vmem:[#allocation2 + $0xf8] sm:$0xf]
        %v1955 = vld [vmem:[#allocation2 + $0xfc] sm:$0xff]
        %v1956 = vld [vmem:[#allocation2 + $0x104] sm:$0xf]
        %v1957 = vld [vmem:[#allocation2 + $0x108] sm:$0xff]
        %v1958 = vld [vmem:[#allocation2 + $0x110] sm:$0xf]
        %v1959 = vld [vmem:[#allocation2 + $0x114] sm:$0xff]
        %v1960 = vld [vmem:[#allocation2 + $0x11c] sm:$0xf]
        %v1961 = vld [vmem:[#allocation2 + $0x120] sm:$0xff]
        %v1962 = vld [vmem:[#allocation2 + $0x128] sm:$0xf]
        %v1963 = vld [vmem:[#allocation2 + $0x12c] sm:$0xff]
        %v1964 = vld [vmem:[#allocation2 + $0x134] sm:$0xf]
        %v1965 = vld [vmem:[#allocation2 + $0x138] sm:$0xff]
        %v1966 = vld [vmem:[#allocation2 + $0x140] sm:$0xf]
        %v1967 = vld [vmem:[#allocation2 + $0x144] sm:$0xff]
        %v1968 = vld [vmem:[#allocation2 + $0x14c] sm:$0xf]
        %v1969 = vld [vmem:[#allocation2 + $0x150] sm:$0xff]
        %v1970 = vld [vmem:[#allocation2 + $0x158] sm:$0xf]
        %v1971 = vld [vmem:[#allocation2 + $0x15c] sm:$0xff]
        %v1972 = vld [vmem:[#allocation2 + $0x164] sm:$0xf]
        %v1973 = vld [vmem:[#allocation2 + $0x168] sm:$0xff]
        %v1974 = vld [vmem:[#allocation2 + $0x170] sm:$0xf]
        %v1975 = vld [vmem:[#allocation2 + $0x174] sm:$0xff]
        %v1976 = vld [vmem:[#allocation2 + $0x17c] sm:$0xf]
        %v1977 = vld [vmem:[#allocation2 + $0x180] sm:$0xff]
        %v1978 = vld [vmem:[#allocation2 + $0x188] sm:$0xf]
        %v1979 = vld [vmem:[#allocation2 + $0x18c] sm:$0xff]
        %v1980 = vld [vmem:[#allocation2 + $0x194] sm:$0xf]
        %v1981 = vld [vmem:[#allocation2 + $0x198] sm:$0xff]
        %v1982 = vld [vmem:[#allocation2 + $0x1a0] sm:$0xf]
        %v1983 = vld [vmem:[#allocation2 + $0x1a4] sm:$0xff]
        %v1984 = vld [vmem:[#allocation2 + $0x1ac] sm:$0xf]
        %v1985 = vld [vmem:[#allocation2 + $0x1b0] sm:$0xff]
        %v1986 = vld [vmem:[#allocation2 + $0x1b8] sm:$0xf]
        %v1987 = vld [vmem:[#allocation2 + $0x1bc] sm:$0xff]
        %v1988 = vld [vmem:[#allocation2 + $0x1c4] sm:$0xf]
        %v1989 = vld [vmem:[#allocation2 + $0x1c8] sm:$0xff]
        %v1990 = vld [vmem:[#allocation2 + $0x1d0] sm:$0xf]
        %v1991 = vld [vmem:[#allocation2 + $0x1d4] sm:$0xff]
        %v1992 = vld [vmem:[#allocation2 + $0x1dc] sm:$0xf]
        %v1993 = vld [vmem:[#allocation2 + $0x1e0] sm:$0xff]
        %v1994 = vld [vmem:[#allocation2 + $0x1e8] sm:$0xf]
        %v1995 = vld [vmem:[#allocation2 + $0x1ec] sm:$0xff]
        %v1996 = vld [vmem:[#allocation2 + $0x1f4] sm:$0xf]
        %v1997 = vld [vmem:[#allocation2 + $0x1f8] sm:$0xff]
        %v1998 = vld [vmem:[#allocation2 + $0x200] sm:$0xf]
        %v1999 = vld [vmem:[#allocation2 + $0x204] sm:$0xff]
        %v2000 = vld [vmem:[#allocation2 + $0x20c] sm:$0xf]
        %v2001 = vld [vmem:[#allocation2 + $0x210] sm:$0xff]
        %v2002 = vld [vmem:[#allocation2 + $0x218] sm:$0xf]
        %v2003 = vld [vmem:[#allocation2 + $0x21c] sm:$0xff]
        %v2004 = vld [vmem:[#allocation2 + $0x224] sm:$0xf]
        %v2005 = vld [vmem:[#allocation2 + $0x228] sm:$0xff]
        %v2006 = vld [vmem:[#allocation2 + $0x230] sm:$0xf]
        %v2007 = vld [vmem:[#allocation2 + $0x234] sm:$0xff]
        %v2008 = vld [vmem:[#allocation2 + $0x23c] sm:$0xf]
        %v2009 = vld [vmem:[#allocation2 + $0x240] sm:$0xff]
        %v2010 = vld [vmem:[#allocation2 + $0x248] sm:$0xf]
        %v2011 = vld [vmem:[#allocation2 + $0x24c] sm:$0xff]
        %v2012 = vld [vmem:[#allocation2 + $0x254] sm:$0xf]
        %v2013 = vld [vmem:[#allocation2 + $0x258] sm:$0xff]
        %v2014 = vld [vmem:[#allocation2 + $0x260] sm:$0xf]
        %v2015 = vld [vmem:[#allocation2 + $0x264] sm:$0xff]
        %v2016 = vld [vmem:[#allocation2 + $0x26c] sm:$0xf]
        %v2017 = vld [vmem:[#allocation2 + $0x270] sm:$0xff]
        %v2018 = vld [vmem:[#allocation2 + $0x278] sm:$0xf]
        %v2019 = vld [vmem:[#allocation2 + $0x27c] sm:$0xff]
        %v2020 = vld [vmem:[#allocation2 + $0x284] sm:$0xf]
        %v2021 = vld [vmem:[#allocation2 + $0x288] sm:$0xff]
        %v2022 = vld [vmem:[#allocation2 + $0x290] sm:$0xf]
        %v2023 = vld [vmem:[#allocation2 + $0x294] sm:$0xff]
        %v2024 = vld [vmem:[#allocation2 + $0x29c] sm:$0xf]
        %v2025 = vld [vmem:[#allocation2 + $0x2a0] sm:$0xff]
        %v2026 = vld [vmem:[#allocation2 + $0x2a8] sm:$0xf]
        %v2027 = vld [vmem:[#allocation2 + $0x2ac] sm:$0xff]
        %v2028 = vld [vmem:[#allocation2 + $0x2b4] sm:$0xf]
        %v2029 = vld [vmem:[#allocation2 + $0x2b8] sm:$0xff]
        %v2030 = vld [vmem:[#allocation2 + $0x2c0] sm:$0xf]
        %v2031 = vld [vmem:[#allocation2 + $0x2c4] sm:$0xff]
        %v2032 = vld [vmem:[#allocation2 + $0x2cc] sm:$0xf]
        %v2033 = vld [vmem:[#allocation2 + $0x2d0] sm:$0xff]
        %v2034 = vld [vmem:[#allocation2 + $0x2d8] sm:$0xf]
        %v2035 = vld [vmem:[#allocation2 + $0x2dc] sm:$0xff]
        %v2036 = vld [vmem:[#allocation2 + $0x2e4] sm:$0xf]
        %v2037 = vld [vmem:[#allocation2 + $0x2e8] sm:$0xff]
        %v2038 = vld [vmem:[#allocation2 + $0x2f0] sm:$0xf]
        %v2039 = vld [vmem:[#allocation2 + $0x2f4] sm:$0xff]
        %v2040 = vld [vmem:[#allocation2 + $0x2fc] sm:$0xf]
        %v2041 = vld [vmem:[#allocation2 + $0x300] sm:$0xff]
        %v2042 = vld [vmem:[#allocation2 + $0x308] sm:$0xf]
        %v2043 = vld [vmem:[#allocation2 + $0x30c] sm:$0xff]
        %v2044 = vld [vmem:[#allocation2 + $0x314] sm:$0xf]
        %v2045 = vld [vmem:[#allocation2 + $0x318] sm:$0xff]
        %v2046 = vld [vmem:[#allocation2 + $0x320] sm:$0xf]
        %v2047 = vld [vmem:[#allocation2 + $0x324] sm:$0xff]
        %v2048 = vld [vmem:[#allocation2 + $0x32c] sm:$0xf]
        %v2049 = vld [vmem:[#allocation2 + $0x330] sm:$0xff]
        %v2050 = vld [vmem:[#allocation2 + $0x338] sm:$0xf]
        %v2051 = vld [vmem:[#allocation2 + $0x33c] sm:$0xff]
        %v2052 = vld [vmem:[#allocation2 + $0x344] sm:$0xf]
        %v2053 = vld [vmem:[#allocation2 + $0x348] sm:$0xff]
        %v2054 = vld [vmem:[#allocation2 + $0x350] sm:$0xf]
        %v2055 = vld [vmem:[#allocation2 + $0x354] sm:$0xff]
        %v2056 = vld [vmem:[#allocation2 + $0x35c] sm:$0xf]
        %v2057 = vld [vmem:[#allocation2 + $0x360] sm:$0xff]
        %v2058 = vld [vmem:[#allocation2 + $0x368] sm:$0xf]
        %v2059 = vld [vmem:[#allocation2 + $0x36c] sm:$0xff]
        %v2060 = vld [vmem:[#allocation2 + $0x374] sm:$0xf]
        %v2061 = vld [vmem:[#allocation2 + $0x378] sm:$0xff]
        %v2062 = vld [vmem:[#allocation2 + $0x380] sm:$0xf]
        %v2063 = vld [vmem:[#allocation2 + $0x384] sm:$0xff]
        %v2064 = vld [vmem:[#allocation2 + $0x38c] sm:$0xf]
        %v2065 = vld [vmem:[#allocation2 + $0x390] sm:$0xff]
        %v2066 = vld [vmem:[#allocation2 + $0x398] sm:$0xf]
        %v2067 = vld [vmem:[#allocation2 + $0x39c] sm:$0xff]
        %v2068 = vld [vmem:[#allocation2 + $0x3a4] sm:$0xf]
        %v2069 = vld [vmem:[#allocation2 + $0x3a8] sm:$0xff]
        %v2070 = vld [vmem:[#allocation2 + $0x3b0] sm:$0xf]
        %v2071 = vld [vmem:[#allocation2 + $0x3b4] sm:$0xff]
        %v2072 = vld [vmem:[#allocation2 + $0x3bc] sm:$0xf]
        %v2073 = vld [vmem:[#allocation2 + $0x3c0] sm:$0xff]
        %v2074 = vld [vmem:[#allocation2 + $0x3c8] sm:$0xf]
        %v2075 = vld [vmem:[#allocation2 + $0x3cc] sm:$0xff]
        %v2076 = vld [vmem:[#allocation2 + $0x3d4] sm:$0xf]
        %v2077 = vld [vmem:[#allocation2 + $0x3d8] sm:$0xff]
        %v2078 = vld [vmem:[#allocation2 + $0x3e0] sm:$0xf]
        %v2079 = vld [vmem:[#allocation2 + $0x3e4] sm:$0xff]
        %v2080 = vld [vmem:[#allocation2 + $0x3ec] sm:$0xf]
        %v2081 = vld [vmem:[#allocation2 + $0x3f0] sm:$0xff]
        %v2082 = vld [vmem:[#allocation2 + $0x3f8] sm:$0xf]
        %v2083 = vld [vmem:[#allocation2 + $0x3fc] sm:$0xff]
        %v2084 = vld [vmem:[#allocation2 + $0x404] sm:$0xf]
        %v2085 = vld [vmem:[#allocation2 + $0x408] sm:$0xff]
        %v2086 = vld [vmem:[#allocation2 + $0x410] sm:$0xf]
        %v2087 = vld [vmem:[#allocation2 + $0x414] sm:$0xff]
        %v2088 = vld [vmem:[#allocation2 + $0x41c] sm:$0xf]
        %v2089 = vld [vmem:[#allocation2 + $0x420] sm:$0xff]
        %v2090 = vld [vmem:[#allocation2 + $0x428] sm:$0xf]
        %v2091 = vld [vmem:[#allocation2 + $0x42c] sm:$0xff]
        %v2092 = vld [vmem:[#allocation2 + $0x434] sm:$0xf]
        %v2093 = vld [vmem:[#allocation2 + $0x438] sm:$0xff]
        %v2094 = vld [vmem:[#allocation2 + $0x440] sm:$0xf]
        %v2095 = vld [vmem:[#allocation2 + $0x444] sm:$0xff]
        %v2096 = vld [vmem:[#allocation2 + $0x44c] sm:$0xf]
        %v2097 = vld [vmem:[#allocation2 + $0x450] sm:$0xff]
        %v2098 = vld [vmem:[#allocation2 + $0x458] sm:$0xf]
        %v2099 = vld [vmem:[#allocation2 + $0x45c] sm:$0xff]
        %v2100 = vld [vmem:[#allocation2 + $0x464] sm:$0xf]
        %v2101 = vld [vmem:[#allocation2 + $0x468] sm:$0xff]
        %v2102 = vld [vmem:[#allocation2 + $0x470] sm:$0xf]
        %v2103 = vld [vmem:[#allocation2 + $0x474] sm:$0xff]
        %v2104 = vld [vmem:[#allocation2 + $0x47c] sm:$0xf]
        %v2105 = vld [vmem:[#allocation2 + $0x480] sm:$0xff]
        %v2106 = vld [vmem:[#allocation2 + $0x488] sm:$0xf]
        %v2107 = vld [vmem:[#allocation2 + $0x48c] sm:$0xff]
        %v2108 = vld [vmem:[#allocation2 + $0x494] sm:$0xf]
        %v2109 = vld [vmem:[#allocation2 + $0x498] sm:$0xff]
        %v2110 = vld [vmem:[#allocation2 + $0x4a0] sm:$0xf]
        %v2111 = vld [vmem:[#allocation2 + $0x4a4] sm:$0xff]
        %v2112 = vld [vmem:[#allocation2 + $0x4ac] sm:$0xf]
        %v2113 = vld [vmem:[#allocation2 + $0x4b0] sm:$0xff]
        %v2114 = vld [vmem:[#allocation2 + $0x4b8] sm:$0xf]
        %v2115 = vld [vmem:[#allocation2 + $0x4bc] sm:$0xff]
        %v2116 = vld [vmem:[#allocation2 + $0x4c4] sm:$0xf]
        %v2117 = vld [vmem:[#allocation2 + $0x4c8] sm:$0xff]
        %v2118 = vld [vmem:[#allocation2 + $0x4d0] sm:$0xf]
        %v2119 = vld [vmem:[#allocation2 + $0x4d4] sm:$0xff]
        %v2120 = vld [vmem:[#allocation2 + $0x4dc] sm:$0xf]
        %v2121 = vld [vmem:[#allocation2 + $0x4e0] sm:$0xff]
        %v2122 = vld [vmem:[#allocation2 + $0x4e8] sm:$0xf]
        %v2123 = vld [vmem:[#allocation2 + $0x4ec] sm:$0xff]
        %v2124 = vld [vmem:[#allocation2 + $0x4f4] sm:$0xf]
        %v2125 = vld [vmem:[#allocation2 + $0x4f8] sm:$0xff]
        %v2126 = vld [vmem:[#allocation2 + $0x500] sm:$0xf]
        %v2127 = vld [vmem:[#allocation2 + $0x504] sm:$0xff]
        %v2128 = vld [vmem:[#allocation2 + $0x50c] sm:$0xf]
        %v2129 = vld [vmem:[#allocation2 + $0x510] sm:$0xff]
        %v2130 = vld [vmem:[#allocation2 + $0x518] sm:$0xf]
        %v2131 = vld [vmem:[#allocation2 + $0x51c] sm:$0xff]
        %v2132 = vld [vmem:[#allocation2 + $0x524] sm:$0xf]
        %v2133 = vld [vmem:[#allocation2 + $0x528] sm:$0xff]
        %v2134 = vld [vmem:[#allocation2 + $0x530] sm:$0xf]
        %v2135 = vld [vmem:[#allocation2 + $0x534] sm:$0xff]
        %v2136 = vld [vmem:[#allocation2 + $0x53c] sm:$0xf]
        %v2137 = vld [vmem:[#allocation2 + $0x540] sm:$0xff]
        %v2138 = vld [vmem:[#allocation2 + $0x548] sm:$0xf]
        %v2139 = vld [vmem:[#allocation2 + $0x54c] sm:$0xff]
        %v2140 = vld [vmem:[#allocation2 + $0x554] sm:$0xf]
        %v2141 = vld [vmem:[#allocation2 + $0x558] sm:$0xff]
        %v2142 = vld [vmem:[#allocation2 + $0x560] sm:$0xf]
        %v2143 = vld [vmem:[#allocation2 + $0x564] sm:$0xff]
        %v2144 = vld [vmem:[#allocation2 + $0x56c] sm:$0xf]
        %v2145 = vld [vmem:[#allocation2 + $0x570] sm:$0xff]
        %v2146 = vld [vmem:[#allocation2 + $0x578] sm:$0xf]
        %v2147 = vld [vmem:[#allocation2 + $0x57c] sm:$0xff]
        %v2148 = vld [vmem:[#allocation2 + $0x584] sm:$0xf]
        %v2149 = vld [vmem:[#allocation2 + $0x588] sm:$0xff]
        %v2150 = vld [vmem:[#allocation2 + $0x590] sm:$0xf]
        %v2151 = vld [vmem:[#allocation2 + $0x594] sm:$0xff]
        %v2152 = vld [vmem:[#allocation2 + $0x59c] sm:$0xf]
        %v2153 = vld [vmem:[#allocation2 + $0x5a0] sm:$0xff]
        %v2154 = vld [vmem:[#allocation2 + $0x5a8] sm:$0xf]
        %v2155 = vld [vmem:[#allocation2 + $0x5ac] sm:$0xff]
        %v2156 = vld [vmem:[#allocation2 + $0x5b4] sm:$0xf]
        %v2157 = vld [vmem:[#allocation2 + $0x5b8] sm:$0xff]
        %v2158 = vld [vmem:[#allocation2 + $0x5c0] sm:$0xf]
        %v2159 = vld [vmem:[#allocation2 + $0x5c4] sm:$0xff]
        %v2160 = vld [vmem:[#allocation2 + $0x5cc] sm:$0xf]
        %v2161 = vld [vmem:[#allocation2 + $0x5d0] sm:$0xff]
        %v2162 = vld [vmem:[#allocation2 + $0x5d8] sm:$0xf]
        %v2163 = vld [vmem:[#allocation2 + $0x5dc] sm:$0xff]
        %v2164 = vld [vmem:[#allocation2 + $0x5e4] sm:$0xf]
        %v2165 = vld [vmem:[#allocation2 + $0x5e8] sm:$0xff]
        %v2166 = vld [vmem:[#allocation2 + $0x5f0] sm:$0xf]
        %v2167 = vld [vmem:[#allocation2 + $0x5f4] sm:$0xff]
        %v2168 = vld [vmem:[#allocation2 + $0x5fc] sm:$0xf]
        %v2169 = vld [vmem:[%s532] sm:$0xf]
        %v2170 = vld [vmem:[%s532 + $0x4] sm:$0xf]
        %v2171 = vld [vmem:[%s532 + $0x8] sm:$0xf]
        %v2172 = vld [vmem:[%s532 + $0xc] sm:$0xf]
        %v2173 = vld [vmem:[%s532 + $0x10] sm:$0xf]
        %v2174 = vld [vmem:[%s532 + $0x14] sm:$0xf]
        %v2175 = vld [vmem:[%s532 + $0x18] sm:$0xf]
        %v2176 = vld [vmem:[%s532 + $0x1c] sm:$0xf]
        %v2177 = vld [vmem:[%s532 + $0x20] sm:$0xf]
        %v2178 = vld [vmem:[%s532 + $0x24] sm:$0xf]
        %v2179 = vld [vmem:[%s532 + $0x28] sm:$0xf]
        %v2180 = vld [vmem:[%s532 + $0x2c] sm:$0xf]
        %v2181 = vld [vmem:[%s532 + $0x30] sm:$0xf]
        %v2182 = vld [vmem:[%s532 + $0x34] sm:$0xf]
        %v2183 = vld [vmem:[%s532 + $0x38] sm:$0xf]
        %v2184 = vld [vmem:[%s532 + $0x3c] sm:$0xf]
        %v2185 = vld [vmem:[%s532 + $0x40] sm:$0xf]
        %v2186 = vld [vmem:[%s532 + $0x44] sm:$0xf]
        %v2187 = vld [vmem:[%s532 + $0x48] sm:$0xf]
        %v2188 = vld [vmem:[%s532 + $0x4c] sm:$0xf]
        %v2189 = vld [vmem:[%s532 + $0x50] sm:$0xf]
        %v2190 = vld [vmem:[%s532 + $0x54] sm:$0xf]
        %v2191 = vld [vmem:[%s532 + $0x58] sm:$0xf]
        %v2192 = vld [vmem:[%s532 + $0x5c] sm:$0xf]
        %v2193 = vld [vmem:[%s532 + $0x60] sm:$0xf]
        %v2194 = vld [vmem:[%s532 + $0x64] sm:$0xf]
        %v2195 = vld [vmem:[%s532 + $0x68] sm:$0xf]
        %v2196 = vld [vmem:[%s532 + $0x6c] sm:$0xf]
        %v2197 = vld [vmem:[%s532 + $0x70] sm:$0xf]
        %v2198 = vld [vmem:[%s532 + $0x74] sm:$0xf]
        %v2199 = vld [vmem:[%s532 + $0x78] sm:$0xf]
        %v2200 = vld [vmem:[%s532 + $0x7c] sm:$0xf]
        %v2201 = vld [vmem:[%s532 + $0x80] sm:$0xf]
        %v2202 = vld [vmem:[%s532 + $0x84] sm:$0xf]
        %v2203 = vld [vmem:[%s532 + $0x88] sm:$0xf]
        %v2204 = vld [vmem:[%s532 + $0x8c] sm:$0xf]
        %v2205 = vld [vmem:[%s532 + $0x90] sm:$0xf]
        %v2206 = vld [vmem:[%s532 + $0x94] sm:$0xf]
        %v2207 = vld [vmem:[%s532 + $0x98] sm:$0xf]
        %v2208 = vld [vmem:[%s532 + $0x9c] sm:$0xf]
        %v2209 = vld [vmem:[%s532 + $0xa0] sm:$0xf]
        %v2210 = vld [vmem:[%s532 + $0xa4] sm:$0xf]
        %v2211 = vld [vmem:[%s532 + $0xa8] sm:$0xf]
        %v2212 = vld [vmem:[%s532 + $0xac] sm:$0xf]
        %v2213 = vld [vmem:[%s532 + $0xb0] sm:$0xf]
        %v2214 = vld [vmem:[%s532 + $0xb4] sm:$0xf]
        %v2215 = vld [vmem:[%s532 + $0xb8] sm:$0xf]
        %v2216 = vld [vmem:[%s532 + $0xbc] sm:$0xf]
        %v2217 = vld [vmem:[%s620] sm:$0x1]
        %v2219 = vlaneseq
        %v2220 = vshrl.u32 %v2219, 7
        %v2221 = vsub.s32 0, %v2220
        %v2222 = vrot.slane %v2217, %v2221
        %v2480 = vunpack.c.l.b16 %v1913
        %v2481 = vunpack.c.h.b16 %v1913
        %v2482 = vunpack.c.l.b16 %v1914
        %v2483 = vunpack.c.l.b16 %v1915
        %v2484 = vunpack.c.h.b16 %v1915
        %v2485 = vunpack.c.l.b16 %v1916
        %v2486 = vunpack.c.l.b16 %v1917
        %v2487 = vunpack.c.h.b16 %v1917
        %v2488 = vunpack.c.l.b16 %v1918
        %v2489 = vunpack.c.l.b16 %v1919
        %v2490 = vunpack.c.h.b16 %v1919
        %v2491 = vunpack.c.l.b16 %v1920
        %v2492 = vunpack.c.l.b16 %v1921
        %v2493 = vunpack.c.h.b16 %v1921
        %v2494 = vunpack.c.l.b16 %v1922
        %v2495 = vunpack.c.l.b16 %v1923
        %v2496 = vunpack.c.h.b16 %v1923
        %v2497 = vunpack.c.l.b16 %v1924
        %v2498 = vunpack.c.l.b16 %v1925
        %v2499 = vunpack.c.h.b16 %v1925
        %v2500 = vunpack.c.l.b16 %v1926
        %v2501 = vunpack.c.l.b16 %v1927
        %v2502 = vunpack.c.h.b16 %v1927
        %v2503 = vunpack.c.l.b16 %v1928
        %v2504 = vunpack.c.l.b16 %v1929
        %v2505 = vunpack.c.h.b16 %v1929
        %v2506 = vunpack.c.l.b16 %v1930
        %v2507 = vunpack.c.l.b16 %v1931
        %v2508 = vunpack.c.h.b16 %v1931
        %v2509 = vunpack.c.l.b16 %v1932
        %v2510 = vunpack.c.l.b16 %v1933
        %v2511 = vunpack.c.h.b16 %v1933
        %v2512 = vunpack.c.l.b16 %v1934
        %v2513 = vunpack.c.l.b16 %v1935
        %v2514 = vunpack.c.h.b16 %v1935
        %v2515 = vunpack.c.l.b16 %v1936
        %v2516 = vunpack.c.l.b16 %v1937
        %v2517 = vunpack.c.h.b16 %v1937
        %v2518 = vunpack.c.l.b16 %v1938
        %v2519 = vunpack.c.l.b16 %v1939
        %v2520 = vunpack.c.h.b16 %v1939
        %v2521 = vunpack.c.l.b16 %v1940
        %v2522 = vunpack.c.l.b16 %v1941
        %v2523 = vunpack.c.h.b16 %v1941
        %v2524 = vunpack.c.l.b16 %v1942
        %v2525 = vunpack.c.l.b16 %v1943
        %v2526 = vunpack.c.h.b16 %v1943
        %v2527 = vunpack.c.l.b16 %v1944
        %v2528 = vunpack.c.l.b16 %v1945
        %v2529 = vunpack.c.h.b16 %v1945
        %v2530 = vunpack.c.l.b16 %v1946
        %v2531 = vunpack.c.l.b16 %v1947
        %v2532 = vunpack.c.h.b16 %v1947
        %v2533 = vunpack.c.l.b16 %v1948
        %v2534 = vunpack.c.l.b16 %v1949
        %v2535 = vunpack.c.h.b16 %v1949
        %v2536 = vunpack.c.l.b16 %v1950
        %v2537 = vunpack.c.l.b16 %v1951
        %v2538 = vunpack.c.h.b16 %v1951
        %v2539 = vunpack.c.l.b16 %v1952
        %v2540 = vunpack.c.l.b16 %v1953
        %v2541 = vunpack.c.h.b16 %v1953
        %v2542 = vunpack.c.l.b16 %v1954
        %v2543 = vunpack.c.l.b16 %v1955
        %v2544 = vunpack.c.h.b16 %v1955
        %v2545 = vunpack.c.l.b16 %v1956
        %v2546 = vunpack.c.l.b16 %v1957
        %v2547 = vunpack.c.h.b16 %v1957
        %v2548 = vunpack.c.l.b16 %v1958
        %v2549 = vunpack.c.l.b16 %v1959
        %v2550 = vunpack.c.h.b16 %v1959
        %v2551 = vunpack.c.l.b16 %v1960
        %v2552 = vunpack.c.l.b16 %v1961
        %v2553 = vunpack.c.h.b16 %v1961
        %v2554 = vunpack.c.l.b16 %v1962
        %v2555 = vunpack.c.l.b16 %v1963
        %v2556 = vunpack.c.h.b16 %v1963
        %v2557 = vunpack.c.l.b16 %v1964
        %v2558 = vunpack.c.l.b16 %v1965
        %v2559 = vunpack.c.h.b16 %v1965
        %v2560 = vunpack.c.l.b16 %v1966
        %v2561 = vunpack.c.l.b16 %v1967
        %v2562 = vunpack.c.h.b16 %v1967
        %v2563 = vunpack.c.l.b16 %v1968
        %v2564 = vunpack.c.l.b16 %v1969
        %v2565 = vunpack.c.h.b16 %v1969
        %v2566 = vunpack.c.l.b16 %v1970
        %v2567 = vunpack.c.l.b16 %v1971
        %v2568 = vunpack.c.h.b16 %v1971
        %v2569 = vunpack.c.l.b16 %v1972
        %v2570 = vunpack.c.l.b16 %v1973
        %v2571 = vunpack.c.h.b16 %v1973
        %v2572 = vunpack.c.l.b16 %v1974
        %v2573 = vunpack.c.l.b16 %v1975
        %v2574 = vunpack.c.h.b16 %v1975
        %v2575 = vunpack.c.l.b16 %v1976
        %v2576 = vunpack.c.l.b16 %v1977
        %v2577 = vunpack.c.h.b16 %v1977
        %v2578 = vunpack.c.l.b16 %v1978
        %v2579 = vunpack.c.l.b16 %v1979
        %v2580 = vunpack.c.h.b16 %v1979
        %v2581 = vunpack.c.l.b16 %v1980
        %v2582 = vunpack.c.l.b16 %v1981
        %v2583 = vunpack.c.h.b16 %v1981
        %v2584 = vunpack.c.l.b16 %v1982
        %v2585 = vunpack.c.l.b16 %v1983
        %v2586 = vunpack.c.h.b16 %v1983
        %v2587 = vunpack.c.l.b16 %v1984
        %v2588 = vunpack.c.l.b16 %v1985
        %v2589 = vunpack.c.h.b16 %v1985
        %v2590 = vunpack.c.l.b16 %v1986
        %v2591 = vunpack.c.l.b16 %v1987
        %v2592 = vunpack.c.h.b16 %v1987
        %v2593 = vunpack.c.l.b16 %v1988
        %v2594 = vunpack.c.l.b16 %v1989
        %v2595 = vunpack.c.h.b16 %v1989
        %v2596 = vunpack.c.l.b16 %v1990
        %v2597 = vunpack.c.l.b16 %v1991
        %v2598 = vunpack.c.h.b16 %v1991
        %v2599 = vunpack.c.l.b16 %v1992
        %v2600 = vunpack.c.l.b16 %v1993
        %v2601 = vunpack.c.h.b16 %v1993
        %v2602 = vunpack.c.l.b16 %v1994
        %v2603 = vunpack.c.l.b16 %v1995
        %v2604 = vunpack.c.h.b16 %v1995
        %v2605 = vunpack.c.l.b16 %v1996
        %v2606 = vunpack.c.l.b16 %v1997
        %v2607 = vunpack.c.h.b16 %v1997
        %v2608 = vunpack.c.l.b16 %v1998
        %v2609 = vunpack.c.l.b16 %v1999
        %v2610 = vunpack.c.h.b16 %v1999
        %v2611 = vunpack.c.l.b16 %v2000
        %v2612 = vunpack.c.l.b16 %v2001
        %v2613 = vunpack.c.h.b16 %v2001
        %v2614 = vunpack.c.l.b16 %v2002
        %v2615 = vunpack.c.l.b16 %v2003
        %v2616 = vunpack.c.h.b16 %v2003
        %v2617 = vunpack.c.l.b16 %v2004
        %v2618 = vunpack.c.l.b16 %v2005
        %v2619 = vunpack.c.h.b16 %v2005
        %v2620 = vunpack.c.l.b16 %v2006
        %v2621 = vunpack.c.l.b16 %v2007
        %v2622 = vunpack.c.h.b16 %v2007
        %v2623 = vunpack.c.l.b16 %v2008
        %v2624 = vunpack.c.l.b16 %v2009
        %v2625 = vunpack.c.h.b16 %v2009
        %v2626 = vunpack.c.l.b16 %v2010
        %v2627 = vunpack.c.l.b16 %v2011
        %v2628 = vunpack.c.h.b16 %v2011
        %v2629 = vunpack.c.l.b16 %v2012
        %v2630 = vunpack.c.l.b16 %v2013
        %v2631 = vunpack.c.h.b16 %v2013
        %v2632 = vunpack.c.l.b16 %v2014
        %v2633 = vunpack.c.l.b16 %v2015
        %v2634 = vunpack.c.h.b16 %v2015
        %v2635 = vunpack.c.l.b16 %v2016
        %v2636 = vunpack.c.l.b16 %v2017
        %v2637 = vunpack.c.h.b16 %v2017
        %v2638 = vunpack.c.l.b16 %v2018
        %v2639 = vunpack.c.l.b16 %v2019
        %v2640 = vunpack.c.h.b16 %v2019
        %v2641 = vunpack.c.l.b16 %v2020
        %v2642 = vunpack.c.l.b16 %v2021
        %v2643 = vunpack.c.h.b16 %v2021
        %v2644 = vunpack.c.l.b16 %v2022
        %v2645 = vunpack.c.l.b16 %v2023
        %v2646 = vunpack.c.h.b16 %v2023
        %v2647 = vunpack.c.l.b16 %v2024
        %v2648 = vunpack.c.l.b16 %v2025
        %v2649 = vunpack.c.h.b16 %v2025
        %v2650 = vunpack.c.l.b16 %v2026
        %v2651 = vunpack.c.l.b16 %v2027
        %v2652 = vunpack.c.h.b16 %v2027
        %v2653 = vunpack.c.l.b16 %v2028
        %v2654 = vunpack.c.l.b16 %v2029
        %v2655 = vunpack.c.h.b16 %v2029
        %v2656 = vunpack.c.l.b16 %v2030
        %v2657 = vunpack.c.l.b16 %v2031
        %v2658 = vunpack.c.h.b16 %v2031
        %v2659 = vunpack.c.l.b16 %v2032
        %v2660 = vunpack.c.l.b16 %v2033
        %v2661 = vunpack.c.h.b16 %v2033
        %v2662 = vunpack.c.l.b16 %v2034
        %v2663 = vunpack.c.l.b16 %v2035
        %v2664 = vunpack.c.h.b16 %v2035
        %v2665 = vunpack.c.l.b16 %v2036
        %v2666 = vunpack.c.l.b16 %v2037
        %v2667 = vunpack.c.h.b16 %v2037
        %v2668 = vunpack.c.l.b16 %v2038
        %v2669 = vunpack.c.l.b16 %v2039
        %v2670 = vunpack.c.h.b16 %v2039
        %v2671 = vunpack.c.l.b16 %v2040
        %v2672 = vunpack.c.l.b16 %v2041
        %v2673 = vunpack.c.h.b16 %v2041
        %v2674 = vunpack.c.l.b16 %v2042
        %v2675 = vunpack.c.l.b16 %v2043
        %v2676 = vunpack.c.h.b16 %v2043
        %v2677 = vunpack.c.l.b16 %v2044
        %v2678 = vunpack.c.l.b16 %v2045
        %v2679 = vunpack.c.h.b16 %v2045
        %v2680 = vunpack.c.l.b16 %v2046
        %v2681 = vunpack.c.l.b16 %v2047
        %v2682 = vunpack.c.h.b16 %v2047
        %v2683 = vunpack.c.l.b16 %v2048
        %v2684 = vunpack.c.l.b16 %v2049
        %v2685 = vunpack.c.h.b16 %v2049
        %v2686 = vunpack.c.l.b16 %v2050
        %v2687 = vunpack.c.l.b16 %v2051
        %v2688 = vunpack.c.h.b16 %v2051
        %v2689 = vunpack.c.l.b16 %v2052
        %v2690 = vunpack.c.l.b16 %v2053
        %v2691 = vunpack.c.h.b16 %v2053
        %v2692 = vunpack.c.l.b16 %v2054
        %v2693 = vunpack.c.l.b16 %v2055
        %v2694 = vunpack.c.h.b16 %v2055
        %v2695 = vunpack.c.l.b16 %v2056
        %v2696 = vunpack.c.l.b16 %v2057
        %v2697 = vunpack.c.h.b16 %v2057
        %v2698 = vunpack.c.l.b16 %v2058
        %v2699 = vunpack.c.l.b16 %v2059
        %v2700 = vunpack.c.h.b16 %v2059
        %v2701 = vunpack.c.l.b16 %v2060
        %v2702 = vunpack.c.l.b16 %v2061
        %v2703 = vunpack.c.h.b16 %v2061
        %v2704 = vunpack.c.l.b16 %v2062
        %v2705 = vunpack.c.l.b16 %v2063
        %v2706 = vunpack.c.h.b16 %v2063
        %v2707 = vunpack.c.l.b16 %v2064
        %v2708 = vunpack.c.l.b16 %v2065
        %v2709 = vunpack.c.h.b16 %v2065
        %v2710 = vunpack.c.l.b16 %v2066
        %v2711 = vunpack.c.l.b16 %v2067
        %v2712 = vunpack.c.h.b16 %v2067
        %v2713 = vunpack.c.l.b16 %v2068
        %v2714 = vunpack.c.l.b16 %v2069
        %v2715 = vunpack.c.h.b16 %v2069
        %v2716 = vunpack.c.l.b16 %v2070
        %v2717 = vunpack.c.l.b16 %v2071
        %v2718 = vunpack.c.h.b16 %v2071
        %v2719 = vunpack.c.l.b16 %v2072
        %v2720 = vunpack.c.l.b16 %v2073
        %v2721 = vunpack.c.h.b16 %v2073
        %v2722 = vunpack.c.l.b16 %v2074
        %v2723 = vunpack.c.l.b16 %v2075
        %v2724 = vunpack.c.h.b16 %v2075
        %v2725 = vunpack.c.l.b16 %v2076
        %v2726 = vunpack.c.l.b16 %v2077
        %v2727 = vunpack.c.h.b16 %v2077
        %v2728 = vunpack.c.l.b16 %v2078
        %v2729 = vunpack.c.l.b16 %v2079
        %v2730 = vunpack.c.h.b16 %v2079
        %v2731 = vunpack.c.l.b16 %v2080
        %v2732 = vunpack.c.l.b16 %v2081
        %v2733 = vunpack.c.h.b16 %v2081
        %v2734 = vunpack.c.l.b16 %v2082
        %v2735 = vunpack.c.l.b16 %v2083
        %v2736 = vunpack.c.h.b16 %v2083
        %v2737 = vunpack.c.l.b16 %v2084
        %v2738 = vunpack.c.l.b16 %v2085
        %v2739 = vunpack.c.h.b16 %v2085
        %v2740 = vunpack.c.l.b16 %v2086
        %v2741 = vunpack.c.l.b16 %v2087
        %v2742 = vunpack.c.h.b16 %v2087
        %v2743 = vunpack.c.l.b16 %v2088
        %v2744 = vunpack.c.l.b16 %v2089
        %v2745 = vunpack.c.h.b16 %v2089
        %v2746 = vunpack.c.l.b16 %v2090
        %v2747 = vunpack.c.l.b16 %v2091
        %v2748 = vunpack.c.h.b16 %v2091
        %v2749 = vunpack.c.l.b16 %v2092
        %v2750 = vunpack.c.l.b16 %v2093
        %v2751 = vunpack.c.h.b16 %v2093
        %v2752 = vunpack.c.l.b16 %v2094
        %v2753 = vunpack.c.l.b16 %v2095
        %v2754 = vunpack.c.h.b16 %v2095
        %v2755 = vunpack.c.l.b16 %v2096
        %v2756 = vunpack.c.l.b16 %v2097
        %v2757 = vunpack.c.h.b16 %v2097
        %v2758 = vunpack.c.l.b16 %v2098
        %v2759 = vunpack.c.l.b16 %v2099
        %v2760 = vunpack.c.h.b16 %v2099
        %v2761 = vunpack.c.l.b16 %v2100
        %v2762 = vunpack.c.l.b16 %v2101
        %v2763 = vunpack.c.h.b16 %v2101
        %v2764 = vunpack.c.l.b16 %v2102
        %v2765 = vunpack.c.l.b16 %v2103
        %v2766 = vunpack.c.h.b16 %v2103
        %v2767 = vunpack.c.l.b16 %v2104
        %v2768 = vunpack.c.l.b16 %v2105
        %v2769 = vunpack.c.h.b16 %v2105
        %v2770 = vunpack.c.l.b16 %v2106
        %v2771 = vunpack.c.l.b16 %v2107
        %v2772 = vunpack.c.h.b16 %v2107
        %v2773 = vunpack.c.l.b16 %v2108
        %v2774 = vunpack.c.l.b16 %v2109
        %v2775 = vunpack.c.h.b16 %v2109
        %v2776 = vunpack.c.l.b16 %v2110
        %v2777 = vunpack.c.l.b16 %v2111
        %v2778 = vunpack.c.h.b16 %v2111
        %v2779 = vunpack.c.l.b16 %v2112
        %v2780 = vunpack.c.l.b16 %v2113
        %v2781 = vunpack.c.h.b16 %v2113
        %v2782 = vunpack.c.l.b16 %v2114
        %v2783 = vunpack.c.l.b16 %v2115
        %v2784 = vunpack.c.h.b16 %v2115
        %v2785 = vunpack.c.l.b16 %v2116
        %v2786 = vunpack.c.l.b16 %v2117
        %v2787 = vunpack.c.h.b16 %v2117
        %v2788 = vunpack.c.l.b16 %v2118
        %v2789 = vunpack.c.l.b16 %v2119
        %v2790 = vunpack.c.h.b16 %v2119
        %v2791 = vunpack.c.l.b16 %v2120
        %v2792 = vunpack.c.l.b16 %v2121
        %v2793 = vunpack.c.h.b16 %v2121
        %v2794 = vunpack.c.l.b16 %v2122
        %v2795 = vunpack.c.l.b16 %v2123
        %v2796 = vunpack.c.h.b16 %v2123
        %v2797 = vunpack.c.l.b16 %v2124
        %v2798 = vunpack.c.l.b16 %v2125
        %v2799 = vunpack.c.h.b16 %v2125
        %v2800 = vunpack.c.l.b16 %v2126
        %v2801 = vunpack.c.l.b16 %v2127
        %v2802 = vunpack.c.h.b16 %v2127
        %v2803 = vunpack.c.l.b16 %v2128
        %v2804 = vunpack.c.l.b16 %v2129
        %v2805 = vunpack.c.h.b16 %v2129
        %v2806 = vunpack.c.l.b16 %v2130
        %v2807 = vunpack.c.l.b16 %v2131
        %v2808 = vunpack.c.h.b16 %v2131
        %v2809 = vunpack.c.l.b16 %v2132
        %v2810 = vunpack.c.l.b16 %v2133
        %v2811 = vunpack.c.h.b16 %v2133
        %v2812 = vunpack.c.l.b16 %v2134
        %v2813 = vunpack.c.l.b16 %v2135
        %v2814 = vunpack.c.h.b16 %v2135
        %v2815 = vunpack.c.l.b16 %v2136
        %v2816 = vunpack.c.l.b16 %v2137
        %v2817 = vunpack.c.h.b16 %v2137
        %v2818 = vunpack.c.l.b16 %v2138
        %v2819 = vunpack.c.l.b16 %v2139
        %v2820 = vunpack.c.h.b16 %v2139
        %v2821 = vunpack.c.l.b16 %v2140
        %v2822 = vunpack.c.l.b16 %v2141
        %v2823 = vunpack.c.h.b16 %v2141
        %v2824 = vunpack.c.l.b16 %v2142
        %v2825 = vunpack.c.l.b16 %v2143
        %v2826 = vunpack.c.h.b16 %v2143
        %v2827 = vunpack.c.l.b16 %v2144
        %v2828 = vunpack.c.l.b16 %v2145
        %v2829 = vunpack.c.h.b16 %v2145
        %v2830 = vunpack.c.l.b16 %v2146
        %v2831 = vunpack.c.l.b16 %v2147
        %v2832 = vunpack.c.h.b16 %v2147
        %v2833 = vunpack.c.l.b16 %v2148
        %v2834 = vunpack.c.l.b16 %v2149
        %v2835 = vunpack.c.h.b16 %v2149
        %v2836 = vunpack.c.l.b16 %v2150
        %v2837 = vunpack.c.l.b16 %v2151
        %v2838 = vunpack.c.h.b16 %v2151
        %v2839 = vunpack.c.l.b16 %v2152
        %v2840 = vunpack.c.l.b16 %v2153
        %v2841 = vunpack.c.h.b16 %v2153
        %v2842 = vunpack.c.l.b16 %v2154
        %v2843 = vunpack.c.l.b16 %v2155
        %v2844 = vunpack.c.h.b16 %v2155
        %v2845 = vunpack.c.l.b16 %v2156
        %v2846 = vunpack.c.l.b16 %v2157
        %v2847 = vunpack.c.h.b16 %v2157
        %v2848 = vunpack.c.l.b16 %v2158
        %v2849 = vunpack.c.l.b16 %v2159
        %v2850 = vunpack.c.h.b16 %v2159
        %v2851 = vunpack.c.l.b16 %v2160
        %v2852 = vunpack.c.l.b16 %v2161
        %v2853 = vunpack.c.h.b16 %v2161
        %v2854 = vunpack.c.l.b16 %v2162
        %v2855 = vunpack.c.l.b16 %v2163
        %v2856 = vunpack.c.h.b16 %v2163
        %v2857 = vunpack.c.l.b16 %v2164
        %v2858 = vunpack.c.l.b16 %v2165
        %v2859 = vunpack.c.h.b16 %v2165
        %v2860 = vunpack.c.l.b16 %v2166
        %v2861 = vunpack.c.l.b16 %v2167
        %v2862 = vunpack.c.h.b16 %v2167
        %v2863 = vunpack.c.l.b16 %v2168
        %v2864 = vpack.c.b16 %v2483, %v2480
        %v2865 = vpack.c.b16 %v2484, %v2481
        %v2866 = vpack.c.b16 %v2485, %v2482
        %v2867 = vpack.c.b16 %v2489, %v2486
        %v2868 = vpack.c.b16 %v2490, %v2487
        %v2869 = vpack.c.b16 %v2491, %v2488
        %v2870 = vpack.c.b16 %v2495, %v2492
        %v2871 = vpack.c.b16 %v2496, %v2493
        %v2872 = vpack.c.b16 %v2497, %v2494
        %v2873 = vpack.c.b16 %v2501, %v2498
        %v2874 = vpack.c.b16 %v2502, %v2499
        %v2875 = vpack.c.b16 %v2503, %v2500
        %v2876 = vpack.c.b16 %v2507, %v2504
        %v2877 = vpack.c.b16 %v2508, %v2505
        %v2878 = vpack.c.b16 %v2509, %v2506
        %v2879 = vpack.c.b16 %v2513, %v2510
        %v2880 = vpack.c.b16 %v2514, %v2511
        %v2881 = vpack.c.b16 %v2515, %v2512
        %v2882 = vpack.c.b16 %v2519, %v2516
        %v2883 = vpack.c.b16 %v2520, %v2517
        %v2884 = vpack.c.b16 %v2521, %v2518
        %v2885 = vpack.c.b16 %v2525, %v2522
        %v2886 = vpack.c.b16 %v2526, %v2523
        %v2887 = vpack.c.b16 %v2527, %v2524
        %v2888 = vpack.c.b16 %v2531, %v2528
        %v2889 = vpack.c.b16 %v2532, %v2529
        %v2890 = vpack.c.b16 %v2533, %v2530
        %v2891 = vpack.c.b16 %v2537, %v2534
        %v2892 = vpack.c.b16 %v2538, %v2535
        %v2893 = vpack.c.b16 %v2539, %v2536
        %v2894 = vpack.c.b16 %v2543, %v2540
        %v2895 = vpack.c.b16 %v2544, %v2541
        %v2896 = vpack.c.b16 %v2545, %v2542
        %v2897 = vpack.c.b16 %v2549, %v2546
        %v2898 = vpack.c.b16 %v2550, %v2547
        %v2899 = vpack.c.b16 %v2551, %v2548
        %v2900 = vpack.c.b16 %v2555, %v2552
        %v2901 = vpack.c.b16 %v2556, %v2553
        %v2902 = vpack.c.b16 %v2557, %v2554
        %v2903 = vpack.c.b16 %v2561, %v2558
        %v2904 = vpack.c.b16 %v2562, %v2559
        %v2905 = vpack.c.b16 %v2563, %v2560
        %v2906 = vpack.c.b16 %v2567, %v2564
        %v2907 = vpack.c.b16 %v2568, %v2565
        %v2908 = vpack.c.b16 %v2569, %v2566
        %v2909 = vpack.c.b16 %v2573, %v2570
        %v2910 = vpack.c.b16 %v2574, %v2571
        %v2911 = vpack.c.b16 %v2575, %v2572
        %v2912 = vpack.c.b16 %v2579, %v2576
        %v2913 = vpack.c.b16 %v2580, %v2577
        %v2914 = vpack.c.b16 %v2581, %v2578
        %v2915 = vpack.c.b16 %v2585, %v2582
        %v2916 = vpack.c.b16 %v2586, %v2583
        %v2917 = vpack.c.b16 %v2587, %v2584
        %v2918 = vpack.c.b16 %v2591, %v2588
        %v2919 = vpack.c.b16 %v2592, %v2589
        %v2920 = vpack.c.b16 %v2593, %v2590
        %v2921 = vpack.c.b16 %v2597, %v2594
        %v2922 = vpack.c.b16 %v2598, %v2595
        %v2923 = vpack.c.b16 %v2599, %v2596
        %v2924 = vpack.c.b16 %v2603, %v2600
        %v2925 = vpack.c.b16 %v2604, %v2601
        %v2926 = vpack.c.b16 %v2605, %v2602
        %v2927 = vpack.c.b16 %v2609, %v2606
        %v2928 = vpack.c.b16 %v2610, %v2607
        %v2929 = vpack.c.b16 %v2611, %v2608
        %v2930 = vpack.c.b16 %v2615, %v2612
        %v2931 = vpack.c.b16 %v2616, %v2613
        %v2932 = vpack.c.b16 %v2617, %v2614
        %v2933 = vpack.c.b16 %v2621, %v2618
        %v2934 = vpack.c.b16 %v2622, %v2619
        %v2935 = vpack.c.b16 %v2623, %v2620
        %v2936 = vpack.c.b16 %v2627, %v2624
        %v2937 = vpack.c.b16 %v2628, %v2625
        %v2938 = vpack.c.b16 %v2629, %v2626
        %v2939 = vpack.c.b16 %v2633, %v2630
        %v2940 = vpack.c.b16 %v2634, %v2631
        %v2941 = vpack.c.b16 %v2635, %v2632
        %v2942 = vpack.c.b16 %v2639, %v2636
        %v2943 = vpack.c.b16 %v2640, %v2637
        %v2944 = vpack.c.b16 %v2641, %v2638
        %v2945 = vpack.c.b16 %v2645, %v2642
        %v2946 = vpack.c.b16 %v2646, %v2643
        %v2947 = vpack.c.b16 %v2647, %v2644
        %v2948 = vpack.c.b16 %v2651, %v2648
        %v2949 = vpack.c.b16 %v2652, %v2649
        %v2950 = vpack.c.b16 %v2653, %v2650
        %v2951 = vpack.c.b16 %v2657, %v2654
        %v2952 = vpack.c.b16 %v2658, %v2655
        %v2953 = vpack.c.b16 %v2659, %v2656
        %v2954 = vpack.c.b16 %v2663, %v2660
        %v2955 = vpack.c.b16 %v2664, %v2661
        %v2956 = vpack.c.b16 %v2665, %v2662
        %v2957 = vpack.c.b16 %v2669, %v2666
        %v2958 = vpack.c.b16 %v2670, %v2667
        %v2959 = vpack.c.b16 %v2671, %v2668
        %v2960 = vpack.c.b16 %v2675, %v2672
        %v2961 = vpack.c.b16 %v2676, %v2673
        %v2962 = vpack.c.b16 %v2677, %v2674
        %v2963 = vpack.c.b16 %v2681, %v2678
        %v2964 = vpack.c.b16 %v2682, %v2679
        %v2965 = vpack.c.b16 %v2683, %v2680
        %v2966 = vpack.c.b16 %v2687, %v2684
        %v2967 = vpack.c.b16 %v2688, %v2685
        %v2968 = vpack.c.b16 %v2689, %v2686
        %v2969 = vpack.c.b16 %v2693, %v2690
        %v2970 = vpack.c.b16 %v2694, %v2691
        %v2971 = vpack.c.b16 %v2695, %v2692
        %v2972 = vpack.c.b16 %v2699, %v2696
        %v2973 = vpack.c.b16 %v2700, %v2697
        %v2974 = vpack.c.b16 %v2701, %v2698
        %v2975 = vpack.c.b16 %v2705, %v2702
        %v2976 = vpack.c.b16 %v2706, %v2703
        %v2977 = vpack.c.b16 %v2707, %v2704
        %v2978 = vpack.c.b16 %v2711, %v2708
        %v2979 = vpack.c.b16 %v2712, %v2709
        %v2980 = vpack.c.b16 %v2713, %v2710
        %v2981 = vpack.c.b16 %v2717, %v2714
        %v2982 = vpack.c.b16 %v2718, %v2715
        %v2983 = vpack.c.b16 %v2719, %v2716
        %v2984 = vpack.c.b16 %v2723, %v2720
        %v2985 = vpack.c.b16 %v2724, %v2721
        %v2986 = vpack.c.b16 %v2725, %v2722
        %v2987 = vpack.c.b16 %v2729, %v2726
        %v2988 = vpack.c.b16 %v2730, %v2727
        %v2989 = vpack.c.b16 %v2731, %v2728
        %v2990 = vpack.c.b16 %v2735, %v2732
        %v2991 = vpack.c.b16 %v2736, %v2733
        %v2992 = vpack.c.b16 %v2737, %v2734
        %v2993 = vpack.c.b16 %v2741, %v2738
        %v2994 = vpack.c.b16 %v2742, %v2739
        %v2995 = vpack.c.b16 %v2743, %v2740
        %v2996 = vpack.c.b16 %v2747, %v2744
        %v2997 = vpack.c.b16 %v2748, %v2745
        %v2998 = vpack.c.b16 %v2749, %v2746
        %v2999 = vpack.c.b16 %v2753, %v2750
        %v3000 = vpack.c.b16 %v2754, %v2751
        %v3001 = vpack.c.b16 %v2755, %v2752
        %v3002 = vpack.c.b16 %v2759, %v2756
        %v3003 = vpack.c.b16 %v2760, %v2757
        %v3004 = vpack.c.b16 %v2761, %v2758
        %v3005 = vpack.c.b16 %v2765, %v2762
        %v3006 = vpack.c.b16 %v2766, %v2763
        %v3007 = vpack.c.b16 %v2767, %v2764
        %v3008 = vpack.c.b16 %v2771, %v2768
        %v3009 = vpack.c.b16 %v2772, %v2769
        %v3010 = vpack.c.b16 %v2773, %v2770
        %v3011 = vpack.c.b16 %v2777, %v2774
        %v3012 = vpack.c.b16 %v2778, %v2775
        %v3013 = vpack.c.b16 %v2779, %v2776
        %v3014 = vpack.c.b16 %v2783, %v2780
        %v3015 = vpack.c.b16 %v2784, %v2781
        %v3016 = vpack.c.b16 %v2785, %v2782
        %v3017 = vpack.c.b16 %v2789, %v2786
        %v3018 = vpack.c.b16 %v2790, %v2787
        %v3019 = vpack.c.b16 %v2791, %v2788
        %v3020 = vpack.c.b16 %v2795, %v2792
        %v3021 = vpack.c.b16 %v2796, %v2793
        %v3022 = vpack.c.b16 %v2797, %v2794
        %v3023 = vpack.c.b16 %v2801, %v2798
        %v3024 = vpack.c.b16 %v2802, %v2799
        %v3025 = vpack.c.b16 %v2803, %v2800
        %v3026 = vpack.c.b16 %v2807, %v2804
        %v3027 = vpack.c.b16 %v2808, %v2805
        %v3028 = vpack.c.b16 %v2809, %v2806
        %v3029 = vpack.c.b16 %v2813, %v2810
        %v3030 = vpack.c.b16 %v2814, %v2811
        %v3031 = vpack.c.b16 %v2815, %v2812
        %v3032 = vpack.c.b16 %v2819, %v2816
        %v3033 = vpack.c.b16 %v2820, %v2817
        %v3034 = vpack.c.b16 %v2821, %v2818
        %v3035 = vpack.c.b16 %v2825, %v2822
        %v3036 = vpack.c.b16 %v2826, %v2823
        %v3037 = vpack.c.b16 %v2827, %v2824
        %v3038 = vpack.c.b16 %v2831, %v2828
        %v3039 = vpack.c.b16 %v2832, %v2829
        %v3040 = vpack.c.b16 %v2833, %v2830
        %v3041 = vpack.c.b16 %v2837, %v2834
        %v3042 = vpack.c.b16 %v2838, %v2835
        %v3043 = vpack.c.b16 %v2839, %v2836
        %v3044 = vpack.c.b16 %v2843, %v2840
        %v3045 = vpack.c.b16 %v2844, %v2841
        %v3046 = vpack.c.b16 %v2845, %v2842
        %v3047 = vpack.c.b16 %v2849, %v2846
        %v3048 = vpack.c.b16 %v2850, %v2847
        %v3049 = vpack.c.b16 %v2851, %v2848
        %v3050 = vpack.c.b16 %v2855, %v2852
        %v3051 = vpack.c.b16 %v2856, %v2853
        %v3052 = vpack.c.b16 %v2857, %v2854
        %v3053 = vpack.c.b16 %v2861, %v2858
        %v3054 = vpack.c.b16 %v2862, %v2859
        %v3055 = vpack.c.b16 %v2863, %v2860
        %v3296 = vunpack.c.l.b16 %v2169
        %v3297 = vunpack.c.l.b16 %v2170
        %v3298 = vunpack.c.l.b16 %v2171
        %v3299 = vunpack.c.l.b16 %v2172
        %v3300 = vunpack.c.l.b16 %v2173
        %v3301 = vunpack.c.l.b16 %v2174
        %v3302 = vunpack.c.l.b16 %v2175
        %v3303 = vunpack.c.l.b16 %v2176
        %v3304 = vunpack.c.l.b16 %v2177
        %v3305 = vunpack.c.l.b16 %v2178
        %v3306 = vunpack.c.l.b16 %v2179
        %v3307 = vunpack.c.l.b16 %v2180
        %v3308 = vunpack.c.l.b16 %v2181
        %v3309 = vunpack.c.l.b16 %v2182
        %v3310 = vunpack.c.l.b16 %v2183
        %v3311 = vunpack.c.l.b16 %v2184
        %v3312 = vunpack.c.l.b16 %v2185
        %v3313 = vunpack.c.l.b16 %v2186
        %v3314 = vunpack.c.l.b16 %v2187
        %v3315 = vunpack.c.l.b16 %v2188
        %v3316 = vunpack.c.l.b16 %v2189
        %v3317 = vunpack.c.l.b16 %v2190
        %v3318 = vunpack.c.l.b16 %v2191
        %v3319 = vunpack.c.l.b16 %v2192
        %v3320 = vunpack.c.l.b16 %v2193
        %v3321 = vunpack.c.l.b16 %v2194
        %v3322 = vunpack.c.l.b16 %v2195
        %v3323 = vunpack.c.l.b16 %v2196
        %v3324 = vunpack.c.l.b16 %v2197
        %v3325 = vunpack.c.l.b16 %v2198
        %v3326 = vunpack.c.l.b16 %v2199
        %v3327 = vunpack.c.l.b16 %v2200
        %v3328 = vunpack.c.l.b16 %v2201
        %v3329 = vunpack.c.l.b16 %v2202
        %v3330 = vunpack.c.l.b16 %v2203
        %v3331 = vunpack.c.l.b16 %v2204
        %v3332 = vunpack.c.l.b16 %v2205
        %v3333 = vunpack.c.l.b16 %v2206
        %v3334 = vunpack.c.l.b16 %v2207
        %v3335 = vunpack.c.l.b16 %v2208
        %v3336 = vunpack.c.l.b16 %v2209
        %v3337 = vunpack.c.l.b16 %v2210
        %v3338 = vunpack.c.l.b16 %v2211
        %v3339 = vunpack.c.l.b16 %v2212
        %v3340 = vunpack.c.l.b16 %v2213
        %v3341 = vunpack.c.l.b16 %v2214
        %v3342 = vunpack.c.l.b16 %v2215
        %v3343 = vunpack.c.l.b16 %v2216
        %v3344 = vpack.c.b16 %v3297, %v3296
        %v3345 = vpack.c.b16 %v3299, %v3298
        %v3346 = vpack.c.b16 %v3301, %v3300
        %v3347 = vpack.c.b16 %v3303, %v3302
        %v3348 = vpack.c.b16 %v3305, %v3304
        %v3349 = vpack.c.b16 %v3307, %v3306
        %v3350 = vpack.c.b16 %v3309, %v3308
        %v3351 = vpack.c.b16 %v3311, %v3310
        %v3352 = vpack.c.b16 %v3313, %v3312
        %v3353 = vpack.c.b16 %v3315, %v3314
        %v3354 = vpack.c.b16 %v3317, %v3316
        %v3355 = vpack.c.b16 %v3319, %v3318
        %v3356 = vpack.c.b16 %v3321, %v3320
        %v3357 = vpack.c.b16 %v3323, %v3322
        %v3358 = vpack.c.b16 %v3325, %v3324
        %v3359 = vpack.c.b16 %v3327, %v3326
        %v3360 = vpack.c.b16 %v3329, %v3328
        %v3361 = vpack.c.b16 %v3331, %v3330
        %v3362 = vpack.c.b16 %v3333, %v3332
        %v3363 = vpack.c.b16 %v3335, %v3334
        %v3364 = vpack.c.b16 %v3337, %v3336
        %v3365 = vpack.c.b16 %v3339, %v3338
        %v3366 = vpack.c.b16 %v3341, %v3340
        %v3367 = vpack.c.b16 %v3343, %v3342
        %3392 = vmatprep.subr.bf16.mxu0 0
        %3393 = vmatpush1.bf16.msra.mxu0 %v3351
        %3394 = vmatprep.subr.bf16.mxu0 0
        %3395 = vmatpush1.bf16.msra.mxu0 %v3350
        %3396 = vmatprep.subr.bf16.mxu0 0
        %3397 = vmatpush1.bf16.msra.mxu0 %v3349
        %3398 = vmatprep.subr.bf16.mxu0 0
        %3399 = vmatpush1.bf16.msra.mxu0 %v3348
        %3400 = vmatprep.subr.bf16.mxu0 0
        %3401 = vmatpush1.bf16.msra.mxu0 %v3347
        %3402 = vmatprep.subr.bf16.mxu0 0
        %3403 = vmatpush1.bf16.msra.mxu0 %v3346
        %3404 = vmatprep.subr.bf16.mxu0 0
        %3405 = vmatpush1.bf16.msra.mxu0 %v3345
        %3406 = vmatprep.subr.bf16.mxu0 0
        %3407 = vmatpush1.bf16.msra.mxu0 %v3344
        %3408 = vmatprep.subr.bf16.mxu0 0
        %3409 = vmatpush2.bf16.msra.mxu0 %v3359
        %3410 = vmatprep.subr.bf16.mxu0 0
        %3411 = vmatpush2.bf16.msra.mxu0 %v3358
        %3412 = vmatprep.subr.bf16.mxu0 0
        %3413 = vmatpush2.bf16.msra.mxu0 %v3357
        %3414 = vmatprep.subr.bf16.mxu0 0
        %3415 = vmatpush2.bf16.msra.mxu0 %v3356
        %3416 = vmatprep.subr.bf16.mxu0 0
        %3417 = vmatpush2.bf16.msra.mxu0 %v3355
        %3418 = vmatprep.subr.bf16.mxu0 0
        %3419 = vmatpush2.bf16.msra.mxu0 %v3354
        %3420 = vmatprep.subr.bf16.mxu0 0
        %3421 = vmatpush2.bf16.msra.mxu0 %v3353
        %3422 = vmatprep.subr.bf16.mxu0 0
        %3423 = vmatpush2.bf16.msra.mxu0 %v3352
        %3424 = vmatprep.mubr.bf16.mxu0 %v2865
        %3425 = vmatmul.mubr.bf16.gmra.mxu0 %v2864
        %v3426 = vpop.f32.mrf.mxu0
        %v3427 = vadd.f32 %v2222, %v3426
        %v3428 = vpop.f32.mrf.mxu0
        %v3429 = vpop.f32.mrf.mxu0
        %v3430 = vadd.f32 %v2222, %v3429
        %v3431 = vpop.f32.mrf.mxu0
        %3432 = vmatprep.mubr.bf16.mxu0 %v2868
        %3433 = vmatmul.mubr.bf16.gmra.mxu0 %v2867
        %v3434 = vpop.f32.mrf.mxu0
        %v3435 = vadd.f32 %v2222, %v3434
        %v3436 = vpop.f32.mrf.mxu0
        %v3437 = vpop.f32.mrf.mxu0
        %v3438 = vadd.f32 %v2222, %v3437
        %v3439 = vpop.f32.mrf.mxu0
        %3440 = vmatprep.mubr.bf16.mxu0 %v2871
        %3441 = vmatmul.mubr.bf16.gmra.mxu0 %v2870
        %v3442 = vpop.f32.mrf.mxu0
        %v3443 = vadd.f32 %v2222, %v3442
        %v3444 = vpop.f32.mrf.mxu0
        %v3445 = vpop.f32.mrf.mxu0
        %v3446 = vadd.f32 %v2222, %v3445
        %v3447 = vpop.f32.mrf.mxu0
        %3448 = vmatprep.mubr.bf16.mxu0 %v2874
        %3449 = vmatmul.mubr.bf16.gmra.mxu0 %v2873
        %v3450 = vpop.f32.mrf.mxu0
        %v3451 = vadd.f32 %v2222, %v3450
        %v3452 = vpop.f32.mrf.mxu0
        %v3453 = vpop.f32.mrf.mxu0
        %v3454 = vadd.f32 %v2222, %v3453
        %v3455 = vpop.f32.mrf.mxu0
        %3456 = vmatprep.mubr.bf16.mxu0 %v2877
        %3457 = vmatmul.mubr.bf16.gmra.mxu0 %v2876
        %v3458 = vpop.f32.mrf.mxu0
        %v3459 = vadd.f32 %v2222, %v3458
        %v3460 = vpop.f32.mrf.mxu0
        %v3461 = vpop.f32.mrf.mxu0
        %v3462 = vadd.f32 %v2222, %v3461
        %v3463 = vpop.f32.mrf.mxu0
        %3464 = vmatprep.mubr.bf16.mxu0 %v2880
        %3465 = vmatmul.mubr.bf16.gmra.mxu0 %v2879
        %v3466 = vpop.f32.mrf.mxu0
        %v3467 = vadd.f32 %v2222, %v3466
        %v3468 = vpop.f32.mrf.mxu0
        %v3469 = vpop.f32.mrf.mxu0
        %v3470 = vadd.f32 %v2222, %v3469
        %v3471 = vpop.f32.mrf.mxu0
        %3472 = vmatprep.mubr.bf16.mxu0 %v2883
        %3473 = vmatmul.mubr.bf16.gmra.mxu0 %v2882
        %v3474 = vpop.f32.mrf.mxu0
        %v3475 = vadd.f32 %v2222, %v3474
        %v3476 = vpop.f32.mrf.mxu0
        %v3477 = vpop.f32.mrf.mxu0
        %v3478 = vadd.f32 %v2222, %v3477
        %v3479 = vpop.f32.mrf.mxu0
        %3480 = vmatprep.mubr.bf16.mxu0 %v2886
        %3481 = vmatmul.mubr.bf16.gmra.mxu0 %v2885
        %v3482 = vpop.f32.mrf.mxu0
        %v3483 = vadd.f32 %v2222, %v3482
        %v3484 = vpop.f32.mrf.mxu0
        %v3485 = vpop.f32.mrf.mxu0
        %v3486 = vadd.f32 %v2222, %v3485
        %v3487 = vpop.f32.mrf.mxu0
        %3488 = vmatprep.mubr.bf16.mxu0 %v2889
        %3489 = vmatmul.mubr.bf16.gmra.mxu0 %v2888
        %v3490 = vpop.f32.mrf.mxu0
        %v3491 = vadd.f32 %v2222, %v3490
        %v3492 = vpop.f32.mrf.mxu0
        %v3493 = vpop.f32.mrf.mxu0
        %v3494 = vadd.f32 %v2222, %v3493
        %v3495 = vpop.f32.mrf.mxu0
        %3496 = vmatprep.mubr.bf16.mxu0 %v2892
        %3497 = vmatmul.mubr.bf16.gmra.mxu0 %v2891
        %v3498 = vpop.f32.mrf.mxu0
        %v3499 = vadd.f32 %v2222, %v3498
        %v3500 = vpop.f32.mrf.mxu0
        %v3501 = vpop.f32.mrf.mxu0
        %v3502 = vadd.f32 %v2222, %v3501
        %v3503 = vpop.f32.mrf.mxu0
        %3504 = vmatprep.mubr.bf16.mxu0 %v2895
        %3505 = vmatmul.mubr.bf16.gmra.mxu0 %v2894
        %v3506 = vpop.f32.mrf.mxu0
        %v3507 = vadd.f32 %v2222, %v3506
        %v3508 = vpop.f32.mrf.mxu0
        %v3509 = vpop.f32.mrf.mxu0
        %v3510 = vadd.f32 %v2222, %v3509
        %v3511 = vpop.f32.mrf.mxu0
        %3512 = vmatprep.mubr.bf16.mxu0 %v2898
        %3513 = vmatmul.mubr.bf16.gmra.mxu0 %v2897
        %v3514 = vpop.f32.mrf.mxu0
        %v3515 = vadd.f32 %v2222, %v3514
        %v3516 = vpop.f32.mrf.mxu0
        %v3517 = vpop.f32.mrf.mxu0
        %v3518 = vadd.f32 %v2222, %v3517
        %v3519 = vpop.f32.mrf.mxu0
        %3520 = vmatprep.mubr.bf16.mxu0 %v2901
        %3521 = vmatmul.mubr.bf16.gmra.mxu0 %v2900
        %v3522 = vpop.f32.mrf.mxu0
        %v3523 = vadd.f32 %v2222, %v3522
        %v3524 = vpop.f32.mrf.mxu0
        %v3525 = vpop.f32.mrf.mxu0
        %v3526 = vadd.f32 %v2222, %v3525
        %v3527 = vpop.f32.mrf.mxu0
        %3528 = vmatprep.mubr.bf16.mxu0 %v2904
        %3529 = vmatmul.mubr.bf16.gmra.mxu0 %v2903
        %v3530 = vpop.f32.mrf.mxu0
        %v3531 = vadd.f32 %v2222, %v3530
        %v3532 = vpop.f32.mrf.mxu0
        %v3533 = vpop.f32.mrf.mxu0
        %v3534 = vadd.f32 %v2222, %v3533
        %v3535 = vpop.f32.mrf.mxu0
        %3536 = vmatprep.mubr.bf16.mxu0 %v2907
        %3537 = vmatmul.mubr.bf16.gmra.mxu0 %v2906
        %v3538 = vpop.f32.mrf.mxu0
        %v3539 = vadd.f32 %v2222, %v3538
        %v3540 = vpop.f32.mrf.mxu0
        %v3541 = vpop.f32.mrf.mxu0
        %v3542 = vadd.f32 %v2222, %v3541
        %v3543 = vpop.f32.mrf.mxu0
        %3544 = vmatprep.mubr.bf16.mxu0 %v2910
        %3545 = vmatmul.mubr.bf16.gmra.mxu0 %v2909
        %v3546 = vpop.f32.mrf.mxu0
        %v3547 = vadd.f32 %v2222, %v3546
        %v3548 = vpop.f32.mrf.mxu0
        %v3549 = vpop.f32.mrf.mxu0
        %v3550 = vadd.f32 %v2222, %v3549
        %v3551 = vpop.f32.mrf.mxu0
        %3552 = vmatprep.mubr.bf16.mxu0 %v2913
        %3553 = vmatmul.mubr.bf16.gmra.mxu0 %v2912
        %v3554 = vpop.f32.mrf.mxu0
        %v3555 = vadd.f32 %v2222, %v3554
        %v3556 = vpop.f32.mrf.mxu0
        %v3557 = vpop.f32.mrf.mxu0
        %v3558 = vadd.f32 %v2222, %v3557
        %v3559 = vpop.f32.mrf.mxu0
        %3560 = vmatprep.mubr.bf16.mxu0 %v2916
        %3561 = vmatmul.mubr.bf16.gmra.mxu0 %v2915
        %v3562 = vpop.f32.mrf.mxu0
        %v3563 = vadd.f32 %v2222, %v3562
        %v3564 = vpop.f32.mrf.mxu0
        %v3565 = vpop.f32.mrf.mxu0
        %v3566 = vadd.f32 %v2222, %v3565
        %v3567 = vpop.f32.mrf.mxu0
        %3568 = vmatprep.mubr.bf16.mxu0 %v2919
        %3569 = vmatmul.mubr.bf16.gmra.mxu0 %v2918
        %v3570 = vpop.f32.mrf.mxu0
        %v3571 = vadd.f32 %v2222, %v3570
        %v3572 = vpop.f32.mrf.mxu0
        %v3573 = vpop.f32.mrf.mxu0
        %v3574 = vadd.f32 %v2222, %v3573
        %v3575 = vpop.f32.mrf.mxu0
        %3576 = vmatprep.mubr.bf16.mxu0 %v2922
        %3577 = vmatmul.mubr.bf16.gmra.mxu0 %v2921
        %v3578 = vpop.f32.mrf.mxu0
        %v3579 = vadd.f32 %v2222, %v3578
        %v3580 = vpop.f32.mrf.mxu0
        %v3581 = vpop.f32.mrf.mxu0
        %v3582 = vadd.f32 %v2222, %v3581
        %v3583 = vpop.f32.mrf.mxu0
        %3584 = vmatprep.mubr.bf16.mxu0 %v2925
        %3585 = vmatmul.mubr.bf16.gmra.mxu0 %v2924
        %v3586 = vpop.f32.mrf.mxu0
        %v3587 = vadd.f32 %v2222, %v3586
        %v3588 = vpop.f32.mrf.mxu0
        %v3589 = vpop.f32.mrf.mxu0
        %v3590 = vadd.f32 %v2222, %v3589
        %v3591 = vpop.f32.mrf.mxu0
        %3592 = vmatprep.mubr.bf16.mxu0 %v2928
        %3593 = vmatmul.mubr.bf16.gmra.mxu0 %v2927
        %v3594 = vpop.f32.mrf.mxu0
        %v3595 = vadd.f32 %v2222, %v3594
        %v3596 = vpop.f32.mrf.mxu0
        %v3597 = vpop.f32.mrf.mxu0
        %v3598 = vadd.f32 %v2222, %v3597
        %v3599 = vpop.f32.mrf.mxu0
        %3600 = vmatprep.mubr.bf16.mxu0 %v2931
        %3601 = vmatmul.mubr.bf16.gmra.mxu0 %v2930
        %v3602 = vpop.f32.mrf.mxu0
        %v3603 = vadd.f32 %v2222, %v3602
        %v3604 = vpop.f32.mrf.mxu0
        %v3605 = vpop.f32.mrf.mxu0
        %v3606 = vadd.f32 %v2222, %v3605
        %v3607 = vpop.f32.mrf.mxu0
        %3608 = vmatprep.mubr.bf16.mxu0 %v2934
        %3609 = vmatmul.mubr.bf16.gmra.mxu0 %v2933
        %v3610 = vpop.f32.mrf.mxu0
        %v3611 = vadd.f32 %v2222, %v3610
        %v3612 = vpop.f32.mrf.mxu0
        %v3613 = vpop.f32.mrf.mxu0
        %v3614 = vadd.f32 %v2222, %v3613
        %v3615 = vpop.f32.mrf.mxu0
        %3616 = vmatprep.mubr.bf16.mxu0 %v2937
        %3617 = vmatmul.mubr.bf16.gmra.mxu0 %v2936
        %v3618 = vpop.f32.mrf.mxu0
        %v3619 = vadd.f32 %v2222, %v3618
        %v3620 = vpop.f32.mrf.mxu0
        %v3621 = vpop.f32.mrf.mxu0
        %v3622 = vadd.f32 %v2222, %v3621
        %v3623 = vpop.f32.mrf.mxu0
        %3624 = vmatprep.mubr.bf16.mxu0 %v2940
        %3625 = vmatmul.mubr.bf16.gmra.mxu0 %v2939
        %v3626 = vpop.f32.mrf.mxu0
        %v3627 = vadd.f32 %v2222, %v3626
        %v3628 = vpop.f32.mrf.mxu0
        %v3629 = vpop.f32.mrf.mxu0
        %v3630 = vadd.f32 %v2222, %v3629
        %v3631 = vpop.f32.mrf.mxu0
        %3632 = vmatprep.mubr.bf16.mxu0 %v2943
        %3633 = vmatmul.mubr.bf16.gmra.mxu0 %v2942
        %v3634 = vpop.f32.mrf.mxu0
        %v3635 = vadd.f32 %v2222, %v3634
        %v3636 = vpop.f32.mrf.mxu0
        %v3637 = vpop.f32.mrf.mxu0
        %v3638 = vadd.f32 %v2222, %v3637
        %v3639 = vpop.f32.mrf.mxu0
        %3640 = vmatprep.mubr.bf16.mxu0 %v2946
        %3641 = vmatmul.mubr.bf16.gmra.mxu0 %v2945
        %v3642 = vpop.f32.mrf.mxu0
        %v3643 = vadd.f32 %v2222, %v3642
        %v3644 = vpop.f32.mrf.mxu0
        %v3645 = vpop.f32.mrf.mxu0
        %v3646 = vadd.f32 %v2222, %v3645
        %v3647 = vpop.f32.mrf.mxu0
        %3648 = vmatprep.mubr.bf16.mxu0 %v2949
        %3649 = vmatmul.mubr.bf16.gmra.mxu0 %v2948
        %v3650 = vpop.f32.mrf.mxu0
        %v3651 = vadd.f32 %v2222, %v3650
        %v3652 = vpop.f32.mrf.mxu0
        %v3653 = vpop.f32.mrf.mxu0
        %v3654 = vadd.f32 %v2222, %v3653
        %v3655 = vpop.f32.mrf.mxu0
        %3656 = vmatprep.mubr.bf16.mxu0 %v2952
        %3657 = vmatmul.mubr.bf16.gmra.mxu0 %v2951
        %v3658 = vpop.f32.mrf.mxu0
        %v3659 = vadd.f32 %v2222, %v3658
        %v3660 = vpop.f32.mrf.mxu0
        %v3661 = vpop.f32.mrf.mxu0
        %v3662 = vadd.f32 %v2222, %v3661
        %v3663 = vpop.f32.mrf.mxu0
        %3664 = vmatprep.mubr.bf16.mxu0 %v2955
        %3665 = vmatmul.mubr.bf16.gmra.mxu0 %v2954
        %v3666 = vpop.f32.mrf.mxu0
        %v3667 = vadd.f32 %v2222, %v3666
        %v3668 = vpop.f32.mrf.mxu0
        %v3669 = vpop.f32.mrf.mxu0
        %v3670 = vadd.f32 %v2222, %v3669
        %v3671 = vpop.f32.mrf.mxu0
        %3672 = vmatprep.mubr.bf16.mxu0 %v2958
        %3673 = vmatmul.mubr.bf16.gmra.mxu0 %v2957
        %v3674 = vpop.f32.mrf.mxu0
        %v3675 = vadd.f32 %v2222, %v3674
        %v3676 = vpop.f32.mrf.mxu0
        %v3677 = vpop.f32.mrf.mxu0
        %v3678 = vadd.f32 %v2222, %v3677
        %v3679 = vpop.f32.mrf.mxu0
        %3680 = vmatprep.mubr.bf16.mxu0 %v2961
        %3681 = vmatmul.mubr.bf16.gmra.mxu0 %v2960
        %v3682 = vpop.f32.mrf.mxu0
        %v3683 = vadd.f32 %v2222, %v3682
        %v3684 = vpop.f32.mrf.mxu0
        %v3685 = vpop.f32.mrf.mxu0
        %v3686 = vadd.f32 %v2222, %v3685
        %v3687 = vpop.f32.mrf.mxu0
        %3688 = vmatprep.mubr.bf16.mxu0 %v2964
        %3689 = vmatmul.mubr.bf16.gmra.mxu0 %v2963
        %v3690 = vpop.f32.mrf.mxu0
        %v3691 = vadd.f32 %v2222, %v3690
        %v3692 = vpop.f32.mrf.mxu0
        %v3693 = vpop.f32.mrf.mxu0
        %v3694 = vadd.f32 %v2222, %v3693
        %v3695 = vpop.f32.mrf.mxu0
        %3696 = vmatprep.mubr.bf16.mxu0 %v2967
        %3697 = vmatmul.mubr.bf16.gmra.mxu0 %v2966
        %v3698 = vpop.f32.mrf.mxu0
        %v3699 = vadd.f32 %v2222, %v3698
        %v3700 = vpop.f32.mrf.mxu0
        %v3701 = vpop.f32.mrf.mxu0
        %v3702 = vadd.f32 %v2222, %v3701
        %v3703 = vpop.f32.mrf.mxu0
        %3704 = vmatprep.mubr.bf16.mxu0 %v2970
        %3705 = vmatmul.mubr.bf16.gmra.mxu0 %v2969
        %v3706 = vpop.f32.mrf.mxu0
        %v3707 = vadd.f32 %v2222, %v3706
        %v3708 = vpop.f32.mrf.mxu0
        %v3709 = vpop.f32.mrf.mxu0
        %v3710 = vadd.f32 %v2222, %v3709
        %v3711 = vpop.f32.mrf.mxu0
        %3712 = vmatprep.mubr.bf16.mxu0 %v2973
        %3713 = vmatmul.mubr.bf16.gmra.mxu0 %v2972
        %v3714 = vpop.f32.mrf.mxu0
        %v3715 = vadd.f32 %v2222, %v3714
        %v3716 = vpop.f32.mrf.mxu0
        %v3717 = vpop.f32.mrf.mxu0
        %v3718 = vadd.f32 %v2222, %v3717
        %v3719 = vpop.f32.mrf.mxu0
        %3720 = vmatprep.mubr.bf16.mxu0 %v2976
        %3721 = vmatmul.mubr.bf16.gmra.mxu0 %v2975
        %v3722 = vpop.f32.mrf.mxu0
        %v3723 = vadd.f32 %v2222, %v3722
        %v3724 = vpop.f32.mrf.mxu0
        %v3725 = vpop.f32.mrf.mxu0
        %v3726 = vadd.f32 %v2222, %v3725
        %v3727 = vpop.f32.mrf.mxu0
        %3728 = vmatprep.mubr.bf16.mxu0 %v2979
        %3729 = vmatmul.mubr.bf16.gmra.mxu0 %v2978
        %v3730 = vpop.f32.mrf.mxu0
        %v3731 = vadd.f32 %v2222, %v3730
        %v3732 = vpop.f32.mrf.mxu0
        %v3733 = vpop.f32.mrf.mxu0
        %v3734 = vadd.f32 %v2222, %v3733
        %v3735 = vpop.f32.mrf.mxu0
        %3736 = vmatprep.mubr.bf16.mxu0 %v2982
        %3737 = vmatmul.mubr.bf16.gmra.mxu0 %v2981
        %v3738 = vpop.f32.mrf.mxu0
        %v3739 = vadd.f32 %v2222, %v3738
        %v3740 = vpop.f32.mrf.mxu0
        %v3741 = vpop.f32.mrf.mxu0
        %v3742 = vadd.f32 %v2222, %v3741
        %v3743 = vpop.f32.mrf.mxu0
        %3744 = vmatprep.mubr.bf16.mxu0 %v2985
        %3745 = vmatmul.mubr.bf16.gmra.mxu0 %v2984
        %v3746 = vpop.f32.mrf.mxu0
        %v3747 = vadd.f32 %v2222, %v3746
        %v3748 = vpop.f32.mrf.mxu0
        %v3749 = vpop.f32.mrf.mxu0
        %v3750 = vadd.f32 %v2222, %v3749
        %v3751 = vpop.f32.mrf.mxu0
        %3752 = vmatprep.mubr.bf16.mxu0 %v2988
        %3753 = vmatmul.mubr.bf16.gmra.mxu0 %v2987
        %v3754 = vpop.f32.mrf.mxu0
        %v3755 = vadd.f32 %v2222, %v3754
        %v3756 = vpop.f32.mrf.mxu0
        %v3757 = vpop.f32.mrf.mxu0
        %v3758 = vadd.f32 %v2222, %v3757
        %v3759 = vpop.f32.mrf.mxu0
        %3760 = vmatprep.mubr.bf16.mxu0 %v2991
        %3761 = vmatmul.mubr.bf16.gmra.mxu0 %v2990
        %v3762 = vpop.f32.mrf.mxu0
        %v3763 = vadd.f32 %v2222, %v3762
        %v3764 = vpop.f32.mrf.mxu0
        %v3765 = vpop.f32.mrf.mxu0
        %v3766 = vadd.f32 %v2222, %v3765
        %v3767 = vpop.f32.mrf.mxu0
        %3768 = vmatprep.mubr.bf16.mxu0 %v2994
        %3769 = vmatmul.mubr.bf16.gmra.mxu0 %v2993
        %v3770 = vpop.f32.mrf.mxu0
        %v3771 = vadd.f32 %v2222, %v3770
        %v3772 = vpop.f32.mrf.mxu0
        %v3773 = vpop.f32.mrf.mxu0
        %v3774 = vadd.f32 %v2222, %v3773
        %v3775 = vpop.f32.mrf.mxu0
        %3776 = vmatprep.mubr.bf16.mxu0 %v2997
        %3777 = vmatmul.mubr.bf16.gmra.mxu0 %v2996
        %v3778 = vpop.f32.mrf.mxu0
        %v3779 = vadd.f32 %v2222, %v3778
        %v3780 = vpop.f32.mrf.mxu0
        %v3781 = vpop.f32.mrf.mxu0
        %v3782 = vadd.f32 %v2222, %v3781
        %v3783 = vpop.f32.mrf.mxu0
        %3784 = vmatprep.mubr.bf16.mxu0 %v3000
        %3785 = vmatmul.mubr.bf16.gmra.mxu0 %v2999
        %v3786 = vpop.f32.mrf.mxu0
        %v3787 = vadd.f32 %v2222, %v3786
        %v3788 = vpop.f32.mrf.mxu0
        %v3789 = vpop.f32.mrf.mxu0
        %v3790 = vadd.f32 %v2222, %v3789
        %v3791 = vpop.f32.mrf.mxu0
        %3792 = vmatprep.mubr.bf16.mxu0 %v3003
        %3793 = vmatmul.mubr.bf16.gmra.mxu0 %v3002
        %v3794 = vpop.f32.mrf.mxu0
        %v3795 = vadd.f32 %v2222, %v3794
        %v3796 = vpop.f32.mrf.mxu0
        %v3797 = vpop.f32.mrf.mxu0
        %v3798 = vadd.f32 %v2222, %v3797
        %v3799 = vpop.f32.mrf.mxu0
        %3800 = vmatprep.mubr.bf16.mxu0 %v3006
        %3801 = vmatmul.mubr.bf16.gmra.mxu0 %v3005
        %v3802 = vpop.f32.mrf.mxu0
        %v3803 = vadd.f32 %v2222, %v3802
        %v3804 = vpop.f32.mrf.mxu0
        %v3805 = vpop.f32.mrf.mxu0
        %v3806 = vadd.f32 %v2222, %v3805
        %v3807 = vpop.f32.mrf.mxu0
        %3808 = vmatprep.mubr.bf16.mxu0 %v3009
        %3809 = vmatmul.mubr.bf16.gmra.mxu0 %v3008
        %v3810 = vpop.f32.mrf.mxu0
        %v3811 = vadd.f32 %v2222, %v3810
        %v3812 = vpop.f32.mrf.mxu0
        %v3813 = vpop.f32.mrf.mxu0
        %v3814 = vadd.f32 %v2222, %v3813
        %v3815 = vpop.f32.mrf.mxu0
        %3816 = vmatprep.mubr.bf16.mxu0 %v3012
        %3817 = vmatmul.mubr.bf16.gmra.mxu0 %v3011
        %v3818 = vpop.f32.mrf.mxu0
        %v3819 = vadd.f32 %v2222, %v3818
        %v3820 = vpop.f32.mrf.mxu0
        %v3821 = vpop.f32.mrf.mxu0
        %v3822 = vadd.f32 %v2222, %v3821
        %v3823 = vpop.f32.mrf.mxu0
        %3824 = vmatprep.mubr.bf16.mxu0 %v3015
        %3825 = vmatmul.mubr.bf16.gmra.mxu0 %v3014
        %v3826 = vpop.f32.mrf.mxu0
        %v3827 = vadd.f32 %v2222, %v3826
        %v3828 = vpop.f32.mrf.mxu0
        %v3829 = vpop.f32.mrf.mxu0
        %v3830 = vadd.f32 %v2222, %v3829
        %v3831 = vpop.f32.mrf.mxu0
        %3832 = vmatprep.mubr.bf16.mxu0 %v3018
        %3833 = vmatmul.mubr.bf16.gmra.mxu0 %v3017
        %v3834 = vpop.f32.mrf.mxu0
        %v3835 = vadd.f32 %v2222, %v3834
        %v3836 = vpop.f32.mrf.mxu0
        %v3837 = vpop.f32.mrf.mxu0
        %v3838 = vadd.f32 %v2222, %v3837
        %v3839 = vpop.f32.mrf.mxu0
        %3840 = vmatprep.mubr.bf16.mxu0 %v3021
        %3841 = vmatmul.mubr.bf16.gmra.mxu0 %v3020
        %v3842 = vpop.f32.mrf.mxu0
        %v3843 = vadd.f32 %v2222, %v3842
        %v3844 = vpop.f32.mrf.mxu0
        %v3845 = vpop.f32.mrf.mxu0
        %v3846 = vadd.f32 %v2222, %v3845
        %v3847 = vpop.f32.mrf.mxu0
        %3848 = vmatprep.mubr.bf16.mxu0 %v3024
        %3849 = vmatmul.mubr.bf16.gmra.mxu0 %v3023
        %v3850 = vpop.f32.mrf.mxu0
        %v3851 = vadd.f32 %v2222, %v3850
        %v3852 = vpop.f32.mrf.mxu0
        %v3853 = vpop.f32.mrf.mxu0
        %v3854 = vadd.f32 %v2222, %v3853
        %v3855 = vpop.f32.mrf.mxu0
        %3856 = vmatprep.mubr.bf16.mxu0 %v3027
        %3857 = vmatmul.mubr.bf16.gmra.mxu0 %v3026
        %v3858 = vpop.f32.mrf.mxu0
        %v3859 = vadd.f32 %v2222, %v3858
        %v3860 = vpop.f32.mrf.mxu0
        %v3861 = vpop.f32.mrf.mxu0
        %v3862 = vadd.f32 %v2222, %v3861
        %v3863 = vpop.f32.mrf.mxu0
        %3864 = vmatprep.mubr.bf16.mxu0 %v3030
        %3865 = vmatmul.mubr.bf16.gmra.mxu0 %v3029
        %v3866 = vpop.f32.mrf.mxu0
        %v3867 = vadd.f32 %v2222, %v3866
        %v3868 = vpop.f32.mrf.mxu0
        %v3869 = vpop.f32.mrf.mxu0
        %v3870 = vadd.f32 %v2222, %v3869
        %v3871 = vpop.f32.mrf.mxu0
        %3872 = vmatprep.mubr.bf16.mxu0 %v3033
        %3873 = vmatmul.mubr.bf16.gmra.mxu0 %v3032
        %v3874 = vpop.f32.mrf.mxu0
        %v3875 = vadd.f32 %v2222, %v3874
        %v3876 = vpop.f32.mrf.mxu0
        %v3877 = vpop.f32.mrf.mxu0
        %v3878 = vadd.f32 %v2222, %v3877
        %v3879 = vpop.f32.mrf.mxu0
        %3880 = vmatprep.mubr.bf16.mxu0 %v3036
        %3881 = vmatmul.mubr.bf16.gmra.mxu0 %v3035
        %v3882 = vpop.f32.mrf.mxu0
        %v3883 = vadd.f32 %v2222, %v3882
        %v3884 = vpop.f32.mrf.mxu0
        %v3885 = vpop.f32.mrf.mxu0
        %v3886 = vadd.f32 %v2222, %v3885
        %v3887 = vpop.f32.mrf.mxu0
        %3888 = vmatprep.mubr.bf16.mxu0 %v3039
        %3889 = vmatmul.mubr.bf16.gmra.mxu0 %v3038
        %v3890 = vpop.f32.mrf.mxu0
        %v3891 = vadd.f32 %v2222, %v3890
        %v3892 = vpop.f32.mrf.mxu0
        %v3893 = vpop.f32.mrf.mxu0
        %v3894 = vadd.f32 %v2222, %v3893
        %v3895 = vpop.f32.mrf.mxu0
        %3896 = vmatprep.mubr.bf16.mxu0 %v3042
        %3897 = vmatmul.mubr.bf16.gmra.mxu0 %v3041
        %v3898 = vpop.f32.mrf.mxu0
        %v3899 = vadd.f32 %v2222, %v3898
        %v3900 = vpop.f32.mrf.mxu0
        %v3901 = vpop.f32.mrf.mxu0
        %v3902 = vadd.f32 %v2222, %v3901
        %v3903 = vpop.f32.mrf.mxu0
        %3904 = vmatprep.mubr.bf16.mxu0 %v3045
        %3905 = vmatmul.mubr.bf16.gmra.mxu0 %v3044
        %v3906 = vpop.f32.mrf.mxu0
        %v3907 = vadd.f32 %v2222, %v3906
        %v3908 = vpop.f32.mrf.mxu0
        %v3909 = vpop.f32.mrf.mxu0
        %v3910 = vadd.f32 %v2222, %v3909
        %v3911 = vpop.f32.mrf.mxu0
        %3912 = vmatprep.mubr.bf16.mxu0 %v3048
        %3913 = vmatmul.mubr.bf16.gmra.mxu0 %v3047
        %v3914 = vpop.f32.mrf.mxu0
        %v3915 = vadd.f32 %v2222, %v3914
        %v3916 = vpop.f32.mrf.mxu0
        %v3917 = vpop.f32.mrf.mxu0
        %v3918 = vadd.f32 %v2222, %v3917
        %v3919 = vpop.f32.mrf.mxu0
        %3920 = vmatprep.mubr.bf16.mxu0 %v3051
        %3921 = vmatmul.mubr.bf16.gmra.mxu0 %v3050
        %v3922 = vpop.f32.mrf.mxu0
        %v3923 = vadd.f32 %v2222, %v3922
        %v3924 = vpop.f32.mrf.mxu0
        %v3925 = vpop.f32.mrf.mxu0
        %v3926 = vadd.f32 %v2222, %v3925
        %v3927 = vpop.f32.mrf.mxu0
        %3928 = vmatprep.mubr.bf16.mxu0 %v3054
        %3929 = vmatmul.mubr.bf16.gmra.mxu0 %v3053
        %v3930 = vpop.f32.mrf.mxu0
        %v3931 = vadd.f32 %v2222, %v3930
        %v3932 = vpop.f32.mrf.mxu0
        %v3933 = vpop.f32.mrf.mxu0
        %v3934 = vadd.f32 %v2222, %v3933
        %v3935 = vpop.f32.mrf.mxu0
        %3936 = vdwg.mxu0
        %3937 = vmatprep.subr.bf16.mxu0 0
        %3938 = vmatpush1.bf16.msra.mxu0 %v3367
        %3939 = vmatprep.subr.bf16.mxu0 0
        %3940 = vmatpush1.bf16.msra.mxu0 %v3366
        %3941 = vmatprep.subr.bf16.mxu0 0
        %3942 = vmatpush1.bf16.msra.mxu0 %v3365
        %3943 = vmatprep.subr.bf16.mxu0 0
        %3944 = vmatpush1.bf16.msra.mxu0 %v3364
        %3945 = vmatprep.subr.bf16.mxu0 0
        %3946 = vmatpush1.bf16.msra.mxu0 %v3363
        %3947 = vmatprep.subr.bf16.mxu0 0
        %3948 = vmatpush1.bf16.msra.mxu0 %v3362
        %3949 = vmatprep.subr.bf16.mxu0 0
        %3950 = vmatpush1.bf16.msra.mxu0 %v3361
        %3951 = vmatprep.subr.bf16.mxu0 0
        %3952 = vmatpush1.bf16.msra.mxu0 %v3360
        %3953 = vmatprep.subr.bf16.mxu0 0
        %3954 = vmatpush2.bf16.msra.mxu0 0
        %3955 = vmatprep.subr.bf16.mxu0 0
        %3956 = vmatpush2.bf16.msra.mxu0 0
        %3957 = vmatprep.subr.bf16.mxu0 0
        %3958 = vmatpush2.bf16.msra.mxu0 0
        %3959 = vmatprep.subr.bf16.mxu0 0
        %3960 = vmatpush2.bf16.msra.mxu0 0
        %3961 = vmatprep.subr.bf16.mxu0 0
        %3962 = vmatpush2.bf16.msra.mxu0 0
        %3963 = vmatprep.subr.bf16.mxu0 0
        %3964 = vmatpush2.bf16.msra.mxu0 0
        %3965 = vmatprep.subr.bf16.mxu0 0
        %3966 = vmatpush2.bf16.msra.mxu0 0
        %3967 = vmatprep.subr.bf16.mxu0 0
        %3968 = vmatpush2.bf16.msra.mxu0 0
        %3969 = vmatprep.mubr.bf16.mxu0 0
        %3970 = vmatmul.mubr.bf16.gmra.mxu0 %v2866
        %v3971 = vpop.f32.mrf.mxu0
        %v3972 = vadd.f32 %v3427, %v3971
        %v3973 = vpop.f32.mrf.mxu0
        %v3974 = vpop.f32.mrf.mxu0
        %v3975 = vadd.f32 %v3430, %v3974
        %v3976 = vpop.f32.mrf.mxu0
        %3977 = vmatprep.mubr.bf16.mxu0 0
        %3978 = vmatmul.mubr.bf16.gmra.mxu0 %v2869
        %v3979 = vpop.f32.mrf.mxu0
        %v3980 = vadd.f32 %v3435, %v3979
        %v3981 = vpop.f32.mrf.mxu0
        %v3982 = vpop.f32.mrf.mxu0
        %v3983 = vadd.f32 %v3438, %v3982
        %v3984 = vpop.f32.mrf.mxu0
        %3985 = vmatprep.mubr.bf16.mxu0 0
        %3986 = vmatmul.mubr.bf16.gmra.mxu0 %v2872
        %v3987 = vpop.f32.mrf.mxu0
        %v3988 = vadd.f32 %v3443, %v3987
        %v3989 = vpop.f32.mrf.mxu0
        %v3990 = vpop.f32.mrf.mxu0
        %v3991 = vadd.f32 %v3446, %v3990
        %v3992 = vpop.f32.mrf.mxu0
        %3993 = vmatprep.mubr.bf16.mxu0 0
        %3994 = vmatmul.mubr.bf16.gmra.mxu0 %v2875
        %v3995 = vpop.f32.mrf.mxu0
        %v3996 = vadd.f32 %v3451, %v3995
        %v3997 = vpop.f32.mrf.mxu0
        %v3998 = vpop.f32.mrf.mxu0
        %v3999 = vadd.f32 %v3454, %v3998
        %v4000 = vpop.f32.mrf.mxu0
        %4001 = vmatprep.mubr.bf16.mxu0 0
        %4002 = vmatmul.mubr.bf16.gmra.mxu0 %v2878
        %v4003 = vpop.f32.mrf.mxu0
        %v4004 = vadd.f32 %v3459, %v4003
        %v4005 = vpop.f32.mrf.mxu0
        %v4006 = vpop.f32.mrf.mxu0
        %v4007 = vadd.f32 %v3462, %v4006
        %v4008 = vpop.f32.mrf.mxu0
        %4009 = vmatprep.mubr.bf16.mxu0 0
        %4010 = vmatmul.mubr.bf16.gmra.mxu0 %v2881
        %v4011 = vpop.f32.mrf.mxu0
        %v4012 = vadd.f32 %v3467, %v4011
        %v4013 = vpop.f32.mrf.mxu0
        %v4014 = vpop.f32.mrf.mxu0
        %v4015 = vadd.f32 %v3470, %v4014
        %v4016 = vpop.f32.mrf.mxu0
        %4017 = vmatprep.mubr.bf16.mxu0 0
        %4018 = vmatmul.mubr.bf16.gmra.mxu0 %v2884
        %v4019 = vpop.f32.mrf.mxu0
        %v4020 = vadd.f32 %v3475, %v4019
        %v4021 = vpop.f32.mrf.mxu0
        %v4022 = vpop.f32.mrf.mxu0
        %v4023 = vadd.f32 %v3478, %v4022
        %v4024 = vpop.f32.mrf.mxu0
        %4025 = vmatprep.mubr.bf16.mxu0 0
        %4026 = vmatmul.mubr.bf16.gmra.mxu0 %v2887
        %v4027 = vpop.f32.mrf.mxu0
        %v4028 = vadd.f32 %v3483, %v4027
        %v4029 = vpop.f32.mrf.mxu0
        %v4030 = vpop.f32.mrf.mxu0
        %v4031 = vadd.f32 %v3486, %v4030
        %v4032 = vpop.f32.mrf.mxu0
        %4033 = vmatprep.mubr.bf16.mxu0 0
        %4034 = vmatmul.mubr.bf16.gmra.mxu0 %v2890
        %v4035 = vpop.f32.mrf.mxu0
        %v4036 = vadd.f32 %v3491, %v4035
        %v4037 = vpop.f32.mrf.mxu0
        %v4038 = vpop.f32.mrf.mxu0
        %v4039 = vadd.f32 %v3494, %v4038
        %v4040 = vpop.f32.mrf.mxu0
        %4041 = vmatprep.mubr.bf16.mxu0 0
        %4042 = vmatmul.mubr.bf16.gmra.mxu0 %v2893
        %v4043 = vpop.f32.mrf.mxu0
        %v4044 = vadd.f32 %v3499, %v4043
        %v4045 = vpop.f32.mrf.mxu0
        %v4046 = vpop.f32.mrf.mxu0
        %v4047 = vadd.f32 %v3502, %v4046
        %v4048 = vpop.f32.mrf.mxu0
        %4049 = vmatprep.mubr.bf16.mxu0 0
        %4050 = vmatmul.mubr.bf16.gmra.mxu0 %v2896
        %v4051 = vpop.f32.mrf.mxu0
        %v4052 = vadd.f32 %v3507, %v4051
        %v4053 = vpop.f32.mrf.mxu0
        %v4054 = vpop.f32.mrf.mxu0
        %v4055 = vadd.f32 %v3510, %v4054
        %v4056 = vpop.f32.mrf.mxu0
        %4057 = vmatprep.mubr.bf16.mxu0 0
        %4058 = vmatmul.mubr.bf16.gmra.mxu0 %v2899
        %v4059 = vpop.f32.mrf.mxu0
        %v4060 = vadd.f32 %v3515, %v4059
        %v4061 = vpop.f32.mrf.mxu0
        %v4062 = vpop.f32.mrf.mxu0
        %v4063 = vadd.f32 %v3518, %v4062
        %v4064 = vpop.f32.mrf.mxu0
        %4065 = vmatprep.mubr.bf16.mxu0 0
        %4066 = vmatmul.mubr.bf16.gmra.mxu0 %v2902
        %v4067 = vpop.f32.mrf.mxu0
        %v4068 = vadd.f32 %v3523, %v4067
        %v4069 = vpop.f32.mrf.mxu0
        %v4070 = vpop.f32.mrf.mxu0
        %v4071 = vadd.f32 %v3526, %v4070
        %v4072 = vpop.f32.mrf.mxu0
        %4073 = vmatprep.mubr.bf16.mxu0 0
        %4074 = vmatmul.mubr.bf16.gmra.mxu0 %v2905
        %v4075 = vpop.f32.mrf.mxu0
        %v4076 = vadd.f32 %v3531, %v4075
        %v4077 = vpop.f32.mrf.mxu0
        %v4078 = vpop.f32.mrf.mxu0
        %v4079 = vadd.f32 %v3534, %v4078
        %v4080 = vpop.f32.mrf.mxu0
        %4081 = vmatprep.mubr.bf16.mxu0 0
        %4082 = vmatmul.mubr.bf16.gmra.mxu0 %v2908
        %v4083 = vpop.f32.mrf.mxu0
        %v4084 = vadd.f32 %v3539, %v4083
        %v4085 = vpop.f32.mrf.mxu0
        %v4086 = vpop.f32.mrf.mxu0
        %v4087 = vadd.f32 %v3542, %v4086
        %v4088 = vpop.f32.mrf.mxu0
        %4089 = vmatprep.mubr.bf16.mxu0 0
        %4090 = vmatmul.mubr.bf16.gmra.mxu0 %v2911
        %v4091 = vpop.f32.mrf.mxu0
        %v4092 = vadd.f32 %v3547, %v4091
        %v4093 = vpop.f32.mrf.mxu0
        %v4094 = vpop.f32.mrf.mxu0
        %v4095 = vadd.f32 %v3550, %v4094
        %v4096 = vpop.f32.mrf.mxu0
        %4097 = vmatprep.mubr.bf16.mxu0 0
        %4098 = vmatmul.mubr.bf16.gmra.mxu0 %v2914
        %v4099 = vpop.f32.mrf.mxu0
        %v4100 = vadd.f32 %v3555, %v4099
        %v4101 = vpop.f32.mrf.mxu0
        %v4102 = vpop.f32.mrf.mxu0
        %v4103 = vadd.f32 %v3558, %v4102
        %v4104 = vpop.f32.mrf.mxu0
        %4105 = vmatprep.mubr.bf16.mxu0 0
        %4106 = vmatmul.mubr.bf16.gmra.mxu0 %v2917
        %v4107 = vpop.f32.mrf.mxu0
        %v4108 = vadd.f32 %v3563, %v4107
        %v4109 = vpop.f32.mrf.mxu0
        %v4110 = vpop.f32.mrf.mxu0
        %v4111 = vadd.f32 %v3566, %v4110
        %v4112 = vpop.f32.mrf.mxu0
        %4113 = vmatprep.mubr.bf16.mxu0 0
        %4114 = vmatmul.mubr.bf16.gmra.mxu0 %v2920
        %v4115 = vpop.f32.mrf.mxu0
        %v4116 = vadd.f32 %v3571, %v4115
        %v4117 = vpop.f32.mrf.mxu0
        %v4118 = vpop.f32.mrf.mxu0
        %v4119 = vadd.f32 %v3574, %v4118
        %v4120 = vpop.f32.mrf.mxu0
        %4121 = vmatprep.mubr.bf16.mxu0 0
        %4122 = vmatmul.mubr.bf16.gmra.mxu0 %v2923
        %v4123 = vpop.f32.mrf.mxu0
        %v4124 = vadd.f32 %v3579, %v4123
        %v4125 = vpop.f32.mrf.mxu0
        %v4126 = vpop.f32.mrf.mxu0
        %v4127 = vadd.f32 %v3582, %v4126
        %v4128 = vpop.f32.mrf.mxu0
        %4129 = vmatprep.mubr.bf16.mxu0 0
        %4130 = vmatmul.mubr.bf16.gmra.mxu0 %v2926
        %v4131 = vpop.f32.mrf.mxu0
        %v4132 = vadd.f32 %v3587, %v4131
        %v4133 = vpop.f32.mrf.mxu0
        %v4134 = vpop.f32.mrf.mxu0
        %v4135 = vadd.f32 %v3590, %v4134
        %v4136 = vpop.f32.mrf.mxu0
        %4137 = vmatprep.mubr.bf16.mxu0 0
        %4138 = vmatmul.mubr.bf16.gmra.mxu0 %v2929
        %v4139 = vpop.f32.mrf.mxu0
        %v4140 = vadd.f32 %v3595, %v4139
        %v4141 = vpop.f32.mrf.mxu0
        %v4142 = vpop.f32.mrf.mxu0
        %v4143 = vadd.f32 %v3598, %v4142
        %v4144 = vpop.f32.mrf.mxu0
        %4145 = vmatprep.mubr.bf16.mxu0 0
        %4146 = vmatmul.mubr.bf16.gmra.mxu0 %v2932
        %v4147 = vpop.f32.mrf.mxu0
        %v4148 = vadd.f32 %v3603, %v4147
        %v4149 = vpop.f32.mrf.mxu0
        %v4150 = vpop.f32.mrf.mxu0
        %v4151 = vadd.f32 %v3606, %v4150
        %v4152 = vpop.f32.mrf.mxu0
        %4153 = vmatprep.mubr.bf16.mxu0 0
        %4154 = vmatmul.mubr.bf16.gmra.mxu0 %v2935
        %v4155 = vpop.f32.mrf.mxu0
        %v4156 = vadd.f32 %v3611, %v4155
        %v4157 = vpop.f32.mrf.mxu0
        %v4158 = vpop.f32.mrf.mxu0
        %v4159 = vadd.f32 %v3614, %v4158
        %v4160 = vpop.f32.mrf.mxu0
        %4161 = vmatprep.mubr.bf16.mxu0 0
        %4162 = vmatmul.mubr.bf16.gmra.mxu0 %v2938
        %v4163 = vpop.f32.mrf.mxu0
        %v4164 = vadd.f32 %v3619, %v4163
        %v4165 = vpop.f32.mrf.mxu0
        %v4166 = vpop.f32.mrf.mxu0
        %v4167 = vadd.f32 %v3622, %v4166
        %v4168 = vpop.f32.mrf.mxu0
        %4169 = vmatprep.mubr.bf16.mxu0 0
        %4170 = vmatmul.mubr.bf16.gmra.mxu0 %v2941
        %v4171 = vpop.f32.mrf.mxu0
        %v4172 = vadd.f32 %v3627, %v4171
        %v4173 = vpop.f32.mrf.mxu0
        %v4174 = vpop.f32.mrf.mxu0
        %v4175 = vadd.f32 %v3630, %v4174
        %v4176 = vpop.f32.mrf.mxu0
        %4177 = vmatprep.mubr.bf16.mxu0 0
        %4178 = vmatmul.mubr.bf16.gmra.mxu0 %v2944
        %v4179 = vpop.f32.mrf.mxu0
        %v4180 = vadd.f32 %v3635, %v4179
        %v4181 = vpop.f32.mrf.mxu0
        %v4182 = vpop.f32.mrf.mxu0
        %v4183 = vadd.f32 %v3638, %v4182
        %v4184 = vpop.f32.mrf.mxu0
        %4185 = vmatprep.mubr.bf16.mxu0 0
        %4186 = vmatmul.mubr.bf16.gmra.mxu0 %v2947
        %v4187 = vpop.f32.mrf.mxu0
        %v4188 = vadd.f32 %v3643, %v4187
        %v4189 = vpop.f32.mrf.mxu0
        %v4190 = vpop.f32.mrf.mxu0
        %v4191 = vadd.f32 %v3646, %v4190
        %v4192 = vpop.f32.mrf.mxu0
        %4193 = vmatprep.mubr.bf16.mxu0 0
        %4194 = vmatmul.mubr.bf16.gmra.mxu0 %v2950
        %v4195 = vpop.f32.mrf.mxu0
        %v4196 = vadd.f32 %v3651, %v4195
        %v4197 = vpop.f32.mrf.mxu0
        %v4198 = vpop.f32.mrf.mxu0
        %v4199 = vadd.f32 %v3654, %v4198
        %v4200 = vpop.f32.mrf.mxu0
        %4201 = vmatprep.mubr.bf16.mxu0 0
        %4202 = vmatmul.mubr.bf16.gmra.mxu0 %v2953
        %v4203 = vpop.f32.mrf.mxu0
        %v4204 = vadd.f32 %v3659, %v4203
        %v4205 = vpop.f32.mrf.mxu0
        %v4206 = vpop.f32.mrf.mxu0
        %v4207 = vadd.f32 %v3662, %v4206
        %v4208 = vpop.f32.mrf.mxu0
        %4209 = vmatprep.mubr.bf16.mxu0 0
        %4210 = vmatmul.mubr.bf16.gmra.mxu0 %v2956
        %v4211 = vpop.f32.mrf.mxu0
        %v4212 = vadd.f32 %v3667, %v4211
        %v4213 = vpop.f32.mrf.mxu0
        %v4214 = vpop.f32.mrf.mxu0
        %v4215 = vadd.f32 %v3670, %v4214
        %v4216 = vpop.f32.mrf.mxu0
        %4217 = vmatprep.mubr.bf16.mxu0 0
        %4218 = vmatmul.mubr.bf16.gmra.mxu0 %v2959
        %v4219 = vpop.f32.mrf.mxu0
        %v4220 = vadd.f32 %v3675, %v4219
        %v4221 = vpop.f32.mrf.mxu0
        %v4222 = vpop.f32.mrf.mxu0
        %v4223 = vadd.f32 %v3678, %v4222
        %v4224 = vpop.f32.mrf.mxu0
        %4225 = vmatprep.mubr.bf16.mxu0 0
        %4226 = vmatmul.mubr.bf16.gmra.mxu0 %v2962
        %v4227 = vpop.f32.mrf.mxu0
        %v4228 = vadd.f32 %v3683, %v4227
        %v4229 = vpop.f32.mrf.mxu0
        %v4230 = vpop.f32.mrf.mxu0
        %v4231 = vadd.f32 %v3686, %v4230
        %v4232 = vpop.f32.mrf.mxu0
        %4233 = vmatprep.mubr.bf16.mxu0 0
        %4234 = vmatmul.mubr.bf16.gmra.mxu0 %v2965
        %v4235 = vpop.f32.mrf.mxu0
        %v4236 = vadd.f32 %v3691, %v4235
        %v4237 = vpop.f32.mrf.mxu0
        %v4238 = vpop.f32.mrf.mxu0
        %v4239 = vadd.f32 %v3694, %v4238
        %v4240 = vpop.f32.mrf.mxu0
        %4241 = vmatprep.mubr.bf16.mxu0 0
        %4242 = vmatmul.mubr.bf16.gmra.mxu0 %v2968
        %v4243 = vpop.f32.mrf.mxu0
        %v4244 = vadd.f32 %v3699, %v4243
        %v4245 = vpop.f32.mrf.mxu0
        %v4246 = vpop.f32.mrf.mxu0
        %v4247 = vadd.f32 %v3702, %v4246
        %v4248 = vpop.f32.mrf.mxu0
        %4249 = vmatprep.mubr.bf16.mxu0 0
        %4250 = vmatmul.mubr.bf16.gmra.mxu0 %v2971
        %v4251 = vpop.f32.mrf.mxu0
        %v4252 = vadd.f32 %v3707, %v4251
        %v4253 = vpop.f32.mrf.mxu0
        %v4254 = vpop.f32.mrf.mxu0
        %v4255 = vadd.f32 %v3710, %v4254
        %v4256 = vpop.f32.mrf.mxu0
        %4257 = vmatprep.mubr.bf16.mxu0 0
        %4258 = vmatmul.mubr.bf16.gmra.mxu0 %v2974
        %v4259 = vpop.f32.mrf.mxu0
        %v4260 = vadd.f32 %v3715, %v4259
        %v4261 = vpop.f32.mrf.mxu0
        %v4262 = vpop.f32.mrf.mxu0
        %v4263 = vadd.f32 %v3718, %v4262
        %v4264 = vpop.f32.mrf.mxu0
        %4265 = vmatprep.mubr.bf16.mxu0 0
        %4266 = vmatmul.mubr.bf16.gmra.mxu0 %v2977
        %v4267 = vpop.f32.mrf.mxu0
        %v4268 = vadd.f32 %v3723, %v4267
        %v4269 = vpop.f32.mrf.mxu0
        %v4270 = vpop.f32.mrf.mxu0
        %v4271 = vadd.f32 %v3726, %v4270
        %v4272 = vpop.f32.mrf.mxu0
        %4273 = vmatprep.mubr.bf16.mxu0 0
        %4274 = vmatmul.mubr.bf16.gmra.mxu0 %v2980
        %v4275 = vpop.f32.mrf.mxu0
        %v4276 = vadd.f32 %v3731, %v4275
        %v4277 = vpop.f32.mrf.mxu0
        %v4278 = vpop.f32.mrf.mxu0
        %v4279 = vadd.f32 %v3734, %v4278
        %v4280 = vpop.f32.mrf.mxu0
        %4281 = vmatprep.mubr.bf16.mxu0 0
        %4282 = vmatmul.mubr.bf16.gmra.mxu0 %v2983
        %v4283 = vpop.f32.mrf.mxu0
        %v4284 = vadd.f32 %v3739, %v4283
        %v4285 = vpop.f32.mrf.mxu0
        %v4286 = vpop.f32.mrf.mxu0
        %v4287 = vadd.f32 %v3742, %v4286
        %v4288 = vpop.f32.mrf.mxu0
        %4289 = vmatprep.mubr.bf16.mxu0 0
        %4290 = vmatmul.mubr.bf16.gmra.mxu0 %v2986
        %v4291 = vpop.f32.mrf.mxu0
        %v4292 = vadd.f32 %v3747, %v4291
        %v4293 = vpop.f32.mrf.mxu0
        %v4294 = vpop.f32.mrf.mxu0
        %v4295 = vadd.f32 %v3750, %v4294
        %v4296 = vpop.f32.mrf.mxu0
        %4297 = vmatprep.mubr.bf16.mxu0 0
        %4298 = vmatmul.mubr.bf16.gmra.mxu0 %v2989
        %v4299 = vpop.f32.mrf.mxu0
        %v4300 = vadd.f32 %v3755, %v4299
        %v4301 = vpop.f32.mrf.mxu0
        %v4302 = vpop.f32.mrf.mxu0
        %v4303 = vadd.f32 %v3758, %v4302
        %v4304 = vpop.f32.mrf.mxu0
        %4305 = vmatprep.mubr.bf16.mxu0 0
        %4306 = vmatmul.mubr.bf16.gmra.mxu0 %v2992
        %v4307 = vpop.f32.mrf.mxu0
        %v4308 = vadd.f32 %v3763, %v4307
        %v4309 = vpop.f32.mrf.mxu0
        %v4310 = vpop.f32.mrf.mxu0
        %v4311 = vadd.f32 %v3766, %v4310
        %v4312 = vpop.f32.mrf.mxu0
        %4313 = vmatprep.mubr.bf16.mxu0 0
        %4314 = vmatmul.mubr.bf16.gmra.mxu0 %v2995
        %v4315 = vpop.f32.mrf.mxu0
        %v4316 = vadd.f32 %v3771, %v4315
        %v4317 = vpop.f32.mrf.mxu0
        %v4318 = vpop.f32.mrf.mxu0
        %v4319 = vadd.f32 %v3774, %v4318
        %v4320 = vpop.f32.mrf.mxu0
        %4321 = vmatprep.mubr.bf16.mxu0 0
        %4322 = vmatmul.mubr.bf16.gmra.mxu0 %v2998
        %v4323 = vpop.f32.mrf.mxu0
        %v4324 = vadd.f32 %v3779, %v4323
        %v4325 = vpop.f32.mrf.mxu0
        %v4326 = vpop.f32.mrf.mxu0
        %v4327 = vadd.f32 %v3782, %v4326
        %v4328 = vpop.f32.mrf.mxu0
        %4329 = vmatprep.mubr.bf16.mxu0 0
        %4330 = vmatmul.mubr.bf16.gmra.mxu0 %v3001
        %v4331 = vpop.f32.mrf.mxu0
        %v4332 = vadd.f32 %v3787, %v4331
        %v4333 = vpop.f32.mrf.mxu0
        %v4334 = vpop.f32.mrf.mxu0
        %v4335 = vadd.f32 %v3790, %v4334
        %v4336 = vpop.f32.mrf.mxu0
        %4337 = vmatprep.mubr.bf16.mxu0 0
        %4338 = vmatmul.mubr.bf16.gmra.mxu0 %v3004
        %v4339 = vpop.f32.mrf.mxu0
        %v4340 = vadd.f32 %v3795, %v4339
        %v4341 = vpop.f32.mrf.mxu0
        %v4342 = vpop.f32.mrf.mxu0
        %v4343 = vadd.f32 %v3798, %v4342
        %v4344 = vpop.f32.mrf.mxu0
        %4345 = vmatprep.mubr.bf16.mxu0 0
        %4346 = vmatmul.mubr.bf16.gmra.mxu0 %v3007
        %v4347 = vpop.f32.mrf.mxu0
        %v4348 = vadd.f32 %v3803, %v4347
        %v4349 = vpop.f32.mrf.mxu0
        %v4350 = vpop.f32.mrf.mxu0
        %v4351 = vadd.f32 %v3806, %v4350
        %v4352 = vpop.f32.mrf.mxu0
        %4353 = vmatprep.mubr.bf16.mxu0 0
        %4354 = vmatmul.mubr.bf16.gmra.mxu0 %v3010
        %v4355 = vpop.f32.mrf.mxu0
        %v4356 = vadd.f32 %v3811, %v4355
        %v4357 = vpop.f32.mrf.mxu0
        %v4358 = vpop.f32.mrf.mxu0
        %v4359 = vadd.f32 %v3814, %v4358
        %v4360 = vpop.f32.mrf.mxu0
        %4361 = vmatprep.mubr.bf16.mxu0 0
        %4362 = vmatmul.mubr.bf16.gmra.mxu0 %v3013
        %v4363 = vpop.f32.mrf.mxu0
        %v4364 = vadd.f32 %v3819, %v4363
        %v4365 = vpop.f32.mrf.mxu0
        %v4366 = vpop.f32.mrf.mxu0
        %v4367 = vadd.f32 %v3822, %v4366
        %v4368 = vpop.f32.mrf.mxu0
        %4369 = vmatprep.mubr.bf16.mxu0 0
        %4370 = vmatmul.mubr.bf16.gmra.mxu0 %v3016
        %v4371 = vpop.f32.mrf.mxu0
        %v4372 = vadd.f32 %v3827, %v4371
        %v4373 = vpop.f32.mrf.mxu0
        %v4374 = vpop.f32.mrf.mxu0
        %v4375 = vadd.f32 %v3830, %v4374
        %v4376 = vpop.f32.mrf.mxu0
        %4377 = vmatprep.mubr.bf16.mxu0 0
        %4378 = vmatmul.mubr.bf16.gmra.mxu0 %v3019
        %v4379 = vpop.f32.mrf.mxu0
        %v4380 = vadd.f32 %v3835, %v4379
        %v4381 = vpop.f32.mrf.mxu0
        %v4382 = vpop.f32.mrf.mxu0
        %v4383 = vadd.f32 %v3838, %v4382
        %v4384 = vpop.f32.mrf.mxu0
        %4385 = vmatprep.mubr.bf16.mxu0 0
        %4386 = vmatmul.mubr.bf16.gmra.mxu0 %v3022
        %v4387 = vpop.f32.mrf.mxu0
        %v4388 = vadd.f32 %v3843, %v4387
        %v4389 = vpop.f32.mrf.mxu0
        %v4390 = vpop.f32.mrf.mxu0
        %v4391 = vadd.f32 %v3846, %v4390
        %v4392 = vpop.f32.mrf.mxu0
        %4393 = vmatprep.mubr.bf16.mxu0 0
        %4394 = vmatmul.mubr.bf16.gmra.mxu0 %v3025
        %v4395 = vpop.f32.mrf.mxu0
        %v4396 = vadd.f32 %v3851, %v4395
        %v4397 = vpop.f32.mrf.mxu0
        %v4398 = vpop.f32.mrf.mxu0
        %v4399 = vadd.f32 %v3854, %v4398
        %v4400 = vpop.f32.mrf.mxu0
        %4401 = vmatprep.mubr.bf16.mxu0 0
        %4402 = vmatmul.mubr.bf16.gmra.mxu0 %v3028
        %v4403 = vpop.f32.mrf.mxu0
        %v4404 = vadd.f32 %v3859, %v4403
        %v4405 = vpop.f32.mrf.mxu0
        %v4406 = vpop.f32.mrf.mxu0
        %v4407 = vadd.f32 %v3862, %v4406
        %v4408 = vpop.f32.mrf.mxu0
        %4409 = vmatprep.mubr.bf16.mxu0 0
        %4410 = vmatmul.mubr.bf16.gmra.mxu0 %v3031
        %v4411 = vpop.f32.mrf.mxu0
        %v4412 = vadd.f32 %v3867, %v4411
        %v4413 = vpop.f32.mrf.mxu0
        %v4414 = vpop.f32.mrf.mxu0
        %v4415 = vadd.f32 %v3870, %v4414
        %v4416 = vpop.f32.mrf.mxu0
        %4417 = vmatprep.mubr.bf16.mxu0 0
        %4418 = vmatmul.mubr.bf16.gmra.mxu0 %v3034
        %v4419 = vpop.f32.mrf.mxu0
        %v4420 = vadd.f32 %v3875, %v4419
        %v4421 = vpop.f32.mrf.mxu0
        %v4422 = vpop.f32.mrf.mxu0
        %v4423 = vadd.f32 %v3878, %v4422
        %v4424 = vpop.f32.mrf.mxu0
        %4425 = vmatprep.mubr.bf16.mxu0 0
        %4426 = vmatmul.mubr.bf16.gmra.mxu0 %v3037
        %v4427 = vpop.f32.mrf.mxu0
        %v4428 = vadd.f32 %v3883, %v4427
        %v4429 = vpop.f32.mrf.mxu0
        %v4430 = vpop.f32.mrf.mxu0
        %v4431 = vadd.f32 %v3886, %v4430
        %v4432 = vpop.f32.mrf.mxu0
        %4433 = vmatprep.mubr.bf16.mxu0 0
        %4434 = vmatmul.mubr.bf16.gmra.mxu0 %v3040
        %v4435 = vpop.f32.mrf.mxu0
        %v4436 = vadd.f32 %v3891, %v4435
        %v4437 = vpop.f32.mrf.mxu0
        %v4438 = vpop.f32.mrf.mxu0
        %v4439 = vadd.f32 %v3894, %v4438
        %v4440 = vpop.f32.mrf.mxu0
        %4441 = vmatprep.mubr.bf16.mxu0 0
        %4442 = vmatmul.mubr.bf16.gmra.mxu0 %v3043
        %v4443 = vpop.f32.mrf.mxu0
        %v4444 = vadd.f32 %v3899, %v4443
        %v4445 = vpop.f32.mrf.mxu0
        %v4446 = vpop.f32.mrf.mxu0
        %v4447 = vadd.f32 %v3902, %v4446
        %v4448 = vpop.f32.mrf.mxu0
        %4449 = vmatprep.mubr.bf16.mxu0 0
        %4450 = vmatmul.mubr.bf16.gmra.mxu0 %v3046
        %v4451 = vpop.f32.mrf.mxu0
        %v4452 = vadd.f32 %v3907, %v4451
        %v4453 = vpop.f32.mrf.mxu0
        %v4454 = vpop.f32.mrf.mxu0
        %v4455 = vadd.f32 %v3910, %v4454
        %v4456 = vpop.f32.mrf.mxu0
        %4457 = vmatprep.mubr.bf16.mxu0 0
        %4458 = vmatmul.mubr.bf16.gmra.mxu0 %v3049
        %v4459 = vpop.f32.mrf.mxu0
        %v4460 = vadd.f32 %v3915, %v4459
        %v4461 = vpop.f32.mrf.mxu0
        %v4462 = vpop.f32.mrf.mxu0
        %v4463 = vadd.f32 %v3918, %v4462
        %v4464 = vpop.f32.mrf.mxu0
        %4465 = vmatprep.mubr.bf16.mxu0 0
        %4466 = vmatmul.mubr.bf16.gmra.mxu0 %v3052
        %v4467 = vpop.f32.mrf.mxu0
        %v4468 = vadd.f32 %v3923, %v4467
        %v4469 = vpop.f32.mrf.mxu0
        %v4470 = vpop.f32.mrf.mxu0
        %v4471 = vadd.f32 %v3926, %v4470
        %v4472 = vpop.f32.mrf.mxu0
        %4473 = vmatprep.mubr.bf16.mxu0 0
        %4474 = vmatmul.mubr.bf16.gmra.mxu0 %v3055
        %v4475 = vpop.f32.mrf.mxu0
        %v4476 = vadd.f32 %v3931, %v4475
        %v4477 = vpop.f32.mrf.mxu0
        %v4478 = vpop.f32.mrf.mxu0
        %v4479 = vadd.f32 %v3934, %v4478
        %v4480 = vpop.f32.mrf.mxu0
        %4481 = vdwg.mxu0
        %v4482 = vmax.f32 %v3972, 0.0
        %v4483 = vmax.f32 %v3975, 0.0
        %v4484 = vmax.f32 %v3980, 0.0
        %v4485 = vmax.f32 %v3983, 0.0
        %v4486 = vmax.f32 %v3988, 0.0
        %v4487 = vmax.f32 %v3991, 0.0
        %v4488 = vmax.f32 %v3996, 0.0
        %v4489 = vmax.f32 %v3999, 0.0
        %v4490 = vmax.f32 %v4004, 0.0
        %v4491 = vmax.f32 %v4007, 0.0
        %v4492 = vmax.f32 %v4012, 0.0
        %v4493 = vmax.f32 %v4015, 0.0
        %v4494 = vmax.f32 %v4020, 0.0
        %v4495 = vmax.f32 %v4023, 0.0
        %v4496 = vmax.f32 %v4028, 0.0
        %v4497 = vmax.f32 %v4031, 0.0
        %v4498 = vmax.f32 %v4036, 0.0
        %v4499 = vmax.f32 %v4039, 0.0
        %v4500 = vmax.f32 %v4044, 0.0
        %v4501 = vmax.f32 %v4047, 0.0
        %v4502 = vmax.f32 %v4052, 0.0
        %v4503 = vmax.f32 %v4055, 0.0
        %v4504 = vmax.f32 %v4060, 0.0
        %v4505 = vmax.f32 %v4063, 0.0
        %v4506 = vmax.f32 %v4068, 0.0
        %v4507 = vmax.f32 %v4071, 0.0
        %v4508 = vmax.f32 %v4076, 0.0
        %v4509 = vmax.f32 %v4079, 0.0
        %v4510 = vmax.f32 %v4084, 0.0
        %v4511 = vmax.f32 %v4087, 0.0
        %v4512 = vmax.f32 %v4092, 0.0
        %v4513 = vmax.f32 %v4095, 0.0
        %v4514 = vmax.f32 %v4100, 0.0
        %v4515 = vmax.f32 %v4103, 0.0
        %v4516 = vmax.f32 %v4108, 0.0
        %v4517 = vmax.f32 %v4111, 0.0
        %v4518 = vmax.f32 %v4116, 0.0
        %v4519 = vmax.f32 %v4119, 0.0
        %v4520 = vmax.f32 %v4124, 0.0
        %v4521 = vmax.f32 %v4127, 0.0
        %v4522 = vmax.f32 %v4132, 0.0
        %v4523 = vmax.f32 %v4135, 0.0
        %v4524 = vmax.f32 %v4140, 0.0
        %v4525 = vmax.f32 %v4143, 0.0
        %v4526 = vmax.f32 %v4148, 0.0
        %v4527 = vmax.f32 %v4151, 0.0
        %v4528 = vmax.f32 %v4156, 0.0
        %v4529 = vmax.f32 %v4159, 0.0
        %v4530 = vmax.f32 %v4164, 0.0
        %v4531 = vmax.f32 %v4167, 0.0
        %v4532 = vmax.f32 %v4172, 0.0
        %v4533 = vmax.f32 %v4175, 0.0
        %v4534 = vmax.f32 %v4180, 0.0
        %v4535 = vmax.f32 %v4183, 0.0
        %v4536 = vmax.f32 %v4188, 0.0
        %v4537 = vmax.f32 %v4191, 0.0
        %v4538 = vmax.f32 %v4196, 0.0
        %v4539 = vmax.f32 %v4199, 0.0
        %v4540 = vmax.f32 %v4204, 0.0
        %v4541 = vmax.f32 %v4207, 0.0
        %v4542 = vmax.f32 %v4212, 0.0
        %v4543 = vmax.f32 %v4215, 0.0
        %v4544 = vmax.f32 %v4220, 0.0
        %v4545 = vmax.f32 %v4223, 0.0
        %v4546 = vmax.f32 %v4228, 0.0
        %v4547 = vmax.f32 %v4231, 0.0
        %v4548 = vmax.f32 %v4236, 0.0
        %v4549 = vmax.f32 %v4239, 0.0
        %v4550 = vmax.f32 %v4244, 0.0
        %v4551 = vmax.f32 %v4247, 0.0
        %v4552 = vmax.f32 %v4252, 0.0
        %v4553 = vmax.f32 %v4255, 0.0
        %v4554 = vmax.f32 %v4260, 0.0
        %v4555 = vmax.f32 %v4263, 0.0
        %v4556 = vmax.f32 %v4268, 0.0
        %v4557 = vmax.f32 %v4271, 0.0
        %v4558 = vmax.f32 %v4276, 0.0
        %v4559 = vmax.f32 %v4279, 0.0
        %v4560 = vmax.f32 %v4284, 0.0
        %v4561 = vmax.f32 %v4287, 0.0
        %v4562 = vmax.f32 %v4292, 0.0
        %v4563 = vmax.f32 %v4295, 0.0
        %v4564 = vmax.f32 %v4300, 0.0
        %v4565 = vmax.f32 %v4303, 0.0
        %v4566 = vmax.f32 %v4308, 0.0
        %v4567 = vmax.f32 %v4311, 0.0
        %v4568 = vmax.f32 %v4316, 0.0
        %v4569 = vmax.f32 %v4319, 0.0
        %v4570 = vmax.f32 %v4324, 0.0
        %v4571 = vmax.f32 %v4327, 0.0
        %v4572 = vmax.f32 %v4332, 0.0
        %v4573 = vmax.f32 %v4335, 0.0
        %v4574 = vmax.f32 %v4340, 0.0
        %v4575 = vmax.f32 %v4343, 0.0
        %v4576 = vmax.f32 %v4348, 0.0
        %v4577 = vmax.f32 %v4351, 0.0
        %v4578 = vmax.f32 %v4356, 0.0
        %v4579 = vmax.f32 %v4359, 0.0
        %v4580 = vmax.f32 %v4364, 0.0
        %v4581 = vmax.f32 %v4367, 0.0
        %v4582 = vmax.f32 %v4372, 0.0
        %v4583 = vmax.f32 %v4375, 0.0
        %v4584 = vmax.f32 %v4380, 0.0
        %v4585 = vmax.f32 %v4383, 0.0
        %v4586 = vmax.f32 %v4388, 0.0
        %v4587 = vmax.f32 %v4391, 0.0
        %v4588 = vmax.f32 %v4396, 0.0
        %v4589 = vmax.f32 %v4399, 0.0
        %v4590 = vmax.f32 %v4404, 0.0
        %v4591 = vmax.f32 %v4407, 0.0
        %v4592 = vmax.f32 %v4412, 0.0
        %v4593 = vmax.f32 %v4415, 0.0
        %v4594 = vmax.f32 %v4420, 0.0
        %v4595 = vmax.f32 %v4423, 0.0
        %v4596 = vmax.f32 %v4428, 0.0
        %v4597 = vmax.f32 %v4431, 0.0
        %v4598 = vmax.f32 %v4436, 0.0
        %v4599 = vmax.f32 %v4439, 0.0
        %v4600 = vmax.f32 %v4444, 0.0
        %v4601 = vmax.f32 %v4447, 0.0
        %v4602 = vmax.f32 %v4452, 0.0
        %v4603 = vmax.f32 %v4455, 0.0
        %v4604 = vmax.f32 %v4460, 0.0
        %v4605 = vmax.f32 %v4463, 0.0
        %v4606 = vmax.f32 %v4468, 0.0
        %v4607 = vmax.f32 %v4471, 0.0
        %v4608 = vmax.f32 %v4476, 0.0
        %v4609 = vmax.f32 %v4479, 0.0
        %v4610 = vpack.c.bf16 %v4483, %v4482
        %v4611 = vpack.c.bf16 %v4485, %v4484
        %v4612 = vpack.c.bf16 %v4487, %v4486
        %v4613 = vpack.c.bf16 %v4489, %v4488
        %v4614 = vpack.c.bf16 %v4491, %v4490
        %v4615 = vpack.c.bf16 %v4493, %v4492
        %v4616 = vpack.c.bf16 %v4495, %v4494
        %v4617 = vpack.c.bf16 %v4497, %v4496
        %v4618 = vpack.c.bf16 %v4499, %v4498
        %v4619 = vpack.c.bf16 %v4501, %v4500
        %v4620 = vpack.c.bf16 %v4503, %v4502
        %v4621 = vpack.c.bf16 %v4505, %v4504
        %v4622 = vpack.c.bf16 %v4507, %v4506
        %v4623 = vpack.c.bf16 %v4509, %v4508
        %v4624 = vpack.c.bf16 %v4511, %v4510
        %v4625 = vpack.c.bf16 %v4513, %v4512
        %v4626 = vpack.c.bf16 %v4515, %v4514
        %v4627 = vpack.c.bf16 %v4517, %v4516
        %v4628 = vpack.c.bf16 %v4519, %v4518
        %v4629 = vpack.c.bf16 %v4521, %v4520
        %v4630 = vpack.c.bf16 %v4523, %v4522
        %v4631 = vpack.c.bf16 %v4525, %v4524
        %v4632 = vpack.c.bf16 %v4527, %v4526
        %v4633 = vpack.c.bf16 %v4529, %v4528
        %v4634 = vpack.c.bf16 %v4531, %v4530
        %v4635 = vpack.c.bf16 %v4533, %v4532
        %v4636 = vpack.c.bf16 %v4535, %v4534
        %v4637 = vpack.c.bf16 %v4537, %v4536
        %v4638 = vpack.c.bf16 %v4539, %v4538
        %v4639 = vpack.c.bf16 %v4541, %v4540
        %v4640 = vpack.c.bf16 %v4543, %v4542
        %v4641 = vpack.c.bf16 %v4545, %v4544
        %v4642 = vpack.c.bf16 %v4547, %v4546
        %v4643 = vpack.c.bf16 %v4549, %v4548
        %v4644 = vpack.c.bf16 %v4551, %v4550
        %v4645 = vpack.c.bf16 %v4553, %v4552
        %v4646 = vpack.c.bf16 %v4555, %v4554
        %v4647 = vpack.c.bf16 %v4557, %v4556
        %v4648 = vpack.c.bf16 %v4559, %v4558
        %v4649 = vpack.c.bf16 %v4561, %v4560
        %v4650 = vpack.c.bf16 %v4563, %v4562
        %v4651 = vpack.c.bf16 %v4565, %v4564
        %v4652 = vpack.c.bf16 %v4567, %v4566
        %v4653 = vpack.c.bf16 %v4569, %v4568
        %v4654 = vpack.c.bf16 %v4571, %v4570
        %v4655 = vpack.c.bf16 %v4573, %v4572
        %v4656 = vpack.c.bf16 %v4575, %v4574
        %v4657 = vpack.c.bf16 %v4577, %v4576
        %v4658 = vpack.c.bf16 %v4579, %v4578
        %v4659 = vpack.c.bf16 %v4581, %v4580
        %v4660 = vpack.c.bf16 %v4583, %v4582
        %v4661 = vpack.c.bf16 %v4585, %v4584
        %v4662 = vpack.c.bf16 %v4587, %v4586
        %v4663 = vpack.c.bf16 %v4589, %v4588
        %v4664 = vpack.c.bf16 %v4591, %v4590
        %v4665 = vpack.c.bf16 %v4593, %v4592
        %v4666 = vpack.c.bf16 %v4595, %v4594
        %v4667 = vpack.c.bf16 %v4597, %v4596
        %v4668 = vpack.c.bf16 %v4599, %v4598
        %v4669 = vpack.c.bf16 %v4601, %v4600
        %v4670 = vpack.c.bf16 %v4603, %v4602
        %v4671 = vpack.c.bf16 %v4605, %v4604
        %v4672 = vpack.c.bf16 %v4607, %v4606
        %v4673 = vpack.c.bf16 %v4609, %v4608
        %v4674 = vld [vmem:[%s541] sm:$0xf]
        %v4675 = vld [vmem:[%s541 + $0x4] sm:$0xf]
        %v4676 = vld [vmem:[%s541 + $0x8] sm:$0xf]
        %v4677 = vld [vmem:[%s541 + $0xc] sm:$0xf]
        %v4678 = vld [vmem:[%s541 + $0x10] sm:$0xf]
        %v4679 = vld [vmem:[%s541 + $0x14] sm:$0xf]
        %v4680 = vld [vmem:[%s541 + $0x18] sm:$0xf]
        %v4681 = vld [vmem:[%s541 + $0x1c] sm:$0xf]
        %v4682 = vld [vmem:[%s541 + $0x20] sm:$0xf]
        %v4683 = vld [vmem:[%s541 + $0x24] sm:$0xf]
        %v4684 = vld [vmem:[%s541 + $0x28] sm:$0xf]
        %v4685 = vld [vmem:[%s541 + $0x2c] sm:$0xf]
        %v4686 = vld [vmem:[%s541 + $0x30] sm:$0xf]
        %v4687 = vld [vmem:[%s541 + $0x34] sm:$0xf]
        %v4688 = vld [vmem:[%s541 + $0x38] sm:$0xf]
        %v4689 = vld [vmem:[%s541 + $0x3c] sm:$0xf]
        %v4690 = vld [vmem:[%s623] sm:$0x1]
        %v4692 = vlaneseq
        %v4693 = vshrl.u32 %v4692, 7
        %v4694 = vsub.s32 0, %v4693
        %v4695 = vrot.slane %v4690, %v4694
        %v4713 = vunpack.c.l.b16 %v4674
        %v4714 = vunpack.c.l.b16 %v4675
        %v4715 = vunpack.c.l.b16 %v4676
        %v4716 = vunpack.c.l.b16 %v4677
        %v4717 = vunpack.c.l.b16 %v4678
        %v4718 = vunpack.c.l.b16 %v4679
        %v4719 = vunpack.c.l.b16 %v4680
        %v4720 = vunpack.c.l.b16 %v4681
        %v4721 = vunpack.c.l.b16 %v4682
        %v4722 = vunpack.c.l.b16 %v4683
        %v4723 = vunpack.c.l.b16 %v4684
        %v4724 = vunpack.c.l.b16 %v4685
        %v4725 = vunpack.c.l.b16 %v4686
        %v4726 = vunpack.c.l.b16 %v4687
        %v4727 = vunpack.c.l.b16 %v4688
        %v4728 = vunpack.c.l.b16 %v4689
        %v4729 = vpack.c.b16 %v4714, %v4713
        %v4730 = vpack.c.b16 %v4716, %v4715
        %v4731 = vpack.c.b16 %v4718, %v4717
        %v4732 = vpack.c.b16 %v4720, %v4719
        %v4733 = vpack.c.b16 %v4722, %v4721
        %v4734 = vpack.c.b16 %v4724, %v4723
        %v4735 = vpack.c.b16 %v4726, %v4725
        %v4736 = vpack.c.b16 %v4728, %v4727
        %4745 = vmatprep.subr.bf16.mxu0 0
        %4746 = vmatpush1.bf16.msra.mxu0 %v4736
        %4747 = vmatprep.subr.bf16.mxu0 0
        %4748 = vmatpush1.bf16.msra.mxu0 %v4735
        %4749 = vmatprep.subr.bf16.mxu0 0
        %4750 = vmatpush1.bf16.msra.mxu0 %v4734
        %4751 = vmatprep.subr.bf16.mxu0 0
        %4752 = vmatpush1.bf16.msra.mxu0 %v4733
        %4753 = vmatprep.subr.bf16.mxu0 0
        %4754 = vmatpush1.bf16.msra.mxu0 %v4732
        %4755 = vmatprep.subr.bf16.mxu0 0
        %4756 = vmatpush1.bf16.msra.mxu0 %v4731
        %4757 = vmatprep.subr.bf16.mxu0 0
        %4758 = vmatpush1.bf16.msra.mxu0 %v4730
        %4759 = vmatprep.subr.bf16.mxu0 0
        %4760 = vmatpush1.bf16.msra.mxu0 %v4729
        %4761 = vmatprep.subr.bf16.mxu0 0
        %4762 = vmatpush2.bf16.msra.mxu0 0
        %4763 = vmatprep.subr.bf16.mxu0 0
        %4764 = vmatpush2.bf16.msra.mxu0 0
        %4765 = vmatprep.subr.bf16.mxu0 0
        %4766 = vmatpush2.bf16.msra.mxu0 0
        %4767 = vmatprep.subr.bf16.mxu0 0
        %4768 = vmatpush2.bf16.msra.mxu0 0
        %4769 = vmatprep.subr.bf16.mxu0 0
        %4770 = vmatpush2.bf16.msra.mxu0 0
        %4771 = vmatprep.subr.bf16.mxu0 0
        %4772 = vmatpush2.bf16.msra.mxu0 0
        %4773 = vmatprep.subr.bf16.mxu0 0
        %4774 = vmatpush2.bf16.msra.mxu0 0
        %4775 = vmatprep.subr.bf16.mxu0 0
        %4776 = vmatpush2.bf16.msra.mxu0 0
        %4777 = vmatprep.mubr.bf16.mxu0 0
        %4778 = vmatmul.mubr.bf16.gmra.mxu0 %v4610
        %v4779 = vpop.f32.mrf.mxu0
        %v4780 = vadd.f32 %v4695, %v4779
        %v4781 = vpop.f32.mrf.mxu0
        %v4782 = vpop.f32.mrf.mxu0
        %v4783 = vadd.f32 %v4695, %v4782
        %v4784 = vpop.f32.mrf.mxu0
        %4785 = vmatprep.mubr.bf16.mxu0 0
        %4786 = vmatmul.mubr.bf16.gmra.mxu0 %v4611
        %v4787 = vpop.f32.mrf.mxu0
        %v4788 = vadd.f32 %v4695, %v4787
        %v4789 = vpop.f32.mrf.mxu0
        %v4790 = vpop.f32.mrf.mxu0
        %v4791 = vadd.f32 %v4695, %v4790
        %v4792 = vpop.f32.mrf.mxu0
        %4793 = vmatprep.mubr.bf16.mxu0 0
        %4794 = vmatmul.mubr.bf16.gmra.mxu0 %v4612
        %v4795 = vpop.f32.mrf.mxu0
        %v4796 = vadd.f32 %v4695, %v4795
        %v4797 = vpop.f32.mrf.mxu0
        %v4798 = vpop.f32.mrf.mxu0
        %v4799 = vadd.f32 %v4695, %v4798
        %v4800 = vpop.f32.mrf.mxu0
        %4801 = vmatprep.mubr.bf16.mxu0 0
        %4802 = vmatmul.mubr.bf16.gmra.mxu0 %v4613
        %v4803 = vpop.f32.mrf.mxu0
        %v4804 = vadd.f32 %v4695, %v4803
        %v4805 = vpop.f32.mrf.mxu0
        %v4806 = vpop.f32.mrf.mxu0
        %v4807 = vadd.f32 %v4695, %v4806
        %v4808 = vpop.f32.mrf.mxu0
        %4809 = vmatprep.mubr.bf16.mxu0 0
        %4810 = vmatmul.mubr.bf16.gmra.mxu0 %v4614
        %v4811 = vpop.f32.mrf.mxu0
        %v4812 = vadd.f32 %v4695, %v4811
        %v4813 = vpop.f32.mrf.mxu0
        %v4814 = vpop.f32.mrf.mxu0
        %v4815 = vadd.f32 %v4695, %v4814
        %v4816 = vpop.f32.mrf.mxu0
        %4817 = vmatprep.mubr.bf16.mxu0 0
        %4818 = vmatmul.mubr.bf16.gmra.mxu0 %v4615
        %v4819 = vpop.f32.mrf.mxu0
        %v4820 = vadd.f32 %v4695, %v4819
        %v4821 = vpop.f32.mrf.mxu0
        %v4822 = vpop.f32.mrf.mxu0
        %v4823 = vadd.f32 %v4695, %v4822
        %v4824 = vpop.f32.mrf.mxu0
        %4825 = vmatprep.mubr.bf16.mxu0 0
        %4826 = vmatmul.mubr.bf16.gmra.mxu0 %v4616
        %v4827 = vpop.f32.mrf.mxu0
        %v4828 = vadd.f32 %v4695, %v4827
        %v4829 = vpop.f32.mrf.mxu0
        %v4830 = vpop.f32.mrf.mxu0
        %v4831 = vadd.f32 %v4695, %v4830
        %v4832 = vpop.f32.mrf.mxu0
        %4833 = vmatprep.mubr.bf16.mxu0 0
        %4834 = vmatmul.mubr.bf16.gmra.mxu0 %v4617
        %v4835 = vpop.f32.mrf.mxu0
        %v4836 = vadd.f32 %v4695, %v4835
        %v4837 = vpop.f32.mrf.mxu0
        %v4838 = vpop.f32.mrf.mxu0
        %v4839 = vadd.f32 %v4695, %v4838
        %v4840 = vpop.f32.mrf.mxu0
        %4841 = vmatprep.mubr.bf16.mxu0 0
        %4842 = vmatmul.mubr.bf16.gmra.mxu0 %v4618
        %v4843 = vpop.f32.mrf.mxu0
        %v4844 = vadd.f32 %v4695, %v4843
        %v4845 = vpop.f32.mrf.mxu0
        %v4846 = vpop.f32.mrf.mxu0
        %v4847 = vadd.f32 %v4695, %v4846
        %v4848 = vpop.f32.mrf.mxu0
        %4849 = vmatprep.mubr.bf16.mxu0 0
        %4850 = vmatmul.mubr.bf16.gmra.mxu0 %v4619
        %v4851 = vpop.f32.mrf.mxu0
        %v4852 = vadd.f32 %v4695, %v4851
        %v4853 = vpop.f32.mrf.mxu0
        %v4854 = vpop.f32.mrf.mxu0
        %v4855 = vadd.f32 %v4695, %v4854
        %v4856 = vpop.f32.mrf.mxu0
        %4857 = vmatprep.mubr.bf16.mxu0 0
        %4858 = vmatmul.mubr.bf16.gmra.mxu0 %v4620
        %v4859 = vpop.f32.mrf.mxu0
        %v4860 = vadd.f32 %v4695, %v4859
        %v4861 = vpop.f32.mrf.mxu0
        %v4862 = vpop.f32.mrf.mxu0
        %v4863 = vadd.f32 %v4695, %v4862
        %v4864 = vpop.f32.mrf.mxu0
        %4865 = vmatprep.mubr.bf16.mxu0 0
        %4866 = vmatmul.mubr.bf16.gmra.mxu0 %v4621
        %v4867 = vpop.f32.mrf.mxu0
        %v4868 = vadd.f32 %v4695, %v4867
        %v4869 = vpop.f32.mrf.mxu0
        %v4870 = vpop.f32.mrf.mxu0
        %v4871 = vadd.f32 %v4695, %v4870
        %v4872 = vpop.f32.mrf.mxu0
        %4873 = vmatprep.mubr.bf16.mxu0 0
        %4874 = vmatmul.mubr.bf16.gmra.mxu0 %v4622
        %v4875 = vpop.f32.mrf.mxu0
        %v4876 = vadd.f32 %v4695, %v4875
        %v4877 = vpop.f32.mrf.mxu0
        %v4878 = vpop.f32.mrf.mxu0
        %v4879 = vadd.f32 %v4695, %v4878
        %v4880 = vpop.f32.mrf.mxu0
        %4881 = vmatprep.mubr.bf16.mxu0 0
        %4882 = vmatmul.mubr.bf16.gmra.mxu0 %v4623
        %v4883 = vpop.f32.mrf.mxu0
        %v4884 = vadd.f32 %v4695, %v4883
        %v4885 = vpop.f32.mrf.mxu0
        %v4886 = vpop.f32.mrf.mxu0
        %v4887 = vadd.f32 %v4695, %v4886
        %v4888 = vpop.f32.mrf.mxu0
        %4889 = vmatprep.mubr.bf16.mxu0 0
        %4890 = vmatmul.mubr.bf16.gmra.mxu0 %v4624
        %v4891 = vpop.f32.mrf.mxu0
        %v4892 = vadd.f32 %v4695, %v4891
        %v4893 = vpop.f32.mrf.mxu0
        %v4894 = vpop.f32.mrf.mxu0
        %v4895 = vadd.f32 %v4695, %v4894
        %v4896 = vpop.f32.mrf.mxu0
        %4897 = vmatprep.mubr.bf16.mxu0 0
        %4898 = vmatmul.mubr.bf16.gmra.mxu0 %v4625
        %v4899 = vpop.f32.mrf.mxu0
        %v4900 = vadd.f32 %v4695, %v4899
        %v4901 = vpop.f32.mrf.mxu0
        %v4902 = vpop.f32.mrf.mxu0
        %v4903 = vadd.f32 %v4695, %v4902
        %v4904 = vpop.f32.mrf.mxu0
        %4905 = vmatprep.mubr.bf16.mxu0 0
        %4906 = vmatmul.mubr.bf16.gmra.mxu0 %v4626
        %v4907 = vpop.f32.mrf.mxu0
        %v4908 = vadd.f32 %v4695, %v4907
        %v4909 = vpop.f32.mrf.mxu0
        %v4910 = vpop.f32.mrf.mxu0
        %v4911 = vadd.f32 %v4695, %v4910
        %v4912 = vpop.f32.mrf.mxu0
        %4913 = vmatprep.mubr.bf16.mxu0 0
        %4914 = vmatmul.mubr.bf16.gmra.mxu0 %v4627
        %v4915 = vpop.f32.mrf.mxu0
        %v4916 = vadd.f32 %v4695, %v4915
        %v4917 = vpop.f32.mrf.mxu0
        %v4918 = vpop.f32.mrf.mxu0
        %v4919 = vadd.f32 %v4695, %v4918
        %v4920 = vpop.f32.mrf.mxu0
        %4921 = vmatprep.mubr.bf16.mxu0 0
        %4922 = vmatmul.mubr.bf16.gmra.mxu0 %v4628
        %v4923 = vpop.f32.mrf.mxu0
        %v4924 = vadd.f32 %v4695, %v4923
        %v4925 = vpop.f32.mrf.mxu0
        %v4926 = vpop.f32.mrf.mxu0
        %v4927 = vadd.f32 %v4695, %v4926
        %v4928 = vpop.f32.mrf.mxu0
        %4929 = vmatprep.mubr.bf16.mxu0 0
        %4930 = vmatmul.mubr.bf16.gmra.mxu0 %v4629
        %v4931 = vpop.f32.mrf.mxu0
        %v4932 = vadd.f32 %v4695, %v4931
        %v4933 = vpop.f32.mrf.mxu0
        %v4934 = vpop.f32.mrf.mxu0
        %v4935 = vadd.f32 %v4695, %v4934
        %v4936 = vpop.f32.mrf.mxu0
        %4937 = vmatprep.mubr.bf16.mxu0 0
        %4938 = vmatmul.mubr.bf16.gmra.mxu0 %v4630
        %v4939 = vpop.f32.mrf.mxu0
        %v4940 = vadd.f32 %v4695, %v4939
        %v4941 = vpop.f32.mrf.mxu0
        %v4942 = vpop.f32.mrf.mxu0
        %v4943 = vadd.f32 %v4695, %v4942
        %v4944 = vpop.f32.mrf.mxu0
        %4945 = vmatprep.mubr.bf16.mxu0 0
        %4946 = vmatmul.mubr.bf16.gmra.mxu0 %v4631
        %v4947 = vpop.f32.mrf.mxu0
        %v4948 = vadd.f32 %v4695, %v4947
        %v4949 = vpop.f32.mrf.mxu0
        %v4950 = vpop.f32.mrf.mxu0
        %v4951 = vadd.f32 %v4695, %v4950
        %v4952 = vpop.f32.mrf.mxu0
        %4953 = vmatprep.mubr.bf16.mxu0 0
        %4954 = vmatmul.mubr.bf16.gmra.mxu0 %v4632
        %v4955 = vpop.f32.mrf.mxu0
        %v4956 = vadd.f32 %v4695, %v4955
        %v4957 = vpop.f32.mrf.mxu0
        %v4958 = vpop.f32.mrf.mxu0
        %v4959 = vadd.f32 %v4695, %v4958
        %v4960 = vpop.f32.mrf.mxu0
        %4961 = vmatprep.mubr.bf16.mxu0 0
        %4962 = vmatmul.mubr.bf16.gmra.mxu0 %v4633
        %v4963 = vpop.f32.mrf.mxu0
        %v4964 = vadd.f32 %v4695, %v4963
        %v4965 = vpop.f32.mrf.mxu0
        %v4966 = vpop.f32.mrf.mxu0
        %v4967 = vadd.f32 %v4695, %v4966
        %v4968 = vpop.f32.mrf.mxu0
        %4969 = vmatprep.mubr.bf16.mxu0 0
        %4970 = vmatmul.mubr.bf16.gmra.mxu0 %v4634
        %v4971 = vpop.f32.mrf.mxu0
        %v4972 = vadd.f32 %v4695, %v4971
        %v4973 = vpop.f32.mrf.mxu0
        %v4974 = vpop.f32.mrf.mxu0
        %v4975 = vadd.f32 %v4695, %v4974
        %v4976 = vpop.f32.mrf.mxu0
        %4977 = vmatprep.mubr.bf16.mxu0 0
        %4978 = vmatmul.mubr.bf16.gmra.mxu0 %v4635
        %v4979 = vpop.f32.mrf.mxu0
        %v4980 = vadd.f32 %v4695, %v4979
        %v4981 = vpop.f32.mrf.mxu0
        %v4982 = vpop.f32.mrf.mxu0
        %v4983 = vadd.f32 %v4695, %v4982
        %v4984 = vpop.f32.mrf.mxu0
        %4985 = vmatprep.mubr.bf16.mxu0 0
        %4986 = vmatmul.mubr.bf16.gmra.mxu0 %v4636
        %v4987 = vpop.f32.mrf.mxu0
        %v4988 = vadd.f32 %v4695, %v4987
        %v4989 = vpop.f32.mrf.mxu0
        %v4990 = vpop.f32.mrf.mxu0
        %v4991 = vadd.f32 %v4695, %v4990
        %v4992 = vpop.f32.mrf.mxu0
        %4993 = vmatprep.mubr.bf16.mxu0 0
        %4994 = vmatmul.mubr.bf16.gmra.mxu0 %v4637
        %v4995 = vpop.f32.mrf.mxu0
        %v4996 = vadd.f32 %v4695, %v4995
        %v4997 = vpop.f32.mrf.mxu0
        %v4998 = vpop.f32.mrf.mxu0
        %v4999 = vadd.f32 %v4695, %v4998
        %v5000 = vpop.f32.mrf.mxu0
        %5001 = vmatprep.mubr.bf16.mxu0 0
        %5002 = vmatmul.mubr.bf16.gmra.mxu0 %v4638
        %v5003 = vpop.f32.mrf.mxu0
        %v5004 = vadd.f32 %v4695, %v5003
        %v5005 = vpop.f32.mrf.mxu0
        %v5006 = vpop.f32.mrf.mxu0
        %v5007 = vadd.f32 %v4695, %v5006
        %v5008 = vpop.f32.mrf.mxu0
        %5009 = vmatprep.mubr.bf16.mxu0 0
        %5010 = vmatmul.mubr.bf16.gmra.mxu0 %v4639
        %v5011 = vpop.f32.mrf.mxu0
        %v5012 = vadd.f32 %v4695, %v5011
        %v5013 = vpop.f32.mrf.mxu0
        %v5014 = vpop.f32.mrf.mxu0
        %v5015 = vadd.f32 %v4695, %v5014
        %v5016 = vpop.f32.mrf.mxu0
        %5017 = vmatprep.mubr.bf16.mxu0 0
        %5018 = vmatmul.mubr.bf16.gmra.mxu0 %v4640
        %v5019 = vpop.f32.mrf.mxu0
        %v5020 = vadd.f32 %v4695, %v5019
        %v5021 = vpop.f32.mrf.mxu0
        %v5022 = vpop.f32.mrf.mxu0
        %v5023 = vadd.f32 %v4695, %v5022
        %v5024 = vpop.f32.mrf.mxu0
        %5025 = vmatprep.mubr.bf16.mxu0 0
        %5026 = vmatmul.mubr.bf16.gmra.mxu0 %v4641
        %v5027 = vpop.f32.mrf.mxu0
        %v5028 = vadd.f32 %v4695, %v5027
        %v5029 = vpop.f32.mrf.mxu0
        %v5030 = vpop.f32.mrf.mxu0
        %v5031 = vadd.f32 %v4695, %v5030
        %v5032 = vpop.f32.mrf.mxu0
        %5033 = vmatprep.mubr.bf16.mxu0 0
        %5034 = vmatmul.mubr.bf16.gmra.mxu0 %v4642
        %v5035 = vpop.f32.mrf.mxu0
        %v5036 = vadd.f32 %v4695, %v5035
        %v5037 = vpop.f32.mrf.mxu0
        %v5038 = vpop.f32.mrf.mxu0
        %v5039 = vadd.f32 %v4695, %v5038
        %v5040 = vpop.f32.mrf.mxu0
        %5041 = vmatprep.mubr.bf16.mxu0 0
        %5042 = vmatmul.mubr.bf16.gmra.mxu0 %v4643
        %v5043 = vpop.f32.mrf.mxu0
        %v5044 = vadd.f32 %v4695, %v5043
        %v5045 = vpop.f32.mrf.mxu0
        %v5046 = vpop.f32.mrf.mxu0
        %v5047 = vadd.f32 %v4695, %v5046
        %v5048 = vpop.f32.mrf.mxu0
        %5049 = vmatprep.mubr.bf16.mxu0 0
        %5050 = vmatmul.mubr.bf16.gmra.mxu0 %v4644
        %v5051 = vpop.f32.mrf.mxu0
        %v5052 = vadd.f32 %v4695, %v5051
        %v5053 = vpop.f32.mrf.mxu0
        %v5054 = vpop.f32.mrf.mxu0
        %v5055 = vadd.f32 %v4695, %v5054
        %v5056 = vpop.f32.mrf.mxu0
        %5057 = vmatprep.mubr.bf16.mxu0 0
        %5058 = vmatmul.mubr.bf16.gmra.mxu0 %v4645
        %v5059 = vpop.f32.mrf.mxu0
        %v5060 = vadd.f32 %v4695, %v5059
        %v5061 = vpop.f32.mrf.mxu0
        %v5062 = vpop.f32.mrf.mxu0
        %v5063 = vadd.f32 %v4695, %v5062
        %v5064 = vpop.f32.mrf.mxu0
        %5065 = vmatprep.mubr.bf16.mxu0 0
        %5066 = vmatmul.mubr.bf16.gmra.mxu0 %v4646
        %v5067 = vpop.f32.mrf.mxu0
        %v5068 = vadd.f32 %v4695, %v5067
        %v5069 = vpop.f32.mrf.mxu0
        %v5070 = vpop.f32.mrf.mxu0
        %v5071 = vadd.f32 %v4695, %v5070
        %v5072 = vpop.f32.mrf.mxu0
        %5073 = vmatprep.mubr.bf16.mxu0 0
        %5074 = vmatmul.mubr.bf16.gmra.mxu0 %v4647
        %v5075 = vpop.f32.mrf.mxu0
        %v5076 = vadd.f32 %v4695, %v5075
        %v5077 = vpop.f32.mrf.mxu0
        %v5078 = vpop.f32.mrf.mxu0
        %v5079 = vadd.f32 %v4695, %v5078
        %v5080 = vpop.f32.mrf.mxu0
        %5081 = vmatprep.mubr.bf16.mxu0 0
        %5082 = vmatmul.mubr.bf16.gmra.mxu0 %v4648
        %v5083 = vpop.f32.mrf.mxu0
        %v5084 = vadd.f32 %v4695, %v5083
        %v5085 = vpop.f32.mrf.mxu0
        %v5086 = vpop.f32.mrf.mxu0
        %v5087 = vadd.f32 %v4695, %v5086
        %v5088 = vpop.f32.mrf.mxu0
        %5089 = vmatprep.mubr.bf16.mxu0 0
        %5090 = vmatmul.mubr.bf16.gmra.mxu0 %v4649
        %v5091 = vpop.f32.mrf.mxu0
        %v5092 = vadd.f32 %v4695, %v5091
        %v5093 = vpop.f32.mrf.mxu0
        %v5094 = vpop.f32.mrf.mxu0
        %v5095 = vadd.f32 %v4695, %v5094
        %v5096 = vpop.f32.mrf.mxu0
        %5097 = vmatprep.mubr.bf16.mxu0 0
        %5098 = vmatmul.mubr.bf16.gmra.mxu0 %v4650
        %v5099 = vpop.f32.mrf.mxu0
        %v5100 = vadd.f32 %v4695, %v5099
        %v5101 = vpop.f32.mrf.mxu0
        %v5102 = vpop.f32.mrf.mxu0
        %v5103 = vadd.f32 %v4695, %v5102
        %v5104 = vpop.f32.mrf.mxu0
        %5105 = vmatprep.mubr.bf16.mxu0 0
        %5106 = vmatmul.mubr.bf16.gmra.mxu0 %v4651
        %v5107 = vpop.f32.mrf.mxu0
        %v5108 = vadd.f32 %v4695, %v5107
        %v5109 = vpop.f32.mrf.mxu0
        %v5110 = vpop.f32.mrf.mxu0
        %v5111 = vadd.f32 %v4695, %v5110
        %v5112 = vpop.f32.mrf.mxu0
        %5113 = vmatprep.mubr.bf16.mxu0 0
        %5114 = vmatmul.mubr.bf16.gmra.mxu0 %v4652
        %v5115 = vpop.f32.mrf.mxu0
        %v5116 = vadd.f32 %v4695, %v5115
        %v5117 = vpop.f32.mrf.mxu0
        %v5118 = vpop.f32.mrf.mxu0
        %v5119 = vadd.f32 %v4695, %v5118
        %v5120 = vpop.f32.mrf.mxu0
        %5121 = vmatprep.mubr.bf16.mxu0 0
        %5122 = vmatmul.mubr.bf16.gmra.mxu0 %v4653
        %v5123 = vpop.f32.mrf.mxu0
        %v5124 = vadd.f32 %v4695, %v5123
        %v5125 = vpop.f32.mrf.mxu0
        %v5126 = vpop.f32.mrf.mxu0
        %v5127 = vadd.f32 %v4695, %v5126
        %v5128 = vpop.f32.mrf.mxu0
        %5129 = vmatprep.mubr.bf16.mxu0 0
        %5130 = vmatmul.mubr.bf16.gmra.mxu0 %v4654
        %v5131 = vpop.f32.mrf.mxu0
        %v5132 = vadd.f32 %v4695, %v5131
        %v5133 = vpop.f32.mrf.mxu0
        %v5134 = vpop.f32.mrf.mxu0
        %v5135 = vadd.f32 %v4695, %v5134
        %v5136 = vpop.f32.mrf.mxu0
        %5137 = vmatprep.mubr.bf16.mxu0 0
        %5138 = vmatmul.mubr.bf16.gmra.mxu0 %v4655
        %v5139 = vpop.f32.mrf.mxu0
        %v5140 = vadd.f32 %v4695, %v5139
        %v5141 = vpop.f32.mrf.mxu0
        %v5142 = vpop.f32.mrf.mxu0
        %v5143 = vadd.f32 %v4695, %v5142
        %v5144 = vpop.f32.mrf.mxu0
        %5145 = vmatprep.mubr.bf16.mxu0 0
        %5146 = vmatmul.mubr.bf16.gmra.mxu0 %v4656
        %v5147 = vpop.f32.mrf.mxu0
        %v5148 = vadd.f32 %v4695, %v5147
        %v5149 = vpop.f32.mrf.mxu0
        %v5150 = vpop.f32.mrf.mxu0
        %v5151 = vadd.f32 %v4695, %v5150
        %v5152 = vpop.f32.mrf.mxu0
        %5153 = vmatprep.mubr.bf16.mxu0 0
        %5154 = vmatmul.mubr.bf16.gmra.mxu0 %v4657
        %v5155 = vpop.f32.mrf.mxu0
        %v5156 = vadd.f32 %v4695, %v5155
        %v5157 = vpop.f32.mrf.mxu0
        %v5158 = vpop.f32.mrf.mxu0
        %v5159 = vadd.f32 %v4695, %v5158
        %v5160 = vpop.f32.mrf.mxu0
        %5161 = vmatprep.mubr.bf16.mxu0 0
        %5162 = vmatmul.mubr.bf16.gmra.mxu0 %v4658
        %v5163 = vpop.f32.mrf.mxu0
        %v5164 = vadd.f32 %v4695, %v5163
        %v5165 = vpop.f32.mrf.mxu0
        %v5166 = vpop.f32.mrf.mxu0
        %v5167 = vadd.f32 %v4695, %v5166
        %v5168 = vpop.f32.mrf.mxu0
        %5169 = vmatprep.mubr.bf16.mxu0 0
        %5170 = vmatmul.mubr.bf16.gmra.mxu0 %v4659
        %v5171 = vpop.f32.mrf.mxu0
        %v5172 = vadd.f32 %v4695, %v5171
        %v5173 = vpop.f32.mrf.mxu0
        %v5174 = vpop.f32.mrf.mxu0
        %v5175 = vadd.f32 %v4695, %v5174
        %v5176 = vpop.f32.mrf.mxu0
        %5177 = vmatprep.mubr.bf16.mxu0 0
        %5178 = vmatmul.mubr.bf16.gmra.mxu0 %v4660
        %v5179 = vpop.f32.mrf.mxu0
        %v5180 = vadd.f32 %v4695, %v5179
        %v5181 = vpop.f32.mrf.mxu0
        %v5182 = vpop.f32.mrf.mxu0
        %v5183 = vadd.f32 %v4695, %v5182
        %v5184 = vpop.f32.mrf.mxu0
        %5185 = vmatprep.mubr.bf16.mxu0 0
        %5186 = vmatmul.mubr.bf16.gmra.mxu0 %v4661
        %v5187 = vpop.f32.mrf.mxu0
        %v5188 = vadd.f32 %v4695, %v5187
        %v5189 = vpop.f32.mrf.mxu0
        %v5190 = vpop.f32.mrf.mxu0
        %v5191 = vadd.f32 %v4695, %v5190
        %v5192 = vpop.f32.mrf.mxu0
        %5193 = vmatprep.mubr.bf16.mxu0 0
        %5194 = vmatmul.mubr.bf16.gmra.mxu0 %v4662
        %v5195 = vpop.f32.mrf.mxu0
        %v5196 = vadd.f32 %v4695, %v5195
        %v5197 = vpop.f32.mrf.mxu0
        %v5198 = vpop.f32.mrf.mxu0
        %v5199 = vadd.f32 %v4695, %v5198
        %v5200 = vpop.f32.mrf.mxu0
        %5201 = vmatprep.mubr.bf16.mxu0 0
        %5202 = vmatmul.mubr.bf16.gmra.mxu0 %v4663
        %v5203 = vpop.f32.mrf.mxu0
        %v5204 = vadd.f32 %v4695, %v5203
        %v5205 = vpop.f32.mrf.mxu0
        %v5206 = vpop.f32.mrf.mxu0
        %v5207 = vadd.f32 %v4695, %v5206
        %v5208 = vpop.f32.mrf.mxu0
        %5209 = vmatprep.mubr.bf16.mxu0 0
        %5210 = vmatmul.mubr.bf16.gmra.mxu0 %v4664
        %v5211 = vpop.f32.mrf.mxu0
        %v5212 = vadd.f32 %v4695, %v5211
        %v5213 = vpop.f32.mrf.mxu0
        %v5214 = vpop.f32.mrf.mxu0
        %v5215 = vadd.f32 %v4695, %v5214
        %v5216 = vpop.f32.mrf.mxu0
        %5217 = vmatprep.mubr.bf16.mxu0 0
        %5218 = vmatmul.mubr.bf16.gmra.mxu0 %v4665
        %v5219 = vpop.f32.mrf.mxu0
        %v5220 = vadd.f32 %v4695, %v5219
        %v5221 = vpop.f32.mrf.mxu0
        %v5222 = vpop.f32.mrf.mxu0
        %v5223 = vadd.f32 %v4695, %v5222
        %v5224 = vpop.f32.mrf.mxu0
        %5225 = vmatprep.mubr.bf16.mxu0 0
        %5226 = vmatmul.mubr.bf16.gmra.mxu0 %v4666
        %v5227 = vpop.f32.mrf.mxu0
        %v5228 = vadd.f32 %v4695, %v5227
        %v5229 = vpop.f32.mrf.mxu0
        %v5230 = vpop.f32.mrf.mxu0
        %v5231 = vadd.f32 %v4695, %v5230
        %v5232 = vpop.f32.mrf.mxu0
        %5233 = vmatprep.mubr.bf16.mxu0 0
        %5234 = vmatmul.mubr.bf16.gmra.mxu0 %v4667
        %v5235 = vpop.f32.mrf.mxu0
        %v5236 = vadd.f32 %v4695, %v5235
        %v5237 = vpop.f32.mrf.mxu0
        %v5238 = vpop.f32.mrf.mxu0
        %v5239 = vadd.f32 %v4695, %v5238
        %v5240 = vpop.f32.mrf.mxu0
        %5241 = vmatprep.mubr.bf16.mxu0 0
        %5242 = vmatmul.mubr.bf16.gmra.mxu0 %v4668
        %v5243 = vpop.f32.mrf.mxu0
        %v5244 = vadd.f32 %v4695, %v5243
        %v5245 = vpop.f32.mrf.mxu0
        %v5246 = vpop.f32.mrf.mxu0
        %v5247 = vadd.f32 %v4695, %v5246
        %v5248 = vpop.f32.mrf.mxu0
        %5249 = vmatprep.mubr.bf16.mxu0 0
        %5250 = vmatmul.mubr.bf16.gmra.mxu0 %v4669
        %v5251 = vpop.f32.mrf.mxu0
        %v5252 = vadd.f32 %v4695, %v5251
        %v5253 = vpop.f32.mrf.mxu0
        %v5254 = vpop.f32.mrf.mxu0
        %v5255 = vadd.f32 %v4695, %v5254
        %v5256 = vpop.f32.mrf.mxu0
        %5257 = vmatprep.mubr.bf16.mxu0 0
        %5258 = vmatmul.mubr.bf16.gmra.mxu0 %v4670
        %v5259 = vpop.f32.mrf.mxu0
        %v5260 = vadd.f32 %v4695, %v5259
        %v5261 = vpop.f32.mrf.mxu0
        %v5262 = vpop.f32.mrf.mxu0
        %v5263 = vadd.f32 %v4695, %v5262
        %v5264 = vpop.f32.mrf.mxu0
        %5265 = vmatprep.mubr.bf16.mxu0 0
        %5266 = vmatmul.mubr.bf16.gmra.mxu0 %v4671
        %v5267 = vpop.f32.mrf.mxu0
        %v5268 = vadd.f32 %v4695, %v5267
        %v5269 = vpop.f32.mrf.mxu0
        %v5270 = vpop.f32.mrf.mxu0
        %v5271 = vadd.f32 %v4695, %v5270
        %v5272 = vpop.f32.mrf.mxu0
        %5273 = vmatprep.mubr.bf16.mxu0 0
        %5274 = vmatmul.mubr.bf16.gmra.mxu0 %v4672
        %v5275 = vpop.f32.mrf.mxu0
        %v5276 = vadd.f32 %v4695, %v5275
        %v5277 = vpop.f32.mrf.mxu0
        %v5278 = vpop.f32.mrf.mxu0
        %v5279 = vadd.f32 %v4695, %v5278
        %v5280 = vpop.f32.mrf.mxu0
        %5281 = vmatprep.mubr.bf16.mxu0 0
        %5282 = vmatmul.mubr.bf16.gmra.mxu0 %v4673
        %v5283 = vpop.f32.mrf.mxu0
        %v5284 = vadd.f32 %v4695, %v5283
        %v5285 = vpop.f32.mrf.mxu0
        %v5286 = vpop.f32.mrf.mxu0
        %v5287 = vadd.f32 %v4695, %v5286
        %v5288 = vpop.f32.mrf.mxu0
        %5289 = vdwg.mxu0
        %5290 = vadd.xlane.f32.xlu0 %v4780
        %v5291 = vpop.xlane.xlu0 %5290
        %5292 = vadd.xlane.f32.xlu0 %v4783
        %v5293 = vpop.xlane.xlu0 %5292
        %5294 = vadd.xlane.f32.xlu0 %v4788
        %v5295 = vpop.xlane.xlu0 %5294
        %5296 = vadd.xlane.f32.xlu0 %v4791
        %v5297 = vpop.xlane.xlu0 %5296
        %5298 = vadd.xlane.f32.xlu0 %v4796
        %v5299 = vpop.xlane.xlu0 %5298
        %5300 = vadd.xlane.f32.xlu0 %v4799
        %v5301 = vpop.xlane.xlu0 %5300
        %5302 = vadd.xlane.f32.xlu0 %v4804
        %v5303 = vpop.xlane.xlu0 %5302
        %5304 = vadd.xlane.f32.xlu0 %v4807
        %v5305 = vpop.xlane.xlu0 %5304
        %5306 = vadd.xlane.f32.xlu0 %v4812
        %v5307 = vpop.xlane.xlu0 %5306
        %5308 = vadd.xlane.f32.xlu0 %v4815
        %v5309 = vpop.xlane.xlu0 %5308
        %5310 = vadd.xlane.f32.xlu0 %v4820
        %v5311 = vpop.xlane.xlu0 %5310
        %5312 = vadd.xlane.f32.xlu0 %v4823
        %v5313 = vpop.xlane.xlu0 %5312
        %5314 = vadd.xlane.f32.xlu0 %v4828
        %v5315 = vpop.xlane.xlu0 %5314
        %5316 = vadd.xlane.f32.xlu0 %v4831
        %v5317 = vpop.xlane.xlu0 %5316
        %5318 = vadd.xlane.f32.xlu0 %v4836
        %v5319 = vpop.xlane.xlu0 %5318
        %5320 = vadd.xlane.f32.xlu0 %v4839
        %v5321 = vpop.xlane.xlu0 %5320
        %5322 = vadd.xlane.f32.xlu0 %v4844
        %v5323 = vpop.xlane.xlu0 %5322
        %5324 = vadd.xlane.f32.xlu0 %v4847
        %v5325 = vpop.xlane.xlu0 %5324
        %5326 = vadd.xlane.f32.xlu0 %v4852
        %v5327 = vpop.xlane.xlu0 %5326
        %5328 = vadd.xlane.f32.xlu0 %v4855
        %v5329 = vpop.xlane.xlu0 %5328
        %5330 = vadd.xlane.f32.xlu0 %v4860
        %v5331 = vpop.xlane.xlu0 %5330
        %5332 = vadd.xlane.f32.xlu0 %v4863
        %v5333 = vpop.xlane.xlu0 %5332
        %5334 = vadd.xlane.f32.xlu0 %v4868
        %v5335 = vpop.xlane.xlu0 %5334
        %5336 = vadd.xlane.f32.xlu0 %v4871
        %v5337 = vpop.xlane.xlu0 %5336
        %5338 = vadd.xlane.f32.xlu0 %v4876
        %v5339 = vpop.xlane.xlu0 %5338
        %5340 = vadd.xlane.f32.xlu0 %v4879
        %v5341 = vpop.xlane.xlu0 %5340
        %5342 = vadd.xlane.f32.xlu0 %v4884
        %v5343 = vpop.xlane.xlu0 %5342
        %5344 = vadd.xlane.f32.xlu0 %v4887
        %v5345 = vpop.xlane.xlu0 %5344
        %5346 = vadd.xlane.f32.xlu0 %v4892
        %v5347 = vpop.xlane.xlu0 %5346
        %5348 = vadd.xlane.f32.xlu0 %v4895
        %v5349 = vpop.xlane.xlu0 %5348
        %5350 = vadd.xlane.f32.xlu0 %v4900
        %v5351 = vpop.xlane.xlu0 %5350
        %5352 = vadd.xlane.f32.xlu0 %v4903
        %v5353 = vpop.xlane.xlu0 %5352
        %5354 = vadd.xlane.f32.xlu0 %v4908
        %v5355 = vpop.xlane.xlu0 %5354
        %5356 = vadd.xlane.f32.xlu0 %v4911
        %v5357 = vpop.xlane.xlu0 %5356
        %5358 = vadd.xlane.f32.xlu0 %v4916
        %v5359 = vpop.xlane.xlu0 %5358
        %5360 = vadd.xlane.f32.xlu0 %v4919
        %v5361 = vpop.xlane.xlu0 %5360
        %5362 = vadd.xlane.f32.xlu0 %v4924
        %v5363 = vpop.xlane.xlu0 %5362
        %5364 = vadd.xlane.f32.xlu0 %v4927
        %v5365 = vpop.xlane.xlu0 %5364
        %5366 = vadd.xlane.f32.xlu0 %v4932
        %v5367 = vpop.xlane.xlu0 %5366
        %5368 = vadd.xlane.f32.xlu0 %v4935
        %v5369 = vpop.xlane.xlu0 %5368
        %5370 = vadd.xlane.f32.xlu0 %v4940
        %v5371 = vpop.xlane.xlu0 %5370
        %5372 = vadd.xlane.f32.xlu0 %v4943
        %v5373 = vpop.xlane.xlu0 %5372
        %5374 = vadd.xlane.f32.xlu0 %v4948
        %v5375 = vpop.xlane.xlu0 %5374
        %5376 = vadd.xlane.f32.xlu0 %v4951
        %v5377 = vpop.xlane.xlu0 %5376
        %5378 = vadd.xlane.f32.xlu0 %v4956
        %v5379 = vpop.xlane.xlu0 %5378
        %5380 = vadd.xlane.f32.xlu0 %v4959
        %v5381 = vpop.xlane.xlu0 %5380
        %5382 = vadd.xlane.f32.xlu0 %v4964
        %v5383 = vpop.xlane.xlu0 %5382
        %5384 = vadd.xlane.f32.xlu0 %v4967
        %v5385 = vpop.xlane.xlu0 %5384
        %5386 = vadd.xlane.f32.xlu0 %v4972
        %v5387 = vpop.xlane.xlu0 %5386
        %5388 = vadd.xlane.f32.xlu0 %v4975
        %v5389 = vpop.xlane.xlu0 %5388
        %5390 = vadd.xlane.f32.xlu0 %v4980
        %v5391 = vpop.xlane.xlu0 %5390
        %5392 = vadd.xlane.f32.xlu0 %v4983
        %v5393 = vpop.xlane.xlu0 %5392
        %5394 = vadd.xlane.f32.xlu0 %v4988
        %v5395 = vpop.xlane.xlu0 %5394
        %5396 = vadd.xlane.f32.xlu0 %v4991
        %v5397 = vpop.xlane.xlu0 %5396
        %5398 = vadd.xlane.f32.xlu0 %v4996
        %v5399 = vpop.xlane.xlu0 %5398
        %5400 = vadd.xlane.f32.xlu0 %v4999
        %v5401 = vpop.xlane.xlu0 %5400
        %5402 = vadd.xlane.f32.xlu0 %v5004
        %v5403 = vpop.xlane.xlu0 %5402
        %5404 = vadd.xlane.f32.xlu0 %v5007
        %v5405 = vpop.xlane.xlu0 %5404
        %5406 = vadd.xlane.f32.xlu0 %v5012
        %v5407 = vpop.xlane.xlu0 %5406
        %5408 = vadd.xlane.f32.xlu0 %v5015
        %v5409 = vpop.xlane.xlu0 %5408
        %5410 = vadd.xlane.f32.xlu0 %v5020
        %v5411 = vpop.xlane.xlu0 %5410
        %5412 = vadd.xlane.f32.xlu0 %v5023
        %v5413 = vpop.xlane.xlu0 %5412
        %5414 = vadd.xlane.f32.xlu0 %v5028
        %v5415 = vpop.xlane.xlu0 %5414
        %5416 = vadd.xlane.f32.xlu0 %v5031
        %v5417 = vpop.xlane.xlu0 %5416
        %5418 = vadd.xlane.f32.xlu0 %v5036
        %v5419 = vpop.xlane.xlu0 %5418
        %5420 = vadd.xlane.f32.xlu0 %v5039
        %v5421 = vpop.xlane.xlu0 %5420
        %5422 = vadd.xlane.f32.xlu0 %v5044
        %v5423 = vpop.xlane.xlu0 %5422
        %5424 = vadd.xlane.f32.xlu0 %v5047
        %v5425 = vpop.xlane.xlu0 %5424
        %5426 = vadd.xlane.f32.xlu0 %v5052
        %v5427 = vpop.xlane.xlu0 %5426
        %5428 = vadd.xlane.f32.xlu0 %v5055
        %v5429 = vpop.xlane.xlu0 %5428
        %5430 = vadd.xlane.f32.xlu0 %v5060
        %v5431 = vpop.xlane.xlu0 %5430
        %5432 = vadd.xlane.f32.xlu0 %v5063
        %v5433 = vpop.xlane.xlu0 %5432
        %5434 = vadd.xlane.f32.xlu0 %v5068
        %v5435 = vpop.xlane.xlu0 %5434
        %5436 = vadd.xlane.f32.xlu0 %v5071
        %v5437 = vpop.xlane.xlu0 %5436
        %5438 = vadd.xlane.f32.xlu0 %v5076
        %v5439 = vpop.xlane.xlu0 %5438
        %5440 = vadd.xlane.f32.xlu0 %v5079
        %v5441 = vpop.xlane.xlu0 %5440
        %5442 = vadd.xlane.f32.xlu0 %v5084
        %v5443 = vpop.xlane.xlu0 %5442
        %5444 = vadd.xlane.f32.xlu0 %v5087
        %v5445 = vpop.xlane.xlu0 %5444
        %5446 = vadd.xlane.f32.xlu0 %v5092
        %v5447 = vpop.xlane.xlu0 %5446
        %5448 = vadd.xlane.f32.xlu0 %v5095
        %v5449 = vpop.xlane.xlu0 %5448
        %5450 = vadd.xlane.f32.xlu0 %v5100
        %v5451 = vpop.xlane.xlu0 %5450
        %5452 = vadd.xlane.f32.xlu0 %v5103
        %v5453 = vpop.xlane.xlu0 %5452
        %5454 = vadd.xlane.f32.xlu0 %v5108
        %v5455 = vpop.xlane.xlu0 %5454
        %5456 = vadd.xlane.f32.xlu0 %v5111
        %v5457 = vpop.xlane.xlu0 %5456
        %5458 = vadd.xlane.f32.xlu0 %v5116
        %v5459 = vpop.xlane.xlu0 %5458
        %5460 = vadd.xlane.f32.xlu0 %v5119
        %v5461 = vpop.xlane.xlu0 %5460
        %5462 = vadd.xlane.f32.xlu0 %v5124
        %v5463 = vpop.xlane.xlu0 %5462
        %5464 = vadd.xlane.f32.xlu0 %v5127
        %v5465 = vpop.xlane.xlu0 %5464
        %5466 = vadd.xlane.f32.xlu0 %v5132
        %v5467 = vpop.xlane.xlu0 %5466
        %5468 = vadd.xlane.f32.xlu0 %v5135
        %v5469 = vpop.xlane.xlu0 %5468
        %5470 = vadd.xlane.f32.xlu0 %v5140
        %v5471 = vpop.xlane.xlu0 %5470
        %5472 = vadd.xlane.f32.xlu0 %v5143
        %v5473 = vpop.xlane.xlu0 %5472
        %5474 = vadd.xlane.f32.xlu0 %v5148
        %v5475 = vpop.xlane.xlu0 %5474
        %5476 = vadd.xlane.f32.xlu0 %v5151
        %v5477 = vpop.xlane.xlu0 %5476
        %5478 = vadd.xlane.f32.xlu0 %v5156
        %v5479 = vpop.xlane.xlu0 %5478
        %5480 = vadd.xlane.f32.xlu0 %v5159
        %v5481 = vpop.xlane.xlu0 %5480
        %5482 = vadd.xlane.f32.xlu0 %v5164
        %v5483 = vpop.xlane.xlu0 %5482
        %5484 = vadd.xlane.f32.xlu0 %v5167
        %v5485 = vpop.xlane.xlu0 %5484
        %5486 = vadd.xlane.f32.xlu0 %v5172
        %v5487 = vpop.xlane.xlu0 %5486
        %5488 = vadd.xlane.f32.xlu0 %v5175
        %v5489 = vpop.xlane.xlu0 %5488
        %5490 = vadd.xlane.f32.xlu0 %v5180
        %v5491 = vpop.xlane.xlu0 %5490
        %5492 = vadd.xlane.f32.xlu0 %v5183
        %v5493 = vpop.xlane.xlu0 %5492
        %5494 = vadd.xlane.f32.xlu0 %v5188
        %v5495 = vpop.xlane.xlu0 %5494
        %5496 = vadd.xlane.f32.xlu0 %v5191
        %v5497 = vpop.xlane.xlu0 %5496
        %5498 = vadd.xlane.f32.xlu0 %v5196
        %v5499 = vpop.xlane.xlu0 %5498
        %5500 = vadd.xlane.f32.xlu0 %v5199
        %v5501 = vpop.xlane.xlu0 %5500
        %5502 = vadd.xlane.f32.xlu0 %v5204
        %v5503 = vpop.xlane.xlu0 %5502
        %5504 = vadd.xlane.f32.xlu0 %v5207
        %v5505 = vpop.xlane.xlu0 %5504
        %5506 = vadd.xlane.f32.xlu0 %v5212
        %v5507 = vpop.xlane.xlu0 %5506
        %5508 = vadd.xlane.f32.xlu0 %v5215
        %v5509 = vpop.xlane.xlu0 %5508
        %5510 = vadd.xlane.f32.xlu0 %v5220
        %v5511 = vpop.xlane.xlu0 %5510
        %5512 = vadd.xlane.f32.xlu0 %v5223
        %v5513 = vpop.xlane.xlu0 %5512
        %5514 = vadd.xlane.f32.xlu0 %v5228
        %v5515 = vpop.xlane.xlu0 %5514
        %5516 = vadd.xlane.f32.xlu0 %v5231
        %v5517 = vpop.xlane.xlu0 %5516
        %5518 = vadd.xlane.f32.xlu0 %v5236
        %v5519 = vpop.xlane.xlu0 %5518
        %5520 = vadd.xlane.f32.xlu0 %v5239
        %v5521 = vpop.xlane.xlu0 %5520
        %5522 = vadd.xlane.f32.xlu0 %v5244
        %v5523 = vpop.xlane.xlu0 %5522
        %5524 = vadd.xlane.f32.xlu0 %v5247
        %v5525 = vpop.xlane.xlu0 %5524
        %5526 = vadd.xlane.f32.xlu0 %v5252
        %v5527 = vpop.xlane.xlu0 %5526
        %5528 = vadd.xlane.f32.xlu0 %v5255
        %v5529 = vpop.xlane.xlu0 %5528
        %5530 = vadd.xlane.f32.xlu0 %v5260
        %v5531 = vpop.xlane.xlu0 %5530
        %5532 = vadd.xlane.f32.xlu0 %v5263
        %v5533 = vpop.xlane.xlu0 %5532
        %5534 = vadd.xlane.f32.xlu0 %v5268
        %v5535 = vpop.xlane.xlu0 %5534
        %5536 = vadd.xlane.f32.xlu0 %v5271
        %v5537 = vpop.xlane.xlu0 %5536
        %5538 = vadd.xlane.f32.xlu0 %v5276
        %v5539 = vpop.xlane.xlu0 %5538
        %5540 = vadd.xlane.f32.xlu0 %v5279
        %v5541 = vpop.xlane.xlu0 %5540
        %5542 = vadd.xlane.f32.xlu0 %v5284
        %v5543 = vpop.xlane.xlu0 %5542
        %5544 = vadd.xlane.f32.xlu0 %v5287
        %v5545 = vpop.xlane.xlu0 %5544
        %v5546 = vrcp.pop 128.0
        %v5547 = vmul.f32 %v5291, %v5546
        %v5548 = vmul.f32 %v5293, %v5546
        %v5549 = vmul.f32 %v5295, %v5546
        %v5550 = vmul.f32 %v5297, %v5546
        %v5551 = vmul.f32 %v5299, %v5546
        %v5552 = vmul.f32 %v5301, %v5546
        %v5553 = vmul.f32 %v5303, %v5546
        %v5554 = vmul.f32 %v5305, %v5546
        %v5555 = vmul.f32 %v5307, %v5546
        %v5556 = vmul.f32 %v5309, %v5546
        %v5557 = vmul.f32 %v5311, %v5546
        %v5558 = vmul.f32 %v5313, %v5546
        %v5559 = vmul.f32 %v5315, %v5546
        %v5560 = vmul.f32 %v5317, %v5546
        %v5561 = vmul.f32 %v5319, %v5546
        %v5562 = vmul.f32 %v5321, %v5546
        %v5563 = vmul.f32 %v5323, %v5546
        %v5564 = vmul.f32 %v5325, %v5546
        %v5565 = vmul.f32 %v5327, %v5546
        %v5566 = vmul.f32 %v5329, %v5546
        %v5567 = vmul.f32 %v5331, %v5546
        %v5568 = vmul.f32 %v5333, %v5546
        %v5569 = vmul.f32 %v5335, %v5546
        %v5570 = vmul.f32 %v5337, %v5546
        %v5571 = vmul.f32 %v5339, %v5546
        %v5572 = vmul.f32 %v5341, %v5546
        %v5573 = vmul.f32 %v5343, %v5546
        %v5574 = vmul.f32 %v5345, %v5546
        %v5575 = vmul.f32 %v5347, %v5546
        %v5576 = vmul.f32 %v5349, %v5546
        %v5577 = vmul.f32 %v5351, %v5546
        %v5578 = vmul.f32 %v5353, %v5546
        %v5579 = vmul.f32 %v5355, %v5546
        %v5580 = vmul.f32 %v5357, %v5546
        %v5581 = vmul.f32 %v5359, %v5546
        %v5582 = vmul.f32 %v5361, %v5546
        %v5583 = vmul.f32 %v5363, %v5546
        %v5584 = vmul.f32 %v5365, %v5546
        %v5585 = vmul.f32 %v5367, %v5546
        %v5586 = vmul.f32 %v5369, %v5546
        %v5587 = vmul.f32 %v5371, %v5546
        %v5588 = vmul.f32 %v5373, %v5546
        %v5589 = vmul.f32 %v5375, %v5546
        %v5590 = vmul.f32 %v5377, %v5546
        %v5591 = vmul.f32 %v5379, %v5546
        %v5592 = vmul.f32 %v5381, %v5546
        %v5593 = vmul.f32 %v5383, %v5546
        %v5594 = vmul.f32 %v5385, %v5546
        %v5595 = vmul.f32 %v5387, %v5546
        %v5596 = vmul.f32 %v5389, %v5546
        %v5597 = vmul.f32 %v5391, %v5546
        %v5598 = vmul.f32 %v5393, %v5546
        %v5599 = vmul.f32 %v5395, %v5546
        %v5600 = vmul.f32 %v5397, %v5546
        %v5601 = vmul.f32 %v5399, %v5546
        %v5602 = vmul.f32 %v5401, %v5546
        %v5603 = vmul.f32 %v5403, %v5546
        %v5604 = vmul.f32 %v5405, %v5546
        %v5605 = vmul.f32 %v5407, %v5546
        %v5606 = vmul.f32 %v5409, %v5546
        %v5607 = vmul.f32 %v5411, %v5546
        %v5608 = vmul.f32 %v5413, %v5546
        %v5609 = vmul.f32 %v5415, %v5546
        %v5610 = vmul.f32 %v5417, %v5546
        %v5611 = vmul.f32 %v5419, %v5546
        %v5612 = vmul.f32 %v5421, %v5546
        %v5613 = vmul.f32 %v5423, %v5546
        %v5614 = vmul.f32 %v5425, %v5546
        %v5615 = vmul.f32 %v5427, %v5546
        %v5616 = vmul.f32 %v5429, %v5546
        %v5617 = vmul.f32 %v5431, %v5546
        %v5618 = vmul.f32 %v5433, %v5546
        %v5619 = vmul.f32 %v5435, %v5546
        %v5620 = vmul.f32 %v5437, %v5546
        %v5621 = vmul.f32 %v5439, %v5546
        %v5622 = vmul.f32 %v5441, %v5546
        %v5623 = vmul.f32 %v5443, %v5546
        %v5624 = vmul.f32 %v5445, %v5546
        %v5625 = vmul.f32 %v5447, %v5546
        %v5626 = vmul.f32 %v5449, %v5546
        %v5627 = vmul.f32 %v5451, %v5546
        %v5628 = vmul.f32 %v5453, %v5546
        %v5629 = vmul.f32 %v5455, %v5546
        %v5630 = vmul.f32 %v5457, %v5546
        %v5631 = vmul.f32 %v5459, %v5546
        %v5632 = vmul.f32 %v5461, %v5546
        %v5633 = vmul.f32 %v5463, %v5546
        %v5634 = vmul.f32 %v5465, %v5546
        %v5635 = vmul.f32 %v5467, %v5546
        %v5636 = vmul.f32 %v5469, %v5546
        %v5637 = vmul.f32 %v5471, %v5546
        %v5638 = vmul.f32 %v5473, %v5546
        %v5639 = vmul.f32 %v5475, %v5546
        %v5640 = vmul.f32 %v5477, %v5546
        %v5641 = vmul.f32 %v5479, %v5546
        %v5642 = vmul.f32 %v5481, %v5546
        %v5643 = vmul.f32 %v5483, %v5546
        %v5644 = vmul.f32 %v5485, %v5546
        %v5645 = vmul.f32 %v5487, %v5546
        %v5646 = vmul.f32 %v5489, %v5546
        %v5647 = vmul.f32 %v5491, %v5546
        %v5648 = vmul.f32 %v5493, %v5546
        %v5649 = vmul.f32 %v5495, %v5546
        %v5650 = vmul.f32 %v5497, %v5546
        %v5651 = vmul.f32 %v5499, %v5546
        %v5652 = vmul.f32 %v5501, %v5546
        %v5653 = vmul.f32 %v5503, %v5546
        %v5654 = vmul.f32 %v5505, %v5546
        %v5655 = vmul.f32 %v5507, %v5546
        %v5656 = vmul.f32 %v5509, %v5546
        %v5657 = vmul.f32 %v5511, %v5546
        %v5658 = vmul.f32 %v5513, %v5546
        %v5659 = vmul.f32 %v5515, %v5546
        %v5660 = vmul.f32 %v5517, %v5546
        %v5661 = vmul.f32 %v5519, %v5546
        %v5662 = vmul.f32 %v5521, %v5546
        %v5663 = vmul.f32 %v5523, %v5546
        %v5664 = vmul.f32 %v5525, %v5546
        %v5665 = vmul.f32 %v5527, %v5546
        %v5666 = vmul.f32 %v5529, %v5546
        %v5667 = vmul.f32 %v5531, %v5546
        %v5668 = vmul.f32 %v5533, %v5546
        %v5669 = vmul.f32 %v5535, %v5546
        %v5670 = vmul.f32 %v5537, %v5546
        %v5671 = vmul.f32 %v5539, %v5546
        %v5672 = vmul.f32 %v5541, %v5546
        %v5673 = vmul.f32 %v5543, %v5546
        %v5674 = vmul.f32 %v5545, %v5546
        %v5675 = vmul.f32 %v4780, %v4780
        %v5676 = vmul.f32 %v4783, %v4783
        %v5677 = vmul.f32 %v4788, %v4788
        %v5678 = vmul.f32 %v4791, %v4791
        %v5679 = vmul.f32 %v4796, %v4796
        %v5680 = vmul.f32 %v4799, %v4799
        %v5681 = vmul.f32 %v4804, %v4804
        %v5682 = vmul.f32 %v4807, %v4807
        %v5683 = vmul.f32 %v4812, %v4812
        %v5684 = vmul.f32 %v4815, %v4815
        %v5685 = vmul.f32 %v4820, %v4820
        %v5686 = vmul.f32 %v4823, %v4823
        %v5687 = vmul.f32 %v4828, %v4828
        %v5688 = vmul.f32 %v4831, %v4831
        %v5689 = vmul.f32 %v4836, %v4836
        %v5690 = vmul.f32 %v4839, %v4839
        %v5691 = vmul.f32 %v4844, %v4844
        %v5692 = vmul.f32 %v4847, %v4847
        %v5693 = vmul.f32 %v4852, %v4852
        %v5694 = vmul.f32 %v4855, %v4855
        %v5695 = vmul.f32 %v4860, %v4860
        %v5696 = vmul.f32 %v4863, %v4863
        %v5697 = vmul.f32 %v4868, %v4868
        %v5698 = vmul.f32 %v4871, %v4871
        %v5699 = vmul.f32 %v4876, %v4876
        %v5700 = vmul.f32 %v4879, %v4879
        %v5701 = vmul.f32 %v4884, %v4884
        %v5702 = vmul.f32 %v4887, %v4887
        %v5703 = vmul.f32 %v4892, %v4892
        %v5704 = vmul.f32 %v4895, %v4895
        %v5705 = vmul.f32 %v4900, %v4900
        %v5706 = vmul.f32 %v4903, %v4903
        %v5707 = vmul.f32 %v4908, %v4908
        %v5708 = vmul.f32 %v4911, %v4911
        %v5709 = vmul.f32 %v4916, %v4916
        %v5710 = vmul.f32 %v4919, %v4919
        %v5711 = vmul.f32 %v4924, %v4924
        %v5712 = vmul.f32 %v4927, %v4927
        %v5713 = vmul.f32 %v4932, %v4932
        %v5714 = vmul.f32 %v4935, %v4935
        %v5715 = vmul.f32 %v4940, %v4940
        %v5716 = vmul.f32 %v4943, %v4943
        %v5717 = vmul.f32 %v4948, %v4948
        %v5718 = vmul.f32 %v4951, %v4951
        %v5719 = vmul.f32 %v4956, %v4956
        %v5720 = vmul.f32 %v4959, %v4959
        %v5721 = vmul.f32 %v4964, %v4964
        %v5722 = vmul.f32 %v4967, %v4967
        %v5723 = vmul.f32 %v4972, %v4972
        %v5724 = vmul.f32 %v4975, %v4975
        %v5725 = vmul.f32 %v4980, %v4980
        %v5726 = vmul.f32 %v4983, %v4983
        %v5727 = vmul.f32 %v4988, %v4988
        %v5728 = vmul.f32 %v4991, %v4991
        %v5729 = vmul.f32 %v4996, %v4996
        %v5730 = vmul.f32 %v4999, %v4999
        %v5731 = vmul.f32 %v5004, %v5004
        %v5732 = vmul.f32 %v5007, %v5007
        %v5733 = vmul.f32 %v5012, %v5012
        %v5734 = vmul.f32 %v5015, %v5015
        %v5735 = vmul.f32 %v5020, %v5020
        %v5736 = vmul.f32 %v5023, %v5023
        %v5737 = vmul.f32 %v5028, %v5028
        %v5738 = vmul.f32 %v5031, %v5031
        %v5739 = vmul.f32 %v5036, %v5036
        %v5740 = vmul.f32 %v5039, %v5039
        %v5741 = vmul.f32 %v5044, %v5044
        %v5742 = vmul.f32 %v5047, %v5047
        %v5743 = vmul.f32 %v5052, %v5052
        %v5744 = vmul.f32 %v5055, %v5055
        %v5745 = vmul.f32 %v5060, %v5060
        %v5746 = vmul.f32 %v5063, %v5063
        %v5747 = vmul.f32 %v5068, %v5068
        %v5748 = vmul.f32 %v5071, %v5071
        %v5749 = vmul.f32 %v5076, %v5076
        %v5750 = vmul.f32 %v5079, %v5079
        %v5751 = vmul.f32 %v5084, %v5084
        %v5752 = vmul.f32 %v5087, %v5087
        %v5753 = vmul.f32 %v5092, %v5092
        %v5754 = vmul.f32 %v5095, %v5095
        %v5755 = vmul.f32 %v5100, %v5100
        %v5756 = vmul.f32 %v5103, %v5103
        %v5757 = vmul.f32 %v5108, %v5108
        %v5758 = vmul.f32 %v5111, %v5111
        %v5759 = vmul.f32 %v5116, %v5116
        %v5760 = vmul.f32 %v5119, %v5119
        %v5761 = vmul.f32 %v5124, %v5124
        %v5762 = vmul.f32 %v5127, %v5127
        %v5763 = vmul.f32 %v5132, %v5132
        %v5764 = vmul.f32 %v5135, %v5135
        %v5765 = vmul.f32 %v5140, %v5140
        %v5766 = vmul.f32 %v5143, %v5143
        %v5767 = vmul.f32 %v5148, %v5148
        %v5768 = vmul.f32 %v5151, %v5151
        %v5769 = vmul.f32 %v5156, %v5156
        %v5770 = vmul.f32 %v5159, %v5159
        %v5771 = vmul.f32 %v5164, %v5164
        %v5772 = vmul.f32 %v5167, %v5167
        %v5773 = vmul.f32 %v5172, %v5172
        %v5774 = vmul.f32 %v5175, %v5175
        %v5775 = vmul.f32 %v5180, %v5180
        %v5776 = vmul.f32 %v5183, %v5183
        %v5777 = vmul.f32 %v5188, %v5188
        %v5778 = vmul.f32 %v5191, %v5191
        %v5779 = vmul.f32 %v5196, %v5196
        %v5780 = vmul.f32 %v5199, %v5199
        %v5781 = vmul.f32 %v5204, %v5204
        %v5782 = vmul.f32 %v5207, %v5207
        %v5783 = vmul.f32 %v5212, %v5212
        %v5784 = vmul.f32 %v5215, %v5215
        %v5785 = vmul.f32 %v5220, %v5220
        %v5786 = vmul.f32 %v5223, %v5223
        %v5787 = vmul.f32 %v5228, %v5228
        %v5788 = vmul.f32 %v5231, %v5231
        %v5789 = vmul.f32 %v5236, %v5236
        %v5790 = vmul.f32 %v5239, %v5239
        %v5791 = vmul.f32 %v5244, %v5244
        %v5792 = vmul.f32 %v5247, %v5247
        %v5793 = vmul.f32 %v5252, %v5252
        %v5794 = vmul.f32 %v5255, %v5255
        %v5795 = vmul.f32 %v5260, %v5260
        %v5796 = vmul.f32 %v5263, %v5263
        %v5797 = vmul.f32 %v5268, %v5268
        %v5798 = vmul.f32 %v5271, %v5271
        %v5799 = vmul.f32 %v5276, %v5276
        %v5800 = vmul.f32 %v5279, %v5279
        %v5801 = vmul.f32 %v5284, %v5284
        %v5802 = vmul.f32 %v5287, %v5287
        %5803 = vadd.xlane.f32.xlu0 %v5675
        %v5804 = vpop.xlane.xlu0 %5803
        %5805 = vadd.xlane.f32.xlu0 %v5676
        %v5806 = vpop.xlane.xlu0 %5805
        %5807 = vadd.xlane.f32.xlu0 %v5677
        %v5808 = vpop.xlane.xlu0 %5807
        %5809 = vadd.xlane.f32.xlu0 %v5678
        %v5810 = vpop.xlane.xlu0 %5809
        %5811 = vadd.xlane.f32.xlu0 %v5679
        %v5812 = vpop.xlane.xlu0 %5811
        %5813 = vadd.xlane.f32.xlu0 %v5680
        %v5814 = vpop.xlane.xlu0 %5813
        %5815 = vadd.xlane.f32.xlu0 %v5681
        %v5816 = vpop.xlane.xlu0 %5815
        %5817 = vadd.xlane.f32.xlu0 %v5682
        %v5818 = vpop.xlane.xlu0 %5817
        %5819 = vadd.xlane.f32.xlu0 %v5683
        %v5820 = vpop.xlane.xlu0 %5819
        %5821 = vadd.xlane.f32.xlu0 %v5684
        %v5822 = vpop.xlane.xlu0 %5821
        %5823 = vadd.xlane.f32.xlu0 %v5685
        %v5824 = vpop.xlane.xlu0 %5823
        %5825 = vadd.xlane.f32.xlu0 %v5686
        %v5826 = vpop.xlane.xlu0 %5825
        %5827 = vadd.xlane.f32.xlu0 %v5687
        %v5828 = vpop.xlane.xlu0 %5827
        %5829 = vadd.xlane.f32.xlu0 %v5688
        %v5830 = vpop.xlane.xlu0 %5829
        %5831 = vadd.xlane.f32.xlu0 %v5689
        %v5832 = vpop.xlane.xlu0 %5831
        %5833 = vadd.xlane.f32.xlu0 %v5690
        %v5834 = vpop.xlane.xlu0 %5833
        %5835 = vadd.xlane.f32.xlu0 %v5691
        %v5836 = vpop.xlane.xlu0 %5835
        %5837 = vadd.xlane.f32.xlu0 %v5692
        %v5838 = vpop.xlane.xlu0 %5837
        %5839 = vadd.xlane.f32.xlu0 %v5693
        %v5840 = vpop.xlane.xlu0 %5839
        %5841 = vadd.xlane.f32.xlu0 %v5694
        %v5842 = vpop.xlane.xlu0 %5841
        %5843 = vadd.xlane.f32.xlu0 %v5695
        %v5844 = vpop.xlane.xlu0 %5843
        %5845 = vadd.xlane.f32.xlu0 %v5696
        %v5846 = vpop.xlane.xlu0 %5845
        %5847 = vadd.xlane.f32.xlu0 %v5697
        %v5848 = vpop.xlane.xlu0 %5847
        %5849 = vadd.xlane.f32.xlu0 %v5698
        %v5850 = vpop.xlane.xlu0 %5849
        %5851 = vadd.xlane.f32.xlu0 %v5699
        %v5852 = vpop.xlane.xlu0 %5851
        %5853 = vadd.xlane.f32.xlu0 %v5700
        %v5854 = vpop.xlane.xlu0 %5853
        %5855 = vadd.xlane.f32.xlu0 %v5701
        %v5856 = vpop.xlane.xlu0 %5855
        %5857 = vadd.xlane.f32.xlu0 %v5702
        %v5858 = vpop.xlane.xlu0 %5857
        %5859 = vadd.xlane.f32.xlu0 %v5703
        %v5860 = vpop.xlane.xlu0 %5859
        %5861 = vadd.xlane.f32.xlu0 %v5704
        %v5862 = vpop.xlane.xlu0 %5861
        %5863 = vadd.xlane.f32.xlu0 %v5705
        %v5864 = vpop.xlane.xlu0 %5863
        %5865 = vadd.xlane.f32.xlu0 %v5706
        %v5866 = vpop.xlane.xlu0 %5865
        %5867 = vadd.xlane.f32.xlu0 %v5707
        %v5868 = vpop.xlane.xlu0 %5867
        %5869 = vadd.xlane.f32.xlu0 %v5708
        %v5870 = vpop.xlane.xlu0 %5869
        %5871 = vadd.xlane.f32.xlu0 %v5709
        %v5872 = vpop.xlane.xlu0 %5871
        %5873 = vadd.xlane.f32.xlu0 %v5710
        %v5874 = vpop.xlane.xlu0 %5873
        %5875 = vadd.xlane.f32.xlu0 %v5711
        %v5876 = vpop.xlane.xlu0 %5875
        %5877 = vadd.xlane.f32.xlu0 %v5712
        %v5878 = vpop.xlane.xlu0 %5877
        %5879 = vadd.xlane.f32.xlu0 %v5713
        %v5880 = vpop.xlane.xlu0 %5879
        %5881 = vadd.xlane.f32.xlu0 %v5714
        %v5882 = vpop.xlane.xlu0 %5881
        %5883 = vadd.xlane.f32.xlu0 %v5715
        %v5884 = vpop.xlane.xlu0 %5883
        %5885 = vadd.xlane.f32.xlu0 %v5716
        %v5886 = vpop.xlane.xlu0 %5885
        %5887 = vadd.xlane.f32.xlu0 %v5717
        %v5888 = vpop.xlane.xlu0 %5887
        %5889 = vadd.xlane.f32.xlu0 %v5718
        %v5890 = vpop.xlane.xlu0 %5889
        %5891 = vadd.xlane.f32.xlu0 %v5719
        %v5892 = vpop.xlane.xlu0 %5891
        %5893 = vadd.xlane.f32.xlu0 %v5720
        %v5894 = vpop.xlane.xlu0 %5893
        %5895 = vadd.xlane.f32.xlu0 %v5721
        %v5896 = vpop.xlane.xlu0 %5895
        %5897 = vadd.xlane.f32.xlu0 %v5722
        %v5898 = vpop.xlane.xlu0 %5897
        %5899 = vadd.xlane.f32.xlu0 %v5723
        %v5900 = vpop.xlane.xlu0 %5899
        %5901 = vadd.xlane.f32.xlu0 %v5724
        %v5902 = vpop.xlane.xlu0 %5901
        %5903 = vadd.xlane.f32.xlu0 %v5725
        %v5904 = vpop.xlane.xlu0 %5903
        %5905 = vadd.xlane.f32.xlu0 %v5726
        %v5906 = vpop.xlane.xlu0 %5905
        %5907 = vadd.xlane.f32.xlu0 %v5727
        %v5908 = vpop.xlane.xlu0 %5907
        %5909 = vadd.xlane.f32.xlu0 %v5728
        %v5910 = vpop.xlane.xlu0 %5909
        %5911 = vadd.xlane.f32.xlu0 %v5729
        %v5912 = vpop.xlane.xlu0 %5911
        %5913 = vadd.xlane.f32.xlu0 %v5730
        %v5914 = vpop.xlane.xlu0 %5913
        %5915 = vadd.xlane.f32.xlu0 %v5731
        %v5916 = vpop.xlane.xlu0 %5915
        %5917 = vadd.xlane.f32.xlu0 %v5732
        %v5918 = vpop.xlane.xlu0 %5917
        %5919 = vadd.xlane.f32.xlu0 %v5733
        %v5920 = vpop.xlane.xlu0 %5919
        %5921 = vadd.xlane.f32.xlu0 %v5734
        %v5922 = vpop.xlane.xlu0 %5921
        %5923 = vadd.xlane.f32.xlu0 %v5735
        %v5924 = vpop.xlane.xlu0 %5923
        %5925 = vadd.xlane.f32.xlu0 %v5736
        %v5926 = vpop.xlane.xlu0 %5925
        %5927 = vadd.xlane.f32.xlu0 %v5737
        %v5928 = vpop.xlane.xlu0 %5927
        %5929 = vadd.xlane.f32.xlu0 %v5738
        %v5930 = vpop.xlane.xlu0 %5929
        %5931 = vadd.xlane.f32.xlu0 %v5739
        %v5932 = vpop.xlane.xlu0 %5931
        %5933 = vadd.xlane.f32.xlu0 %v5740
        %v5934 = vpop.xlane.xlu0 %5933
        %5935 = vadd.xlane.f32.xlu0 %v5741
        %v5936 = vpop.xlane.xlu0 %5935
        %5937 = vadd.xlane.f32.xlu0 %v5742
        %v5938 = vpop.xlane.xlu0 %5937
        %5939 = vadd.xlane.f32.xlu0 %v5743
        %v5940 = vpop.xlane.xlu0 %5939
        %5941 = vadd.xlane.f32.xlu0 %v5744
        %v5942 = vpop.xlane.xlu0 %5941
        %5943 = vadd.xlane.f32.xlu0 %v5745
        %v5944 = vpop.xlane.xlu0 %5943
        %5945 = vadd.xlane.f32.xlu0 %v5746
        %v5946 = vpop.xlane.xlu0 %5945
        %5947 = vadd.xlane.f32.xlu0 %v5747
        %v5948 = vpop.xlane.xlu0 %5947
        %5949 = vadd.xlane.f32.xlu0 %v5748
        %v5950 = vpop.xlane.xlu0 %5949
        %5951 = vadd.xlane.f32.xlu0 %v5749
        %v5952 = vpop.xlane.xlu0 %5951
        %5953 = vadd.xlane.f32.xlu0 %v5750
        %v5954 = vpop.xlane.xlu0 %5953
        %5955 = vadd.xlane.f32.xlu0 %v5751
        %v5956 = vpop.xlane.xlu0 %5955
        %5957 = vadd.xlane.f32.xlu0 %v5752
        %v5958 = vpop.xlane.xlu0 %5957
        %5959 = vadd.xlane.f32.xlu0 %v5753
        %v5960 = vpop.xlane.xlu0 %5959
        %5961 = vadd.xlane.f32.xlu0 %v5754
        %v5962 = vpop.xlane.xlu0 %5961
        %5963 = vadd.xlane.f32.xlu0 %v5755
        %v5964 = vpop.xlane.xlu0 %5963
        %5965 = vadd.xlane.f32.xlu0 %v5756
        %v5966 = vpop.xlane.xlu0 %5965
        %5967 = vadd.xlane.f32.xlu0 %v5757
        %v5968 = vpop.xlane.xlu0 %5967
        %5969 = vadd.xlane.f32.xlu0 %v5758
        %v5970 = vpop.xlane.xlu0 %5969
        %5971 = vadd.xlane.f32.xlu0 %v5759
        %v5972 = vpop.xlane.xlu0 %5971
        %5973 = vadd.xlane.f32.xlu0 %v5760
        %v5974 = vpop.xlane.xlu0 %5973
        %5975 = vadd.xlane.f32.xlu0 %v5761
        %v5976 = vpop.xlane.xlu0 %5975
        %5977 = vadd.xlane.f32.xlu0 %v5762
        %v5978 = vpop.xlane.xlu0 %5977
        %5979 = vadd.xlane.f32.xlu0 %v5763
        %v5980 = vpop.xlane.xlu0 %5979
        %5981 = vadd.xlane.f32.xlu0 %v5764
        %v5982 = vpop.xlane.xlu0 %5981
        %5983 = vadd.xlane.f32.xlu0 %v5765
        %v5984 = vpop.xlane.xlu0 %5983
        %5985 = vadd.xlane.f32.xlu0 %v5766
        %v5986 = vpop.xlane.xlu0 %5985
        %5987 = vadd.xlane.f32.xlu0 %v5767
        %v5988 = vpop.xlane.xlu0 %5987
        %5989 = vadd.xlane.f32.xlu0 %v5768
        %v5990 = vpop.xlane.xlu0 %5989
        %5991 = vadd.xlane.f32.xlu0 %v5769
        %v5992 = vpop.xlane.xlu0 %5991
        %5993 = vadd.xlane.f32.xlu0 %v5770
        %v5994 = vpop.xlane.xlu0 %5993
        %5995 = vadd.xlane.f32.xlu0 %v5771
        %v5996 = vpop.xlane.xlu0 %5995
        %5997 = vadd.xlane.f32.xlu0 %v5772
        %v5998 = vpop.xlane.xlu0 %5997
        %5999 = vadd.xlane.f32.xlu0 %v5773
        %v6000 = vpop.xlane.xlu0 %5999
        %6001 = vadd.xlane.f32.xlu0 %v5774
        %v6002 = vpop.xlane.xlu0 %6001
        %6003 = vadd.xlane.f32.xlu0 %v5775
        %v6004 = vpop.xlane.xlu0 %6003
        %6005 = vadd.xlane.f32.xlu0 %v5776
        %v6006 = vpop.xlane.xlu0 %6005
        %6007 = vadd.xlane.f32.xlu0 %v5777
        %v6008 = vpop.xlane.xlu0 %6007
        %6009 = vadd.xlane.f32.xlu0 %v5778
        %v6010 = vpop.xlane.xlu0 %6009
        %6011 = vadd.xlane.f32.xlu0 %v5779
        %v6012 = vpop.xlane.xlu0 %6011
        %6013 = vadd.xlane.f32.xlu0 %v5780
        %v6014 = vpop.xlane.xlu0 %6013
        %6015 = vadd.xlane.f32.xlu0 %v5781
        %v6016 = vpop.xlane.xlu0 %6015
        %6017 = vadd.xlane.f32.xlu0 %v5782
        %v6018 = vpop.xlane.xlu0 %6017
        %6019 = vadd.xlane.f32.xlu0 %v5783
        %v6020 = vpop.xlane.xlu0 %6019
        %6021 = vadd.xlane.f32.xlu0 %v5784
        %v6022 = vpop.xlane.xlu0 %6021
        %6023 = vadd.xlane.f32.xlu0 %v5785
        %v6024 = vpop.xlane.xlu0 %6023
        %6025 = vadd.xlane.f32.xlu0 %v5786
        %v6026 = vpop.xlane.xlu0 %6025
        %6027 = vadd.xlane.f32.xlu0 %v5787
        %v6028 = vpop.xlane.xlu0 %6027
        %6029 = vadd.xlane.f32.xlu0 %v5788
        %v6030 = vpop.xlane.xlu0 %6029
        %6031 = vadd.xlane.f32.xlu0 %v5789
        %v6032 = vpop.xlane.xlu0 %6031
        %6033 = vadd.xlane.f32.xlu0 %v5790
        %v6034 = vpop.xlane.xlu0 %6033
        %6035 = vadd.xlane.f32.xlu0 %v5791
        %v6036 = vpop.xlane.xlu0 %6035
        %6037 = vadd.xlane.f32.xlu0 %v5792
        %v6038 = vpop.xlane.xlu0 %6037
        %6039 = vadd.xlane.f32.xlu0 %v5793
        %v6040 = vpop.xlane.xlu0 %6039
        %6041 = vadd.xlane.f32.xlu0 %v5794
        %v6042 = vpop.xlane.xlu0 %6041
        %6043 = vadd.xlane.f32.xlu0 %v5795
        %v6044 = vpop.xlane.xlu0 %6043
        %6045 = vadd.xlane.f32.xlu0 %v5796
        %v6046 = vpop.xlane.xlu0 %6045
        %6047 = vadd.xlane.f32.xlu0 %v5797
        %v6048 = vpop.xlane.xlu0 %6047
        %6049 = vadd.xlane.f32.xlu0 %v5798
        %v6050 = vpop.xlane.xlu0 %6049
        %6051 = vadd.xlane.f32.xlu0 %v5799
        %v6052 = vpop.xlane.xlu0 %6051
        %6053 = vadd.xlane.f32.xlu0 %v5800
        %v6054 = vpop.xlane.xlu0 %6053
        %6055 = vadd.xlane.f32.xlu0 %v5801
        %v6056 = vpop.xlane.xlu0 %6055
        %6057 = vadd.xlane.f32.xlu0 %v5802
        %v6058 = vpop.xlane.xlu0 %6057
        %v6059 = vmul.f32 %v5804, %v5546
        %v6060 = vmul.f32 %v5806, %v5546
        %v6061 = vmul.f32 %v5808, %v5546
        %v6062 = vmul.f32 %v5810, %v5546
        %v6063 = vmul.f32 %v5812, %v5546
        %v6064 = vmul.f32 %v5814, %v5546
        %v6065 = vmul.f32 %v5816, %v5546
        %v6066 = vmul.f32 %v5818, %v5546
        %v6067 = vmul.f32 %v5820, %v5546
        %v6068 = vmul.f32 %v5822, %v5546
        %v6069 = vmul.f32 %v5824, %v5546
        %v6070 = vmul.f32 %v5826, %v5546
        %v6071 = vmul.f32 %v5828, %v5546
        %v6072 = vmul.f32 %v5830, %v5546
        %v6073 = vmul.f32 %v5832, %v5546
        %v6074 = vmul.f32 %v5834, %v5546
        %v6075 = vmul.f32 %v5836, %v5546
        %v6076 = vmul.f32 %v5838, %v5546
        %v6077 = vmul.f32 %v5840, %v5546
        %v6078 = vmul.f32 %v5842, %v5546
        %v6079 = vmul.f32 %v5844, %v5546
        %v6080 = vmul.f32 %v5846, %v5546
        %v6081 = vmul.f32 %v5848, %v5546
        %v6082 = vmul.f32 %v5850, %v5546
        %v6083 = vmul.f32 %v5852, %v5546
        %v6084 = vmul.f32 %v5854, %v5546
        %v6085 = vmul.f32 %v5856, %v5546
        %v6086 = vmul.f32 %v5858, %v5546
        %v6087 = vmul.f32 %v5860, %v5546
        %v6088 = vmul.f32 %v5862, %v5546
        %v6089 = vmul.f32 %v5864, %v5546
        %v6090 = vmul.f32 %v5866, %v5546
        %v6091 = vmul.f32 %v5868, %v5546
        %v6092 = vmul.f32 %v5870, %v5546
        %v6093 = vmul.f32 %v5872, %v5546
        %v6094 = vmul.f32 %v5874, %v5546
        %v6095 = vmul.f32 %v5876, %v5546
        %v6096 = vmul.f32 %v5878, %v5546
        %v6097 = vmul.f32 %v5880, %v5546
        %v6098 = vmul.f32 %v5882, %v5546
        %v6099 = vmul.f32 %v5884, %v5546
        %v6100 = vmul.f32 %v5886, %v5546
        %v6101 = vmul.f32 %v5888, %v5546
        %v6102 = vmul.f32 %v5890, %v5546
        %v6103 = vmul.f32 %v5892, %v5546
        %v6104 = vmul.f32 %v5894, %v5546
        %v6105 = vmul.f32 %v5896, %v5546
        %v6106 = vmul.f32 %v5898, %v5546
        %v6107 = vmul.f32 %v5900, %v5546
        %v6108 = vmul.f32 %v5902, %v5546
        %v6109 = vmul.f32 %v5904, %v5546
        %v6110 = vmul.f32 %v5906, %v5546
        %v6111 = vmul.f32 %v5908, %v5546
        %v6112 = vmul.f32 %v5910, %v5546
        %v6113 = vmul.f32 %v5912, %v5546
        %v6114 = vmul.f32 %v5914, %v5546
        %v6115 = vmul.f32 %v5916, %v5546
        %v6116 = vmul.f32 %v5918, %v5546
        %v6117 = vmul.f32 %v5920, %v5546
        %v6118 = vmul.f32 %v5922, %v5546
        %v6119 = vmul.f32 %v5924, %v5546
        %v6120 = vmul.f32 %v5926, %v5546
        %v6121 = vmul.f32 %v5928, %v5546
        %v6122 = vmul.f32 %v5930, %v5546
        %v6123 = vmul.f32 %v5932, %v5546
        %v6124 = vmul.f32 %v5934, %v5546
        %v6125 = vmul.f32 %v5936, %v5546
        %v6126 = vmul.f32 %v5938, %v5546
        %v6127 = vmul.f32 %v5940, %v5546
        %v6128 = vmul.f32 %v5942, %v5546
        %v6129 = vmul.f32 %v5944, %v5546
        %v6130 = vmul.f32 %v5946, %v5546
        %v6131 = vmul.f32 %v5948, %v5546
        %v6132 = vmul.f32 %v5950, %v5546
        %v6133 = vmul.f32 %v5952, %v5546
        %v6134 = vmul.f32 %v5954, %v5546
        %v6135 = vmul.f32 %v5956, %v5546
        %v6136 = vmul.f32 %v5958, %v5546
        %v6137 = vmul.f32 %v5960, %v5546
        %v6138 = vmul.f32 %v5962, %v5546
        %v6139 = vmul.f32 %v5964, %v5546
        %v6140 = vmul.f32 %v5966, %v5546
        %v6141 = vmul.f32 %v5968, %v5546
        %v6142 = vmul.f32 %v5970, %v5546
        %v6143 = vmul.f32 %v5972, %v5546
        %v6144 = vmul.f32 %v5974, %v5546
        %v6145 = vmul.f32 %v5976, %v5546
        %v6146 = vmul.f32 %v5978, %v5546
        %v6147 = vmul.f32 %v5980, %v5546
        %v6148 = vmul.f32 %v5982, %v5546
        %v6149 = vmul.f32 %v5984, %v5546
        %v6150 = vmul.f32 %v5986, %v5546
        %v6151 = vmul.f32 %v5988, %v5546
        %v6152 = vmul.f32 %v5990, %v5546
        %v6153 = vmul.f32 %v5992, %v5546
        %v6154 = vmul.f32 %v5994, %v5546
        %v6155 = vmul.f32 %v5996, %v5546
        %v6156 = vmul.f32 %v5998, %v5546
        %v6157 = vmul.f32 %v6000, %v5546
        %v6158 = vmul.f32 %v6002, %v5546
        %v6159 = vmul.f32 %v6004, %v5546
        %v6160 = vmul.f32 %v6006, %v5546
        %v6161 = vmul.f32 %v6008, %v5546
        %v6162 = vmul.f32 %v6010, %v5546
        %v6163 = vmul.f32 %v6012, %v5546
        %v6164 = vmul.f32 %v6014, %v5546
        %v6165 = vmul.f32 %v6016, %v5546
        %v6166 = vmul.f32 %v6018, %v5546
        %v6167 = vmul.f32 %v6020, %v5546
        %v6168 = vmul.f32 %v6022, %v5546
        %v6169 = vmul.f32 %v6024, %v5546
        %v6170 = vmul.f32 %v6026, %v5546
        %v6171 = vmul.f32 %v6028, %v5546
        %v6172 = vmul.f32 %v6030, %v5546
        %v6173 = vmul.f32 %v6032, %v5546
        %v6174 = vmul.f32 %v6034, %v5546
        %v6175 = vmul.f32 %v6036, %v5546
        %v6176 = vmul.f32 %v6038, %v5546
        %v6177 = vmul.f32 %v6040, %v5546
        %v6178 = vmul.f32 %v6042, %v5546
        %v6179 = vmul.f32 %v6044, %v5546
        %v6180 = vmul.f32 %v6046, %v5546
        %v6181 = vmul.f32 %v6048, %v5546
        %v6182 = vmul.f32 %v6050, %v5546
        %v6183 = vmul.f32 %v6052, %v5546
        %v6184 = vmul.f32 %v6054, %v5546
        %v6185 = vmul.f32 %v6056, %v5546
        %v6186 = vmul.f32 %v6058, %v5546
        %v6187 = vmul.f32 %v5547, %v5547
        %v6188 = vmul.f32 %v5548, %v5548
        %v6189 = vmul.f32 %v5549, %v5549
        %v6190 = vmul.f32 %v5550, %v5550
        %v6191 = vmul.f32 %v5551, %v5551
        %v6192 = vmul.f32 %v5552, %v5552
        %v6193 = vmul.f32 %v5553, %v5553
        %v6194 = vmul.f32 %v5554, %v5554
        %v6195 = vmul.f32 %v5555, %v5555
        %v6196 = vmul.f32 %v5556, %v5556
        %v6197 = vmul.f32 %v5557, %v5557
        %v6198 = vmul.f32 %v5558, %v5558
        %v6199 = vmul.f32 %v5559, %v5559
        %v6200 = vmul.f32 %v5560, %v5560
        %v6201 = vmul.f32 %v5561, %v5561
        %v6202 = vmul.f32 %v5562, %v5562
        %v6203 = vmul.f32 %v5563, %v5563
        %v6204 = vmul.f32 %v5564, %v5564
        %v6205 = vmul.f32 %v5565, %v5565
        %v6206 = vmul.f32 %v5566, %v5566
        %v6207 = vmul.f32 %v5567, %v5567
        %v6208 = vmul.f32 %v5568, %v5568
        %v6209 = vmul.f32 %v5569, %v5569
        %v6210 = vmul.f32 %v5570, %v5570
        %v6211 = vmul.f32 %v5571, %v5571
        %v6212 = vmul.f32 %v5572, %v5572
        %v6213 = vmul.f32 %v5573, %v5573
        %v6214 = vmul.f32 %v5574, %v5574
        %v6215 = vmul.f32 %v5575, %v5575
        %v6216 = vmul.f32 %v5576, %v5576
        %v6217 = vmul.f32 %v5577, %v5577
        %v6218 = vmul.f32 %v5578, %v5578
        %v6219 = vmul.f32 %v5579, %v5579
        %v6220 = vmul.f32 %v5580, %v5580
        %v6221 = vmul.f32 %v5581, %v5581
        %v6222 = vmul.f32 %v5582, %v5582
        %v6223 = vmul.f32 %v5583, %v5583
        %v6224 = vmul.f32 %v5584, %v5584
        %v6225 = vmul.f32 %v5585, %v5585
        %v6226 = vmul.f32 %v5586, %v5586
        %v6227 = vmul.f32 %v5587, %v5587
        %v6228 = vmul.f32 %v5588, %v5588
        %v6229 = vmul.f32 %v5589, %v5589
        %v6230 = vmul.f32 %v5590, %v5590
        %v6231 = vmul.f32 %v5591, %v5591
        %v6232 = vmul.f32 %v5592, %v5592
        %v6233 = vmul.f32 %v5593, %v5593
        %v6234 = vmul.f32 %v5594, %v5594
        %v6235 = vmul.f32 %v5595, %v5595
        %v6236 = vmul.f32 %v5596, %v5596
        %v6237 = vmul.f32 %v5597, %v5597
        %v6238 = vmul.f32 %v5598, %v5598
        %v6239 = vmul.f32 %v5599, %v5599
        %v6240 = vmul.f32 %v5600, %v5600
        %v6241 = vmul.f32 %v5601, %v5601
        %v6242 = vmul.f32 %v5602, %v5602
        %v6243 = vmul.f32 %v5603, %v5603
        %v6244 = vmul.f32 %v5604, %v5604
        %v6245 = vmul.f32 %v5605, %v5605
        %v6246 = vmul.f32 %v5606, %v5606
        %v6247 = vmul.f32 %v5607, %v5607
        %v6248 = vmul.f32 %v5608, %v5608
        %v6249 = vmul.f32 %v5609, %v5609
        %v6250 = vmul.f32 %v5610, %v5610
        %v6251 = vmul.f32 %v5611, %v5611
        %v6252 = vmul.f32 %v5612, %v5612
        %v6253 = vmul.f32 %v5613, %v5613
        %v6254 = vmul.f32 %v5614, %v5614
        %v6255 = vmul.f32 %v5615, %v5615
        %v6256 = vmul.f32 %v5616, %v5616
        %v6257 = vmul.f32 %v5617, %v5617
        %v6258 = vmul.f32 %v5618, %v5618
        %v6259 = vmul.f32 %v5619, %v5619
        %v6260 = vmul.f32 %v5620, %v5620
        %v6261 = vmul.f32 %v5621, %v5621
        %v6262 = vmul.f32 %v5622, %v5622
        %v6263 = vmul.f32 %v5623, %v5623
        %v6264 = vmul.f32 %v5624, %v5624
        %v6265 = vmul.f32 %v5625, %v5625
        %v6266 = vmul.f32 %v5626, %v5626
        %v6267 = vmul.f32 %v5627, %v5627
        %v6268 = vmul.f32 %v5628, %v5628
        %v6269 = vmul.f32 %v5629, %v5629
        %v6270 = vmul.f32 %v5630, %v5630
        %v6271 = vmul.f32 %v5631, %v5631
        %v6272 = vmul.f32 %v5632, %v5632
        %v6273 = vmul.f32 %v5633, %v5633
        %v6274 = vmul.f32 %v5634, %v5634
        %v6275 = vmul.f32 %v5635, %v5635
        %v6276 = vmul.f32 %v5636, %v5636
        %v6277 = vmul.f32 %v5637, %v5637
        %v6278 = vmul.f32 %v5638, %v5638
        %v6279 = vmul.f32 %v5639, %v5639
        %v6280 = vmul.f32 %v5640, %v5640
        %v6281 = vmul.f32 %v5641, %v5641
        %v6282 = vmul.f32 %v5642, %v5642
        %v6283 = vmul.f32 %v5643, %v5643
        %v6284 = vmul.f32 %v5644, %v5644
        %v6285 = vmul.f32 %v5645, %v5645
        %v6286 = vmul.f32 %v5646, %v5646
        %v6287 = vmul.f32 %v5647, %v5647
        %v6288 = vmul.f32 %v5648, %v5648
        %v6289 = vmul.f32 %v5649, %v5649
        %v6290 = vmul.f32 %v5650, %v5650
        %v6291 = vmul.f32 %v5651, %v5651
        %v6292 = vmul.f32 %v5652, %v5652
        %v6293 = vmul.f32 %v5653, %v5653
        %v6294 = vmul.f32 %v5654, %v5654
        %v6295 = vmul.f32 %v5655, %v5655
        %v6296 = vmul.f32 %v5656, %v5656
        %v6297 = vmul.f32 %v5657, %v5657
        %v6298 = vmul.f32 %v5658, %v5658
        %v6299 = vmul.f32 %v5659, %v5659
        %v6300 = vmul.f32 %v5660, %v5660
        %v6301 = vmul.f32 %v5661, %v5661
        %v6302 = vmul.f32 %v5662, %v5662
        %v6303 = vmul.f32 %v5663, %v5663
        %v6304 = vmul.f32 %v5664, %v5664
        %v6305 = vmul.f32 %v5665, %v5665
        %v6306 = vmul.f32 %v5666, %v5666
        %v6307 = vmul.f32 %v5667, %v5667
        %v6308 = vmul.f32 %v5668, %v5668
        %v6309 = vmul.f32 %v5669, %v5669
        %v6310 = vmul.f32 %v5670, %v5670
        %v6311 = vmul.f32 %v5671, %v5671
        %v6312 = vmul.f32 %v5672, %v5672
        %v6313 = vmul.f32 %v5673, %v5673
        %v6314 = vmul.f32 %v5674, %v5674
        %v6315 = vsub.f32 %v6059, %v6187
        %v6316 = vsub.f32 %v6060, %v6188
        %v6317 = vsub.f32 %v6061, %v6189
        %v6318 = vsub.f32 %v6062, %v6190
        %v6319 = vsub.f32 %v6063, %v6191
        %v6320 = vsub.f32 %v6064, %v6192
        %v6321 = vsub.f32 %v6065, %v6193
        %v6322 = vsub.f32 %v6066, %v6194
        %v6323 = vsub.f32 %v6067, %v6195
        %v6324 = vsub.f32 %v6068, %v6196
        %v6325 = vsub.f32 %v6069, %v6197
        %v6326 = vsub.f32 %v6070, %v6198
        %v6327 = vsub.f32 %v6071, %v6199
        %v6328 = vsub.f32 %v6072, %v6200
        %v6329 = vsub.f32 %v6073, %v6201
        %v6330 = vsub.f32 %v6074, %v6202
        %v6331 = vsub.f32 %v6075, %v6203
        %v6332 = vsub.f32 %v6076, %v6204
        %v6333 = vsub.f32 %v6077, %v6205
        %v6334 = vsub.f32 %v6078, %v6206
        %v6335 = vsub.f32 %v6079, %v6207
        %v6336 = vsub.f32 %v6080, %v6208
        %v6337 = vsub.f32 %v6081, %v6209
        %v6338 = vsub.f32 %v6082, %v6210
        %v6339 = vsub.f32 %v6083, %v6211
        %v6340 = vsub.f32 %v6084, %v6212
        %v6341 = vsub.f32 %v6085, %v6213
        %v6342 = vsub.f32 %v6086, %v6214
        %v6343 = vsub.f32 %v6087, %v6215
        %v6344 = vsub.f32 %v6088, %v6216
        %v6345 = vsub.f32 %v6089, %v6217
        %v6346 = vsub.f32 %v6090, %v6218
        %v6347 = vsub.f32 %v6091, %v6219
        %v6348 = vsub.f32 %v6092, %v6220
        %v6349 = vsub.f32 %v6093, %v6221
        %v6350 = vsub.f32 %v6094, %v6222
        %v6351 = vsub.f32 %v6095, %v6223
        %v6352 = vsub.f32 %v6096, %v6224
        %v6353 = vsub.f32 %v6097, %v6225
        %v6354 = vsub.f32 %v6098, %v6226
        %v6355 = vsub.f32 %v6099, %v6227
        %v6356 = vsub.f32 %v6100, %v6228
        %v6357 = vsub.f32 %v6101, %v6229
        %v6358 = vsub.f32 %v6102, %v6230
        %v6359 = vsub.f32 %v6103, %v6231
        %v6360 = vsub.f32 %v6104, %v6232
        %v6361 = vsub.f32 %v6105, %v6233
        %v6362 = vsub.f32 %v6106, %v6234
        %v6363 = vsub.f32 %v6107, %v6235
        %v6364 = vsub.f32 %v6108, %v6236
        %v6365 = vsub.f32 %v6109, %v6237
        %v6366 = vsub.f32 %v6110, %v6238
        %v6367 = vsub.f32 %v6111, %v6239
        %v6368 = vsub.f32 %v6112, %v6240
        %v6369 = vsub.f32 %v6113, %v6241
        %v6370 = vsub.f32 %v6114, %v6242
        %v6371 = vsub.f32 %v6115, %v6243
        %v6372 = vsub.f32 %v6116, %v6244
        %v6373 = vsub.f32 %v6117, %v6245
        %v6374 = vsub.f32 %v6118, %v6246
        %v6375 = vsub.f32 %v6119, %v6247
        %v6376 = vsub.f32 %v6120, %v6248
        %v6377 = vsub.f32 %v6121, %v6249
        %v6378 = vsub.f32 %v6122, %v6250
        %v6379 = vsub.f32 %v6123, %v6251
        %v6380 = vsub.f32 %v6124, %v6252
        %v6381 = vsub.f32 %v6125, %v6253
        %v6382 = vsub.f32 %v6126, %v6254
        %v6383 = vsub.f32 %v6127, %v6255
        %v6384 = vsub.f32 %v6128, %v6256
        %v6385 = vsub.f32 %v6129, %v6257
        %v6386 = vsub.f32 %v6130, %v6258
        %v6387 = vsub.f32 %v6131, %v6259
        %v6388 = vsub.f32 %v6132, %v6260
        %v6389 = vsub.f32 %v6133, %v6261
        %v6390 = vsub.f32 %v6134, %v6262
        %v6391 = vsub.f32 %v6135, %v6263
        %v6392 = vsub.f32 %v6136, %v6264
        %v6393 = vsub.f32 %v6137, %v6265
        %v6394 = vsub.f32 %v6138, %v6266
        %v6395 = vsub.f32 %v6139, %v6267
        %v6396 = vsub.f32 %v6140, %v6268
        %v6397 = vsub.f32 %v6141, %v6269
        %v6398 = vsub.f32 %v6142, %v6270
        %v6399 = vsub.f32 %v6143, %v6271
        %v6400 = vsub.f32 %v6144, %v6272
        %v6401 = vsub.f32 %v6145, %v6273
        %v6402 = vsub.f32 %v6146, %v6274
        %v6403 = vsub.f32 %v6147, %v6275
        %v6404 = vsub.f32 %v6148, %v6276
        %v6405 = vsub.f32 %v6149, %v6277
        %v6406 = vsub.f32 %v6150, %v6278
        %v6407 = vsub.f32 %v6151, %v6279
        %v6408 = vsub.f32 %v6152, %v6280
        %v6409 = vsub.f32 %v6153, %v6281
        %v6410 = vsub.f32 %v6154, %v6282
        %v6411 = vsub.f32 %v6155, %v6283
        %v6412 = vsub.f32 %v6156, %v6284
        %v6413 = vsub.f32 %v6157, %v6285
        %v6414 = vsub.f32 %v6158, %v6286
        %v6415 = vsub.f32 %v6159, %v6287
        %v6416 = vsub.f32 %v6160, %v6288
        %v6417 = vsub.f32 %v6161, %v6289
        %v6418 = vsub.f32 %v6162, %v6290
        %v6419 = vsub.f32 %v6163, %v6291
        %v6420 = vsub.f32 %v6164, %v6292
        %v6421 = vsub.f32 %v6165, %v6293
        %v6422 = vsub.f32 %v6166, %v6294
        %v6423 = vsub.f32 %v6167, %v6295
        %v6424 = vsub.f32 %v6168, %v6296
        %v6425 = vsub.f32 %v6169, %v6297
        %v6426 = vsub.f32 %v6170, %v6298
        %v6427 = vsub.f32 %v6171, %v6299
        %v6428 = vsub.f32 %v6172, %v6300
        %v6429 = vsub.f32 %v6173, %v6301
        %v6430 = vsub.f32 %v6174, %v6302
        %v6431 = vsub.f32 %v6175, %v6303
        %v6432 = vsub.f32 %v6176, %v6304
        %v6433 = vsub.f32 %v6177, %v6305
        %v6434 = vsub.f32 %v6178, %v6306
        %v6435 = vsub.f32 %v6179, %v6307
        %v6436 = vsub.f32 %v6180, %v6308
        %v6437 = vsub.f32 %v6181, %v6309
        %v6438 = vsub.f32 %v6182, %v6310
        %v6439 = vsub.f32 %v6183, %v6311
        %v6440 = vsub.f32 %v6184, %v6312
        %v6441 = vsub.f32 %v6185, %v6313
        %v6442 = vsub.f32 %v6186, %v6314
        %v6443 = vmax.f32 %v6315, 0.0
        %v6444 = vmax.f32 %v6316, 0.0
        %v6445 = vmax.f32 %v6317, 0.0
        %v6446 = vmax.f32 %v6318, 0.0
        %v6447 = vmax.f32 %v6319, 0.0
        %v6448 = vmax.f32 %v6320, 0.0
        %v6449 = vmax.f32 %v6321, 0.0
        %v6450 = vmax.f32 %v6322, 0.0
        %v6451 = vmax.f32 %v6323, 0.0
        %v6452 = vmax.f32 %v6324, 0.0
        %v6453 = vmax.f32 %v6325, 0.0
        %v6454 = vmax.f32 %v6326, 0.0
        %v6455 = vmax.f32 %v6327, 0.0
        %v6456 = vmax.f32 %v6328, 0.0
        %v6457 = vmax.f32 %v6329, 0.0
        %v6458 = vmax.f32 %v6330, 0.0
        %v6459 = vmax.f32 %v6331, 0.0
        %v6460 = vmax.f32 %v6332, 0.0
        %v6461 = vmax.f32 %v6333, 0.0
        %v6462 = vmax.f32 %v6334, 0.0
        %v6463 = vmax.f32 %v6335, 0.0
        %v6464 = vmax.f32 %v6336, 0.0
        %v6465 = vmax.f32 %v6337, 0.0
        %v6466 = vmax.f32 %v6338, 0.0
        %v6467 = vmax.f32 %v6339, 0.0
        %v6468 = vmax.f32 %v6340, 0.0
        %v6469 = vmax.f32 %v6341, 0.0
        %v6470 = vmax.f32 %v6342, 0.0
        %v6471 = vmax.f32 %v6343, 0.0
        %v6472 = vmax.f32 %v6344, 0.0
        %v6473 = vmax.f32 %v6345, 0.0
        %v6474 = vmax.f32 %v6346, 0.0
        %v6475 = vmax.f32 %v6347, 0.0
        %v6476 = vmax.f32 %v6348, 0.0
        %v6477 = vmax.f32 %v6349, 0.0
        %v6478 = vmax.f32 %v6350, 0.0
        %v6479 = vmax.f32 %v6351, 0.0
        %v6480 = vmax.f32 %v6352, 0.0
        %v6481 = vmax.f32 %v6353, 0.0
        %v6482 = vmax.f32 %v6354, 0.0
        %v6483 = vmax.f32 %v6355, 0.0
        %v6484 = vmax.f32 %v6356, 0.0
        %v6485 = vmax.f32 %v6357, 0.0
        %v6486 = vmax.f32 %v6358, 0.0
        %v6487 = vmax.f32 %v6359, 0.0
        %v6488 = vmax.f32 %v6360, 0.0
        %v6489 = vmax.f32 %v6361, 0.0
        %v6490 = vmax.f32 %v6362, 0.0
        %v6491 = vmax.f32 %v6363, 0.0
        %v6492 = vmax.f32 %v6364, 0.0
        %v6493 = vmax.f32 %v6365, 0.0
        %v6494 = vmax.f32 %v6366, 0.0
        %v6495 = vmax.f32 %v6367, 0.0
        %v6496 = vmax.f32 %v6368, 0.0
        %v6497 = vmax.f32 %v6369, 0.0
        %v6498 = vmax.f32 %v6370, 0.0
        %v6499 = vmax.f32 %v6371, 0.0
        %v6500 = vmax.f32 %v6372, 0.0
        %v6501 = vmax.f32 %v6373, 0.0
        %v6502 = vmax.f32 %v6374, 0.0
        %v6503 = vmax.f32 %v6375, 0.0
        %v6504 = vmax.f32 %v6376, 0.0
        %v6505 = vmax.f32 %v6377, 0.0
        %v6506 = vmax.f32 %v6378, 0.0
        %v6507 = vmax.f32 %v6379, 0.0
        %v6508 = vmax.f32 %v6380, 0.0
        %v6509 = vmax.f32 %v6381, 0.0
        %v6510 = vmax.f32 %v6382, 0.0
        %v6511 = vmax.f32 %v6383, 0.0
        %v6512 = vmax.f32 %v6384, 0.0
        %v6513 = vmax.f32 %v6385, 0.0
        %v6514 = vmax.f32 %v6386, 0.0
        %v6515 = vmax.f32 %v6387, 0.0
        %v6516 = vmax.f32 %v6388, 0.0
        %v6517 = vmax.f32 %v6389, 0.0
        %v6518 = vmax.f32 %v6390, 0.0
        %v6519 = vmax.f32 %v6391, 0.0
        %v6520 = vmax.f32 %v6392, 0.0
        %v6521 = vmax.f32 %v6393, 0.0
        %v6522 = vmax.f32 %v6394, 0.0
        %v6523 = vmax.f32 %v6395, 0.0
        %v6524 = vmax.f32 %v6396, 0.0
        %v6525 = vmax.f32 %v6397, 0.0
        %v6526 = vmax.f32 %v6398, 0.0
        %v6527 = vmax.f32 %v6399, 0.0
        %v6528 = vmax.f32 %v6400, 0.0
        %v6529 = vmax.f32 %v6401, 0.0
        %v6530 = vmax.f32 %v6402, 0.0
        %v6531 = vmax.f32 %v6403, 0.0
        %v6532 = vmax.f32 %v6404, 0.0
        %v6533 = vmax.f32 %v6405, 0.0
        %v6534 = vmax.f32 %v6406, 0.0
        %v6535 = vmax.f32 %v6407, 0.0
        %v6536 = vmax.f32 %v6408, 0.0
        %v6537 = vmax.f32 %v6409, 0.0
        %v6538 = vmax.f32 %v6410, 0.0
        %v6539 = vmax.f32 %v6411, 0.0
        %v6540 = vmax.f32 %v6412, 0.0
        %v6541 = vmax.f32 %v6413, 0.0
        %v6542 = vmax.f32 %v6414, 0.0
        %v6543 = vmax.f32 %v6415, 0.0
        %v6544 = vmax.f32 %v6416, 0.0
        %v6545 = vmax.f32 %v6417, 0.0
        %v6546 = vmax.f32 %v6418, 0.0
        %v6547 = vmax.f32 %v6419, 0.0
        %v6548 = vmax.f32 %v6420, 0.0
        %v6549 = vmax.f32 %v6421, 0.0
        %v6550 = vmax.f32 %v6422, 0.0
        %v6551 = vmax.f32 %v6423, 0.0
        %v6552 = vmax.f32 %v6424, 0.0
        %v6553 = vmax.f32 %v6425, 0.0
        %v6554 = vmax.f32 %v6426, 0.0
        %v6555 = vmax.f32 %v6427, 0.0
        %v6556 = vmax.f32 %v6428, 0.0
        %v6557 = vmax.f32 %v6429, 0.0
        %v6558 = vmax.f32 %v6430, 0.0
        %v6559 = vmax.f32 %v6431, 0.0
        %v6560 = vmax.f32 %v6432, 0.0
        %v6561 = vmax.f32 %v6433, 0.0
        %v6562 = vmax.f32 %v6434, 0.0
        %v6563 = vmax.f32 %v6435, 0.0
        %v6564 = vmax.f32 %v6436, 0.0
        %v6565 = vmax.f32 %v6437, 0.0
        %v6566 = vmax.f32 %v6438, 0.0
        %v6567 = vmax.f32 %v6439, 0.0
        %v6568 = vmax.f32 %v6440, 0.0
        %v6569 = vmax.f32 %v6441, 0.0
        %v6570 = vmax.f32 %v6442, 0.0
        %v6571 = vsub.f32 %v4780, %v5547
        %v6572 = vsub.f32 %v4783, %v5548
        %v6573 = vsub.f32 %v4788, %v5549
        %v6574 = vsub.f32 %v4791, %v5550
        %v6575 = vsub.f32 %v4796, %v5551
        %v6576 = vsub.f32 %v4799, %v5552
        %v6577 = vsub.f32 %v4804, %v5553
        %v6578 = vsub.f32 %v4807, %v5554
        %v6579 = vsub.f32 %v4812, %v5555
        %v6580 = vsub.f32 %v4815, %v5556
        %v6581 = vsub.f32 %v4820, %v5557
        %v6582 = vsub.f32 %v4823, %v5558
        %v6583 = vsub.f32 %v4828, %v5559
        %v6584 = vsub.f32 %v4831, %v5560
        %v6585 = vsub.f32 %v4836, %v5561
        %v6586 = vsub.f32 %v4839, %v5562
        %v6587 = vsub.f32 %v4844, %v5563
        %v6588 = vsub.f32 %v4847, %v5564
        %v6589 = vsub.f32 %v4852, %v5565
        %v6590 = vsub.f32 %v4855, %v5566
        %v6591 = vsub.f32 %v4860, %v5567
        %v6592 = vsub.f32 %v4863, %v5568
        %v6593 = vsub.f32 %v4868, %v5569
        %v6594 = vsub.f32 %v4871, %v5570
        %v6595 = vsub.f32 %v4876, %v5571
        %v6596 = vsub.f32 %v4879, %v5572
        %v6597 = vsub.f32 %v4884, %v5573
        %v6598 = vsub.f32 %v4887, %v5574
        %v6599 = vsub.f32 %v4892, %v5575
        %v6600 = vsub.f32 %v4895, %v5576
        %v6601 = vsub.f32 %v4900, %v5577
        %v6602 = vsub.f32 %v4903, %v5578
        %v6603 = vsub.f32 %v4908, %v5579
        %v6604 = vsub.f32 %v4911, %v5580
        %v6605 = vsub.f32 %v4916, %v5581
        %v6606 = vsub.f32 %v4919, %v5582
        %v6607 = vsub.f32 %v4924, %v5583
        %v6608 = vsub.f32 %v4927, %v5584
        %v6609 = vsub.f32 %v4932, %v5585
        %v6610 = vsub.f32 %v4935, %v5586
        %v6611 = vsub.f32 %v4940, %v5587
        %v6612 = vsub.f32 %v4943, %v5588
        %v6613 = vsub.f32 %v4948, %v5589
        %v6614 = vsub.f32 %v4951, %v5590
        %v6615 = vsub.f32 %v4956, %v5591
        %v6616 = vsub.f32 %v4959, %v5592
        %v6617 = vsub.f32 %v4964, %v5593
        %v6618 = vsub.f32 %v4967, %v5594
        %v6619 = vsub.f32 %v4972, %v5595
        %v6620 = vsub.f32 %v4975, %v5596
        %v6621 = vsub.f32 %v4980, %v5597
        %v6622 = vsub.f32 %v4983, %v5598
        %v6623 = vsub.f32 %v4988, %v5599
        %v6624 = vsub.f32 %v4991, %v5600
        %v6625 = vsub.f32 %v4996, %v5601
        %v6626 = vsub.f32 %v4999, %v5602
        %v6627 = vsub.f32 %v5004, %v5603
        %v6628 = vsub.f32 %v5007, %v5604
        %v6629 = vsub.f32 %v5012, %v5605
        %v6630 = vsub.f32 %v5015, %v5606
        %v6631 = vsub.f32 %v5020, %v5607
        %v6632 = vsub.f32 %v5023, %v5608
        %v6633 = vsub.f32 %v5028, %v5609
        %v6634 = vsub.f32 %v5031, %v5610
        %v6635 = vsub.f32 %v5036, %v5611
        %v6636 = vsub.f32 %v5039, %v5612
        %v6637 = vsub.f32 %v5044, %v5613
        %v6638 = vsub.f32 %v5047, %v5614
        %v6639 = vsub.f32 %v5052, %v5615
        %v6640 = vsub.f32 %v5055, %v5616
        %v6641 = vsub.f32 %v5060, %v5617
        %v6642 = vsub.f32 %v5063, %v5618
        %v6643 = vsub.f32 %v5068, %v5619
        %v6644 = vsub.f32 %v5071, %v5620
        %v6645 = vsub.f32 %v5076, %v5621
        %v6646 = vsub.f32 %v5079, %v5622
        %v6647 = vsub.f32 %v5084, %v5623
        %v6648 = vsub.f32 %v5087, %v5624
        %v6649 = vsub.f32 %v5092, %v5625
        %v6650 = vsub.f32 %v5095, %v5626
        %v6651 = vsub.f32 %v5100, %v5627
        %v6652 = vsub.f32 %v5103, %v5628
        %v6653 = vsub.f32 %v5108, %v5629
        %v6654 = vsub.f32 %v5111, %v5630
        %v6655 = vsub.f32 %v5116, %v5631
        %v6656 = vsub.f32 %v5119, %v5632
        %v6657 = vsub.f32 %v5124, %v5633
        %v6658 = vsub.f32 %v5127, %v5634
        %v6659 = vsub.f32 %v5132, %v5635
        %v6660 = vsub.f32 %v5135, %v5636
        %v6661 = vsub.f32 %v5140, %v5637
        %v6662 = vsub.f32 %v5143, %v5638
        %v6663 = vsub.f32 %v5148, %v5639
        %v6664 = vsub.f32 %v5151, %v5640
        %v6665 = vsub.f32 %v5156, %v5641
        %v6666 = vsub.f32 %v5159, %v5642
        %v6667 = vsub.f32 %v5164, %v5643
        %v6668 = vsub.f32 %v5167, %v5644
        %v6669 = vsub.f32 %v5172, %v5645
        %v6670 = vsub.f32 %v5175, %v5646
        %v6671 = vsub.f32 %v5180, %v5647
        %v6672 = vsub.f32 %v5183, %v5648
        %v6673 = vsub.f32 %v5188, %v5649
        %v6674 = vsub.f32 %v5191, %v5650
        %v6675 = vsub.f32 %v5196, %v5651
        %v6676 = vsub.f32 %v5199, %v5652
        %v6677 = vsub.f32 %v5204, %v5653
        %v6678 = vsub.f32 %v5207, %v5654
        %v6679 = vsub.f32 %v5212, %v5655
        %v6680 = vsub.f32 %v5215, %v5656
        %v6681 = vsub.f32 %v5220, %v5657
        %v6682 = vsub.f32 %v5223, %v5658
        %v6683 = vsub.f32 %v5228, %v5659
        %v6684 = vsub.f32 %v5231, %v5660
        %v6685 = vsub.f32 %v5236, %v5661
        %v6686 = vsub.f32 %v5239, %v5662
        %v6687 = vsub.f32 %v5244, %v5663
        %v6688 = vsub.f32 %v5247, %v5664
        %v6689 = vsub.f32 %v5252, %v5665
        %v6690 = vsub.f32 %v5255, %v5666
        %v6691 = vsub.f32 %v5260, %v5667
        %v6692 = vsub.f32 %v5263, %v5668
        %v6693 = vsub.f32 %v5268, %v5669
        %v6694 = vsub.f32 %v5271, %v5670
        %v6695 = vsub.f32 %v5276, %v5671
        %v6696 = vsub.f32 %v5279, %v5672
        %v6697 = vsub.f32 %v5284, %v5673
        %v6698 = vsub.f32 %v5287, %v5674
        %v6699 = vadd.f32 %v6443, 1e-05
        %v6700 = vadd.f32 %v6444, 1e-05
        %v6701 = vadd.f32 %v6445, 1e-05
        %v6702 = vadd.f32 %v6446, 1e-05
        %v6703 = vadd.f32 %v6447, 1e-05
        %v6704 = vadd.f32 %v6448, 1e-05
        %v6705 = vadd.f32 %v6449, 1e-05
        %v6706 = vadd.f32 %v6450, 1e-05
        %v6707 = vadd.f32 %v6451, 1e-05
        %v6708 = vadd.f32 %v6452, 1e-05
        %v6709 = vadd.f32 %v6453, 1e-05
        %v6710 = vadd.f32 %v6454, 1e-05
        %v6711 = vadd.f32 %v6455, 1e-05
        %v6712 = vadd.f32 %v6456, 1e-05
        %v6713 = vadd.f32 %v6457, 1e-05
        %v6714 = vadd.f32 %v6458, 1e-05
        %v6715 = vadd.f32 %v6459, 1e-05
        %v6716 = vadd.f32 %v6460, 1e-05
        %v6717 = vadd.f32 %v6461, 1e-05
        %v6718 = vadd.f32 %v6462, 1e-05
        %v6719 = vadd.f32 %v6463, 1e-05
        %v6720 = vadd.f32 %v6464, 1e-05
        %v6721 = vadd.f32 %v6465, 1e-05
        %v6722 = vadd.f32 %v6466, 1e-05
        %v6723 = vadd.f32 %v6467, 1e-05
        %v6724 = vadd.f32 %v6468, 1e-05
        %v6725 = vadd.f32 %v6469, 1e-05
        %v6726 = vadd.f32 %v6470, 1e-05
        %v6727 = vadd.f32 %v6471, 1e-05
        %v6728 = vadd.f32 %v6472, 1e-05
        %v6729 = vadd.f32 %v6473, 1e-05
        %v6730 = vadd.f32 %v6474, 1e-05
        %v6731 = vadd.f32 %v6475, 1e-05
        %v6732 = vadd.f32 %v6476, 1e-05
        %v6733 = vadd.f32 %v6477, 1e-05
        %v6734 = vadd.f32 %v6478, 1e-05
        %v6735 = vadd.f32 %v6479, 1e-05
        %v6736 = vadd.f32 %v6480, 1e-05
        %v6737 = vadd.f32 %v6481, 1e-05
        %v6738 = vadd.f32 %v6482, 1e-05
        %v6739 = vadd.f32 %v6483, 1e-05
        %v6740 = vadd.f32 %v6484, 1e-05
        %v6741 = vadd.f32 %v6485, 1e-05
        %v6742 = vadd.f32 %v6486, 1e-05
        %v6743 = vadd.f32 %v6487, 1e-05
        %v6744 = vadd.f32 %v6488, 1e-05
        %v6745 = vadd.f32 %v6489, 1e-05
        %v6746 = vadd.f32 %v6490, 1e-05
        %v6747 = vadd.f32 %v6491, 1e-05
        %v6748 = vadd.f32 %v6492, 1e-05
        %v6749 = vadd.f32 %v6493, 1e-05
        %v6750 = vadd.f32 %v6494, 1e-05
        %v6751 = vadd.f32 %v6495, 1e-05
        %v6752 = vadd.f32 %v6496, 1e-05
        %v6753 = vadd.f32 %v6497, 1e-05
        %v6754 = vadd.f32 %v6498, 1e-05
        %v6755 = vadd.f32 %v6499, 1e-05
        %v6756 = vadd.f32 %v6500, 1e-05
        %v6757 = vadd.f32 %v6501, 1e-05
        %v6758 = vadd.f32 %v6502, 1e-05
        %v6759 = vadd.f32 %v6503, 1e-05
        %v6760 = vadd.f32 %v6504, 1e-05
        %v6761 = vadd.f32 %v6505, 1e-05
        %v6762 = vadd.f32 %v6506, 1e-05
        %v6763 = vadd.f32 %v6507, 1e-05
        %v6764 = vadd.f32 %v6508, 1e-05
        %v6765 = vadd.f32 %v6509, 1e-05
        %v6766 = vadd.f32 %v6510, 1e-05
        %v6767 = vadd.f32 %v6511, 1e-05
        %v6768 = vadd.f32 %v6512, 1e-05
        %v6769 = vadd.f32 %v6513, 1e-05
        %v6770 = vadd.f32 %v6514, 1e-05
        %v6771 = vadd.f32 %v6515, 1e-05
        %v6772 = vadd.f32 %v6516, 1e-05
        %v6773 = vadd.f32 %v6517, 1e-05
        %v6774 = vadd.f32 %v6518, 1e-05
        %v6775 = vadd.f32 %v6519, 1e-05
        %v6776 = vadd.f32 %v6520, 1e-05
        %v6777 = vadd.f32 %v6521, 1e-05
        %v6778 = vadd.f32 %v6522, 1e-05
        %v6779 = vadd.f32 %v6523, 1e-05
        %v6780 = vadd.f32 %v6524, 1e-05
        %v6781 = vadd.f32 %v6525, 1e-05
        %v6782 = vadd.f32 %v6526, 1e-05
        %v6783 = vadd.f32 %v6527, 1e-05
        %v6784 = vadd.f32 %v6528, 1e-05
        %v6785 = vadd.f32 %v6529, 1e-05
        %v6786 = vadd.f32 %v6530, 1e-05
        %v6787 = vadd.f32 %v6531, 1e-05
        %v6788 = vadd.f32 %v6532, 1e-05
        %v6789 = vadd.f32 %v6533, 1e-05
        %v6790 = vadd.f32 %v6534, 1e-05
        %v6791 = vadd.f32 %v6535, 1e-05
        %v6792 = vadd.f32 %v6536, 1e-05
        %v6793 = vadd.f32 %v6537, 1e-05
        %v6794 = vadd.f32 %v6538, 1e-05
        %v6795 = vadd.f32 %v6539, 1e-05
        %v6796 = vadd.f32 %v6540, 1e-05
        %v6797 = vadd.f32 %v6541, 1e-05
        %v6798 = vadd.f32 %v6542, 1e-05
        %v6799 = vadd.f32 %v6543, 1e-05
        %v6800 = vadd.f32 %v6544, 1e-05
        %v6801 = vadd.f32 %v6545, 1e-05
        %v6802 = vadd.f32 %v6546, 1e-05
        %v6803 = vadd.f32 %v6547, 1e-05
        %v6804 = vadd.f32 %v6548, 1e-05
        %v6805 = vadd.f32 %v6549, 1e-05
        %v6806 = vadd.f32 %v6550, 1e-05
        %v6807 = vadd.f32 %v6551, 1e-05
        %v6808 = vadd.f32 %v6552, 1e-05
        %v6809 = vadd.f32 %v6553, 1e-05
        %v6810 = vadd.f32 %v6554, 1e-05
        %v6811 = vadd.f32 %v6555, 1e-05
        %v6812 = vadd.f32 %v6556, 1e-05
        %v6813 = vadd.f32 %v6557, 1e-05
        %v6814 = vadd.f32 %v6558, 1e-05
        %v6815 = vadd.f32 %v6559, 1e-05
        %v6816 = vadd.f32 %v6560, 1e-05
        %v6817 = vadd.f32 %v6561, 1e-05
        %v6818 = vadd.f32 %v6562, 1e-05
        %v6819 = vadd.f32 %v6563, 1e-05
        %v6820 = vadd.f32 %v6564, 1e-05
        %v6821 = vadd.f32 %v6565, 1e-05
        %v6822 = vadd.f32 %v6566, 1e-05
        %v6823 = vadd.f32 %v6567, 1e-05
        %v6824 = vadd.f32 %v6568, 1e-05
        %v6825 = vadd.f32 %v6569, 1e-05
        %v6826 = vadd.f32 %v6570, 1e-05
        %v6827 = vrsqrt.pop %v6699
        %v6828 = vrsqrt.pop %v6700
        %v6829 = vrsqrt.pop %v6701
        %v6830 = vrsqrt.pop %v6702
        %v6831 = vrsqrt.pop %v6703
        %v6832 = vrsqrt.pop %v6704
        %v6833 = vrsqrt.pop %v6705
        %v6834 = vrsqrt.pop %v6706
        %v6835 = vrsqrt.pop %v6707
        %v6836 = vrsqrt.pop %v6708
        %v6837 = vrsqrt.pop %v6709
        %v6838 = vrsqrt.pop %v6710
        %v6839 = vrsqrt.pop %v6711
        %v6840 = vrsqrt.pop %v6712
        %v6841 = vrsqrt.pop %v6713
        %v6842 = vrsqrt.pop %v6714
        %v6843 = vrsqrt.pop %v6715
        %v6844 = vrsqrt.pop %v6716
        %v6845 = vrsqrt.pop %v6717
        %v6846 = vrsqrt.pop %v6718
        %v6847 = vrsqrt.pop %v6719
        %v6848 = vrsqrt.pop %v6720
        %v6849 = vrsqrt.pop %v6721
        %v6850 = vrsqrt.pop %v6722
        %v6851 = vrsqrt.pop %v6723
        %v6852 = vrsqrt.pop %v6724
        %v6853 = vrsqrt.pop %v6725
        %v6854 = vrsqrt.pop %v6726
        %v6855 = vrsqrt.pop %v6727
        %v6856 = vrsqrt.pop %v6728
        %v6857 = vrsqrt.pop %v6729
        %v6858 = vrsqrt.pop %v6730
        %v6859 = vrsqrt.pop %v6731
        %v6860 = vrsqrt.pop %v6732
        %v6861 = vrsqrt.pop %v6733
        %v6862 = vrsqrt.pop %v6734
        %v6863 = vrsqrt.pop %v6735
        %v6864 = vrsqrt.pop %v6736
        %v6865 = vrsqrt.pop %v6737
        %v6866 = vrsqrt.pop %v6738
        %v6867 = vrsqrt.pop %v6739
        %v6868 = vrsqrt.pop %v6740
        %v6869 = vrsqrt.pop %v6741
        %v6870 = vrsqrt.pop %v6742
        %v6871 = vrsqrt.pop %v6743
        %v6872 = vrsqrt.pop %v6744
        %v6873 = vrsqrt.pop %v6745
        %v6874 = vrsqrt.pop %v6746
        %v6875 = vrsqrt.pop %v6747
        %v6876 = vrsqrt.pop %v6748
        %v6877 = vrsqrt.pop %v6749
        %v6878 = vrsqrt.pop %v6750
        %v6879 = vrsqrt.pop %v6751
        %v6880 = vrsqrt.pop %v6752
        %v6881 = vrsqrt.pop %v6753
        %v6882 = vrsqrt.pop %v6754
        %v6883 = vrsqrt.pop %v6755
        %v6884 = vrsqrt.pop %v6756
        %v6885 = vrsqrt.pop %v6757
        %v6886 = vrsqrt.pop %v6758
        %v6887 = vrsqrt.pop %v6759
        %v6888 = vrsqrt.pop %v6760
        %v6889 = vrsqrt.pop %v6761
        %v6890 = vrsqrt.pop %v6762
        %v6891 = vrsqrt.pop %v6763
        %v6892 = vrsqrt.pop %v6764
        %v6893 = vrsqrt.pop %v6765
        %v6894 = vrsqrt.pop %v6766
        %v6895 = vrsqrt.pop %v6767
        %v6896 = vrsqrt.pop %v6768
        %v6897 = vrsqrt.pop %v6769
        %v6898 = vrsqrt.pop %v6770
        %v6899 = vrsqrt.pop %v6771
        %v6900 = vrsqrt.pop %v6772
        %v6901 = vrsqrt.pop %v6773
        %v6902 = vrsqrt.pop %v6774
        %v6903 = vrsqrt.pop %v6775
        %v6904 = vrsqrt.pop %v6776
        %v6905 = vrsqrt.pop %v6777
        %v6906 = vrsqrt.pop %v6778
        %v6907 = vrsqrt.pop %v6779
        %v6908 = vrsqrt.pop %v6780
        %v6909 = vrsqrt.pop %v6781
        %v6910 = vrsqrt.pop %v6782
        %v6911 = vrsqrt.pop %v6783
        %v6912 = vrsqrt.pop %v6784
        %v6913 = vrsqrt.pop %v6785
        %v6914 = vrsqrt.pop %v6786
        %v6915 = vrsqrt.pop %v6787
        %v6916 = vrsqrt.pop %v6788
        %v6917 = vrsqrt.pop %v6789
        %v6918 = vrsqrt.pop %v6790
        %v6919 = vrsqrt.pop %v6791
        %v6920 = vrsqrt.pop %v6792
        %v6921 = vrsqrt.pop %v6793
        %v6922 = vrsqrt.pop %v6794
        %v6923 = vrsqrt.pop %v6795
        %v6924 = vrsqrt.pop %v6796
        %v6925 = vrsqrt.pop %v6797
        %v6926 = vrsqrt.pop %v6798
        %v6927 = vrsqrt.pop %v6799
        %v6928 = vrsqrt.pop %v6800
        %v6929 = vrsqrt.pop %v6801
        %v6930 = vrsqrt.pop %v6802
        %v6931 = vrsqrt.pop %v6803
        %v6932 = vrsqrt.pop %v6804
        %v6933 = vrsqrt.pop %v6805
        %v6934 = vrsqrt.pop %v6806
        %v6935 = vrsqrt.pop %v6807
        %v6936 = vrsqrt.pop %v6808
        %v6937 = vrsqrt.pop %v6809
        %v6938 = vrsqrt.pop %v6810
        %v6939 = vrsqrt.pop %v6811
        %v6940 = vrsqrt.pop %v6812
        %v6941 = vrsqrt.pop %v6813
        %v6942 = vrsqrt.pop %v6814
        %v6943 = vrsqrt.pop %v6815
        %v6944 = vrsqrt.pop %v6816
        %v6945 = vrsqrt.pop %v6817
        %v6946 = vrsqrt.pop %v6818
        %v6947 = vrsqrt.pop %v6819
        %v6948 = vrsqrt.pop %v6820
        %v6949 = vrsqrt.pop %v6821
        %v6950 = vrsqrt.pop %v6822
        %v6951 = vrsqrt.pop %v6823
        %v6952 = vrsqrt.pop %v6824
        %v6953 = vrsqrt.pop %v6825
        %v6954 = vrsqrt.pop %v6826
        %v6955 = vmul.f32 %v6571, %v6827
        %v6956 = vmul.f32 %v6572, %v6828
        %v6957 = vmul.f32 %v6573, %v6829
        %v6958 = vmul.f32 %v6574, %v6830
        %v6959 = vmul.f32 %v6575, %v6831
        %v6960 = vmul.f32 %v6576, %v6832
        %v6961 = vmul.f32 %v6577, %v6833
        %v6962 = vmul.f32 %v6578, %v6834
        %v6963 = vmul.f32 %v6579, %v6835
        %v6964 = vmul.f32 %v6580, %v6836
        %v6965 = vmul.f32 %v6581, %v6837
        %v6966 = vmul.f32 %v6582, %v6838
        %v6967 = vmul.f32 %v6583, %v6839
        %v6968 = vmul.f32 %v6584, %v6840
        %v6969 = vmul.f32 %v6585, %v6841
        %v6970 = vmul.f32 %v6586, %v6842
        %v6971 = vmul.f32 %v6587, %v6843
        %v6972 = vmul.f32 %v6588, %v6844
        %v6973 = vmul.f32 %v6589, %v6845
        %v6974 = vmul.f32 %v6590, %v6846
        %v6975 = vmul.f32 %v6591, %v6847
        %v6976 = vmul.f32 %v6592, %v6848
        %v6977 = vmul.f32 %v6593, %v6849
        %v6978 = vmul.f32 %v6594, %v6850
        %v6979 = vmul.f32 %v6595, %v6851
        %v6980 = vmul.f32 %v6596, %v6852
        %v6981 = vmul.f32 %v6597, %v6853
        %v6982 = vmul.f32 %v6598, %v6854
        %v6983 = vmul.f32 %v6599, %v6855
        %v6984 = vmul.f32 %v6600, %v6856
        %v6985 = vmul.f32 %v6601, %v6857
        %v6986 = vmul.f32 %v6602, %v6858
        %v6987 = vmul.f32 %v6603, %v6859
        %v6988 = vmul.f32 %v6604, %v6860
        %v6989 = vmul.f32 %v6605, %v6861
        %v6990 = vmul.f32 %v6606, %v6862
        %v6991 = vmul.f32 %v6607, %v6863
        %v6992 = vmul.f32 %v6608, %v6864
        %v6993 = vmul.f32 %v6609, %v6865
        %v6994 = vmul.f32 %v6610, %v6866
        %v6995 = vmul.f32 %v6611, %v6867
        %v6996 = vmul.f32 %v6612, %v6868
        %v6997 = vmul.f32 %v6613, %v6869
        %v6998 = vmul.f32 %v6614, %v6870
        %v6999 = vmul.f32 %v6615, %v6871
        %v7000 = vmul.f32 %v6616, %v6872
        %v7001 = vmul.f32 %v6617, %v6873
        %v7002 = vmul.f32 %v6618, %v6874
        %v7003 = vmul.f32 %v6619, %v6875
        %v7004 = vmul.f32 %v6620, %v6876
        %v7005 = vmul.f32 %v6621, %v6877
        %v7006 = vmul.f32 %v6622, %v6878
        %v7007 = vmul.f32 %v6623, %v6879
        %v7008 = vmul.f32 %v6624, %v6880
        %v7009 = vmul.f32 %v6625, %v6881
        %v7010 = vmul.f32 %v6626, %v6882
        %v7011 = vmul.f32 %v6627, %v6883
        %v7012 = vmul.f32 %v6628, %v6884
        %v7013 = vmul.f32 %v6629, %v6885
        %v7014 = vmul.f32 %v6630, %v6886
        %v7015 = vmul.f32 %v6631, %v6887
        %v7016 = vmul.f32 %v6632, %v6888
        %v7017 = vmul.f32 %v6633, %v6889
        %v7018 = vmul.f32 %v6634, %v6890
        %v7019 = vmul.f32 %v6635, %v6891
        %v7020 = vmul.f32 %v6636, %v6892
        %v7021 = vmul.f32 %v6637, %v6893
        %v7022 = vmul.f32 %v6638, %v6894
        %v7023 = vmul.f32 %v6639, %v6895
        %v7024 = vmul.f32 %v6640, %v6896
        %v7025 = vmul.f32 %v6641, %v6897
        %v7026 = vmul.f32 %v6642, %v6898
        %v7027 = vmul.f32 %v6643, %v6899
        %v7028 = vmul.f32 %v6644, %v6900
        %v7029 = vmul.f32 %v6645, %v6901
        %v7030 = vmul.f32 %v6646, %v6902
        %v7031 = vmul.f32 %v6647, %v6903
        %v7032 = vmul.f32 %v6648, %v6904
        %v7033 = vmul.f32 %v6649, %v6905
        %v7034 = vmul.f32 %v6650, %v6906
        %v7035 = vmul.f32 %v6651, %v6907
        %v7036 = vmul.f32 %v6652, %v6908
        %v7037 = vmul.f32 %v6653, %v6909
        %v7038 = vmul.f32 %v6654, %v6910
        %v7039 = vmul.f32 %v6655, %v6911
        %v7040 = vmul.f32 %v6656, %v6912
        %v7041 = vmul.f32 %v6657, %v6913
        %v7042 = vmul.f32 %v6658, %v6914
        %v7043 = vmul.f32 %v6659, %v6915
        %v7044 = vmul.f32 %v6660, %v6916
        %v7045 = vmul.f32 %v6661, %v6917
        %v7046 = vmul.f32 %v6662, %v6918
        %v7047 = vmul.f32 %v6663, %v6919
        %v7048 = vmul.f32 %v6664, %v6920
        %v7049 = vmul.f32 %v6665, %v6921
        %v7050 = vmul.f32 %v6666, %v6922
        %v7051 = vmul.f32 %v6667, %v6923
        %v7052 = vmul.f32 %v6668, %v6924
        %v7053 = vmul.f32 %v6669, %v6925
        %v7054 = vmul.f32 %v6670, %v6926
        %v7055 = vmul.f32 %v6671, %v6927
        %v7056 = vmul.f32 %v6672, %v6928
        %v7057 = vmul.f32 %v6673, %v6929
        %v7058 = vmul.f32 %v6674, %v6930
        %v7059 = vmul.f32 %v6675, %v6931
        %v7060 = vmul.f32 %v6676, %v6932
        %v7061 = vmul.f32 %v6677, %v6933
        %v7062 = vmul.f32 %v6678, %v6934
        %v7063 = vmul.f32 %v6679, %v6935
        %v7064 = vmul.f32 %v6680, %v6936
        %v7065 = vmul.f32 %v6681, %v6937
        %v7066 = vmul.f32 %v6682, %v6938
        %v7067 = vmul.f32 %v6683, %v6939
        %v7068 = vmul.f32 %v6684, %v6940
        %v7069 = vmul.f32 %v6685, %v6941
        %v7070 = vmul.f32 %v6686, %v6942
        %v7071 = vmul.f32 %v6687, %v6943
        %v7072 = vmul.f32 %v6688, %v6944
        %v7073 = vmul.f32 %v6689, %v6945
        %v7074 = vmul.f32 %v6690, %v6946
        %v7075 = vmul.f32 %v6691, %v6947
        %v7076 = vmul.f32 %v6692, %v6948
        %v7077 = vmul.f32 %v6693, %v6949
        %v7078 = vmul.f32 %v6694, %v6950
        %v7079 = vmul.f32 %v6695, %v6951
        %v7080 = vmul.f32 %v6696, %v6952
        %v7081 = vmul.f32 %v6697, %v6953
        %v7082 = vmul.f32 %v6698, %v6954
        %v7083 = vld [vmem:[%s626] sm:$0x1]
        %v7085 = vlaneseq
        %v7086 = vshrl.u32 %v7085, 7
        %v7087 = vsub.s32 0, %v7086
        %v7088 = vrot.slane %v7083, %v7087
        %v7090 = vmul.f32 %v6955, %v7088
        %v7091 = vmul.f32 %v6956, %v7088
        %v7092 = vmul.f32 %v6957, %v7088
        %v7093 = vmul.f32 %v6958, %v7088
        %v7094 = vmul.f32 %v6959, %v7088
        %v7095 = vmul.f32 %v6960, %v7088
        %v7096 = vmul.f32 %v6961, %v7088
        %v7097 = vmul.f32 %v6962, %v7088
        %v7098 = vmul.f32 %v6963, %v7088
        %v7099 = vmul.f32 %v6964, %v7088
        %v7100 = vmul.f32 %v6965, %v7088
        %v7101 = vmul.f32 %v6966, %v7088
        %v7102 = vmul.f32 %v6967, %v7088
        %v7103 = vmul.f32 %v6968, %v7088
        %v7104 = vmul.f32 %v6969, %v7088
        %v7105 = vmul.f32 %v6970, %v7088
        %v7106 = vmul.f32 %v6971, %v7088
        %v7107 = vmul.f32 %v6972, %v7088
        %v7108 = vmul.f32 %v6973, %v7088
        %v7109 = vmul.f32 %v6974, %v7088
        %v7110 = vmul.f32 %v6975, %v7088
        %v7111 = vmul.f32 %v6976, %v7088
        %v7112 = vmul.f32 %v6977, %v7088
        %v7113 = vmul.f32 %v6978, %v7088
        %v7114 = vmul.f32 %v6979, %v7088
        %v7115 = vmul.f32 %v6980, %v7088
        %v7116 = vmul.f32 %v6981, %v7088
        %v7117 = vmul.f32 %v6982, %v7088
        %v7118 = vmul.f32 %v6983, %v7088
        %v7119 = vmul.f32 %v6984, %v7088
        %v7120 = vmul.f32 %v6985, %v7088
        %v7121 = vmul.f32 %v6986, %v7088
        %v7122 = vmul.f32 %v6987, %v7088
        %v7123 = vmul.f32 %v6988, %v7088
        %v7124 = vmul.f32 %v6989, %v7088
        %v7125 = vmul.f32 %v6990, %v7088
        %v7126 = vmul.f32 %v6991, %v7088
        %v7127 = vmul.f32 %v6992, %v7088
        %v7128 = vmul.f32 %v6993, %v7088
        %v7129 = vmul.f32 %v6994, %v7088
        %v7130 = vmul.f32 %v6995, %v7088
        %v7131 = vmul.f32 %v6996, %v7088
        %v7132 = vmul.f32 %v6997, %v7088
        %v7133 = vmul.f32 %v6998, %v7088
        %v7134 = vmul.f32 %v6999, %v7088
        %v7135 = vmul.f32 %v7000, %v7088
        %v7136 = vmul.f32 %v7001, %v7088
        %v7137 = vmul.f32 %v7002, %v7088
        %v7138 = vmul.f32 %v7003, %v7088
        %v7139 = vmul.f32 %v7004, %v7088
        %v7140 = vmul.f32 %v7005, %v7088
        %v7141 = vmul.f32 %v7006, %v7088
        %v7142 = vmul.f32 %v7007, %v7088
        %v7143 = vmul.f32 %v7008, %v7088
        %v7144 = vmul.f32 %v7009, %v7088
        %v7145 = vmul.f32 %v7010, %v7088
        %v7146 = vmul.f32 %v7011, %v7088
        %v7147 = vmul.f32 %v7012, %v7088
        %v7148 = vmul.f32 %v7013, %v7088
        %v7149 = vmul.f32 %v7014, %v7088
        %v7150 = vmul.f32 %v7015, %v7088
        %v7151 = vmul.f32 %v7016, %v7088
        %v7152 = vmul.f32 %v7017, %v7088
        %v7153 = vmul.f32 %v7018, %v7088
        %v7154 = vmul.f32 %v7019, %v7088
        %v7155 = vmul.f32 %v7020, %v7088
        %v7156 = vmul.f32 %v7021, %v7088
        %v7157 = vmul.f32 %v7022, %v7088
        %v7158 = vmul.f32 %v7023, %v7088
        %v7159 = vmul.f32 %v7024, %v7088
        %v7160 = vmul.f32 %v7025, %v7088
        %v7161 = vmul.f32 %v7026, %v7088
        %v7162 = vmul.f32 %v7027, %v7088
        %v7163 = vmul.f32 %v7028, %v7088
        %v7164 = vmul.f32 %v7029, %v7088
        %v7165 = vmul.f32 %v7030, %v7088
        %v7166 = vmul.f32 %v7031, %v7088
        %v7167 = vmul.f32 %v7032, %v7088
        %v7168 = vmul.f32 %v7033, %v7088
        %v7169 = vmul.f32 %v7034, %v7088
        %v7170 = vmul.f32 %v7035, %v7088
        %v7171 = vmul.f32 %v7036, %v7088
        %v7172 = vmul.f32 %v7037, %v7088
        %v7173 = vmul.f32 %v7038, %v7088
        %v7174 = vmul.f32 %v7039, %v7088
        %v7175 = vmul.f32 %v7040, %v7088
        %v7176 = vmul.f32 %v7041, %v7088
        %v7177 = vmul.f32 %v7042, %v7088
        %v7178 = vmul.f32 %v7043, %v7088
        %v7179 = vmul.f32 %v7044, %v7088
        %v7180 = vmul.f32 %v7045, %v7088
        %v7181 = vmul.f32 %v7046, %v7088
        %v7182 = vmul.f32 %v7047, %v7088
        %v7183 = vmul.f32 %v7048, %v7088
        %v7184 = vmul.f32 %v7049, %v7088
        %v7185 = vmul.f32 %v7050, %v7088
        %v7186 = vmul.f32 %v7051, %v7088
        %v7187 = vmul.f32 %v7052, %v7088
        %v7188 = vmul.f32 %v7053, %v7088
        %v7189 = vmul.f32 %v7054, %v7088
        %v7190 = vmul.f32 %v7055, %v7088
        %v7191 = vmul.f32 %v7056, %v7088
        %v7192 = vmul.f32 %v7057, %v7088
        %v7193 = vmul.f32 %v7058, %v7088
        %v7194 = vmul.f32 %v7059, %v7088
        %v7195 = vmul.f32 %v7060, %v7088
        %v7196 = vmul.f32 %v7061, %v7088
        %v7197 = vmul.f32 %v7062, %v7088
        %v7198 = vmul.f32 %v7063, %v7088
        %v7199 = vmul.f32 %v7064, %v7088
        %v7200 = vmul.f32 %v7065, %v7088
        %v7201 = vmul.f32 %v7066, %v7088
        %v7202 = vmul.f32 %v7067, %v7088
        %v7203 = vmul.f32 %v7068, %v7088
        %v7204 = vmul.f32 %v7069, %v7088
        %v7205 = vmul.f32 %v7070, %v7088
        %v7206 = vmul.f32 %v7071, %v7088
        %v7207 = vmul.f32 %v7072, %v7088
        %v7208 = vmul.f32 %v7073, %v7088
        %v7209 = vmul.f32 %v7074, %v7088
        %v7210 = vmul.f32 %v7075, %v7088
        %v7211 = vmul.f32 %v7076, %v7088
        %v7212 = vmul.f32 %v7077, %v7088
        %v7213 = vmul.f32 %v7078, %v7088
        %v7214 = vmul.f32 %v7079, %v7088
        %v7215 = vmul.f32 %v7080, %v7088
        %v7216 = vmul.f32 %v7081, %v7088
        %v7217 = vmul.f32 %v7082, %v7088
        %v7218 = vld [vmem:[%s629] sm:$0x1]
        %v7220 = vlaneseq
        %v7221 = vshrl.u32 %v7220, 7
        %v7222 = vsub.s32 0, %v7221
        %v7223 = vrot.slane %v7218, %v7222
        %v7225 = vadd.f32 %v7090, %v7223
        %v7226 = vadd.f32 %v7091, %v7223
        %v7227 = vadd.f32 %v7092, %v7223
        %v7228 = vadd.f32 %v7093, %v7223
        %v7229 = vadd.f32 %v7094, %v7223
        %v7230 = vadd.f32 %v7095, %v7223
        %v7231 = vadd.f32 %v7096, %v7223
        %v7232 = vadd.f32 %v7097, %v7223
        %v7233 = vadd.f32 %v7098, %v7223
        %v7234 = vadd.f32 %v7099, %v7223
        %v7235 = vadd.f32 %v7100, %v7223
        %v7236 = vadd.f32 %v7101, %v7223
        %v7237 = vadd.f32 %v7102, %v7223
        %v7238 = vadd.f32 %v7103, %v7223
        %v7239 = vadd.f32 %v7104, %v7223
        %v7240 = vadd.f32 %v7105, %v7223
        %v7241 = vadd.f32 %v7106, %v7223
        %v7242 = vadd.f32 %v7107, %v7223
        %v7243 = vadd.f32 %v7108, %v7223
        %v7244 = vadd.f32 %v7109, %v7223
        %v7245 = vadd.f32 %v7110, %v7223
        %v7246 = vadd.f32 %v7111, %v7223
        %v7247 = vadd.f32 %v7112, %v7223
        %v7248 = vadd.f32 %v7113, %v7223
        %v7249 = vadd.f32 %v7114, %v7223
        %v7250 = vadd.f32 %v7115, %v7223
        %v7251 = vadd.f32 %v7116, %v7223
        %v7252 = vadd.f32 %v7117, %v7223
        %v7253 = vadd.f32 %v7118, %v7223
        %v7254 = vadd.f32 %v7119, %v7223
        %v7255 = vadd.f32 %v7120, %v7223
        %v7256 = vadd.f32 %v7121, %v7223
        %v7257 = vadd.f32 %v7122, %v7223
        %v7258 = vadd.f32 %v7123, %v7223
        %v7259 = vadd.f32 %v7124, %v7223
        %v7260 = vadd.f32 %v7125, %v7223
        %v7261 = vadd.f32 %v7126, %v7223
        %v7262 = vadd.f32 %v7127, %v7223
        %v7263 = vadd.f32 %v7128, %v7223
        %v7264 = vadd.f32 %v7129, %v7223
        %v7265 = vadd.f32 %v7130, %v7223
        %v7266 = vadd.f32 %v7131, %v7223
        %v7267 = vadd.f32 %v7132, %v7223
        %v7268 = vadd.f32 %v7133, %v7223
        %v7269 = vadd.f32 %v7134, %v7223
        %v7270 = vadd.f32 %v7135, %v7223
        %v7271 = vadd.f32 %v7136, %v7223
        %v7272 = vadd.f32 %v7137, %v7223
        %v7273 = vadd.f32 %v7138, %v7223
        %v7274 = vadd.f32 %v7139, %v7223
        %v7275 = vadd.f32 %v7140, %v7223
        %v7276 = vadd.f32 %v7141, %v7223
        %v7277 = vadd.f32 %v7142, %v7223
        %v7278 = vadd.f32 %v7143, %v7223
        %v7279 = vadd.f32 %v7144, %v7223
        %v7280 = vadd.f32 %v7145, %v7223
        %v7281 = vadd.f32 %v7146, %v7223
        %v7282 = vadd.f32 %v7147, %v7223
        %v7283 = vadd.f32 %v7148, %v7223
        %v7284 = vadd.f32 %v7149, %v7223
        %v7285 = vadd.f32 %v7150, %v7223
        %v7286 = vadd.f32 %v7151, %v7223
        %v7287 = vadd.f32 %v7152, %v7223
        %v7288 = vadd.f32 %v7153, %v7223
        %v7289 = vadd.f32 %v7154, %v7223
        %v7290 = vadd.f32 %v7155, %v7223
        %v7291 = vadd.f32 %v7156, %v7223
        %v7292 = vadd.f32 %v7157, %v7223
        %v7293 = vadd.f32 %v7158, %v7223
        %v7294 = vadd.f32 %v7159, %v7223
        %v7295 = vadd.f32 %v7160, %v7223
        %v7296 = vadd.f32 %v7161, %v7223
        %v7297 = vadd.f32 %v7162, %v7223
        %v7298 = vadd.f32 %v7163, %v7223
        %v7299 = vadd.f32 %v7164, %v7223
        %v7300 = vadd.f32 %v7165, %v7223
        %v7301 = vadd.f32 %v7166, %v7223
        %v7302 = vadd.f32 %v7167, %v7223
        %v7303 = vadd.f32 %v7168, %v7223
        %v7304 = vadd.f32 %v7169, %v7223
        %v7305 = vadd.f32 %v7170, %v7223
        %v7306 = vadd.f32 %v7171, %v7223
        %v7307 = vadd.f32 %v7172, %v7223
        %v7308 = vadd.f32 %v7173, %v7223
        %v7309 = vadd.f32 %v7174, %v7223
        %v7310 = vadd.f32 %v7175, %v7223
        %v7311 = vadd.f32 %v7176, %v7223
        %v7312 = vadd.f32 %v7177, %v7223
        %v7313 = vadd.f32 %v7178, %v7223
        %v7314 = vadd.f32 %v7179, %v7223
        %v7315 = vadd.f32 %v7180, %v7223
        %v7316 = vadd.f32 %v7181, %v7223
        %v7317 = vadd.f32 %v7182, %v7223
        %v7318 = vadd.f32 %v7183, %v7223
        %v7319 = vadd.f32 %v7184, %v7223
        %v7320 = vadd.f32 %v7185, %v7223
        %v7321 = vadd.f32 %v7186, %v7223
        %v7322 = vadd.f32 %v7187, %v7223
        %v7323 = vadd.f32 %v7188, %v7223
        %v7324 = vadd.f32 %v7189, %v7223
        %v7325 = vadd.f32 %v7190, %v7223
        %v7326 = vadd.f32 %v7191, %v7223
        %v7327 = vadd.f32 %v7192, %v7223
        %v7328 = vadd.f32 %v7193, %v7223
        %v7329 = vadd.f32 %v7194, %v7223
        %v7330 = vadd.f32 %v7195, %v7223
        %v7331 = vadd.f32 %v7196, %v7223
        %v7332 = vadd.f32 %v7197, %v7223
        %v7333 = vadd.f32 %v7198, %v7223
        %v7334 = vadd.f32 %v7199, %v7223
        %v7335 = vadd.f32 %v7200, %v7223
        %v7336 = vadd.f32 %v7201, %v7223
        %v7337 = vadd.f32 %v7202, %v7223
        %v7338 = vadd.f32 %v7203, %v7223
        %v7339 = vadd.f32 %v7204, %v7223
        %v7340 = vadd.f32 %v7205, %v7223
        %v7341 = vadd.f32 %v7206, %v7223
        %v7342 = vadd.f32 %v7207, %v7223
        %v7343 = vadd.f32 %v7208, %v7223
        %v7344 = vadd.f32 %v7209, %v7223
        %v7345 = vadd.f32 %v7210, %v7223
        %v7346 = vadd.f32 %v7211, %v7223
        %v7347 = vadd.f32 %v7212, %v7223
        %v7348 = vadd.f32 %v7213, %v7223
        %v7349 = vadd.f32 %v7214, %v7223
        %v7350 = vadd.f32 %v7215, %v7223
        %v7351 = vadd.f32 %v7216, %v7223
        %v7352 = vadd.f32 %v7217, %v7223
        %v7353 = vpack.c.bf16 %v7226, %v7225
        %v7354 = vpack.c.bf16 %v7228, %v7227
        %v7355 = vpack.c.bf16 %v7230, %v7229
        %v7356 = vpack.c.bf16 %v7232, %v7231
        %v7357 = vpack.c.bf16 %v7234, %v7233
        %v7358 = vpack.c.bf16 %v7236, %v7235
        %v7359 = vpack.c.bf16 %v7238, %v7237
        %v7360 = vpack.c.bf16 %v7240, %v7239
        %v7361 = vpack.c.bf16 %v7242, %v7241
        %v7362 = vpack.c.bf16 %v7244, %v7243
        %v7363 = vpack.c.bf16 %v7246, %v7245
        %v7364 = vpack.c.bf16 %v7248, %v7247
        %v7365 = vpack.c.bf16 %v7250, %v7249
        %v7366 = vpack.c.bf16 %v7252, %v7251
        %v7367 = vpack.c.bf16 %v7254, %v7253
        %v7368 = vpack.c.bf16 %v7256, %v7255
        %v7369 = vpack.c.bf16 %v7258, %v7257
        %v7370 = vpack.c.bf16 %v7260, %v7259
        %v7371 = vpack.c.bf16 %v7262, %v7261
        %v7372 = vpack.c.bf16 %v7264, %v7263
        %v7373 = vpack.c.bf16 %v7266, %v7265
        %v7374 = vpack.c.bf16 %v7268, %v7267
        %v7375 = vpack.c.bf16 %v7270, %v7269
        %v7376 = vpack.c.bf16 %v7272, %v7271
        %v7377 = vpack.c.bf16 %v7274, %v7273
        %v7378 = vpack.c.bf16 %v7276, %v7275
        %v7379 = vpack.c.bf16 %v7278, %v7277
        %v7380 = vpack.c.bf16 %v7280, %v7279
        %v7381 = vpack.c.bf16 %v7282, %v7281
        %v7382 = vpack.c.bf16 %v7284, %v7283
        %v7383 = vpack.c.bf16 %v7286, %v7285
        %v7384 = vpack.c.bf16 %v7288, %v7287
        %v7385 = vpack.c.bf16 %v7290, %v7289
        %v7386 = vpack.c.bf16 %v7292, %v7291
        %v7387 = vpack.c.bf16 %v7294, %v7293
        %v7388 = vpack.c.bf16 %v7296, %v7295
        %v7389 = vpack.c.bf16 %v7298, %v7297
        %v7390 = vpack.c.bf16 %v7300, %v7299
        %v7391 = vpack.c.bf16 %v7302, %v7301
        %v7392 = vpack.c.bf16 %v7304, %v7303
        %v7393 = vpack.c.bf16 %v7306, %v7305
        %v7394 = vpack.c.bf16 %v7308, %v7307
        %v7395 = vpack.c.bf16 %v7310, %v7309
        %v7396 = vpack.c.bf16 %v7312, %v7311
        %v7397 = vpack.c.bf16 %v7314, %v7313
        %v7398 = vpack.c.bf16 %v7316, %v7315
        %v7399 = vpack.c.bf16 %v7318, %v7317
        %v7400 = vpack.c.bf16 %v7320, %v7319
        %v7401 = vpack.c.bf16 %v7322, %v7321
        %v7402 = vpack.c.bf16 %v7324, %v7323
        %v7403 = vpack.c.bf16 %v7326, %v7325
        %v7404 = vpack.c.bf16 %v7328, %v7327
        %v7405 = vpack.c.bf16 %v7330, %v7329
        %v7406 = vpack.c.bf16 %v7332, %v7331
        %v7407 = vpack.c.bf16 %v7334, %v7333
        %v7408 = vpack.c.bf16 %v7336, %v7335
        %v7409 = vpack.c.bf16 %v7338, %v7337
        %v7410 = vpack.c.bf16 %v7340, %v7339
        %v7411 = vpack.c.bf16 %v7342, %v7341
        %v7412 = vpack.c.bf16 %v7344, %v7343
        %v7413 = vpack.c.bf16 %v7346, %v7345
        %v7414 = vpack.c.bf16 %v7348, %v7347
        %v7415 = vpack.c.bf16 %v7350, %v7349
        %v7416 = vpack.c.bf16 %v7352, %v7351
        %v7481 = vunpack.c.l.b16 %v7353
        %v7482 = vunpack.c.h.b16 %v7353
        %v7483 = vunpack.c.l.b16 %v7354
        %v7484 = vunpack.c.h.b16 %v7354
        %v7485 = vunpack.c.l.b16 %v7355
        %v7486 = vunpack.c.h.b16 %v7355
        %v7487 = vunpack.c.l.b16 %v7356
        %v7488 = vunpack.c.h.b16 %v7356
        %v7489 = vunpack.c.l.b16 %v7357
        %v7490 = vunpack.c.h.b16 %v7357
        %v7491 = vunpack.c.l.b16 %v7358
        %v7492 = vunpack.c.h.b16 %v7358
        %v7493 = vunpack.c.l.b16 %v7359
        %v7494 = vunpack.c.h.b16 %v7359
        %v7495 = vunpack.c.l.b16 %v7360
        %v7496 = vunpack.c.h.b16 %v7360
        %v7497 = vunpack.c.l.b16 %v7361
        %v7498 = vunpack.c.h.b16 %v7361
        %v7499 = vunpack.c.l.b16 %v7362
        %v7500 = vunpack.c.h.b16 %v7362
        %v7501 = vunpack.c.l.b16 %v7363
        %v7502 = vunpack.c.h.b16 %v7363
        %v7503 = vunpack.c.l.b16 %v7364
        %v7504 = vunpack.c.h.b16 %v7364
        %v7505 = vunpack.c.l.b16 %v7365
        %v7506 = vunpack.c.h.b16 %v7365
        %v7507 = vunpack.c.l.b16 %v7366
        %v7508 = vunpack.c.h.b16 %v7366
        %v7509 = vunpack.c.l.b16 %v7367
        %v7510 = vunpack.c.h.b16 %v7367
        %v7511 = vunpack.c.l.b16 %v7368
        %v7512 = vunpack.c.h.b16 %v7368
        %v7513 = vunpack.c.l.b16 %v7369
        %v7514 = vunpack.c.h.b16 %v7369
        %v7515 = vunpack.c.l.b16 %v7370
        %v7516 = vunpack.c.h.b16 %v7370
        %v7517 = vunpack.c.l.b16 %v7371
        %v7518 = vunpack.c.h.b16 %v7371
        %v7519 = vunpack.c.l.b16 %v7372
        %v7520 = vunpack.c.h.b16 %v7372
        %v7521 = vunpack.c.l.b16 %v7373
        %v7522 = vunpack.c.h.b16 %v7373
        %v7523 = vunpack.c.l.b16 %v7374
        %v7524 = vunpack.c.h.b16 %v7374
        %v7525 = vunpack.c.l.b16 %v7375
        %v7526 = vunpack.c.h.b16 %v7375
        %v7527 = vunpack.c.l.b16 %v7376
        %v7528 = vunpack.c.h.b16 %v7376
        %v7529 = vunpack.c.l.b16 %v7377
        %v7530 = vunpack.c.h.b16 %v7377
        %v7531 = vunpack.c.l.b16 %v7378
        %v7532 = vunpack.c.h.b16 %v7378
        %v7533 = vunpack.c.l.b16 %v7379
        %v7534 = vunpack.c.h.b16 %v7379
        %v7535 = vunpack.c.l.b16 %v7380
        %v7536 = vunpack.c.h.b16 %v7380
        %v7537 = vunpack.c.l.b16 %v7381
        %v7538 = vunpack.c.h.b16 %v7381
        %v7539 = vunpack.c.l.b16 %v7382
        %v7540 = vunpack.c.h.b16 %v7382
        %v7541 = vunpack.c.l.b16 %v7383
        %v7542 = vunpack.c.h.b16 %v7383
        %v7543 = vunpack.c.l.b16 %v7384
        %v7544 = vunpack.c.h.b16 %v7384
        %v7545 = vunpack.c.l.b16 %v7385
        %v7546 = vunpack.c.h.b16 %v7385
        %v7547 = vunpack.c.l.b16 %v7386
        %v7548 = vunpack.c.h.b16 %v7386
        %v7549 = vunpack.c.l.b16 %v7387
        %v7550 = vunpack.c.h.b16 %v7387
        %v7551 = vunpack.c.l.b16 %v7388
        %v7552 = vunpack.c.h.b16 %v7388
        %v7553 = vunpack.c.l.b16 %v7389
        %v7554 = vunpack.c.h.b16 %v7389
        %v7555 = vunpack.c.l.b16 %v7390
        %v7556 = vunpack.c.h.b16 %v7390
        %v7557 = vunpack.c.l.b16 %v7391
        %v7558 = vunpack.c.h.b16 %v7391
        %v7559 = vunpack.c.l.b16 %v7392
        %v7560 = vunpack.c.h.b16 %v7392
        %v7561 = vunpack.c.l.b16 %v7393
        %v7562 = vunpack.c.h.b16 %v7393
        %v7563 = vunpack.c.l.b16 %v7394
        %v7564 = vunpack.c.h.b16 %v7394
        %v7565 = vunpack.c.l.b16 %v7395
        %v7566 = vunpack.c.h.b16 %v7395
        %v7567 = vunpack.c.l.b16 %v7396
        %v7568 = vunpack.c.h.b16 %v7396
        %v7569 = vunpack.c.l.b16 %v7397
        %v7570 = vunpack.c.h.b16 %v7397
        %v7571 = vunpack.c.l.b16 %v7398
        %v7572 = vunpack.c.h.b16 %v7398
        %v7573 = vunpack.c.l.b16 %v7399
        %v7574 = vunpack.c.h.b16 %v7399
        %v7575 = vunpack.c.l.b16 %v7400
        %v7576 = vunpack.c.h.b16 %v7400
        %v7577 = vunpack.c.l.b16 %v7401
        %v7578 = vunpack.c.h.b16 %v7401
        %v7579 = vunpack.c.l.b16 %v7402
        %v7580 = vunpack.c.h.b16 %v7402
        %v7581 = vunpack.c.l.b16 %v7403
        %v7582 = vunpack.c.h.b16 %v7403
        %v7583 = vunpack.c.l.b16 %v7404
        %v7584 = vunpack.c.h.b16 %v7404
        %v7585 = vunpack.c.l.b16 %v7405
        %v7586 = vunpack.c.h.b16 %v7405
        %v7587 = vunpack.c.l.b16 %v7406
        %v7588 = vunpack.c.h.b16 %v7406
        %v7589 = vunpack.c.l.b16 %v7407
        %v7590 = vunpack.c.h.b16 %v7407
        %v7591 = vunpack.c.l.b16 %v7408
        %v7592 = vunpack.c.h.b16 %v7408
        %v7593 = vunpack.c.l.b16 %v7409
        %v7594 = vunpack.c.h.b16 %v7409
        %v7595 = vunpack.c.l.b16 %v7410
        %v7596 = vunpack.c.h.b16 %v7410
        %v7597 = vunpack.c.l.b16 %v7411
        %v7598 = vunpack.c.h.b16 %v7411
        %v7599 = vunpack.c.l.b16 %v7412
        %v7600 = vunpack.c.h.b16 %v7412
        %v7601 = vunpack.c.l.b16 %v7413
        %v7602 = vunpack.c.h.b16 %v7413
        %v7603 = vunpack.c.l.b16 %v7414
        %v7604 = vunpack.c.h.b16 %v7414
        %v7605 = vunpack.c.l.b16 %v7415
        %v7606 = vunpack.c.h.b16 %v7415
        %v7607 = vunpack.c.l.b16 %v7416
        %v7608 = vunpack.c.h.b16 %v7416
        %v7609 = vpack.c.b16 %v7481, %v7481
        %v7610 = vpack.c.b16 %v7482, %v7482
        %v7611 = vpack.c.b16 %v7483, %v7483
        %v7612 = vpack.c.b16 %v7484, %v7484
        %v7613 = vpack.c.b16 %v7485, %v7485
        %v7614 = vpack.c.b16 %v7486, %v7486
        %v7615 = vpack.c.b16 %v7487, %v7487
        %v7616 = vpack.c.b16 %v7488, %v7488
        %v7617 = vpack.c.b16 %v7489, %v7489
        %v7618 = vpack.c.b16 %v7490, %v7490
        %v7619 = vpack.c.b16 %v7491, %v7491
        %v7620 = vpack.c.b16 %v7492, %v7492
        %v7621 = vpack.c.b16 %v7493, %v7493
        %v7622 = vpack.c.b16 %v7494, %v7494
        %v7623 = vpack.c.b16 %v7495, %v7495
        %v7624 = vpack.c.b16 %v7496, %v7496
        %v7625 = vpack.c.b16 %v7497, %v7497
        %v7626 = vpack.c.b16 %v7498, %v7498
        %v7627 = vpack.c.b16 %v7499, %v7499
        %v7628 = vpack.c.b16 %v7500, %v7500
        %v7629 = vpack.c.b16 %v7501, %v7501
        %v7630 = vpack.c.b16 %v7502, %v7502
        %v7631 = vpack.c.b16 %v7503, %v7503
        %v7632 = vpack.c.b16 %v7504, %v7504
        %v7633 = vpack.c.b16 %v7505, %v7505
        %v7634 = vpack.c.b16 %v7506, %v7506
        %v7635 = vpack.c.b16 %v7507, %v7507
        %v7636 = vpack.c.b16 %v7508, %v7508
        %v7637 = vpack.c.b16 %v7509, %v7509
        %v7638 = vpack.c.b16 %v7510, %v7510
        %v7639 = vpack.c.b16 %v7511, %v7511
        %v7640 = vpack.c.b16 %v7512, %v7512
        %v7641 = vpack.c.b16 %v7513, %v7513
        %v7642 = vpack.c.b16 %v7514, %v7514
        %v7643 = vpack.c.b16 %v7515, %v7515
        %v7644 = vpack.c.b16 %v7516, %v7516
        %v7645 = vpack.c.b16 %v7517, %v7517
        %v7646 = vpack.c.b16 %v7518, %v7518
        %v7647 = vpack.c.b16 %v7519, %v7519
        %v7648 = vpack.c.b16 %v7520, %v7520
        %v7649 = vpack.c.b16 %v7521, %v7521
        %v7650 = vpack.c.b16 %v7522, %v7522
        %v7651 = vpack.c.b16 %v7523, %v7523
        %v7652 = vpack.c.b16 %v7524, %v7524
        %v7653 = vpack.c.b16 %v7525, %v7525
        %v7654 = vpack.c.b16 %v7526, %v7526
        %v7655 = vpack.c.b16 %v7527, %v7527
        %v7656 = vpack.c.b16 %v7528, %v7528
        %v7657 = vpack.c.b16 %v7529, %v7529
        %v7658 = vpack.c.b16 %v7530, %v7530
        %v7659 = vpack.c.b16 %v7531, %v7531
        %v7660 = vpack.c.b16 %v7532, %v7532
        %v7661 = vpack.c.b16 %v7533, %v7533
        %v7662 = vpack.c.b16 %v7534, %v7534
        %v7663 = vpack.c.b16 %v7535, %v7535
        %v7664 = vpack.c.b16 %v7536, %v7536
        %v7665 = vpack.c.b16 %v7537, %v7537
        %v7666 = vpack.c.b16 %v7538, %v7538
        %v7667 = vpack.c.b16 %v7539, %v7539
        %v7668 = vpack.c.b16 %v7540, %v7540
        %v7669 = vpack.c.b16 %v7541, %v7541
        %v7670 = vpack.c.b16 %v7542, %v7542
        %v7671 = vpack.c.b16 %v7543, %v7543
        %v7672 = vpack.c.b16 %v7544, %v7544
        %v7673 = vpack.c.b16 %v7545, %v7545
        %v7674 = vpack.c.b16 %v7546, %v7546
        %v7675 = vpack.c.b16 %v7547, %v7547
        %v7676 = vpack.c.b16 %v7548, %v7548
        %v7677 = vpack.c.b16 %v7549, %v7549
        %v7678 = vpack.c.b16 %v7550, %v7550
        %v7679 = vpack.c.b16 %v7551, %v7551
        %v7680 = vpack.c.b16 %v7552, %v7552
        %v7681 = vpack.c.b16 %v7553, %v7553
        %v7682 = vpack.c.b16 %v7554, %v7554
        %v7683 = vpack.c.b16 %v7555, %v7555
        %v7684 = vpack.c.b16 %v7556, %v7556
        %v7685 = vpack.c.b16 %v7557, %v7557
        %v7686 = vpack.c.b16 %v7558, %v7558
        %v7687 = vpack.c.b16 %v7559, %v7559
        %v7688 = vpack.c.b16 %v7560, %v7560
        %v7689 = vpack.c.b16 %v7561, %v7561
        %v7690 = vpack.c.b16 %v7562, %v7562
        %v7691 = vpack.c.b16 %v7563, %v7563
        %v7692 = vpack.c.b16 %v7564, %v7564
        %v7693 = vpack.c.b16 %v7565, %v7565
        %v7694 = vpack.c.b16 %v7566, %v7566
        %v7695 = vpack.c.b16 %v7567, %v7567
        %v7696 = vpack.c.b16 %v7568, %v7568
        %v7697 = vpack.c.b16 %v7569, %v7569
        %v7698 = vpack.c.b16 %v7570, %v7570
        %v7699 = vpack.c.b16 %v7571, %v7571
        %v7700 = vpack.c.b16 %v7572, %v7572
        %v7701 = vpack.c.b16 %v7573, %v7573
        %v7702 = vpack.c.b16 %v7574, %v7574
        %v7703 = vpack.c.b16 %v7575, %v7575
        %v7704 = vpack.c.b16 %v7576, %v7576
        %v7705 = vpack.c.b16 %v7577, %v7577
        %v7706 = vpack.c.b16 %v7578, %v7578
        %v7707 = vpack.c.b16 %v7579, %v7579
        %v7708 = vpack.c.b16 %v7580, %v7580
        %v7709 = vpack.c.b16 %v7581, %v7581
        %v7710 = vpack.c.b16 %v7582, %v7582
        %v7711 = vpack.c.b16 %v7583, %v7583
        %v7712 = vpack.c.b16 %v7584, %v7584
        %v7713 = vpack.c.b16 %v7585, %v7585
        %v7714 = vpack.c.b16 %v7586, %v7586
        %v7715 = vpack.c.b16 %v7587, %v7587
        %v7716 = vpack.c.b16 %v7588, %v7588
        %v7717 = vpack.c.b16 %v7589, %v7589
        %v7718 = vpack.c.b16 %v7590, %v7590
        %v7719 = vpack.c.b16 %v7591, %v7591
        %v7720 = vpack.c.b16 %v7592, %v7592
        %v7721 = vpack.c.b16 %v7593, %v7593
        %v7722 = vpack.c.b16 %v7594, %v7594
        %v7723 = vpack.c.b16 %v7595, %v7595
        %v7724 = vpack.c.b16 %v7596, %v7596
        %v7725 = vpack.c.b16 %v7597, %v7597
        %v7726 = vpack.c.b16 %v7598, %v7598
        %v7727 = vpack.c.b16 %v7599, %v7599
        %v7728 = vpack.c.b16 %v7600, %v7600
        %v7729 = vpack.c.b16 %v7601, %v7601
        %v7730 = vpack.c.b16 %v7602, %v7602
        %v7731 = vpack.c.b16 %v7603, %v7603
        %v7732 = vpack.c.b16 %v7604, %v7604
        %v7733 = vpack.c.b16 %v7605, %v7605
        %v7734 = vpack.c.b16 %v7606, %v7606
        %v7735 = vpack.c.b16 %v7607, %v7607
        %v7736 = vpack.c.b16 %v7608, %v7608
        %7865 = vst [vmem:[%s607] sm:$0xf] %v7609
        %7866 = vst [vmem:[%s607 + $0x4] sm:$0xf] %v7610
        %7867 = vst [vmem:[%s607 + $0x8] sm:$0xf] %v7611
        %7868 = vst [vmem:[%s607 + $0xc] sm:$0xf] %v7612
        %7869 = vst [vmem:[%s607 + $0x10] sm:$0xf] %v7613
        %7870 = vst [vmem:[%s607 + $0x14] sm:$0xf] %v7614
        %7871 = vst [vmem:[%s607 + $0x18] sm:$0xf] %v7615
        %7872 = vst [vmem:[%s607 + $0x1c] sm:$0xf] %v7616
        %7873 = vst [vmem:[%s607 + $0x20] sm:$0xf] %v7617
        %7874 = vst [vmem:[%s607 + $0x24] sm:$0xf] %v7618
        %7875 = vst [vmem:[%s607 + $0x28] sm:$0xf] %v7619
        %7876 = vst [vmem:[%s607 + $0x2c] sm:$0xf] %v7620
        %7877 = vst [vmem:[%s607 + $0x30] sm:$0xf] %v7621
        %7878 = vst [vmem:[%s607 + $0x34] sm:$0xf] %v7622
        %7879 = vst [vmem:[%s607 + $0x38] sm:$0xf] %v7623
        %7880 = vst [vmem:[%s607 + $0x3c] sm:$0xf] %v7624
        %7881 = vst [vmem:[%s607 + $0x40] sm:$0xf] %v7625
        %7882 = vst [vmem:[%s607 + $0x44] sm:$0xf] %v7626
        %7883 = vst [vmem:[%s607 + $0x48] sm:$0xf] %v7627
        %7884 = vst [vmem:[%s607 + $0x4c] sm:$0xf] %v7628
        %7885 = vst [vmem:[%s607 + $0x50] sm:$0xf] %v7629
        %7886 = vst [vmem:[%s607 + $0x54] sm:$0xf] %v7630
        %7887 = vst [vmem:[%s607 + $0x58] sm:$0xf] %v7631
        %7888 = vst [vmem:[%s607 + $0x5c] sm:$0xf] %v7632
        %7889 = vst [vmem:[%s607 + $0x60] sm:$0xf] %v7633
        %7890 = vst [vmem:[%s607 + $0x64] sm:$0xf] %v7634
        %7891 = vst [vmem:[%s607 + $0x68] sm:$0xf] %v7635
        %7892 = vst [vmem:[%s607 + $0x6c] sm:$0xf] %v7636
        %7893 = vst [vmem:[%s607 + $0x70] sm:$0xf] %v7637
        %7894 = vst [vmem:[%s607 + $0x74] sm:$0xf] %v7638
        %7895 = vst [vmem:[%s607 + $0x78] sm:$0xf] %v7639
        %7896 = vst [vmem:[%s607 + $0x7c] sm:$0xf] %v7640
        %7897 = vst [vmem:[%s607 + $0x80] sm:$0xf] %v7641
        %7898 = vst [vmem:[%s607 + $0x84] sm:$0xf] %v7642
        %7899 = vst [vmem:[%s607 + $0x88] sm:$0xf] %v7643
        %7900 = vst [vmem:[%s607 + $0x8c] sm:$0xf] %v7644
        %7901 = vst [vmem:[%s607 + $0x90] sm:$0xf] %v7645
        %7902 = vst [vmem:[%s607 + $0x94] sm:$0xf] %v7646
        %7903 = vst [vmem:[%s607 + $0x98] sm:$0xf] %v7647
        %7904 = vst [vmem:[%s607 + $0x9c] sm:$0xf] %v7648
        %7905 = vst [vmem:[%s607 + $0xa0] sm:$0xf] %v7649
        %7906 = vst [vmem:[%s607 + $0xa4] sm:$0xf] %v7650
        %7907 = vst [vmem:[%s607 + $0xa8] sm:$0xf] %v7651
        %7908 = vst [vmem:[%s607 + $0xac] sm:$0xf] %v7652
        %7909 = vst [vmem:[%s607 + $0xb0] sm:$0xf] %v7653
        %7910 = vst [vmem:[%s607 + $0xb4] sm:$0xf] %v7654
        %7911 = vst [vmem:[%s607 + $0xb8] sm:$0xf] %v7655
        %7912 = vst [vmem:[%s607 + $0xbc] sm:$0xf] %v7656
        %7913 = vst [vmem:[%s607 + $0xc0] sm:$0xf] %v7657
        %7914 = vst [vmem:[%s607 + $0xc4] sm:$0xf] %v7658
        %7915 = vst [vmem:[%s607 + $0xc8] sm:$0xf] %v7659
        %7916 = vst [vmem:[%s607 + $0xcc] sm:$0xf] %v7660
        %7917 = vst [vmem:[%s607 + $0xd0] sm:$0xf] %v7661
        %7918 = vst [vmem:[%s607 + $0xd4] sm:$0xf] %v7662
        %7919 = vst [vmem:[%s607 + $0xd8] sm:$0xf] %v7663
        %7920 = vst [vmem:[%s607 + $0xdc] sm:$0xf] %v7664
        %7921 = vst [vmem:[%s607 + $0xe0] sm:$0xf] %v7665
        %7922 = vst [vmem:[%s607 + $0xe4] sm:$0xf] %v7666
        %7923 = vst [vmem:[%s607 + $0xe8] sm:$0xf] %v7667
        %7924 = vst [vmem:[%s607 + $0xec] sm:$0xf] %v7668
        %7925 = vst [vmem:[%s607 + $0xf0] sm:$0xf] %v7669
        %7926 = vst [vmem:[%s607 + $0xf4] sm:$0xf] %v7670
        %7927 = vst [vmem:[%s607 + $0xf8] sm:$0xf] %v7671
        %7928 = vst [vmem:[%s607 + $0xfc] sm:$0xf] %v7672
        %7929 = vst [vmem:[%s607 + $0x100] sm:$0xf] %v7673
        %7930 = vst [vmem:[%s607 + $0x104] sm:$0xf] %v7674
        %7931 = vst [vmem:[%s607 + $0x108] sm:$0xf] %v7675
        %7932 = vst [vmem:[%s607 + $0x10c] sm:$0xf] %v7676
        %7933 = vst [vmem:[%s607 + $0x110] sm:$0xf] %v7677
        %7934 = vst [vmem:[%s607 + $0x114] sm:$0xf] %v7678
        %7935 = vst [vmem:[%s607 + $0x118] sm:$0xf] %v7679
        %7936 = vst [vmem:[%s607 + $0x11c] sm:$0xf] %v7680
        %7937 = vst [vmem:[%s607 + $0x120] sm:$0xf] %v7681
        %7938 = vst [vmem:[%s607 + $0x124] sm:$0xf] %v7682
        %7939 = vst [vmem:[%s607 + $0x128] sm:$0xf] %v7683
        %7940 = vst [vmem:[%s607 + $0x12c] sm:$0xf] %v7684
        %7941 = vst [vmem:[%s607 + $0x130] sm:$0xf] %v7685
        %7942 = vst [vmem:[%s607 + $0x134] sm:$0xf] %v7686
        %7943 = vst [vmem:[%s607 + $0x138] sm:$0xf] %v7687
        %7944 = vst [vmem:[%s607 + $0x13c] sm:$0xf] %v7688
        %7945 = vst [vmem:[%s607 + $0x140] sm:$0xf] %v7689
        %7946 = vst [vmem:[%s607 + $0x144] sm:$0xf] %v7690
        %7947 = vst [vmem:[%s607 + $0x148] sm:$0xf] %v7691
        %7948 = vst [vmem:[%s607 + $0x14c] sm:$0xf] %v7692
        %7949 = vst [vmem:[%s607 + $0x150] sm:$0xf] %v7693
        %7950 = vst [vmem:[%s607 + $0x154] sm:$0xf] %v7694
        %7951 = vst [vmem:[%s607 + $0x158] sm:$0xf] %v7695
        %7952 = vst [vmem:[%s607 + $0x15c] sm:$0xf] %v7696
        %7953 = vst [vmem:[%s607 + $0x160] sm:$0xf] %v7697
        %7954 = vst [vmem:[%s607 + $0x164] sm:$0xf] %v7698
        %7955 = vst [vmem:[%s607 + $0x168] sm:$0xf] %v7699
        %7956 = vst [vmem:[%s607 + $0x16c] sm:$0xf] %v7700
        %7957 = vst [vmem:[%s607 + $0x170] sm:$0xf] %v7701
        %7958 = vst [vmem:[%s607 + $0x174] sm:$0xf] %v7702
        %7959 = vst [vmem:[%s607 + $0x178] sm:$0xf] %v7703
        %7960 = vst [vmem:[%s607 + $0x17c] sm:$0xf] %v7704
        %7961 = vst [vmem:[%s607 + $0x180] sm:$0xf] %v7705
        %7962 = vst [vmem:[%s607 + $0x184] sm:$0xf] %v7706
        %7963 = vst [vmem:[%s607 + $0x188] sm:$0xf] %v7707
        %7964 = vst [vmem:[%s607 + $0x18c] sm:$0xf] %v7708
        %7965 = vst [vmem:[%s607 + $0x190] sm:$0xf] %v7709
        %7966 = vst [vmem:[%s607 + $0x194] sm:$0xf] %v7710
        %7967 = vst [vmem:[%s607 + $0x198] sm:$0xf] %v7711
        %7968 = vst [vmem:[%s607 + $0x19c] sm:$0xf] %v7712
        %7969 = vst [vmem:[%s607 + $0x1a0] sm:$0xf] %v7713
        %7970 = vst [vmem:[%s607 + $0x1a4] sm:$0xf] %v7714
        %7971 = vst [vmem:[%s607 + $0x1a8] sm:$0xf] %v7715
        %7972 = vst [vmem:[%s607 + $0x1ac] sm:$0xf] %v7716
        %7973 = vst [vmem:[%s607 + $0x1b0] sm:$0xf] %v7717
        %7974 = vst [vmem:[%s607 + $0x1b4] sm:$0xf] %v7718
        %7975 = vst [vmem:[%s607 + $0x1b8] sm:$0xf] %v7719
        %7976 = vst [vmem:[%s607 + $0x1bc] sm:$0xf] %v7720
        %7977 = vst [vmem:[%s607 + $0x1c0] sm:$0xf] %v7721
        %7978 = vst [vmem:[%s607 + $0x1c4] sm:$0xf] %v7722
        %7979 = vst [vmem:[%s607 + $0x1c8] sm:$0xf] %v7723
        %7980 = vst [vmem:[%s607 + $0x1cc] sm:$0xf] %v7724
        %7981 = vst [vmem:[%s607 + $0x1d0] sm:$0xf] %v7725
        %7982 = vst [vmem:[%s607 + $0x1d4] sm:$0xf] %v7726
        %7983 = vst [vmem:[%s607 + $0x1d8] sm:$0xf] %v7727
        %7984 = vst [vmem:[%s607 + $0x1dc] sm:$0xf] %v7728
        %7985 = vst [vmem:[%s607 + $0x1e0] sm:$0xf] %v7729
        %7986 = vst [vmem:[%s607 + $0x1e4] sm:$0xf] %v7730
        %7987 = vst [vmem:[%s607 + $0x1e8] sm:$0xf] %v7731
        %7988 = vst [vmem:[%s607 + $0x1ec] sm:$0xf] %v7732
        %7989 = vst [vmem:[%s607 + $0x1f0] sm:$0xf] %v7733
        %7990 = vst [vmem:[%s607 + $0x1f4] sm:$0xf] %v7734
        %7991 = vst [vmem:[%s607 + $0x1f8] sm:$0xf] %v7735
        %7992 = vst [vmem:[%s607 + $0x1fc] sm:$0xf] %v7736
        %v7993 = vadd.f32 %v7225, %v633
        %v7994 = vadd.f32 %v7226, %v634
        %v7995 = vadd.f32 %v7227, %v635
        %v7996 = vadd.f32 %v7228, %v636
        %v7997 = vadd.f32 %v7229, %v637
        %v7998 = vadd.f32 %v7230, %v638
        %v7999 = vadd.f32 %v7231, %v639
        %v8000 = vadd.f32 %v7232, %v640
        %v8001 = vadd.f32 %v7233, %v641
        %v8002 = vadd.f32 %v7234, %v642
        %v8003 = vadd.f32 %v7235, %v643
        %v8004 = vadd.f32 %v7236, %v644
        %v8005 = vadd.f32 %v7237, %v645
        %v8006 = vadd.f32 %v7238, %v646
        %v8007 = vadd.f32 %v7239, %v647
        %v8008 = vadd.f32 %v7240, %v648
        %v8009 = vadd.f32 %v7241, %v649
        %v8010 = vadd.f32 %v7242, %v650
        %v8011 = vadd.f32 %v7243, %v651
        %v8012 = vadd.f32 %v7244, %v652
        %v8013 = vadd.f32 %v7245, %v653
        %v8014 = vadd.f32 %v7246, %v654
        %v8015 = vadd.f32 %v7247, %v655
        %v8016 = vadd.f32 %v7248, %v656
        %v8017 = vadd.f32 %v7249, %v657
        %v8018 = vadd.f32 %v7250, %v658
        %v8019 = vadd.f32 %v7251, %v659
        %v8020 = vadd.f32 %v7252, %v660
        %v8021 = vadd.f32 %v7253, %v661
        %v8022 = vadd.f32 %v7254, %v662
        %v8023 = vadd.f32 %v7255, %v663
        %v8024 = vadd.f32 %v7256, %v664
        %v8025 = vadd.f32 %v7257, %v665
        %v8026 = vadd.f32 %v7258, %v666
        %v8027 = vadd.f32 %v7259, %v667
        %v8028 = vadd.f32 %v7260, %v668
        %v8029 = vadd.f32 %v7261, %v669
        %v8030 = vadd.f32 %v7262, %v670
        %v8031 = vadd.f32 %v7263, %v671
        %v8032 = vadd.f32 %v7264, %v672
        %v8033 = vadd.f32 %v7265, %v673
        %v8034 = vadd.f32 %v7266, %v674
        %v8035 = vadd.f32 %v7267, %v675
        %v8036 = vadd.f32 %v7268, %v676
        %v8037 = vadd.f32 %v7269, %v677
        %v8038 = vadd.f32 %v7270, %v678
        %v8039 = vadd.f32 %v7271, %v679
        %v8040 = vadd.f32 %v7272, %v680
        %v8041 = vadd.f32 %v7273, %v681
        %v8042 = vadd.f32 %v7274, %v682
        %v8043 = vadd.f32 %v7275, %v683
        %v8044 = vadd.f32 %v7276, %v684
        %v8045 = vadd.f32 %v7277, %v685
        %v8046 = vadd.f32 %v7278, %v686
        %v8047 = vadd.f32 %v7279, %v687
        %v8048 = vadd.f32 %v7280, %v688
        %v8049 = vadd.f32 %v7281, %v689
        %v8050 = vadd.f32 %v7282, %v690
        %v8051 = vadd.f32 %v7283, %v691
        %v8052 = vadd.f32 %v7284, %v692
        %v8053 = vadd.f32 %v7285, %v693
        %v8054 = vadd.f32 %v7286, %v694
        %v8055 = vadd.f32 %v7287, %v695
        %v8056 = vadd.f32 %v7288, %v696
        %v8057 = vadd.f32 %v7289, %v697
        %v8058 = vadd.f32 %v7290, %v698
        %v8059 = vadd.f32 %v7291, %v699
        %v8060 = vadd.f32 %v7292, %v700
        %v8061 = vadd.f32 %v7293, %v701
        %v8062 = vadd.f32 %v7294, %v702
        %v8063 = vadd.f32 %v7295, %v703
        %v8064 = vadd.f32 %v7296, %v704
        %v8065 = vadd.f32 %v7297, %v705
        %v8066 = vadd.f32 %v7298, %v706
        %v8067 = vadd.f32 %v7299, %v707
        %v8068 = vadd.f32 %v7300, %v708
        %v8069 = vadd.f32 %v7301, %v709
        %v8070 = vadd.f32 %v7302, %v710
        %v8071 = vadd.f32 %v7303, %v711
        %v8072 = vadd.f32 %v7304, %v712
        %v8073 = vadd.f32 %v7305, %v713
        %v8074 = vadd.f32 %v7306, %v714
        %v8075 = vadd.f32 %v7307, %v715
        %v8076 = vadd.f32 %v7308, %v716
        %v8077 = vadd.f32 %v7309, %v717
        %v8078 = vadd.f32 %v7310, %v718
        %v8079 = vadd.f32 %v7311, %v719
        %v8080 = vadd.f32 %v7312, %v720
        %v8081 = vadd.f32 %v7313, %v721
        %v8082 = vadd.f32 %v7314, %v722
        %v8083 = vadd.f32 %v7315, %v723
        %v8084 = vadd.f32 %v7316, %v724
        %v8085 = vadd.f32 %v7317, %v725
        %v8086 = vadd.f32 %v7318, %v726
        %v8087 = vadd.f32 %v7319, %v727
        %v8088 = vadd.f32 %v7320, %v728
        %v8089 = vadd.f32 %v7321, %v729
        %v8090 = vadd.f32 %v7322, %v730
        %v8091 = vadd.f32 %v7323, %v731
        %v8092 = vadd.f32 %v7324, %v732
        %v8093 = vadd.f32 %v7325, %v733
        %v8094 = vadd.f32 %v7326, %v734
        %v8095 = vadd.f32 %v7327, %v735
        %v8096 = vadd.f32 %v7328, %v736
        %v8097 = vadd.f32 %v7329, %v737
        %v8098 = vadd.f32 %v7330, %v738
        %v8099 = vadd.f32 %v7331, %v739
        %v8100 = vadd.f32 %v7332, %v740
        %v8101 = vadd.f32 %v7333, %v741
        %v8102 = vadd.f32 %v7334, %v742
        %v8103 = vadd.f32 %v7335, %v743
        %v8104 = vadd.f32 %v7336, %v744
        %v8105 = vadd.f32 %v7337, %v745
        %v8106 = vadd.f32 %v7338, %v746
        %v8107 = vadd.f32 %v7339, %v747
        %v8108 = vadd.f32 %v7340, %v748
        %v8109 = vadd.f32 %v7341, %v749
        %v8110 = vadd.f32 %v7342, %v750
        %v8111 = vadd.f32 %v7343, %v751
        %v8112 = vadd.f32 %v7344, %v752
        %v8113 = vadd.f32 %v7345, %v753
        %v8114 = vadd.f32 %v7346, %v754
        %v8115 = vadd.f32 %v7347, %v755
        %v8116 = vadd.f32 %v7348, %v756
        %v8117 = vadd.f32 %v7349, %v757
        %v8118 = vadd.f32 %v7350, %v758
        %v8119 = vadd.f32 %v7351, %v759
        %v8120 = vadd.f32 %v7352, %v760
        %8121 = vst [vmem:[%s614] sm:$0xff] %v7993
        %8122 = vst [vmem:[%s614 + $0x8] sm:$0xff] %v7994
        %8123 = vst [vmem:[%s614 + $0x10] sm:$0xff] %v7995
        %8124 = vst [vmem:[%s614 + $0x18] sm:$0xff] %v7996
        %8125 = vst [vmem:[%s614 + $0x20] sm:$0xff] %v7997
        %8126 = vst [vmem:[%s614 + $0x28] sm:$0xff] %v7998
        %8127 = vst [vmem:[%s614 + $0x30] sm:$0xff] %v7999
        %8128 = vst [vmem:[%s614 + $0x38] sm:$0xff] %v8000
        %8129 = vst [vmem:[%s614 + $0x40] sm:$0xff] %v8001
        %8130 = vst [vmem:[%s614 + $0x48] sm:$0xff] %v8002
        %8131 = vst [vmem:[%s614 + $0x50] sm:$0xff] %v8003
        %8132 = vst [vmem:[%s614 + $0x58] sm:$0xff] %v8004
        %8133 = vst [vmem:[%s614 + $0x60] sm:$0xff] %v8005
        %8134 = vst [vmem:[%s614 + $0x68] sm:$0xff] %v8006
        %8135 = vst [vmem:[%s614 + $0x70] sm:$0xff] %v8007
        %8136 = vst [vmem:[%s614 + $0x78] sm:$0xff] %v8008
        %8137 = vst [vmem:[%s614 + $0x80] sm:$0xff] %v8009
        %8138 = vst [vmem:[%s614 + $0x88] sm:$0xff] %v8010
        %8139 = vst [vmem:[%s614 + $0x90] sm:$0xff] %v8011
        %8140 = vst [vmem:[%s614 + $0x98] sm:$0xff] %v8012
        %8141 = vst [vmem:[%s614 + $0xa0] sm:$0xff] %v8013
        %8142 = vst [vmem:[%s614 + $0xa8] sm:$0xff] %v8014
        %8143 = vst [vmem:[%s614 + $0xb0] sm:$0xff] %v8015
        %8144 = vst [vmem:[%s614 + $0xb8] sm:$0xff] %v8016
        %8145 = vst [vmem:[%s614 + $0xc0] sm:$0xff] %v8017
        %8146 = vst [vmem:[%s614 + $0xc8] sm:$0xff] %v8018
        %8147 = vst [vmem:[%s614 + $0xd0] sm:$0xff] %v8019
        %8148 = vst [vmem:[%s614 + $0xd8] sm:$0xff] %v8020
        %8149 = vst [vmem:[%s614 + $0xe0] sm:$0xff] %v8021
        %8150 = vst [vmem:[%s614 + $0xe8] sm:$0xff] %v8022
        %8151 = vst [vmem:[%s614 + $0xf0] sm:$0xff] %v8023
        %8152 = vst [vmem:[%s614 + $0xf8] sm:$0xff] %v8024
        %8153 = vst [vmem:[%s614 + $0x100] sm:$0xff] %v8025
        %8154 = vst [vmem:[%s614 + $0x108] sm:$0xff] %v8026
        %8155 = vst [vmem:[%s614 + $0x110] sm:$0xff] %v8027
        %8156 = vst [vmem:[%s614 + $0x118] sm:$0xff] %v8028
        %8157 = vst [vmem:[%s614 + $0x120] sm:$0xff] %v8029
        %8158 = vst [vmem:[%s614 + $0x128] sm:$0xff] %v8030
        %8159 = vst [vmem:[%s614 + $0x130] sm:$0xff] %v8031
        %8160 = vst [vmem:[%s614 + $0x138] sm:$0xff] %v8032
        %8161 = vst [vmem:[%s614 + $0x140] sm:$0xff] %v8033
        %8162 = vst [vmem:[%s614 + $0x148] sm:$0xff] %v8034
        %8163 = vst [vmem:[%s614 + $0x150] sm:$0xff] %v8035
        %8164 = vst [vmem:[%s614 + $0x158] sm:$0xff] %v8036
        %8165 = vst [vmem:[%s614 + $0x160] sm:$0xff] %v8037
        %8166 = vst [vmem:[%s614 + $0x168] sm:$0xff] %v8038
        %8167 = vst [vmem:[%s614 + $0x170] sm:$0xff] %v8039
        %8168 = vst [vmem:[%s614 + $0x178] sm:$0xff] %v8040
        %8169 = vst [vmem:[%s614 + $0x180] sm:$0xff] %v8041
        %8170 = vst [vmem:[%s614 + $0x188] sm:$0xff] %v8042
        %8171 = vst [vmem:[%s614 + $0x190] sm:$0xff] %v8043
        %8172 = vst [vmem:[%s614 + $0x198] sm:$0xff] %v8044
        %8173 = vst [vmem:[%s614 + $0x1a0] sm:$0xff] %v8045
        %8174 = vst [vmem:[%s614 + $0x1a8] sm:$0xff] %v8046
        %8175 = vst [vmem:[%s614 + $0x1b0] sm:$0xff] %v8047
        %8176 = vst [vmem:[%s614 + $0x1b8] sm:$0xff] %v8048
        %8177 = vst [vmem:[%s614 + $0x1c0] sm:$0xff] %v8049
        %8178 = vst [vmem:[%s614 + $0x1c8] sm:$0xff] %v8050
        %8179 = vst [vmem:[%s614 + $0x1d0] sm:$0xff] %v8051
        %8180 = vst [vmem:[%s614 + $0x1d8] sm:$0xff] %v8052
        %8181 = vst [vmem:[%s614 + $0x1e0] sm:$0xff] %v8053
        %8182 = vst [vmem:[%s614 + $0x1e8] sm:$0xff] %v8054
        %8183 = vst [vmem:[%s614 + $0x1f0] sm:$0xff] %v8055
        %8184 = vst [vmem:[%s614 + $0x1f8] sm:$0xff] %v8056
        %8185 = vst [vmem:[%s614 + $0x200] sm:$0xff] %v8057
        %8186 = vst [vmem:[%s614 + $0x208] sm:$0xff] %v8058
        %8187 = vst [vmem:[%s614 + $0x210] sm:$0xff] %v8059
        %8188 = vst [vmem:[%s614 + $0x218] sm:$0xff] %v8060
        %8189 = vst [vmem:[%s614 + $0x220] sm:$0xff] %v8061
        %8190 = vst [vmem:[%s614 + $0x228] sm:$0xff] %v8062
        %8191 = vst [vmem:[%s614 + $0x230] sm:$0xff] %v8063
        %8192 = vst [vmem:[%s614 + $0x238] sm:$0xff] %v8064
        %8193 = vst [vmem:[%s614 + $0x240] sm:$0xff] %v8065
        %8194 = vst [vmem:[%s614 + $0x248] sm:$0xff] %v8066
        %8195 = vst [vmem:[%s614 + $0x250] sm:$0xff] %v8067
        %8196 = vst [vmem:[%s614 + $0x258] sm:$0xff] %v8068
        %8197 = vst [vmem:[%s614 + $0x260] sm:$0xff] %v8069
        %8198 = vst [vmem:[%s614 + $0x268] sm:$0xff] %v8070
        %8199 = vst [vmem:[%s614 + $0x270] sm:$0xff] %v8071
        %8200 = vst [vmem:[%s614 + $0x278] sm:$0xff] %v8072
        %8201 = vst [vmem:[%s614 + $0x280] sm:$0xff] %v8073
        %8202 = vst [vmem:[%s614 + $0x288] sm:$0xff] %v8074
        %8203 = vst [vmem:[%s614 + $0x290] sm:$0xff] %v8075
        %8204 = vst [vmem:[%s614 + $0x298] sm:$0xff] %v8076
        %8205 = vst [vmem:[%s614 + $0x2a0] sm:$0xff] %v8077
        %8206 = vst [vmem:[%s614 + $0x2a8] sm:$0xff] %v8078
        %8207 = vst [vmem:[%s614 + $0x2b0] sm:$0xff] %v8079
        %8208 = vst [vmem:[%s614 + $0x2b8] sm:$0xff] %v8080
        %8209 = vst [vmem:[%s614 + $0x2c0] sm:$0xff] %v8081
        %8210 = vst [vmem:[%s614 + $0x2c8] sm:$0xff] %v8082
        %8211 = vst [vmem:[%s614 + $0x2d0] sm:$0xff] %v8083
        %8212 = vst [vmem:[%s614 + $0x2d8] sm:$0xff] %v8084
        %8213 = vst [vmem:[%s614 + $0x2e0] sm:$0xff] %v8085
        %8214 = vst [vmem:[%s614 + $0x2e8] sm:$0xff] %v8086
        %8215 = vst [vmem:[%s614 + $0x2f0] sm:$0xff] %v8087
        %8216 = vst [vmem:[%s614 + $0x2f8] sm:$0xff] %v8088
        %8217 = vst [vmem:[%s614 + $0x300] sm:$0xff] %v8089
        %8218 = vst [vmem:[%s614 + $0x308] sm:$0xff] %v8090
        %8219 = vst [vmem:[%s614 + $0x310] sm:$0xff] %v8091
        %8220 = vst [vmem:[%s614 + $0x318] sm:$0xff] %v8092
        %8221 = vst [vmem:[%s614 + $0x320] sm:$0xff] %v8093
        %8222 = vst [vmem:[%s614 + $0x328] sm:$0xff] %v8094
        %8223 = vst [vmem:[%s614 + $0x330] sm:$0xff] %v8095
        %8224 = vst [vmem:[%s614 + $0x338] sm:$0xff] %v8096
        %8225 = vst [vmem:[%s614 + $0x340] sm:$0xff] %v8097
        %8226 = vst [vmem:[%s614 + $0x348] sm:$0xff] %v8098
        %8227 = vst [vmem:[%s614 + $0x350] sm:$0xff] %v8099
        %8228 = vst [vmem:[%s614 + $0x358] sm:$0xff] %v8100
        %8229 = vst [vmem:[%s614 + $0x360] sm:$0xff] %v8101
        %8230 = vst [vmem:[%s614 + $0x368] sm:$0xff] %v8102
        %8231 = vst [vmem:[%s614 + $0x370] sm:$0xff] %v8103
        %8232 = vst [vmem:[%s614 + $0x378] sm:$0xff] %v8104
        %8233 = vst [vmem:[%s614 + $0x380] sm:$0xff] %v8105
        %8234 = vst [vmem:[%s614 + $0x388] sm:$0xff] %v8106
        %8235 = vst [vmem:[%s614 + $0x390] sm:$0xff] %v8107
        %8236 = vst [vmem:[%s614 + $0x398] sm:$0xff] %v8108
        %8237 = vst [vmem:[%s614 + $0x3a0] sm:$0xff] %v8109
        %8238 = vst [vmem:[%s614 + $0x3a8] sm:$0xff] %v8110
        %8239 = vst [vmem:[%s614 + $0x3b0] sm:$0xff] %v8111
        %8240 = vst [vmem:[%s614 + $0x3b8] sm:$0xff] %v8112
        %8241 = vst [vmem:[%s614 + $0x3c0] sm:$0xff] %v8113
        %8242 = vst [vmem:[%s614 + $0x3c8] sm:$0xff] %v8114
        %8243 = vst [vmem:[%s614 + $0x3d0] sm:$0xff] %v8115
        %8244 = vst [vmem:[%s614 + $0x3d8] sm:$0xff] %v8116
        %8245 = vst [vmem:[%s614 + $0x3e0] sm:$0xff] %v8117
        %8246 = vst [vmem:[%s614 + $0x3e8] sm:$0xff] %v8118
        %8247 = vst [vmem:[%s614 + $0x3f0] sm:$0xff] %v8119
        %8248 = vst [vmem:[%s614 + $0x3f8] sm:$0xff] %v8120
        %s8249 = sand.u32 %s299, 1
        %s8250 = scalar_lea.sflag [#allocation5], %s8249
        %s8251 = sand.u32 %s299, 1
        %s8252 = smul.addr %s8251, 512
        %s8253 = scalar_lea.vmem [#allocation12], %s8252
        %s8254 = sand.u32 %s327, 1
        %s8255 = scalar_lea.sflag [#allocation14], %s8254
        %s8256 = sand.u32 %s327, 1
        %s8257 = smul.addr %s8256, 1024
        %s8258 = scalar_lea.vmem [#allocation13], %s8257
        // Predicated region
        $region77: #{tpu_custom_call.1} parent=55 // pred_check
          %p8259 = pneg %p309
        $region78: #{tpu_custom_call.1} parent=55 // pred_check_branch
          %8261 = sbr.rel (%p8259) target = $region80
        $region79: #{tpu_custom_call.1} parent=55 // pred_region
          %s8262 = smul.u32 128, %s42
          %s8264 = ssub.s32 8192, 8192
          %8265 = vsyncadd %s8250, %s8264
          %s8266 = smul.addr %s41, 128
          %s8267 = sadd.s32 %s8262, %s8266
          %s8268 = smul.addr %s8267, 64
          %s8269 = scalar_lea.hbm %s9, %s8268
          %s8270 = sshll.u32 %s8253, 4
          %s8271 = int_to_ptr.vmem [resolvable:$true] %s8270
          %8276 = dma.vmem_to_hbm [thread:$0]  %s8271, 8192, %s8269, %s8250, 64, 64, 4
        $region80: #{tpu_custom_call.1} parent=55 // pred_fallthru
          _
        // Predicated region
        $region81: #{tpu_custom_call.1} parent=55 // pred_check
          %p8277 = pneg %p337
        $region82: #{tpu_custom_call.1} parent=55 // pred_check_branch
          %8279 = sbr.rel (%p8277) target = $region84
        $region83: #{tpu_custom_call.1} parent=55 // pred_region
          %s8280 = smul.u32 128, %s42
          %s8282 = ssub.s32 16384, 16384
          %8283 = vsyncadd %s8255, %s8282
          %s8284 = smul.addr %s41, 128
          %s8285 = sadd.s32 %s8280, %s8284
          %s8286 = smul.addr %s8285, 128
          %s8287 = scalar_lea.hbm %s10, %s8286
          %s8288 = sshll.u32 %s8258, 4
          %s8289 = int_to_ptr.vmem [resolvable:$true] %s8288
          %8294 = dma.vmem_to_hbm [thread:$0]  %s8289, 16384, %s8287, %s8255, 128, 128, 8
        $region84: #{tpu_custom_call.1} parent=55 // pred_fallthru
          _
      $region56: #{tpu_custom_call.1} parent=5 // pred_fallthru
        _
      %p8295 = scmp.le.s32.totalorder 2, %s32
      // Predicated region
      $region85: #{tpu_custom_call.1} parent=5 // pred_check
        %p8296 = pneg %p8295
      $region86: #{tpu_custom_call.1} parent=5 // pred_check_branch
        %8298 = sbr.rel (%p8296) target = $region88
      $region87: #{tpu_custom_call.1} parent=5 // pred_region
        %s8299 = ssub.s32 %s32, 2
        // Predicated region
        $region89: #{tpu_custom_call.1} parent=87 // pred_check
          %p8300 = pneg %p315
        $region90: #{tpu_custom_call.1} parent=87 // pred_check_branch
          %8302 = sbr.rel (%p8300) target = $region92
        $region91: #{tpu_custom_call.1} parent=87 // pred_region
          %s8303 = sand.u32 %s300, 1
          %s8304 = scalar_lea.sflag [#allocation5], %s8303
          %s8305 = sand.u32 %s300, 1
          %s8306 = smul.addr %s8305, 512
          %s8307 = scalar_lea.vmem [#allocation12], %s8306
          %8308 = dma.done %s8304, 8192
        $region92: #{tpu_custom_call.1} parent=87 // pred_fallthru
          _
        // Predicated region
        $region93: #{tpu_custom_call.1} parent=87 // pred_check
          %p8309 = pneg %p343
        $region94: #{tpu_custom_call.1} parent=87 // pred_check_branch
          %8311 = sbr.rel (%p8309) target = $region96
        $region95: #{tpu_custom_call.1} parent=87 // pred_region
          %s8312 = sand.u32 %s328, 1
          %s8313 = scalar_lea.sflag [#allocation14], %s8312
          %s8314 = sand.u32 %s328, 1
          %s8315 = smul.addr %s8314, 1024
          %s8316 = scalar_lea.vmem [#allocation13], %s8315
          %8317 = dma.done %s8313, 16384
        $region96: #{tpu_custom_call.1} parent=87 // pred_fallthru
          _
      $region88: #{tpu_custom_call.1} parent=5 // pred_fallthru
        _
    $region6: #{tpu_custom_call.1} parent=1 // loop_footer
      %s36 = sadd.s32 1, %s32
    $region7: #{tpu_custom_call.1} parent=1 // loop_footer_branch
      %31 = sbr.rel target = $region3
    $region8: #{tpu_custom_call.1} parent=1 // loop_exit
      _
    %8318 = vsyncpa [#allocation4], 1
    %s8319 = scalar_lea.sflag [#allocation4], 1
    %8320 = vsyncpa %s8319, 1
    %8321 = vsyncpa [#allocation7], 1
    %s8322 = scalar_lea.sflag [#allocation7], 1
    %8323 = vsyncpa %s8322, 1
    %8324 = vsyncpa [#allocation10], 1
    %s8325 = scalar_lea.sflag [#allocation10], 1
    %8326 = vsyncpa %s8325, 1
    %8327 = vsyncpa [#allocation5], 1
    %s8328 = scalar_lea.sflag [#allocation5], 1
    %8329 = vsyncpa %s8328, 1
    %8330 = vsyncpa [#allocation14], 1
    %s8331 = scalar_lea.sflag [#allocation14], 1
    %8332 = vsyncpa %s8331, 1

</llo_original>
